<compile_context>
chip_gen: v6e
topology: v6e:2x2x1
jax: 0.10.0
libtpu: 0.0.40
codegen_flags: <defaults>
</compile_context>

<pallas_src>
import functools
import math

import jax
import jax.numpy as jnp
from jax.experimental import pallas as pl
from jax.experimental.pallas import tpu as pltpu


# ------------------------------ tiling helpers ------------------------------

def _round_up(x, m):
    return (x + m - 1) // m * m


def _tile_full_or(n, target):
    """(tile, padded_n): full dim when small, else `target`-sized tiles."""
    if n <= target:
        return n, n
    return target, _round_up(n, target)


def _lane_tile(n, target=512):
    """Output-lane dim: always pad to a multiple of 128 for dense stores."""
    n_pad = _round_up(n, 128)
    if n_pad <= target:
        return n_pad, n_pad
    t = target if n_pad % target == 0 else 128
    return t, _round_up(n_pad, t)


def _pad_to(a, shape):
    pads = [(0, t - s) for s, t in zip(a.shape, shape)]
    if all(p == (0, 0) for p in pads):
        return a
    return jnp.pad(a, pads)


# 48 MiB scoped VMEM: > default 32 MiB (bigger tiles) yet below v7x's 64 MiB
# physical; well below v5e/v6e's 128 MiB.
_VMEM_LIMIT = 48 * 1024 * 1024


# ----------------------------- tiled linear (+bias/ReLU) --------------------

def _linear_kernel(x_ref, w_ref, b_ref, o_ref, acc_ref, *, activation):
    @pl.when(pl.program_id(2) == 0)
    def _():
        acc_ref[...] = jnp.zeros_like(acc_ref)

    acc_ref[...] += jnp.dot(x_ref[...], w_ref[...],
                            preferred_element_type=jnp.float32)

    @pl.when(pl.program_id(2) == pl.num_programs(2) - 1)
    def _():
        acc = acc_ref[...] + b_ref[...]
        if activation == "relu":
            acc = jnp.maximum(acc, 0.0)
        o_ref[...] = acc.astype(o_ref.dtype)


def linear(x, w, b=None, activation=None, out_dtype=jnp.bfloat16):
    """x: (..., K) @ w: (K, N) [+ b] with optional ReLU. bf16 MXU, f32 acc."""
    lead, K = x.shape[:-1], x.shape[-1]
    N = w.shape[1]
    x2 = x.reshape(-1, K)
    M = x2.shape[0]

    tm, Mp = _tile_full_or(M, 512)
    tn, Np = _lane_tile(N, 512)
    tk, Kp = _tile_full_or(K, 1024)

    xp = _pad_to(x2.astype(jnp.bfloat16), (Mp, Kp))
    wp = _pad_to(w.astype(jnp.bfloat16), (Kp, Np))   # weights pre-cast: no-op
    if b is None:
        bp = jnp.zeros((1, Np), jnp.float32)
    else:
        bp = _pad_to(b.reshape(1, N).astype(jnp.float32), (1, Np))

    out = pl.pallas_call(
        functools.partial(_linear_kernel, activation=activation),
        out_shape=jax.ShapeDtypeStruct((Mp, Np), out_dtype),
        grid=(Mp // tm, Np // tn, Kp // tk),
        in_specs=[pl.BlockSpec((tm, tk), lambda i, j, k: (i, k)),
                  pl.BlockSpec((tk, tn), lambda i, j, k: (k, j)),
                  pl.BlockSpec((1, tn), lambda i, j, k: (0, j))],
        out_specs=pl.BlockSpec((tm, tn), lambda i, j, k: (i, j)),
        scratch_shapes=[pltpu.VMEM((tm, tn), jnp.float32)],
        compiler_params=pltpu.CompilerParams(
            dimension_semantics=("parallel", "parallel", "arbitrary"),
            vmem_limit_bytes=_VMEM_LIMIT),
    )(xp, wp, bp)
    return out[:M, :N].reshape(*lead, N)


# ----------------------- fused residual-add + LayerNorm ---------------------

def _add_layernorm_kernel(x_ref, r_ref, g_ref, b_ref, o_ref):
    x = x_ref[...].astype(jnp.float32) + r_ref[...].astype(jnp.float32)
    mean = jnp.mean(x, axis=-1, keepdims=True)
    var = jnp.mean(jnp.square(x - mean), axis=-1, keepdims=True)
    y = (x - mean) * jax.lax.rsqrt(var + 1e-5)
    o_ref[...] = (y * g_ref[...] + b_ref[...]).astype(o_ref.dtype)


def add_layer_norm(x, res, gamma, beta, out_dtype=jnp.bfloat16):
    """LayerNorm(x + res), row-tiled, f32 LN math, bf16 activation stream."""
    lead, d = x.shape[:-1], x.shape[-1]
    x2 = x.reshape(-1, d)
    r2 = res.reshape(-1, d)
    M = x2.shape[0]
    tm, Mp = _tile_full_or(M, 512)
    xp = _pad_to(x2, (Mp, d))     # keep native dtypes; cast happens in-kernel
    rp = _pad_to(r2, (Mp, d))

    out = pl.pallas_call(
        _add_layernorm_kernel,
        out_shape=jax.ShapeDtypeStruct((Mp, d), out_dtype),
        grid=(Mp // tm,),
        in_specs=[pl.BlockSpec((tm, d), lambda i: (i, 0)),
                  pl.BlockSpec((tm, d), lambda i: (i, 0)),
                  pl.BlockSpec((1, d), lambda i: (0, 0)),
                  pl.BlockSpec((1, d), lambda i: (0, 0))],
        out_specs=pl.BlockSpec((tm, d), lambda i: (i, 0)),
        compiler_params=pltpu.CompilerParams(
            dimension_semantics=("parallel",),
            vmem_limit_bytes=_VMEM_LIMIT),
    )(xp, rp, gamma.reshape(1, d).astype(jnp.float32),
      beta.reshape(1, d).astype(jnp.float32))
    return out[:M].reshape(*lead, d)


# ------------------- mediated attention (flash-style, in-kernel mediator) ---

def _mediated_attention_kernel(table_ref, q_ref, kt_ref, v_ref, mask_ref,
                               o_ref, m_sc, l_sc, acc_sc, *,
                               scale, num_heads, window, tq, tkk, causal):
    qi = pl.program_id(1)
    ki = pl.program_id(2)

    @pl.when(ki == 0)
    def _():
        m_sc[...] = jnp.full(m_sc.shape, -jnp.inf, jnp.float32)
        l_sc[...] = jnp.zeros_like(l_sc)
        acc_sc[...] = jnp.zeros_like(acc_sc)

    def compute():
        # Relative-distance index for this (q, k) tile, built in-kernel.
        q_pos = qi * tq + jax.lax.broadcasted_iota(jnp.int32, (tq, tkk), 0)
        k_pos = ki * tkk + jax.lax.broadcasted_iota(jnp.int32, (tq, tkk), 1)
        rel = jnp.clip(q_pos - k_pos, -window, window) + window   # [0, 2w]
        valid = mask_ref[0] != 0
        neg = jnp.float32(-1e10)
        table = table_ref[...]                        # (2w+1, dh) bf16, resident

        for h in range(num_heads):
            q_h = q_ref[0, h]                         # (tq, dh)   bf16
            kt_h = kt_ref[0, h]                       # (dh, tkk)  bf16
            # Toeplitz/MXU mediated score:
            #   s[q,k] = sum_d Q[q,d] * table[rel(q,k), d] * K[k,d]
            #          = sum_r 1[rel==r] * ((Q * table[r]) @ K^T)[q,k]
            # (2w+1 is small, so the r-unroll is cheap; the dh-contraction
            #  runs on the MXU instead of the VALU.)
            s = jnp.zeros((tq, tkk), jnp.float32)
            for r in range(table.shape[0]):
                qs = q_h * table[r:r + 1, :]                          # bf16 VPU
                part = jnp.dot(qs, kt_h, preferred_element_type=jnp.float32)
                s = s + jnp.where(rel == r, part, 0.0)
            s = s * scale
            s = jnp.where(valid, s, neg)

            m_prev = m_sc[h]                                          # (tq, 1)
            m_new = jnp.maximum(m_prev, jnp.max(s, axis=-1, keepdims=True))
            alpha = jnp.exp(m_prev - m_new)
            p = jnp.exp(s - m_new)
            l_sc[h] = alpha * l_sc[h] + jnp.sum(p, axis=-1, keepdims=True)
            pv = jnp.dot(p.astype(jnp.bfloat16), v_ref[0, h],
                         preferred_element_type=jnp.float32)          # (tq, dh)
            acc_sc[h] = alpha * acc_sc[h] + pv
            m_sc[h] = m_new

    if causal:
        # Skip K tiles entirely above the diagonal (no rescale needed: a
        # skipped tile is exactly an all -inf tile under online softmax).
        pl.when(ki * tkk <= (qi + 1) * tq - 1)(compute)
    else:
        compute()

    @pl.when(ki == pl.num_programs(2) - 1)
    def _():
        outs = []
        for h in range(num_heads):
            inv_l = pl.reciprocal(l_sc[h], approx=True)    # EUP slot
            outs.append((acc_sc[h] * inv_l).astype(o_ref.dtype))
        # single lane-dense (tq, D) store (heads concatenated in-register)
        o_ref[0] = jnp.concatenate(outs, axis=-1)


def mediated_attention(q, k, v, rel_table, mask, *, num_heads, window,
                       causal=False):
    """q: (B,Lq,D); k,v: (B,Lk,D); rel_table: (2w+1, dh) bf16; mask: (B,Lq,Lk).
    Returns merged-head (B, Lq, D) bf16.  The relative mediator is generated
    inside the kernel (never materialized in HBM)."""
    B, Lq, D = q.shape
    Lk = k.shape[1]
    dh = D // num_heads

    tq, Lqp = _tile_full_or(Lq, 256)
    tkk, Lkp = _tile_full_or(Lk, 256)

    def heads(x, L, Lp):        # (B, L, D) -> (B, H, Lp, dh)   (layout plumbing)
        xh = x.astype(jnp.bfloat16).reshape(B, L, num_heads, dh)
        xh = jnp.transpose(xh, (0, 2, 1, 3))
        return _pad_to(xh, (B, num_heads, Lp, dh))

    qh = heads(q, Lq, Lqp)
    kth = jnp.transpose(heads(k, Lk, Lkp), (0, 1, 3, 2))     # (B, H, dh, Lkp)
    vh = heads(v, Lk, Lkp)
    maskp = _pad_to(mask.astype(jnp.int32), (B, Lqp, Lkp))
    table = rel_table.astype(jnp.bfloat16)                   # (2w+1, dh)
    R = table.shape[0]

    kernel = functools.partial(_mediated_attention_kernel,
                               scale=1.0 / math.sqrt(dh),
                               num_heads=num_heads, window=window,
                               tq=tq, tkk=tkk, causal=causal)

    out = pl.pallas_call(
        kernel,
        out_shape=jax.ShapeDtypeStruct((B, Lqp, D), jnp.bfloat16),
        grid=(B, Lqp // tq, Lkp // tkk),
        in_specs=[
            # tiny relative table: constant-index block, stays VMEM-resident
            pl.BlockSpec((R, dh), lambda b, qi, ki: (0, 0)),
            pl.BlockSpec((1, num_heads, tq, dh), lambda b, qi, ki: (b, 0, qi, 0)),
            pl.BlockSpec((1, num_heads, dh, tkk), lambda b, qi, ki: (b, 0, 0, ki)),
            pl.BlockSpec((1, num_heads, tkk, dh), lambda b, qi, ki: (b, 0, ki, 0)),
            pl.BlockSpec((1, tq, tkk), lambda b, qi, ki: (b, qi, ki)),
        ],
        out_specs=pl.BlockSpec((1, tq, D), lambda b, qi, ki: (b, qi, 0)),
        scratch_shapes=[
            pltpu.VMEM((num_heads, tq, 1), jnp.float32),    # running max
            pltpu.VMEM((num_heads, tq, 1), jnp.float32),    # running denom
            pltpu.VMEM((num_heads, tq, dh), jnp.float32),   # head-major acc
        ],
        compiler_params=pltpu.CompilerParams(
            dimension_semantics=("parallel", "parallel", "arbitrary"),
            vmem_limit_bytes=_VMEM_LIMIT),
    )(table, qh, kth, vh, maskp)
    return out[:, :Lq, :]


# ------------------------------ model pieces -------------------------------

def _dense(key, shape, scale=0.02):
    return scale * jax.random.normal(key, shape, dtype=jnp.float32)


def init_params(key, vocab_size, dim, num_heads, num_layers, window_size):
    keys = iter(jax.random.split(key, 256))
    dh = dim // num_heads

    def mha():
        return {"w_qkv": _dense(next(keys), (dim, 3 * dim)),
                "w_out": _dense(next(keys), (dim, dim))}

    def cross():
        return {"w_q": _dense(next(keys), (dim, dim)),
                "w_kv": _dense(next(keys), (dim, 2 * dim)),
                "w_out": _dense(next(keys), (dim, dim))}

    def ffn():
        return {"w1": _dense(next(keys), (dim, 4 * dim)),
                "b1": jnp.zeros((4 * dim,), jnp.float32),
                "w2": _dense(next(keys), (4 * dim, dim)),
                "b2": jnp.zeros((dim,), jnp.float32)}

    def ln():
        return {"gamma": jnp.ones((dim,), jnp.float32),
                "beta": jnp.zeros((dim,), jnp.float32)}

    return {
        "embedding": _dense(next(keys), (vocab_size, dim), 1.0 / math.sqrt(dim)),
        "rel_table": _dense(next(keys), (2 * window_size + 1, dh), 0.1),
        "encoder": [{"mha": mha(), "ln1": ln(), "ffn": ffn(), "ln2": ln()}
                    for _ in range(num_layers[0])],
        "decoder": [{"self": mha(), "ln1": ln(), "cross": cross(), "ln2": ln(),
                     "ffn": ffn(), "ln3": ln()}
                    for _ in range(num_layers[1])],
    }


def prepare_params(params):
    """One-time (outside jit) dtype/layout prep: matmul weights -> bf16,
    E^T precomputed in bf16 for the logits matmul, relative table -> bf16.
    LayerNorm params / biases / embedding gather table stay f32."""
    bf16 = jnp.bfloat16

    def mha(p):
        return {"w_qkv": p["w_qkv"].astype(bf16), "w_out": p["w_out"].astype(bf16)}

    def cross(p):
        return {"w_q": p["w_q"].astype(bf16), "w_kv": p["w_kv"].astype(bf16),
                "w_out": p["w_out"].astype(bf16)}

    def ffn(p):
        return {"w1": p["w1"].astype(bf16), "b1": p["b1"],
                "w2": p["w2"].astype(bf16), "b2": p["b2"]}

    return {
        "embedding": params["embedding"],                        # f32 gather table
        "emb_t": params["embedding"].T.astype(bf16),             # (D, V) for logits
        "rel_table": params["rel_table"].astype(bf16),
        "encoder": [{"mha": mha(l["mha"]), "ln1": dict(l["ln1"]),
                     "ffn": ffn(l["ffn"]), "ln2": dict(l["ln2"])}
                    for l in params["encoder"]],
        "decoder": [{"self": mha(l["self"]), "ln1": dict(l["ln1"]),
                     "cross": cross(l["cross"]), "ln2": dict(l["ln2"]),
                     "ffn": ffn(l["ffn"]), "ln3": dict(l["ln3"])}
                    for l in params["decoder"]],
    }


def self_attention_block(x, rel_table, mask, p, num_heads, window, causal=False):
    qkv = linear(x, p["w_qkv"])
    q, k, v = jnp.split(qkv, 3, axis=-1)
    o = mediated_attention(q, k, v, rel_table, mask, num_heads=num_heads,
                           window=window, causal=causal)
    return linear(o, p["w_out"])


def cross_attention_block(x, enc, rel_table, mask, p, num_heads, window):
    q = linear(x, p["w_q"])
    kv = linear(enc, p["w_kv"])
    k, v = jnp.split(kv, 2, axis=-1)
    o = mediated_attention(q, k, v, rel_table, mask, num_heads=num_heads,
                           window=window)
    return linear(o, p["w_out"])


def ffn_block(x, p):
    h = linear(x, p["w1"], p["b1"], activation="relu")
    return linear(h, p["w2"], p["b2"])


def sequential_absolute_forward(params, encoder_ids, encoder_mask, decoder_ids,
                                decoder_mask, cross_mask, *, num_heads,
                                window_size):
    dim = params["embedding"].shape[1]

    # InvertibleEmbedding.embed (gather kept in plain JAX glue)
    enc_x = params["embedding"][encoder_ids] * math.sqrt(dim)
    dec_x = params["embedding"][decoder_ids] * math.sqrt(dim)

    rel_table = params["rel_table"]          # (2w+1, dh) bf16, used in-kernel
    enc_mask_i = encoder_mask.astype(jnp.int32)
    dec_mask_i = decoder_mask.astype(jnp.int32)
    cross_mask_i = cross_mask.astype(jnp.int32)

    # Encoder (post-LN residual blocks, residual add fused into LN kernel)
    x = enc_x
    for layer in params["encoder"]:
        atn = self_attention_block(x, rel_table, enc_mask_i, layer["mha"],
                                   num_heads, window_size)
        x = add_layer_norm(x, atn, layer["ln1"]["gamma"], layer["ln1"]["beta"])
        ff = ffn_block(x, layer["ffn"])
        x = add_layer_norm(x, ff, layer["ln2"]["gamma"], layer["ln2"]["beta"])
    enc_out = x

    # Decoder (causal self-attention gets the tile-skip fast path)
    y = dec_x
    for layer in params["decoder"]:
        atn = self_attention_block(y, rel_table, dec_mask_i, layer["self"],
                                   num_heads, window_size, causal=True)
        y = add_layer_norm(y, atn, layer["ln1"]["gamma"], layer["ln1"]["beta"])
        ca = cross_attention_block(y, enc_out, rel_table, cross_mask_i,
                                   layer["cross"], num_heads, window_size)
        y = add_layer_norm(y, ca, layer["ln2"]["gamma"], layer["ln2"]["beta"])
        ff = ffn_block(y, layer["ffn"])
        y = add_layer_norm(y, ff, layer["ln3"]["gamma"], layer["ln3"]["beta"])

    # InvertibleEmbedding.invert: logits = y @ E^T (E^T pre-materialized once)
    return linear(y, params["emb_t"], out_dtype=jnp.float32)


# ---------------------------------- main ------------------------------------

if __name__ == "__main__":
    vocab_size, dim, num_heads, num_layers, window_size = 11, 32, 4, (2, 2), 4
    B, enc_len, dec_len = 2, 8, 8

    key = jax.random.PRNGKey(0)
    pkey, ekey, dkey = jax.random.split(key, 3)
    params = prepare_params(
        init_params(pkey, vocab_size, dim, num_heads, num_layers, window_size))

    encoder_ids = jax.random.randint(ekey, (B, enc_len), 0, vocab_size)
    decoder_ids = jax.random.randint(dkey, (B, dec_len), 0, vocab_size)
    encoder_mask = jnp.ones((B, enc_len, enc_len), jnp.int32)
    decoder_mask = jnp.broadcast_to(
        jnp.tril(jnp.ones((dec_len, dec_len), jnp.int32))[None],
        (B, dec_len, dec_len))
    cross_mask = jnp.ones((B, dec_len, enc_len), jnp.int32)

    fwd = jax.jit(functools.partial(sequential_absolute_forward,
                                    num_heads=num_heads,
                                    window_size=window_size))
    out = fwd(params, encoder_ids, encoder_mask, decoder_ids, decoder_mask,
              cross_mask)
    out = jax.block_until_ready(out)

    assert out.shape == (B, dec_len, vocab_size), out.shape
    assert bool(jnp.all(jnp.isfinite(out)))
    print("KERNEL_OK")
</pallas_src>

<mosaic_0001>
module attributes {stable_mosaic.version = 11 : i64} {
  func.func @_linear_kernel(%arg0: i32, %arg1: i32, %arg2: i32, %arg3: memref<16x32xbf16, #tpu.memory_space<vmem>>, %arg4: memref<32x128xbf16, #tpu.memory_space<vmem>>, %arg5: memref<1x128xf32, #tpu.memory_space<vmem>>, %arg6: memref<16x128xbf16, #tpu.memory_space<vmem>>, %arg7: memref<16x128xf32, #tpu.memory_space<vmem>>) attributes {dimension_semantics = [#tpu.dimension_semantics<parallel>, #tpu.dimension_semantics<parallel>, #tpu.dimension_semantics<arbitrary>], iteration_bounds = array<i64: 1, 1, 1>, scalar_prefetch = 0 : i64, scratch_operands = 1 : i64, tpu.core_type = #tpu.core_type<tc>, window_params = [{transform_indices = @transform_0, window_bounds = array<i64: 16, 32>}, {transform_indices = @transform_1, window_bounds = array<i64: 32, 128>}, {transform_indices = @transform_2, window_bounds = array<i64: 1, 128>}, {transform_indices = @transform_3, window_bounds = array<i64: 16, 128>}]} {
    %c0_i32 = arith.constant 0 : i32
    %0 = arith.cmpi eq, %arg2, %c0_i32 : i32
    %1 = arith.extui %0 : i1 to i32
    %c0_i32_0 = arith.constant 0 : i32
    %2 = arith.cmpi ne, %1, %c0_i32_0 : i32
    scf.if %2 {
      %cst_10 = arith.constant 0.000000e+00 : f32
      %12 = vector.broadcast %cst_10 : f32 to vector<16x128xf32>
      %c0_11 = arith.constant 0 : index
      %c0_12 = arith.constant 0 : index
      %13 = vector.load %arg7[%c0_11, %c0_12] : memref<16x128xf32, #tpu.memory_space<vmem>>, vector<16x128xf32>
      tpu.vector_store %arg7[%c0_11, %c0_12], %12 {strides = array<i32>} : memref<16x128xf32, #tpu.memory_space<vmem>>, vector<16x128xf32>,
    } else {
    }
    %c0 = arith.constant 0 : index
    %c0_1 = arith.constant 0 : index
    %3 = vector.load %arg7[%c0, %c0_1] : memref<16x128xf32, #tpu.memory_space<vmem>>, vector<16x128xf32>
    %c0_2 = arith.constant 0 : index
    %c0_3 = arith.constant 0 : index
    %4 = vector.load %arg3[%c0_2, %c0_3] : memref<16x32xbf16, #tpu.memory_space<vmem>>, vector<16x32xbf16>
    %c0_4 = arith.constant 0 : index
    %c0_5 = arith.constant 0 : index
    %5 = vector.load %arg4[%c0_4, %c0_5] : memref<32x128xbf16, #tpu.memory_space<vmem>>, vector<32x128xbf16>
    %cst = arith.constant dense<0.000000e+00> : vector<16x128xf32>
    %6 = tpu.matmul %4, %5, %cst {dimension_numbers = #tpu.dot_dimension_numbers<[1], [0], [0], [1], [0, 0, 1, 1], [], []>} : vector<16x32xbf16>, vector<32x128xbf16>, vector<16x128xf32> -> vector<16x128xf32>
    %7 = arith.addf %3, %6 : vector<16x128xf32>
    %c0_6 = arith.constant 0 : index
    %c0_7 = arith.constant 0 : index
    %8 = vector.load %arg7[%c0_6, %c0_7] : memref<16x128xf32, #tpu.memory_space<vmem>>, vector<16x128xf32>
    tpu.vector_store %arg7[%c0_6, %c0_7], %7 {strides = array<i32>} : memref<16x128xf32, #tpu.memory_space<vmem>>, vector<16x128xf32>,
    %c0_i32_8 = arith.constant 0 : i32
    %9 = arith.cmpi eq, %arg2, %c0_i32_8 : i32
    %10 = arith.extui %9 : i1 to i32
    %c0_i32_9 = arith.constant 0 : i32
    %11 = arith.cmpi ne, %10, %c0_i32_9 : i32
    scf.if %11 {
      %c0_10 = arith.constant 0 : index
      %c0_11 = arith.constant 0 : index
      %12 = vector.load %arg7[%c0_10, %c0_11] : memref<16x128xf32, #tpu.memory_space<vmem>>, vector<16x128xf32>
      %c0_12 = arith.constant 0 : index
      %c0_13 = arith.constant 0 : index
      %13 = vector.load %arg5[%c0_12, %c0_13] : memref<1x128xf32, #tpu.memory_space<vmem>>, vector<1x128xf32>
      %14 = vector.broadcast %13 : vector<1x128xf32> to vector<16x128xf32>
      %15 = arith.addf %12, %14 : vector<16x128xf32>
      %16 = arith.truncf %15 : vector<16x128xf32> to vector<16x128xbf16>
      %c0_14 = arith.constant 0 : index
      %c0_15 = arith.constant 0 : index
      %17 = vector.load %arg6[%c0_14, %c0_15] : memref<16x128xbf16, #tpu.memory_space<vmem>>, vector<16x128xbf16>
      tpu.vector_store %arg6[%c0_14, %c0_15], %16 {strides = array<i32>} : memref<16x128xbf16, #tpu.memory_space<vmem>>, vector<16x128xbf16>,
    } else {
    }
    return
  }
  func.func @transform_0(%arg0: i32, %arg1: i32, %arg2: i32) -> (i32, i32) {
    %c0_i32 = arith.constant 0 : i32
    return %arg0, %arg2 : i32, i32
  }
  func.func @transform_1(%arg0: i32, %arg1: i32, %arg2: i32) -> (i32, i32) {
    %c0_i32 = arith.constant 0 : i32
    return %arg2, %arg1 : i32, i32
  }
  func.func @transform_2(%arg0: i32, %arg1: i32, %arg2: i32) -> (i32, i32) {
    %c0_i32 = arith.constant 0 : i32
    %c0_i32_0 = arith.constant 0 : i32
    return %c0_i32, %arg1 : i32, i32
  }
  func.func @transform_3(%arg0: i32, %arg1: i32, %arg2: i32) -> (i32, i32) {
    %c0_i32 = arith.constant 0 : i32
    return %arg0, %arg1 : i32, i32
  }
}

module attributes {stable_mosaic.version = 11 : i64} {
  func.func @_add_layernorm_kernel(%arg0: i32, %arg1: memref<16x32xf32, #tpu.memory_space<vmem>>, %arg2: memref<16x32xbf16, #tpu.memory_space<vmem>>, %arg3: memref<1x32xf32, #tpu.memory_space<vmem>>, %arg4: memref<1x32xf32, #tpu.memory_space<vmem>>, %arg5: memref<16x32xbf16, #tpu.memory_space<vmem>>) attributes {dimension_semantics = [#tpu.dimension_semantics<parallel>], iteration_bounds = array<i64: 1>, scalar_prefetch = 0 : i64, scratch_operands = 0 : i64, tpu.core_type = #tpu.core_type<tc>, window_params = [{transform_indices = @transform_0, window_bounds = array<i64: 16, 32>}, {transform_indices = @transform_1, window_bounds = array<i64: 16, 32>}, {pipeline_mode = #tpu.pipeline_mode<synchronous>, transform_indices = @transform_2, window_bounds = array<i64: 1, 32>}, {pipeline_mode = #tpu.pipeline_mode<synchronous>, transform_indices = @transform_3, window_bounds = array<i64: 1, 32>}, {transform_indices = @transform_4, window_bounds = array<i64: 16, 32>}]} {
    %c0 = arith.constant 0 : index
    %c0_0 = arith.constant 0 : index
    %0 = vector.load %arg1[%c0, %c0_0] : memref<16x32xf32, #tpu.memory_space<vmem>>, vector<16x32xf32>
    %c0_1 = arith.constant 0 : index
    %c0_2 = arith.constant 0 : index
    %1 = vector.load %arg2[%c0_1, %c0_2] : memref<16x32xbf16, #tpu.memory_space<vmem>>, vector<16x32xbf16>
    %2 = arith.extf %1 : vector<16x32xbf16> to vector<16x32xf32>
    %3 = arith.addf %0, %2 : vector<16x32xf32>
    %cst = arith.constant dense<0.000000e+00> : vector<16xf32>
    %4 = vector.multi_reduction <add>, %3, %cst [1] : vector<16x32xf32> to vector<16xf32>
    %5 = vector.shape_cast %4 : vector<16xf32> to vector<16x1xf32>
    %cst_3 = arith.constant 3.200000e+01 : f32
    %6 = vector.broadcast %cst_3 : f32 to vector<16x1xf32>
    %7 = arith.divf %5, %6 : vector<16x1xf32>
    %8 = vector.broadcast %7 : vector<16x1xf32> to vector<16x32xf32>
    %9 = arith.subf %3, %8 : vector<16x32xf32>
    %10 = arith.mulf %9, %9 : vector<16x32xf32>
    %cst_4 = arith.constant dense<0.000000e+00> : vector<16xf32>
    %11 = vector.multi_reduction <add>, %10, %cst_4 [1] : vector<16x32xf32> to vector<16xf32>
    %12 = vector.shape_cast %11 : vector<16xf32> to vector<16x1xf32>
    %cst_5 = arith.constant 3.200000e+01 : f32
    %13 = vector.broadcast %cst_5 : f32 to vector<16x1xf32>
    %14 = arith.divf %12, %13 : vector<16x1xf32>
    %15 = vector.broadcast %7 : vector<16x1xf32> to vector<16x32xf32>
    %16 = arith.subf %3, %15 : vector<16x32xf32>
    %cst_6 = arith.constant 9.99999974E-6 : f32
    %17 = vector.broadcast %cst_6 : f32 to vector<16x1xf32>
    %18 = arith.addf %14, %17 : vector<16x1xf32>
    %19 = math.rsqrt %18 : vector<16x1xf32>
    %20 = vector.broadcast %19 : vector<16x1xf32> to vector<16x32xf32>
    %21 = arith.mulf %16, %20 : vector<16x32xf32>
    %c0_7 = arith.constant 0 : index
    %c0_8 = arith.constant 0 : index
    %22 = vector.load %arg3[%c0_7, %c0_8] : memref<1x32xf32, #tpu.memory_space<vmem>>, vector<1x32xf32>
    %23 = vector.broadcast %22 : vector<1x32xf32> to vector<16x32xf32>
    %24 = arith.mulf %21, %23 : vector<16x32xf32>
    %c0_9 = arith.constant 0 : index
    %c0_10 = arith.constant 0 : index
    %25 = vector.load %arg4[%c0_9, %c0_10] : memref<1x32xf32, #tpu.memory_space<vmem>>, vector<1x32xf32>
    %26 = vector.broadcast %25 : vector<1x32xf32> to vector<16x32xf32>
    %27 = arith.addf %24, %26 : vector<16x32xf32>
    %28 = arith.truncf %27 : vector<16x32xf32> to vector<16x32xbf16>
    %c0_11 = arith.constant 0 : index
    %c0_12 = arith.constant 0 : index
    %29 = vector.load %arg5[%c0_11, %c0_12] : memref<16x32xbf16, #tpu.memory_space<vmem>>, vector<16x32xbf16>
    tpu.vector_store %arg5[%c0_11, %c0_12], %28 {strides = array<i32>} : memref<16x32xbf16, #tpu.memory_space<vmem>>, vector<16x32xbf16>,
    return
  }
  func.func @transform_0(%arg0: i32) -> (i32, i32) {
    %c0_i32 = arith.constant 0 : i32
    %c0_i32_0 = arith.constant 0 : i32
    return %arg0, %c0_i32 : i32, i32
  }
  func.func @transform_1(%arg0: i32) -> (i32, i32) {
    %c0_i32 = arith.constant 0 : i32
    %c0_i32_0 = arith.constant 0 : i32
    return %arg0, %c0_i32 : i32, i32
  }
  func.func @transform_2(%arg0: i32) -> (i32, i32) {
    %c0_i32 = arith.constant 0 : i32
    %c0_i32_0 = arith.constant 0 : i32
    %c0_i32_1 = arith.constant 0 : i32
    return %c0_i32, %c0_i32_0 : i32, i32
  }
  func.func @transform_3(%arg0: i32) -> (i32, i32) {
    %c0_i32 = arith.constant 0 : i32
    %c0_i32_0 = arith.constant 0 : i32
    %c0_i32_1 = arith.constant 0 : i32
    return %c0_i32, %c0_i32_0 : i32, i32
  }
  func.func @transform_4(%arg0: i32) -> (i32, i32) {
    %c0_i32 = arith.constant 0 : i32
    %c0_i32_0 = arith.constant 0 : i32
    return %arg0, %c0_i32 : i32, i32
  }
}

module attributes {stable_mosaic.version = 11 : i64} {
  func.func @_mediated_attention_kernel(%arg0: i32, %arg1: i32, %arg2: i32, %arg3: memref<9x8xbf16, #tpu.memory_space<vmem>>, %arg4: memref<1x4x8x8xbf16, #tpu.memory_space<vmem>>, %arg5: memref<1x4x8x8xbf16, #tpu.memory_space<vmem>>, %arg6: memref<1x4x8x8xbf16, #tpu.memory_space<vmem>>, %arg7: memref<1x8x8xi32, #tpu.memory_space<vmem>>, %arg8: memref<1x8x32xbf16, #tpu.memory_space<vmem>>, %arg9: memref<4x8x1xf32, #tpu.memory_space<vmem>>, %arg10: memref<4x8x1xf32, #tpu.memory_space<vmem>>, %arg11: memref<4x8x8xf32, #tpu.memory_space<vmem>>) attributes {dimension_semantics = [#tpu.dimension_semantics<parallel>, #tpu.dimension_semantics<parallel>, #tpu.dimension_semantics<arbitrary>], iteration_bounds = array<i64: 2, 1, 1>, scalar_prefetch = 0 : i64, scratch_operands = 3 : i64, tpu.core_type = #tpu.core_type<tc>, window_params = [{pipeline_mode = #tpu.pipeline_mode<synchronous>, transform_indices = @transform_0, window_bounds = array<i64: 9, 8>}, {transform_indices = @transform_1, window_bounds = array<i64: 1, 4, 8, 8>}, {transform_indices = @transform_2, window_bounds = array<i64: 1, 4, 8, 8>}, {transform_indices = @transform_3, window_bounds = array<i64: 1, 4, 8, 8>}, {transform_indices = @transform_4, window_bounds = array<i64: 1, 8, 8>}, {transform_indices = @transform_5, window_bounds = array<i64: 1, 8, 32>}]} {
    %c0_i32 = arith.constant 0 : i32
    %0 = arith.cmpi eq, %arg2, %c0_i32 : i32
    %1 = arith.extui %0 : i1 to i32
    %c0_i32_0 = arith.constant 0 : i32
    %2 = arith.cmpi ne, %1, %c0_i32_0 : i32
    scf.if %2 {
      %cst = arith.constant 0xFF800000 : f32
      %13 = vector.broadcast %cst : f32 to vector<4x8x1xf32>
      %c0 = arith.constant 0 : index
      %c0_6 = arith.constant 0 : index
      %c0_7 = arith.constant 0 : index
      %14 = vector.load %arg9[%c0, %c0_6, %c0_7] : memref<4x8x1xf32, #tpu.memory_space<vmem>>, vector<4x8x1xf32>
      tpu.vector_store %arg9[%c0, %c0_6, %c0_7], %13 {strides = array<i32>} : memref<4x8x1xf32, #tpu.memory_space<vmem>>, vector<4x8x1xf32>,
      %cst_8 = arith.constant 0.000000e+00 : f32
      %15 = vector.broadcast %cst_8 : f32 to vector<4x8x1xf32>
      %c0_9 = arith.constant 0 : index
      %c0_10 = arith.constant 0 : index
      %c0_11 = arith.constant 0 : index
      %16 = vector.load %arg10[%c0_9, %c0_10, %c0_11] : memref<4x8x1xf32, #tpu.memory_space<vmem>>, vector<4x8x1xf32>
      tpu.vector_store %arg10[%c0_9, %c0_10, %c0_11], %15 {strides = array<i32>} : memref<4x8x1xf32, #tpu.memory_space<vmem>>, vector<4x8x1xf32>,
      %cst_12 = arith.constant 0.000000e+00 : f32
      %17 = vector.broadcast %cst_12 : f32 to vector<4x8x8xf32>
      %c0_13 = arith.constant 0 : index
      %c0_14 = arith.constant 0 : index
      %c0_15 = arith.constant 0 : index
      %18 = vector.load %arg11[%c0_13, %c0_14, %c0_15] : memref<4x8x8xf32, #tpu.memory_space<vmem>>, vector<4x8x8xf32>
      tpu.vector_store %arg11[%c0_13, %c0_14, %c0_15], %17 {strides = array<i32>} : memref<4x8x8xf32, #tpu.memory_space<vmem>>, vector<4x8x8xf32>,
    } else {
    }
    %c8_i32 = arith.constant 8 : i32
    %3 = arith.muli %arg2, %c8_i32 : i32
    %c1_i32 = arith.constant 1 : i32
    %4 = arith.addi %arg1, %c1_i32 : i32
    %c8_i32_1 = arith.constant 8 : i32
    %5 = arith.muli %4, %c8_i32_1 : i32
    %c1_i32_2 = arith.constant 1 : i32
    %6 = arith.subi %5, %c1_i32_2 : i32
    %7 = arith.cmpi sle, %3, %6 : i32
    %8 = arith.extui %7 : i1 to i32
    %c0_i32_3 = arith.constant 0 : i32
    %9 = arith.cmpi ne, %8, %c0_i32_3 : i32
    scf.if %9 {
      %c8_i32_6 = arith.constant 8 : i32
      %13 = arith.muli %arg1, %c8_i32_6 : i32
      %14 = tpu.iota {dimensions = array<i32: 0>} : vector<8x8xi32>
      %15 = vector.broadcast %13 : i32 to vector<8x8xi32>
      %16 = arith.addi %15, %14 : vector<8x8xi32>
      %c8_i32_7 = arith.constant 8 : i32
      %17 = arith.muli %arg2, %c8_i32_7 : i32
      %18 = tpu.iota {dimensions = array<i32: 1>} : vector<8x8xi32>
      %19 = vector.broadcast %17 : i32 to vector<8x8xi32>
      %20 = arith.addi %19, %18 : vector<8x8xi32>
      %21 = arith.subi %16, %20 : vector<8x8xi32>
      %c-4_i32 = arith.constant -4 : i32
      %c4_i32 = arith.constant 4 : i32
      %22 = vector.broadcast %c-4_i32 : i32 to vector<8x8xi32>
      %23 = arith.maxsi %22, %21 : vector<8x8xi32>
      %24 = vector.broadcast %c4_i32 : i32 to vector<8x8xi32>
      %25 = arith.minsi %24, %23 : vector<8x8xi32>
      %c4_i32_8 = arith.constant 4 : i32
      %26 = vector.broadcast %c4_i32_8 : i32 to vector<8x8xi32>
      %27 = arith.addi %25, %26 : vector<8x8xi32>
      %c0 = arith.constant 0 : index
      %c0_9 = arith.constant 0 : index
      %c0_10 = arith.constant 0 : index
      %28 = vector.load %arg7[%c0, %c0_9, %c0_10] : memref<1x8x8xi32, #tpu.memory_space<vmem>>, vector<1x8x8xi32>
      %29 = vector.shape_cast %28 : vector<1x8x8xi32> to vector<8x8xi32>
      %c0_i32_11 = arith.constant 0 : i32
      %30 = vector.broadcast %c0_i32_11 : i32 to vector<8x8xi32>
      %31 = arith.cmpi ne, %29, %30 : vector<8x8xi32>
      %c0_12 = arith.constant 0 : index
      %c0_13 = arith.constant 0 : index
      %32 = vector.load %arg3[%c0_12, %c0_13] : memref<9x8xbf16, #tpu.memory_space<vmem>>, vector<9x8xbf16>
      %c0_14 = arith.constant 0 : index
      %c0_15 = arith.constant 0 : index
      %c0_16 = arith.constant 0 : index
      %c0_17 = arith.constant 0 : index
      %33 = vector.load %arg4[%c0_14, %c0_15, %c0_16, %c0_17] : memref<1x4x8x8xbf16, #tpu.memory_space<vmem>>, vector<1x1x8x8xbf16>
      %34 = vector.shape_cast %33 : vector<1x1x8x8xbf16> to vector<8x8xbf16>
      %c0_18 = arith.constant 0 : index
      %c0_19 = arith.constant 0 : index
      %c0_20 = arith.constant 0 : index
      %c0_21 = arith.constant 0 : index
      %35 = vector.load %arg5[%c0_18, %c0_19, %c0_20, %c0_21] : memref<1x4x8x8xbf16, #tpu.memory_space<vmem>>, vector<1x1x8x8xbf16>
      %36 = vector.shape_cast %35 : vector<1x1x8x8xbf16> to vector<8x8xbf16>
      %cst = arith.constant 0.000000e+00 : f32
      %37 = vector.broadcast %cst : f32 to vector<8x8xf32>
      %38 = vector.extract_strided_slice %32 {offsets = [0, 0], sizes = [1, 8], strides = [1, 1]} : vector<9x8xbf16> to vector<1x8xbf16>
      %39 = vector.broadcast %38 : vector<1x8xbf16> to vector<8x8xbf16>
      %40 = arith.mulf %34, %39 : vector<8x8xbf16>
      %cst_22 = arith.constant dense<0.000000e+00> : vector<8x8xf32>
      %41 = tpu.matmul %40, %36, %cst_22 {dimension_numbers = #tpu.dot_dimension_numbers<[1], [0], [0], [1], [0, 0, 1, 1], [], []>} : vector<8x8xbf16>, vector<8x8xbf16>, vector<8x8xf32> -> vector<8x8xf32>
      %c0_i32_23 = arith.constant 0 : i32
      %42 = vector.broadcast %c0_i32_23 : i32 to vector<8x8xi32>
      %43 = arith.cmpi eq, %27, %42 : vector<8x8xi32>
      %cst_24 = arith.constant 0.000000e+00 : f32
      %44 = vector.broadcast %cst_24 : f32 to vector<8x8xf32>
      %45 = arith.select %43, %41, %44 : vector<8x8xi1>, vector<8x8xf32>
      %46 = arith.addf %37, %45 : vector<8x8xf32>
      %47 = vector.extract_strided_slice %32 {offsets = [1, 0], sizes = [1, 8], strides = [1, 1]} : vector<9x8xbf16> to vector<1x8xbf16>
      %48 = vector.broadcast %47 : vector<1x8xbf16> to vector<8x8xbf16>
      %49 = arith.mulf %34, %48 : vector<8x8xbf16>
      %cst_25 = arith.constant dense<0.000000e+00> : vector<8x8xf32>
      %50 = tpu.matmul %49, %36, %cst_25 {dimension_numbers = #tpu.dot_dimension_numbers<[1], [0], [0], [1], [0, 0, 1, 1], [], []>} : vector<8x8xbf16>, vector<8x8xbf16>, vector<8x8xf32> -> vector<8x8xf32>
      %c1_i32_26 = arith.constant 1 : i32
      %51 = vector.broadcast %c1_i32_26 : i32 to vector<8x8xi32>
      %52 = arith.cmpi eq, %27, %51 : vector<8x8xi32>
      %cst_27 = arith.constant 0.000000e+00 : f32
      %53 = vector.broadcast %cst_27 : f32 to vector<8x8xf32>
      %54 = arith.select %52, %50, %53 : vector<8x8xi1>, vector<8x8xf32>
      %55 = arith.addf %46, %54 : vector<8x8xf32>
      %56 = vector.extract_strided_slice %32 {offsets = [2, 0], sizes = [1, 8], strides = [1, 1]} : vector<9x8xbf16> to vector<1x8xbf16>
      %57 = vector.broadcast %56 : vector<1x8xbf16> to vector<8x8xbf16>
      %58 = arith.mulf %34, %57 : vector<8x8xbf16>
      %cst_28 = arith.constant dense<0.000000e+00> : vector<8x8xf32>
      %59 = tpu.matmul %58, %36, %cst_28 {dimension_numbers = #tpu.dot_dimension_numbers<[1], [0], [0], [1], [0, 0, 1, 1], [], []>} : vector<8x8xbf16>, vector<8x8xbf16>, vector<8x8xf32> -> vector<8x8xf32>
      %c2_i32 = arith.constant 2 : i32
      %60 = vector.broadcast %c2_i32 : i32 to vector<8x8xi32>
      %61 = arith.cmpi eq, %27, %60 : vector<8x8xi32>
      %cst_29 = arith.constant 0.000000e+00 : f32
      %62 = vector.broadcast %cst_29 : f32 to vector<8x8xf32>
      %63 = arith.select %61, %59, %62 : vector<8x8xi1>, vector<8x8xf32>
      %64 = arith.addf %55, %63 : vector<8x8xf32>
      %65 = vector.extract_strided_slice %32 {offsets = [3, 0], sizes = [1, 8], strides = [1, 1]} : vector<9x8xbf16> to vector<1x8xbf16>
      %66 = vector.broadcast %65 : vector<1x8xbf16> to vector<8x8xbf16>
      %67 = arith.mulf %34, %66 : vector<8x8xbf16>
      %cst_30 = arith.constant dense<0.000000e+00> : vector<8x8xf32>
      %68 = tpu.matmul %67, %36, %cst_30 {dimension_numbers = #tpu.dot_dimension_numbers<[1], [0], [0], [1], [0, 0, 1, 1], [], []>} : vector<8x8xbf16>, vector<8x8xbf16>, vector<8x8xf32> -> vector<8x8xf32>
      %c3_i32 = arith.constant 3 : i32
      %69 = vector.broadcast %c3_i32 : i32 to vector<8x8xi32>
      %70 = arith.cmpi eq, %27, %69 : vector<8x8xi32>
      %cst_31 = arith.constant 0.000000e+00 : f32
      %71 = vector.broadcast %cst_31 : f32 to vector<8x8xf32>
      %72 = arith.select %70, %68, %71 : vector<8x8xi1>, vector<8x8xf32>
      %73 = arith.addf %64, %72 : vector<8x8xf32>
      %74 = vector.extract_strided_slice %32 {offsets = [4, 0], sizes = [1, 8], strides = [1, 1]} : vector<9x8xbf16> to vector<1x8xbf16>
      %75 = vector.broadcast %74 : vector<1x8xbf16> to vector<8x8xbf16>
      %76 = arith.mulf %34, %75 : vector<8x8xbf16>
      %cst_32 = arith.constant dense<0.000000e+00> : vector<8x8xf32>
      %77 = tpu.matmul %76, %36, %cst_32 {dimension_numbers = #tpu.dot_dimension_numbers<[1], [0], [0], [1], [0, 0, 1, 1], [], []>} : vector<8x8xbf16>, vector<8x8xbf16>, vector<8x8xf32> -> vector<8x8xf32>
      %c4_i32_33 = arith.constant 4 : i32
      %78 = vector.broadcast %c4_i32_33 : i32 to vector<8x8xi32>
      %79 = arith.cmpi eq, %27, %78 : vector<8x8xi32>
      %cst_34 = arith.constant 0.000000e+00 : f32
      %80 = vector.broadcast %cst_34 : f32 to vector<8x8xf32>
      %81 = arith.select %79, %77, %80 : vector<8x8xi1>, vector<8x8xf32>
      %82 = arith.addf %73, %81 : vector<8x8xf32>
      %83 = vector.extract_strided_slice %32 {offsets = [5, 0], sizes = [1, 8], strides = [1, 1]} : vector<9x8xbf16> to vector<1x8xbf16>
      %84 = vector.broadcast %83 : vector<1x8xbf16> to vector<8x8xbf16>
      %85 = arith.mulf %34, %84 : vector<8x8xbf16>
      %cst_35 = arith.constant dense<0.000000e+00> : vector<8x8xf32>
      %86 = tpu.matmul %85, %36, %cst_35 {dimension_numbers = #tpu.dot_dimension_numbers<[1], [0], [0], [1], [0, 0, 1, 1], [], []>} : vector<8x8xbf16>, vector<8x8xbf16>, vector<8x8xf32> -> vector<8x8xf32>
      %c5_i32 = arith.constant 5 : i32
      %87 = vector.broadcast %c5_i32 : i32 to vector<8x8xi32>
      %88 = arith.cmpi eq, %27, %87 : vector<8x8xi32>
      %cst_36 = arith.constant 0.000000e+00 : f32
      %89 = vector.broadcast %cst_36 : f32 to vector<8x8xf32>
      %90 = arith.select %88, %86, %89 : vector<8x8xi1>, vector<8x8xf32>
      %91 = arith.addf %82, %90 : vector<8x8xf32>
      %92 = vector.extract_strided_slice %32 {offsets = [6, 0], sizes = [1, 8], strides = [1, 1]} : vector<9x8xbf16> to vector<1x8xbf16>
      %93 = vector.broadcast %92 : vector<1x8xbf16> to vector<8x8xbf16>
      %94 = arith.mulf %34, %93 : vector<8x8xbf16>
      %cst_37 = arith.constant dense<0.000000e+00> : vector<8x8xf32>
      %95 = tpu.matmul %94, %36, %cst_37 {dimension_numbers = #tpu.dot_dimension_numbers<[1], [0], [0], [1], [0, 0, 1, 1], [], []>} : vector<8x8xbf16>, vector<8x8xbf16>, vector<8x8xf32> -> vector<8x8xf32>
      %c6_i32 = arith.constant 6 : i32
      %96 = vector.broadcast %c6_i32 : i32 to vector<8x8xi32>
      %97 = arith.cmpi eq, %27, %96 : vector<8x8xi32>
      %cst_38 = arith.constant 0.000000e+00 : f32
      %98 = vector.broadcast %cst_38 : f32 to vector<8x8xf32>
      %99 = arith.select %97, %95, %98 : vector<8x8xi1>, vector<8x8xf32>
      %100 = arith.addf %91, %99 : vector<8x8xf32>
      %101 = vector.extract_strided_slice %32 {offsets = [7, 0], sizes = [1, 8], strides = [1, 1]} : vector<9x8xbf16> to vector<1x8xbf16>
      %102 = vector.broadcast %101 : vector<1x8xbf16> to vector<8x8xbf16>
      %103 = arith.mulf %34, %102 : vector<8x8xbf16>
      %cst_39 = arith.constant dense<0.000000e+00> : vector<8x8xf32>
      %104 = tpu.matmul %103, %36, %cst_39 {dimension_numbers = #tpu.dot_dimension_numbers<[1], [0], [0], [1], [0, 0, 1, 1], [], []>} : vector<8x8xbf16>, vector<8x8xbf16>, vector<8x8xf32> -> vector<8x8xf32>
      %c7_i32 = arith.constant 7 : i32
      %105 = vector.broadcast %c7_i32 : i32 to vector<8x8xi32>
      %106 = arith.cmpi eq, %27, %105 : vector<8x8xi32>
      %cst_40 = arith.constant 0.000000e+00 : f32
      %107 = vector.broadcast %cst_40 : f32 to vector<8x8xf32>
      %108 = arith.select %106, %104, %107 : vector<8x8xi1>, vector<8x8xf32>
      %109 = arith.addf %100, %108 : vector<8x8xf32>
      %110 = vector.extract_strided_slice %32 {offsets = [8, 0], sizes = [1, 8], strides = [1, 1]} : vector<9x8xbf16> to vector<1x8xbf16>
      %111 = vector.broadcast %110 : vector<1x8xbf16> to vector<8x8xbf16>
      %112 = arith.mulf %34, %111 : vector<8x8xbf16>
      %cst_41 = arith.constant dense<0.000000e+00> : vector<8x8xf32>
      %113 = tpu.matmul %112, %36, %cst_41 {dimension_numbers = #tpu.dot_dimension_numbers<[1], [0], [0], [1], [0, 0, 1, 1], [], []>} : vector<8x8xbf16>, vector<8x8xbf16>, vector<8x8xf32> -> vector<8x8xf32>
      %c8_i32_42 = arith.constant 8 : i32
      %114 = vector.broadcast %c8_i32_42 : i32 to vector<8x8xi32>
      %115 = arith.cmpi eq, %27, %114 : vector<8x8xi32>
      %cst_43 = arith.constant 0.000000e+00 : f32
      %116 = vector.broadcast %cst_43 : f32 to vector<8x8xf32>
      %117 = arith.select %115, %113, %116 : vector<8x8xi1>, vector<8x8xf32>
      %118 = arith.addf %109, %117 : vector<8x8xf32>
      %cst_44 = arith.constant 0.353553385 : f32
      %119 = vector.broadcast %cst_44 : f32 to vector<8x8xf32>
      %120 = arith.mulf %118, %119 : vector<8x8xf32>
      %cst_45 = arith.constant -1.000000e+10 : f32
      %121 = vector.broadcast %cst_45 : f32 to vector<8x8xf32>
      %122 = arith.select %31, %120, %121 : vector<8x8xi1>, vector<8x8xf32>
      %c0_46 = arith.constant 0 : index
      %c0_47 = arith.constant 0 : index
      %c0_48 = arith.constant 0 : index
      %123 = vector.load %arg9[%c0_46, %c0_47, %c0_48] : memref<4x8x1xf32, #tpu.memory_space<vmem>>, vector<1x8x1xf32>
      %124 = vector.shape_cast %123 : vector<1x8x1xf32> to vector<8x1xf32>
      %cst_49 = arith.constant dense<0xFF800000> : vector<8xf32>
      %125 = vector.multi_reduction <maximumf>, %122, %cst_49 [1] : vector<8x8xf32> to vector<8xf32>
      %126 = vector.shape_cast %125 : vector<8xf32> to vector<8x1xf32>
      %127 = arith.maximumf %124, %126 : vector<8x1xf32>
      %128 = arith.subf %124, %127 : vector<8x1xf32>
      %129 = math.exp %128 : vector<8x1xf32>
      %130 = vector.broadcast %127 : vector<8x1xf32> to vector<8x8xf32>
      %131 = arith.subf %122, %130 : vector<8x8xf32>
      %132 = math.exp %131 : vector<8x8xf32>
      %c0_50 = arith.constant 0 : index
      %c0_51 = arith.constant 0 : index
      %c0_52 = arith.constant 0 : index
      %133 = vector.load %arg10[%c0_50, %c0_51, %c0_52] : memref<4x8x1xf32, #tpu.memory_space<vmem>>, vector<1x8x1xf32>
      %134 = vector.shape_cast %133 : vector<1x8x1xf32> to vector<8x1xf32>
      %135 = arith.mulf %129, %134 : vector<8x1xf32>
      %cst_53 = arith.constant dense<0.000000e+00> : vector<8xf32>
      %136 = vector.multi_reduction <add>, %132, %cst_53 [1] : vector<8x8xf32> to vector<8xf32>
      %137 = vector.shape_cast %136 : vector<8xf32> to vector<8x1xf32>
      %138 = arith.addf %135, %137 : vector<8x1xf32>
      %c0_54 = arith.constant 0 : index
      %c0_55 = arith.constant 0 : index
      %c0_56 = arith.constant 0 : index
      %139 = vector.load %arg10[%c0_54, %c0_55, %c0_56] : memref<4x8x1xf32, #tpu.memory_space<vmem>>, vector<1x8x1xf32>
      %140 = vector.shape_cast %139 : vector<1x8x1xf32> to vector<8x1xf32>
      %141 = vector.shape_cast %138 : vector<8x1xf32> to vector<1x8x1xf32>
      tpu.vector_store %arg10[%c0_54, %c0_55, %c0_56], %141 {strides = array<i32>} : memref<4x8x1xf32, #tpu.memory_space<vmem>>, vector<1x8x1xf32>,
      %142 = arith.truncf %132 : vector<8x8xf32> to vector<8x8xbf16>
      %c0_57 = arith.constant 0 : index
      %c0_58 = arith.constant 0 : index
      %c0_59 = arith.constant 0 : index
      %c0_60 = arith.constant 0 : index
      %143 = vector.load %arg6[%c0_57, %c0_58, %c0_59, %c0_60] : memref<1x4x8x8xbf16, #tpu.memory_space<vmem>>, vector<1x1x8x8xbf16>
      %144 = vector.shape_cast %143 : vector<1x1x8x8xbf16> to vector<8x8xbf16>
      %cst_61 = arith.constant dense<0.000000e+00> : vector<8x8xf32>
      %145 = tpu.matmul %142, %144, %cst_61 {dimension_numbers = #tpu.dot_dimension_numbers<[1], [0], [0], [1], [0, 0, 1, 1], [], []>} : vector<8x8xbf16>, vector<8x8xbf16>, vector<8x8xf32> -> vector<8x8xf32>
      %c0_62 = arith.constant 0 : index
      %c0_63 = arith.constant 0 : index
      %c0_64 = arith.constant 0 : index
      %146 = vector.load %arg11[%c0_62, %c0_63, %c0_64] : memref<4x8x8xf32, #tpu.memory_space<vmem>>, vector<1x8x8xf32>
      %147 = vector.shape_cast %146 : vector<1x8x8xf32> to vector<8x8xf32>
      %148 = vector.broadcast %129 : vector<8x1xf32> to vector<8x8xf32>
      %149 = arith.mulf %148, %147 : vector<8x8xf32>
      %150 = arith.addf %149, %145 : vector<8x8xf32>
      %c0_65 = arith.constant 0 : index
      %c0_66 = arith.constant 0 : index
      %c0_67 = arith.constant 0 : index
      %151 = vector.load %arg11[%c0_65, %c0_66, %c0_67] : memref<4x8x8xf32, #tpu.memory_space<vmem>>, vector<1x8x8xf32>
      %152 = vector.shape_cast %151 : vector<1x8x8xf32> to vector<8x8xf32>
      %153 = vector.shape_cast %150 : vector<8x8xf32> to vector<1x8x8xf32>
      tpu.vector_store %arg11[%c0_65, %c0_66, %c0_67], %153 {strides = array<i32>} : memref<4x8x8xf32, #tpu.memory_space<vmem>>, vector<1x8x8xf32>,
      %c0_68 = arith.constant 0 : index
      %c0_69 = arith.constant 0 : index
      %c0_70 = arith.constant 0 : index
      %154 = vector.load %arg9[%c0_68, %c0_69, %c0_70] : memref<4x8x1xf32, #tpu.memory_space<vmem>>, vector<1x8x1xf32>
      %155 = vector.shape_cast %154 : vector<1x8x1xf32> to vector<8x1xf32>
      %156 = vector.shape_cast %127 : vector<8x1xf32> to vector<1x8x1xf32>
      tpu.vector_store %arg9[%c0_68, %c0_69, %c0_70], %156 {strides = array<i32>} : memref<4x8x1xf32, #tpu.memory_space<vmem>>, vector<1x8x1xf32>,
      %c0_71 = arith.constant 0 : index
      %c1 = arith.constant 1 : index
      %c0_72 = arith.constant 0 : index
      %c0_73 = arith.constant 0 : index
      %157 = vector.load %arg4[%c0_71, %c1, %c0_72, %c0_73] : memref<1x4x8x8xbf16, #tpu.memory_space<vmem>>, vector<1x1x8x8xbf16>
      %158 = vector.shape_cast %157 : vector<1x1x8x8xbf16> to vector<8x8xbf16>
      %c0_74 = arith.constant 0 : index
      %c1_75 = arith.constant 1 : index
      %c0_76 = arith.constant 0 : index
      %c0_77 = arith.constant 0 : index
      %159 = vector.load %arg5[%c0_74, %c1_75, %c0_76, %c0_77] : memref<1x4x8x8xbf16, #tpu.memory_space<vmem>>, vector<1x1x8x8xbf16>
      %160 = vector.shape_cast %159 : vector<1x1x8x8xbf16> to vector<8x8xbf16>
      %cst_78 = arith.constant 0.000000e+00 : f32
      %161 = vector.broadcast %cst_78 : f32 to vector<8x8xf32>
      %162 = vector.extract_strided_slice %32 {offsets = [0, 0], sizes = [1, 8], strides = [1, 1]} : vector<9x8xbf16> to vector<1x8xbf16>
      %163 = vector.broadcast %162 : vector<1x8xbf16> to vector<8x8xbf16>
      %164 = arith.mulf %158, %163 : vector<8x8xbf16>
      %cst_79 = arith.constant dense<0.000000e+00> : vector<8x8xf32>
      %165 = tpu.matmul %164, %160, %cst_79 {dimension_numbers = #tpu.dot_dimension_numbers<[1], [0], [0], [1], [0, 0, 1, 1], [], []>} : vector<8x8xbf16>, vector<8x8xbf16>, vector<8x8xf32> -> vector<8x8xf32>
      %c0_i32_80 = arith.constant 0 : i32
      %166 = vector.broadcast %c0_i32_80 : i32 to vector<8x8xi32>
      %167 = arith.cmpi eq, %27, %166 : vector<8x8xi32>
      %cst_81 = arith.constant 0.000000e+00 : f32
      %168 = vector.broadcast %cst_81 : f32 to vector<8x8xf32>
      %169 = arith.select %167, %165, %168 : vector<8x8xi1>, vector<8x8xf32>
      %170 = arith.addf %161, %169 : vector<8x8xf32>
      %171 = vector.extract_strided_slice %32 {offsets = [1, 0], sizes = [1, 8], strides = [1, 1]} : vector<9x8xbf16> to vector<1x8xbf16>
      %172 = vector.broadcast %171 : vector<1x8xbf16> to vector<8x8xbf16>
      %173 = arith.mulf %158, %172 : vector<8x8xbf16>
      %cst_82 = arith.constant dense<0.000000e+00> : vector<8x8xf32>
      %174 = tpu.matmul %173, %160, %cst_82 {dimension_numbers = #tpu.dot_dimension_numbers<[1], [0], [0], [1], [0, 0, 1, 1], [], []>} : vector<8x8xbf16>, vector<8x8xbf16>, vector<8x8xf32> -> vector<8x8xf32>
      %c1_i32_83 = arith.constant 1 : i32
      %175 = vector.broadcast %c1_i32_83 : i32 to vector<8x8xi32>
      %176 = arith.cmpi eq, %27, %175 : vector<8x8xi32>
      %cst_84 = arith.constant 0.000000e+00 : f32
      %177 = vector.broadcast %cst_84 : f32 to vector<8x8xf32>
      %178 = arith.select %176, %174, %177 : vector<8x8xi1>, vector<8x8xf32>
      %179 = arith.addf %170, %178 : vector<8x8xf32>
      %180 = vector.extract_strided_slice %32 {offsets = [2, 0], sizes = [1, 8], strides = [1, 1]} : vector<9x8xbf16> to vector<1x8xbf16>
      %181 = vector.broadcast %180 : vector<1x8xbf16> to vector<8x8xbf16>
      %182 = arith.mulf %158, %181 : vector<8x8xbf16>
      %cst_85 = arith.constant dense<0.000000e+00> : vector<8x8xf32>
      %183 = tpu.matmul %182, %160, %cst_85 {dimension_numbers = #tpu.dot_dimension_numbers<[1], [0], [0], [1], [0, 0, 1, 1], [], []>} : vector<8x8xbf16>, vector<8x8xbf16>, vector<8x8xf32> -> vector<8x8xf32>
      %c2_i32_86 = arith.constant 2 : i32
      %184 = vector.broadcast %c2_i32_86 : i32 to vector<8x8xi32>
      %185 = arith.cmpi eq, %27, %184 : vector<8x8xi32>
      %cst_87 = arith.constant 0.000000e+00 : f32
      %186 = vector.broadcast %cst_87 : f32 to vector<8x8xf32>
      %187 = arith.select %185, %183, %186 : vector<8x8xi1>, vector<8x8xf32>
      %188 = arith.addf %179, %187 : vector<8x8xf32>
      %189 = vector.extract_strided_slice %32 {offsets = [3, 0], sizes = [1, 8], strides = [1, 1]} : vector<9x8xbf16> to vector<1x8xbf16>
      %190 = vector.broadcast %189 : vector<1x8xbf16> to vector<8x8xbf16>
      %191 = arith.mulf %158, %190 : vector<8x8xbf16>
      %cst_88 = arith.constant dense<0.000000e+00> : vector<8x8xf32>
      %192 = tpu.matmul %191, %160, %cst_88 {dimension_numbers = #tpu.dot_dimension_numbers<[1], [0], [0], [1], [0, 0, 1, 1], [], []>} : vector<8x8xbf16>, vector<8x8xbf16>, vector<8x8xf32> -> vector<8x8xf32>
      %c3_i32_89 = arith.constant 3 : i32
      %193 = vector.broadcast %c3_i32_89 : i32 to vector<8x8xi32>
      %194 = arith.cmpi eq, %27, %193 : vector<8x8xi32>
      %cst_90 = arith.constant 0.000000e+00 : f32
      %195 = vector.broadcast %cst_90 : f32 to vector<8x8xf32>
      %196 = arith.select %194, %192, %195 : vector<8x8xi1>, vector<8x8xf32>
      %197 = arith.addf %188, %196 : vector<8x8xf32>
      %198 = vector.extract_strided_slice %32 {offsets = [4, 0], sizes = [1, 8], strides = [1, 1]} : vector<9x8xbf16> to vector<1x8xbf16>
      %199 = vector.broadcast %198 : vector<1x8xbf16> to vector<8x8xbf16>
      %200 = arith.mulf %158, %199 : vector<8x8xbf16>
      %cst_91 = arith.constant dense<0.000000e+00> : vector<8x8xf32>
      %201 = tpu.matmul %200, %160, %cst_91 {dimension_numbers = #tpu.dot_dimension_numbers<[1], [0], [0], [1], [0, 0, 1, 1], [], []>} : vector<8x8xbf16>, vector<8x8xbf16>, vector<8x8xf32> -> vector<8x8xf32>
      %c4_i32_92 = arith.constant 4 : i32
      %202 = vector.broadcast %c4_i32_92 : i32 to vector<8x8xi32>
      %203 = arith.cmpi eq, %27, %202 : vector<8x8xi32>
      %cst_93 = arith.constant 0.000000e+00 : f32
      %204 = vector.broadcast %cst_93 : f32 to vector<8x8xf32>
      %205 = arith.select %203, %201, %204 : vector<8x8xi1>, vector<8x8xf32>
      %206 = arith.addf %197, %205 : vector<8x8xf32>
      %207 = vector.extract_strided_slice %32 {offsets = [5, 0], sizes = [1, 8], strides = [1, 1]} : vector<9x8xbf16> to vector<1x8xbf16>
      %208 = vector.broadcast %207 : vector<1x8xbf16> to vector<8x8xbf16>
      %209 = arith.mulf %158, %208 : vector<8x8xbf16>
      %cst_94 = arith.constant dense<0.000000e+00> : vector<8x8xf32>
      %210 = tpu.matmul %209, %160, %cst_94 {dimension_numbers = #tpu.dot_dimension_numbers<[1], [0], [0], [1], [0, 0, 1, 1], [], []>} : vector<8x8xbf16>, vector<8x8xbf16>, vector<8x8xf32> -> vector<8x8xf32>
      %c5_i32_95 = arith.constant 5 : i32
      %211 = vector.broadcast %c5_i32_95 : i32 to vector<8x8xi32>
      %212 = arith.cmpi eq, %27, %211 : vector<8x8xi32>
      %cst_96 = arith.constant 0.000000e+00 : f32
      %213 = vector.broadcast %cst_96 : f32 to vector<8x8xf32>
      %214 = arith.select %212, %210, %213 : vector<8x8xi1>, vector<8x8xf32>
      %215 = arith.addf %206, %214 : vector<8x8xf32>
      %216 = vector.extract_strided_slice %32 {offsets = [6, 0], sizes = [1, 8], strides = [1, 1]} : vector<9x8xbf16> to vector<1x8xbf16>
      %217 = vector.broadcast %216 : vector<1x8xbf16> to vector<8x8xbf16>
      %218 = arith.mulf %158, %217 : vector<8x8xbf16>
      %cst_97 = arith.constant dense<0.000000e+00> : vector<8x8xf32>
      %219 = tpu.matmul %218, %160, %cst_97 {dimension_numbers = #tpu.dot_dimension_numbers<[1], [0], [0], [1], [0, 0, 1, 1], [], []>} : vector<8x8xbf16>, vector<8x8xbf16>, vector<8x8xf32> -> vector<8x8xf32>
      %c6_i32_98 = arith.constant 6 : i32
      %220 = vector.broadcast %c6_i32_98 : i32 to vector<8x8xi32>
      %221 = arith.cmpi eq, %27, %220 : vector<8x8xi32>
      %cst_99 = arith.constant 0.000000e+00 : f32
      %222 = vector.broadcast %cst_99 : f32 to vector<8x8xf32>
      %223 = arith.select %221, %219, %222 : vector<8x8xi1>, vector<8x8xf32>
      %224 = arith.addf %215, %223 : vector<8x8xf32>
      %225 = vector.extract_strided_slice %32 {offsets = [7, 0], sizes = [1, 8], strides = [1, 1]} : vector<9x8xbf16> to vector<1x8xbf16>
      %226 = vector.broadcast %225 : vector<1x8xbf16> to vector<8x8xbf16>
      %227 = arith.mulf %158, %226 : vector<8x8xbf16>
      %cst_100 = arith.constant dense<0.000000e+00> : vector<8x8xf32>
      %228 = tpu.matmul %227, %160, %cst_100 {dimension_numbers = #tpu.dot_dimension_numbers<[1], [0], [0], [1], [0, 0, 1, 1], [], []>} : vector<8x8xbf16>, vector<8x8xbf16>, vector<8x8xf32> -> vector<8x8xf32>
      %c7_i32_101 = arith.constant 7 : i32
      %229 = vector.broadcast %c7_i32_101 : i32 to vector<8x8xi32>
      %230 = arith.cmpi eq, %27, %229 : vector<8x8xi32>
      %cst_102 = arith.constant 0.000000e+00 : f32
      %231 = vector.broadcast %cst_102 : f32 to vector<8x8xf32>
      %232 = arith.select %230, %228, %231 : vector<8x8xi1>, vector<8x8xf32>
      %233 = arith.addf %224, %232 : vector<8x8xf32>
      %234 = vector.extract_strided_slice %32 {offsets = [8, 0], sizes = [1, 8], strides = [1, 1]} : vector<9x8xbf16> to vector<1x8xbf16>
      %235 = vector.broadcast %234 : vector<1x8xbf16> to vector<8x8xbf16>
      %236 = arith.mulf %158, %235 : vector<8x8xbf16>
      %cst_103 = arith.constant dense<0.000000e+00> : vector<8x8xf32>
      %237 = tpu.matmul %236, %160, %cst_103 {dimension_numbers = #tpu.dot_dimension_numbers<[1], [0], [0], [1], [0, 0, 1, 1], [], []>} : vector<8x8xbf16>, vector<8x8xbf16>, vector<8x8xf32> -> vector<8x8xf32>
      %c8_i32_104 = arith.constant 8 : i32
      %238 = vector.broadcast %c8_i32_104 : i32 to vector<8x8xi32>
      %239 = arith.cmpi eq, %27, %238 : vector<8x8xi32>
      %cst_105 = arith.constant 0.000000e+00 : f32
      %240 = vector.broadcast %cst_105 : f32 to vector<8x8xf32>
      %241 = arith.select %239, %237, %240 : vector<8x8xi1>, vector<8x8xf32>
      %242 = arith.addf %233, %241 : vector<8x8xf32>
      %cst_106 = arith.constant 0.353553385 : f32
      %243 = vector.broadcast %cst_106 : f32 to vector<8x8xf32>
      %244 = arith.mulf %242, %243 : vector<8x8xf32>
      %cst_107 = arith.constant -1.000000e+10 : f32
      %245 = vector.broadcast %cst_107 : f32 to vector<8x8xf32>
      %246 = arith.select %31, %244, %245 : vector<8x8xi1>, vector<8x8xf32>
      %c1_108 = arith.constant 1 : index
      %c0_109 = arith.constant 0 : index
      %c0_110 = arith.constant 0 : index
      %247 = vector.load %arg9[%c1_108, %c0_109, %c0_110] : memref<4x8x1xf32, #tpu.memory_space<vmem>>, vector<1x8x1xf32>
      %248 = vector.shape_cast %247 : vector<1x8x1xf32> to vector<8x1xf32>
      %cst_111 = arith.constant dense<0xFF800000> : vector<8xf32>
      %249 = vector.multi_reduction <maximumf>, %246, %cst_111 [1] : vector<8x8xf32> to vector<8xf32>
      %250 = vector.shape_cast %249 : vector<8xf32> to vector<8x1xf32>
      %251 = arith.maximumf %248, %250 : vector<8x1xf32>
      %252 = arith.subf %248, %251 : vector<8x1xf32>
      %253 = math.exp %252 : vector<8x1xf32>
      %254 = vector.broadcast %251 : vector<8x1xf32> to vector<8x8xf32>
      %255 = arith.subf %246, %254 : vector<8x8xf32>
      %256 = math.exp %255 : vector<8x8xf32>
      %c1_112 = arith.constant 1 : index
      %c0_113 = arith.constant 0 : index
      %c0_114 = arith.constant 0 : index
      %257 = vector.load %arg10[%c1_112, %c0_113, %c0_114] : memref<4x8x1xf32, #tpu.memory_space<vmem>>, vector<1x8x1xf32>
      %258 = vector.shape_cast %257 : vector<1x8x1xf32> to vector<8x1xf32>
      %259 = arith.mulf %253, %258 : vector<8x1xf32>
      %cst_115 = arith.constant dense<0.000000e+00> : vector<8xf32>
      %260 = vector.multi_reduction <add>, %256, %cst_115 [1] : vector<8x8xf32> to vector<8xf32>
      %261 = vector.shape_cast %260 : vector<8xf32> to vector<8x1xf32>
      %262 = arith.addf %259, %261 : vector<8x1xf32>
      %c1_116 = arith.constant 1 : index
      %c0_117 = arith.constant 0 : index
      %c0_118 = arith.constant 0 : index
      %263 = vector.load %arg10[%c1_116, %c0_117, %c0_118] : memref<4x8x1xf32, #tpu.memory_space<vmem>>, vector<1x8x1xf32>
      %264 = vector.shape_cast %263 : vector<1x8x1xf32> to vector<8x1xf32>
      %265 = vector.shape_cast %262 : vector<8x1xf32> to vector<1x8x1xf32>
      tpu.vector_store %arg10[%c1_116, %c0_117, %c0_118], %265 {strides = array<i32>} : memref<4x8x1xf32, #tpu.memory_space<vmem>>, vector<1x8x1xf32>,
      %266 = arith.truncf %256 : vector<8x8xf32> to vector<8x8xbf16>
      %c0_119 = arith.constant 0 : index
      %c1_120 = arith.constant 1 : index
      %c0_121 = arith.constant 0 : index
      %c0_122 = arith.constant 0 : index
      %267 = vector.load %arg6[%c0_119, %c1_120, %c0_121, %c0_122] : memref<1x4x8x8xbf16, #tpu.memory_space<vmem>>, vector<1x1x8x8xbf16>
      %268 = vector.shape_cast %267 : vector<1x1x8x8xbf16> to vector<8x8xbf16>
      %cst_123 = arith.constant dense<0.000000e+00> : vector<8x8xf32>
      %269 = tpu.matmul %266, %268, %cst_123 {dimension_numbers = #tpu.dot_dimension_numbers<[1], [0], [0], [1], [0, 0, 1, 1], [], []>} : vector<8x8xbf16>, vector<8x8xbf16>, vector<8x8xf32> -> vector<8x8xf32>
      %c1_124 = arith.constant 1 : index
      %c0_125 = arith.constant 0 : index
      %c0_126 = arith.constant 0 : index
      %270 = vector.load %arg11[%c1_124, %c0_125, %c0_126] : memref<4x8x8xf32, #tpu.memory_space<vmem>>, vector<1x8x8xf32>
      %271 = vector.shape_cast %270 : vector<1x8x8xf32> to vector<8x8xf32>
      %272 = vector.broadcast %253 : vector<8x1xf32> to vector<8x8xf32>
      %273 = arith.mulf %272, %271 : vector<8x8xf32>
      %274 = arith.addf %273, %269 : vector<8x8xf32>
      %c1_127 = arith.constant 1 : index
      %c0_128 = arith.constant 0 : index
      %c0_129 = arith.constant 0 : index
      %275 = vector.load %arg11[%c1_127, %c0_128, %c0_129] : memref<4x8x8xf32, #tpu.memory_space<vmem>>, vector<1x8x8xf32>
      %276 = vector.shape_cast %275 : vector<1x8x8xf32> to vector<8x8xf32>
      %277 = vector.shape_cast %274 : vector<8x8xf32> to vector<1x8x8xf32>
      tpu.vector_store %arg11[%c1_127, %c0_128, %c0_129], %277 {strides = array<i32>} : memref<4x8x8xf32, #tpu.memory_space<vmem>>, vector<1x8x8xf32>,
      %c1_130 = arith.constant 1 : index
      %c0_131 = arith.constant 0 : index
      %c0_132 = arith.constant 0 : index
      %278 = vector.load %arg9[%c1_130, %c0_131, %c0_132] : memref<4x8x1xf32, #tpu.memory_space<vmem>>, vector<1x8x1xf32>
      %279 = vector.shape_cast %278 : vector<1x8x1xf32> to vector<8x1xf32>
      %280 = vector.shape_cast %251 : vector<8x1xf32> to vector<1x8x1xf32>
      tpu.vector_store %arg9[%c1_130, %c0_131, %c0_132], %280 {strides = array<i32>} : memref<4x8x1xf32, #tpu.memory_space<vmem>>, vector<1x8x1xf32>,
      %c0_133 = arith.constant 0 : index
      %c2 = arith.constant 2 : index
      %c0_134 = arith.constant 0 : index
      %c0_135 = arith.constant 0 : index
      %281 = vector.load %arg4[%c0_133, %c2, %c0_134, %c0_135] : memref<1x4x8x8xbf16, #tpu.memory_space<vmem>>, vector<1x1x8x8xbf16>
      %282 = vector.shape_cast %281 : vector<1x1x8x8xbf16> to vector<8x8xbf16>
      %c0_136 = arith.constant 0 : index
      %c2_137 = arith.constant 2 : index
      %c0_138 = arith.constant 0 : index
      %c0_139 = arith.constant 0 : index
      %283 = vector.load %arg5[%c0_136, %c2_137, %c0_138, %c0_139] : memref<1x4x8x8xbf16, #tpu.memory_space<vmem>>, vector<1x1x8x8xbf16>
      %284 = vector.shape_cast %283 : vector<1x1x8x8xbf16> to vector<8x8xbf16>
      %cst_140 = arith.constant 0.000000e+00 : f32
      %285 = vector.broadcast %cst_140 : f32 to vector<8x8xf32>
      %286 = vector.extract_strided_slice %32 {offsets = [0, 0], sizes = [1, 8], strides = [1, 1]} : vector<9x8xbf16> to vector<1x8xbf16>
      %287 = vector.broadcast %286 : vector<1x8xbf16> to vector<8x8xbf16>
      %288 = arith.mulf %282, %287 : vector<8x8xbf16>
      %cst_141 = arith.constant dense<0.000000e+00> : vector<8x8xf32>
      %289 = tpu.matmul %288, %284, %cst_141 {dimension_numbers = #tpu.dot_dimension_numbers<[1], [0], [0], [1], [0, 0, 1, 1], [], []>} : vector<8x8xbf16>, vector<8x8xbf16>, vector<8x8xf32> -> vector<8x8xf32>
      %c0_i32_142 = arith.constant 0 : i32
      %290 = vector.broadcast %c0_i32_142 : i32 to vector<8x8xi32>
      %291 = arith.cmpi eq, %27, %290 : vector<8x8xi32>
      %cst_143 = arith.constant 0.000000e+00 : f32
      %292 = vector.broadcast %cst_143 : f32 to vector<8x8xf32>
      %293 = arith.select %291, %289, %292 : vector<8x8xi1>, vector<8x8xf32>
      %294 = arith.addf %285, %293 : vector<8x8xf32>
      %295 = vector.extract_strided_slice %32 {offsets = [1, 0], sizes = [1, 8], strides = [1, 1]} : vector<9x8xbf16> to vector<1x8xbf16>
      %296 = vector.broadcast %295 : vector<1x8xbf16> to vector<8x8xbf16>
      %297 = arith.mulf %282, %296 : vector<8x8xbf16>
      %cst_144 = arith.constant dense<0.000000e+00> : vector<8x8xf32>
      %298 = tpu.matmul %297, %284, %cst_144 {dimension_numbers = #tpu.dot_dimension_numbers<[1], [0], [0], [1], [0, 0, 1, 1], [], []>} : vector<8x8xbf16>, vector<8x8xbf16>, vector<8x8xf32> -> vector<8x8xf32>
      %c1_i32_145 = arith.constant 1 : i32
      %299 = vector.broadcast %c1_i32_145 : i32 to vector<8x8xi32>
      %300 = arith.cmpi eq, %27, %299 : vector<8x8xi32>
      %cst_146 = arith.constant 0.000000e+00 : f32
      %301 = vector.broadcast %cst_146 : f32 to vector<8x8xf32>
      %302 = arith.select %300, %298, %301 : vector<8x8xi1>, vector<8x8xf32>
      %303 = arith.addf %294, %302 : vector<8x8xf32>
      %304 = vector.extract_strided_slice %32 {offsets = [2, 0], sizes = [1, 8], strides = [1, 1]} : vector<9x8xbf16> to vector<1x8xbf16>
      %305 = vector.broadcast %304 : vector<1x8xbf16> to vector<8x8xbf16>
      %306 = arith.mulf %282, %305 : vector<8x8xbf16>
      %cst_147 = arith.constant dense<0.000000e+00> : vector<8x8xf32>
      %307 = tpu.matmul %306, %284, %cst_147 {dimension_numbers = #tpu.dot_dimension_numbers<[1], [0], [0], [1], [0, 0, 1, 1], [], []>} : vector<8x8xbf16>, vector<8x8xbf16>, vector<8x8xf32> -> vector<8x8xf32>
      %c2_i32_148 = arith.constant 2 : i32
      %308 = vector.broadcast %c2_i32_148 : i32 to vector<8x8xi32>
      %309 = arith.cmpi eq, %27, %308 : vector<8x8xi32>
      %cst_149 = arith.constant 0.000000e+00 : f32
      %310 = vector.broadcast %cst_149 : f32 to vector<8x8xf32>
      %311 = arith.select %309, %307, %310 : vector<8x8xi1>, vector<8x8xf32>
      %312 = arith.addf %303, %311 : vector<8x8xf32>
      %313 = vector.extract_strided_slice %32 {offsets = [3, 0], sizes = [1, 8], strides = [1, 1]} : vector<9x8xbf16> to vector<1x8xbf16>
      %314 = vector.broadcast %313 : vector<1x8xbf16> to vector<8x8xbf16>
      %315 = arith.mulf %282, %314 : vector<8x8xbf16>
      %cst_150 = arith.constant dense<0.000000e+00> : vector<8x8xf32>
      %316 = tpu.matmul %315, %284, %cst_150 {dimension_numbers = #tpu.dot_dimension_numbers<[1], [0], [0], [1], [0, 0, 1, 1], [], []>} : vector<8x8xbf16>, vector<8x8xbf16>, vector<8x8xf32> -> vector<8x8xf32>
      %c3_i32_151 = arith.constant 3 : i32
      %317 = vector.broadcast %c3_i32_151 : i32 to vector<8x8xi32>
      %318 = arith.cmpi eq, %27, %317 : vector<8x8xi32>
      %cst_152 = arith.constant 0.000000e+00 : f32
      %319 = vector.broadcast %cst_152 : f32 to vector<8x8xf32>
      %320 = arith.select %318, %316, %319 : vector<8x8xi1>, vector<8x8xf32>
      %321 = arith.addf %312, %320 : vector<8x8xf32>
      %322 = vector.extract_strided_slice %32 {offsets = [4, 0], sizes = [1, 8], strides = [1, 1]} : vector<9x8xbf16> to vector<1x8xbf16>
      %323 = vector.broadcast %322 : vector<1x8xbf16> to vector<8x8xbf16>
      %324 = arith.mulf %282, %323 : vector<8x8xbf16>
      %cst_153 = arith.constant dense<0.000000e+00> : vector<8x8xf32>
      %325 = tpu.matmul %324, %284, %cst_153 {dimension_numbers = #tpu.dot_dimension_numbers<[1], [0], [0], [1], [0, 0, 1, 1], [], []>} : vector<8x8xbf16>, vector<8x8xbf16>, vector<8x8xf32> -> vector<8x8xf32>
      %c4_i32_154 = arith.constant 4 : i32
      %326 = vector.broadcast %c4_i32_154 : i32 to vector<8x8xi32>
      %327 = arith.cmpi eq, %27, %326 : vector<8x8xi32>
      %cst_155 = arith.constant 0.000000e+00 : f32
      %328 = vector.broadcast %cst_155 : f32 to vector<8x8xf32>
      %329 = arith.select %327, %325, %328 : vector<8x8xi1>, vector<8x8xf32>
      %330 = arith.addf %321, %329 : vector<8x8xf32>
      %331 = vector.extract_strided_slice %32 {offsets = [5, 0], sizes = [1, 8], strides = [1, 1]} : vector<9x8xbf16> to vector<1x8xbf16>
      %332 = vector.broadcast %331 : vector<1x8xbf16> to vector<8x8xbf16>
      %333 = arith.mulf %282, %332 : vector<8x8xbf16>
      %cst_156 = arith.constant dense<0.000000e+00> : vector<8x8xf32>
      %334 = tpu.matmul %333, %284, %cst_156 {dimension_numbers = #tpu.dot_dimension_numbers<[1], [0], [0], [1], [0, 0, 1, 1], [], []>} : vector<8x8xbf16>, vector<8x8xbf16>, vector<8x8xf32> -> vector<8x8xf32>
      %c5_i32_157 = arith.constant 5 : i32
      %335 = vector.broadcast %c5_i32_157 : i32 to vector<8x8xi32>
      %336 = arith.cmpi eq, %27, %335 : vector<8x8xi32>
      %cst_158 = arith.constant 0.000000e+00 : f32
      %337 = vector.broadcast %cst_158 : f32 to vector<8x8xf32>
      %338 = arith.select %336, %334, %337 : vector<8x8xi1>, vector<8x8xf32>
      %339 = arith.addf %330, %338 : vector<8x8xf32>
      %340 = vector.extract_strided_slice %32 {offsets = [6, 0], sizes = [1, 8], strides = [1, 1]} : vector<9x8xbf16> to vector<1x8xbf16>
      %341 = vector.broadcast %340 : vector<1x8xbf16> to vector<8x8xbf16>
      %342 = arith.mulf %282, %341 : vector<8x8xbf16>
      %cst_159 = arith.constant dense<0.000000e+00> : vector<8x8xf32>
      %343 = tpu.matmul %342, %284, %cst_159 {dimension_numbers = #tpu.dot_dimension_numbers<[1], [0], [0], [1], [0, 0, 1, 1], [], []>} : vector<8x8xbf16>, vector<8x8xbf16>, vector<8x8xf32> -> vector<8x8xf32>
      %c6_i32_160 = arith.constant 6 : i32
      %344 = vector.broadcast %c6_i32_160 : i32 to vector<8x8xi32>
      %345 = arith.cmpi eq, %27, %344 : vector<8x8xi32>
      %cst_161 = arith.constant 0.000000e+00 : f32
      %346 = vector.broadcast %cst_161 : f32 to vector<8x8xf32>
      %347 = arith.select %345, %343, %346 : vector<8x8xi1>, vector<8x8xf32>
      %348 = arith.addf %339, %347 : vector<8x8xf32>
      %349 = vector.extract_strided_slice %32 {offsets = [7, 0], sizes = [1, 8], strides = [1, 1]} : vector<9x8xbf16> to vector<1x8xbf16>
      %350 = vector.broadcast %349 : vector<1x8xbf16> to vector<8x8xbf16>
      %351 = arith.mulf %282, %350 : vector<8x8xbf16>
      %cst_162 = arith.constant dense<0.000000e+00> : vector<8x8xf32>
      %352 = tpu.matmul %351, %284, %cst_162 {dimension_numbers = #tpu.dot_dimension_numbers<[1], [0], [0], [1], [0, 0, 1, 1], [], []>} : vector<8x8xbf16>, vector<8x8xbf16>, vector<8x8xf32> -> vector<8x8xf32>
      %c7_i32_163 = arith.constant 7 : i32
      %353 = vector.broadcast %c7_i32_163 : i32 to vector<8x8xi32>
      %354 = arith.cmpi eq, %27, %353 : vector<8x8xi32>
      %cst_164 = arith.constant 0.000000e+00 : f32
      %355 = vector.broadcast %cst_164 : f32 to vector<8x8xf32>
      %356 = arith.select %354, %352, %355 : vector<8x8xi1>, vector<8x8xf32>
      %357 = arith.addf %348, %356 : vector<8x8xf32>
      %358 = vector.extract_strided_slice %32 {offsets = [8, 0], sizes = [1, 8], strides = [1, 1]} : vector<9x8xbf16> to vector<1x8xbf16>
      %359 = vector.broadcast %358 : vector<1x8xbf16> to vector<8x8xbf16>
      %360 = arith.mulf %282, %359 : vector<8x8xbf16>
      %cst_165 = arith.constant dense<0.000000e+00> : vector<8x8xf32>
      %361 = tpu.matmul %360, %284, %cst_165 {dimension_numbers = #tpu.dot_dimension_numbers<[1], [0], [0], [1], [0, 0, 1, 1], [], []>} : vector<8x8xbf16>, vector<8x8xbf16>, vector<8x8xf32> -> vector<8x8xf32>
      %c8_i32_166 = arith.constant 8 : i32
      %362 = vector.broadcast %c8_i32_166 : i32 to vector<8x8xi32>
      %363 = arith.cmpi eq, %27, %362 : vector<8x8xi32>
      %cst_167 = arith.constant 0.000000e+00 : f32
      %364 = vector.broadcast %cst_167 : f32 to vector<8x8xf32>
      %365 = arith.select %363, %361, %364 : vector<8x8xi1>, vector<8x8xf32>
      %366 = arith.addf %357, %365 : vector<8x8xf32>
      %cst_168 = arith.constant 0.353553385 : f32
      %367 = vector.broadcast %cst_168 : f32 to vector<8x8xf32>
      %368 = arith.mulf %366, %367 : vector<8x8xf32>
      %cst_169 = arith.constant -1.000000e+10 : f32
      %369 = vector.broadcast %cst_169 : f32 to vector<8x8xf32>
      %370 = arith.select %31, %368, %369 : vector<8x8xi1>, vector<8x8xf32>
      %c2_170 = arith.constant 2 : index
      %c0_171 = arith.constant 0 : index
      %c0_172 = arith.constant 0 : index
      %371 = vector.load %arg9[%c2_170, %c0_171, %c0_172] : memref<4x8x1xf32, #tpu.memory_space<vmem>>, vector<1x8x1xf32>
      %372 = vector.shape_cast %371 : vector<1x8x1xf32> to vector<8x1xf32>
      %cst_173 = arith.constant dense<0xFF800000> : vector<8xf32>
      %373 = vector.multi_reduction <maximumf>, %370, %cst_173 [1] : vector<8x8xf32> to vector<8xf32>
      %374 = vector.shape_cast %373 : vector<8xf32> to vector<8x1xf32>
      %375 = arith.maximumf %372, %374 : vector<8x1xf32>
      %376 = arith.subf %372, %375 : vector<8x1xf32>
      %377 = math.exp %376 : vector<8x1xf32>
      %378 = vector.broadcast %375 : vector<8x1xf32> to vector<8x8xf32>
      %379 = arith.subf %370, %378 : vector<8x8xf32>
      %380 = math.exp %379 : vector<8x8xf32>
      %c2_174 = arith.constant 2 : index
      %c0_175 = arith.constant 0 : index
      %c0_176 = arith.constant 0 : index
      %381 = vector.load %arg10[%c2_174, %c0_175, %c0_176] : memref<4x8x1xf32, #tpu.memory_space<vmem>>, vector<1x8x1xf32>
      %382 = vector.shape_cast %381 : vector<1x8x1xf32> to vector<8x1xf32>
      %383 = arith.mulf %377, %382 : vector<8x1xf32>
      %cst_177 = arith.constant dense<0.000000e+00> : vector<8xf32>
      %384 = vector.multi_reduction <add>, %380, %cst_177 [1] : vector<8x8xf32> to vector<8xf32>
      %385 = vector.shape_cast %384 : vector<8xf32> to vector<8x1xf32>
      %386 = arith.addf %383, %385 : vector<8x1xf32>
      %c2_178 = arith.constant 2 : index
      %c0_179 = arith.constant 0 : index
      %c0_180 = arith.constant 0 : index
      %387 = vector.load %arg10[%c2_178, %c0_179, %c0_180] : memref<4x8x1xf32, #tpu.memory_space<vmem>>, vector<1x8x1xf32>
      %388 = vector.shape_cast %387 : vector<1x8x1xf32> to vector<8x1xf32>
      %389 = vector.shape_cast %386 : vector<8x1xf32> to vector<1x8x1xf32>
      tpu.vector_store %arg10[%c2_178, %c0_179, %c0_180], %389 {strides = array<i32>} : memref<4x8x1xf32, #tpu.memory_space<vmem>>, vector<1x8x1xf32>,
      %390 = arith.truncf %380 : vector<8x8xf32> to vector<8x8xbf16>
      %c0_181 = arith.constant 0 : index
      %c2_182 = arith.constant 2 : index
      %c0_183 = arith.constant 0 : index
      %c0_184 = arith.constant 0 : index
      %391 = vector.load %arg6[%c0_181, %c2_182, %c0_183, %c0_184] : memref<1x4x8x8xbf16, #tpu.memory_space<vmem>>, vector<1x1x8x8xbf16>
      %392 = vector.shape_cast %391 : vector<1x1x8x8xbf16> to vector<8x8xbf16>
      %cst_185 = arith.constant dense<0.000000e+00> : vector<8x8xf32>
      %393 = tpu.matmul %390, %392, %cst_185 {dimension_numbers = #tpu.dot_dimension_numbers<[1], [0], [0], [1], [0, 0, 1, 1], [], []>} : vector<8x8xbf16>, vector<8x8xbf16>, vector<8x8xf32> -> vector<8x8xf32>
      %c2_186 = arith.constant 2 : index
      %c0_187 = arith.constant 0 : index
      %c0_188 = arith.constant 0 : index
      %394 = vector.load %arg11[%c2_186, %c0_187, %c0_188] : memref<4x8x8xf32, #tpu.memory_space<vmem>>, vector<1x8x8xf32>
      %395 = vector.shape_cast %394 : vector<1x8x8xf32> to vector<8x8xf32>
      %396 = vector.broadcast %377 : vector<8x1xf32> to vector<8x8xf32>
      %397 = arith.mulf %396, %395 : vector<8x8xf32>
      %398 = arith.addf %397, %393 : vector<8x8xf32>
      %c2_189 = arith.constant 2 : index
      %c0_190 = arith.constant 0 : index
      %c0_191 = arith.constant 0 : index
      %399 = vector.load %arg11[%c2_189, %c0_190, %c0_191] : memref<4x8x8xf32, #tpu.memory_space<vmem>>, vector<1x8x8xf32>
      %400 = vector.shape_cast %399 : vector<1x8x8xf32> to vector<8x8xf32>
      %401 = vector.shape_cast %398 : vector<8x8xf32> to vector<1x8x8xf32>
      tpu.vector_store %arg11[%c2_189, %c0_190, %c0_191], %401 {strides = array<i32>} : memref<4x8x8xf32, #tpu.memory_space<vmem>>, vector<1x8x8xf32>,
      %c2_192 = arith.constant 2 : index
      %c0_193 = arith.constant 0 : index
      %c0_194 = arith.constant 0 : index
      %402 = vector.load %arg9[%c2_192, %c0_193, %c0_194] : memref<4x8x1xf32, #tpu.memory_space<vmem>>, vector<1x8x1xf32>
      %403 = vector.shape_cast %402 : vector<1x8x1xf32> to vector<8x1xf32>
      %404 = vector.shape_cast %375 : vector<8x1xf32> to vector<1x8x1xf32>
      tpu.vector_store %arg9[%c2_192, %c0_193, %c0_194], %404 {strides = array<i32>} : memref<4x8x1xf32, #tpu.memory_space<vmem>>, vector<1x8x1xf32>,
      %c0_195 = arith.constant 0 : index
      %c3 = arith.constant 3 : index
      %c0_196 = arith.constant 0 : index
      %c0_197 = arith.constant 0 : index
      %405 = vector.load %arg4[%c0_195, %c3, %c0_196, %c0_197] : memref<1x4x8x8xbf16, #tpu.memory_space<vmem>>, vector<1x1x8x8xbf16>
      %406 = vector.shape_cast %405 : vector<1x1x8x8xbf16> to vector<8x8xbf16>
      %c0_198 = arith.constant 0 : index
      %c3_199 = arith.constant 3 : index
      %c0_200 = arith.constant 0 : index
      %c0_201 = arith.constant 0 : index
      %407 = vector.load %arg5[%c0_198, %c3_199, %c0_200, %c0_201] : memref<1x4x8x8xbf16, #tpu.memory_space<vmem>>, vector<1x1x8x8xbf16>
      %408 = vector.shape_cast %407 : vector<1x1x8x8xbf16> to vector<8x8xbf16>
      %cst_202 = arith.constant 0.000000e+00 : f32
      %409 = vector.broadcast %cst_202 : f32 to vector<8x8xf32>
      %410 = vector.extract_strided_slice %32 {offsets = [0, 0], sizes = [1, 8], strides = [1, 1]} : vector<9x8xbf16> to vector<1x8xbf16>
      %411 = vector.broadcast %410 : vector<1x8xbf16> to vector<8x8xbf16>
      %412 = arith.mulf %406, %411 : vector<8x8xbf16>
      %cst_203 = arith.constant dense<0.000000e+00> : vector<8x8xf32>
      %413 = tpu.matmul %412, %408, %cst_203 {dimension_numbers = #tpu.dot_dimension_numbers<[1], [0], [0], [1], [0, 0, 1, 1], [], []>} : vector<8x8xbf16>, vector<8x8xbf16>, vector<8x8xf32> -> vector<8x8xf32>
      %c0_i32_204 = arith.constant 0 : i32
      %414 = vector.broadcast %c0_i32_204 : i32 to vector<8x8xi32>
      %415 = arith.cmpi eq, %27, %414 : vector<8x8xi32>
      %cst_205 = arith.constant 0.000000e+00 : f32
      %416 = vector.broadcast %cst_205 : f32 to vector<8x8xf32>
      %417 = arith.select %415, %413, %416 : vector<8x8xi1>, vector<8x8xf32>
      %418 = arith.addf %409, %417 : vector<8x8xf32>
      %419 = vector.extract_strided_slice %32 {offsets = [1, 0], sizes = [1, 8], strides = [1, 1]} : vector<9x8xbf16> to vector<1x8xbf16>
      %420 = vector.broadcast %419 : vector<1x8xbf16> to vector<8x8xbf16>
      %421 = arith.mulf %406, %420 : vector<8x8xbf16>
      %cst_206 = arith.constant dense<0.000000e+00> : vector<8x8xf32>
      %422 = tpu.matmul %421, %408, %cst_206 {dimension_numbers = #tpu.dot_dimension_numbers<[1], [0], [0], [1], [0, 0, 1, 1], [], []>} : vector<8x8xbf16>, vector<8x8xbf16>, vector<8x8xf32> -> vector<8x8xf32>
      %c1_i32_207 = arith.constant 1 : i32
      %423 = vector.broadcast %c1_i32_207 : i32 to vector<8x8xi32>
      %424 = arith.cmpi eq, %27, %423 : vector<8x8xi32>
      %cst_208 = arith.constant 0.000000e+00 : f32
      %425 = vector.broadcast %cst_208 : f32 to vector<8x8xf32>
      %426 = arith.select %424, %422, %425 : vector<8x8xi1>, vector<8x8xf32>
      %427 = arith.addf %418, %426 : vector<8x8xf32>
      %428 = vector.extract_strided_slice %32 {offsets = [2, 0], sizes = [1, 8], strides = [1, 1]} : vector<9x8xbf16> to vector<1x8xbf16>
      %429 = vector.broadcast %428 : vector<1x8xbf16> to vector<8x8xbf16>
      %430 = arith.mulf %406, %429 : vector<8x8xbf16>
      %cst_209 = arith.constant dense<0.000000e+00> : vector<8x8xf32>
      %431 = tpu.matmul %430, %408, %cst_209 {dimension_numbers = #tpu.dot_dimension_numbers<[1], [0], [0], [1], [0, 0, 1, 1], [], []>} : vector<8x8xbf16>, vector<8x8xbf16>, vector<8x8xf32> -> vector<8x8xf32>
      %c2_i32_210 = arith.constant 2 : i32
      %432 = vector.broadcast %c2_i32_210 : i32 to vector<8x8xi32>
      %433 = arith.cmpi eq, %27, %432 : vector<8x8xi32>
      %cst_211 = arith.constant 0.000000e+00 : f32
      %434 = vector.broadcast %cst_211 : f32 to vector<8x8xf32>
      %435 = arith.select %433, %431, %434 : vector<8x8xi1>, vector<8x8xf32>
      %436 = arith.addf %427, %435 : vector<8x8xf32>
      %437 = vector.extract_strided_slice %32 {offsets = [3, 0], sizes = [1, 8], strides = [1, 1]} : vector<9x8xbf16> to vector<1x8xbf16>
      %438 = vector.broadcast %437 : vector<1x8xbf16> to vector<8x8xbf16>
      %439 = arith.mulf %406, %438 : vector<8x8xbf16>
      %cst_212 = arith.constant dense<0.000000e+00> : vector<8x8xf32>
      %440 = tpu.matmul %439, %408, %cst_212 {dimension_numbers = #tpu.dot_dimension_numbers<[1], [0], [0], [1], [0, 0, 1, 1], [], []>} : vector<8x8xbf16>, vector<8x8xbf16>, vector<8x8xf32> -> vector<8x8xf32>
      %c3_i32_213 = arith.constant 3 : i32
      %441 = vector.broadcast %c3_i32_213 : i32 to vector<8x8xi32>
      %442 = arith.cmpi eq, %27, %441 : vector<8x8xi32>
      %cst_214 = arith.constant 0.000000e+00 : f32
      %443 = vector.broadcast %cst_214 : f32 to vector<8x8xf32>
      %444 = arith.select %442, %440, %443 : vector<8x8xi1>, vector<8x8xf32>
      %445 = arith.addf %436, %444 : vector<8x8xf32>
      %446 = vector.extract_strided_slice %32 {offsets = [4, 0], sizes = [1, 8], strides = [1, 1]} : vector<9x8xbf16> to vector<1x8xbf16>
      %447 = vector.broadcast %446 : vector<1x8xbf16> to vector<8x8xbf16>
      %448 = arith.mulf %406, %447 : vector<8x8xbf16>
      %cst_215 = arith.constant dense<0.000000e+00> : vector<8x8xf32>
      %449 = tpu.matmul %448, %408, %cst_215 {dimension_numbers = #tpu.dot_dimension_numbers<[1], [0], [0], [1], [0, 0, 1, 1], [], []>} : vector<8x8xbf16>, vector<8x8xbf16>, vector<8x8xf32> -> vector<8x8xf32>
      %c4_i32_216 = arith.constant 4 : i32
      %450 = vector.broadcast %c4_i32_216 : i32 to vector<8x8xi32>
      %451 = arith.cmpi eq, %27, %450 : vector<8x8xi32>
      %cst_217 = arith.constant 0.000000e+00 : f32
      %452 = vector.broadcast %cst_217 : f32 to vector<8x8xf32>
      %453 = arith.select %451, %449, %452 : vector<8x8xi1>, vector<8x8xf32>
      %454 = arith.addf %445, %453 : vector<8x8xf32>
      %455 = vector.extract_strided_slice %32 {offsets = [5, 0], sizes = [1, 8], strides = [1, 1]} : vector<9x8xbf16> to vector<1x8xbf16>
      %456 = vector.broadcast %455 : vector<1x8xbf16> to vector<8x8xbf16>
      %457 = arith.mulf %406, %456 : vector<8x8xbf16>
      %cst_218 = arith.constant dense<0.000000e+00> : vector<8x8xf32>
      %458 = tpu.matmul %457, %408, %cst_218 {dimension_numbers = #tpu.dot_dimension_numbers<[1], [0], [0], [1], [0, 0, 1, 1], [], []>} : vector<8x8xbf16>, vector<8x8xbf16>, vector<8x8xf32> -> vector<8x8xf32>
      %c5_i32_219 = arith.constant 5 : i32
      %459 = vector.broadcast %c5_i32_219 : i32 to vector<8x8xi32>
      %460 = arith.cmpi eq, %27, %459 : vector<8x8xi32>
      %cst_220 = arith.constant 0.000000e+00 : f32
      %461 = vector.broadcast %cst_220 : f32 to vector<8x8xf32>
      %462 = arith.select %460, %458, %461 : vector<8x8xi1>, vector<8x8xf32>
      %463 = arith.addf %454, %462 : vector<8x8xf32>
      %464 = vector.extract_strided_slice %32 {offsets = [6, 0], sizes = [1, 8], strides = [1, 1]} : vector<9x8xbf16> to vector<1x8xbf16>
      %465 = vector.broadcast %464 : vector<1x8xbf16> to vector<8x8xbf16>
      %466 = arith.mulf %406, %465 : vector<8x8xbf16>
      %cst_221 = arith.constant dense<0.000000e+00> : vector<8x8xf32>
      %467 = tpu.matmul %466, %408, %cst_221 {dimension_numbers = #tpu.dot_dimension_numbers<[1], [0], [0], [1], [0, 0, 1, 1], [], []>} : vector<8x8xbf16>, vector<8x8xbf16>, vector<8x8xf32> -> vector<8x8xf32>
      %c6_i32_222 = arith.constant 6 : i32
      %468 = vector.broadcast %c6_i32_222 : i32 to vector<8x8xi32>
      %469 = arith.cmpi eq, %27, %468 : vector<8x8xi32>
      %cst_223 = arith.constant 0.000000e+00 : f32
      %470 = vector.broadcast %cst_223 : f32 to vector<8x8xf32>
      %471 = arith.select %469, %467, %470 : vector<8x8xi1>, vector<8x8xf32>
      %472 = arith.addf %463, %471 : vector<8x8xf32>
      %473 = vector.extract_strided_slice %32 {offsets = [7, 0], sizes = [1, 8], strides = [1, 1]} : vector<9x8xbf16> to vector<1x8xbf16>
      %474 = vector.broadcast %473 : vector<1x8xbf16> to vector<8x8xbf16>
      %475 = arith.mulf %406, %474 : vector<8x8xbf16>
      %cst_224 = arith.constant dense<0.000000e+00> : vector<8x8xf32>
      %476 = tpu.matmul %475, %408, %cst_224 {dimension_numbers = #tpu.dot_dimension_numbers<[1], [0], [0], [1], [0, 0, 1, 1], [], []>} : vector<8x8xbf16>, vector<8x8xbf16>, vector<8x8xf32> -> vector<8x8xf32>
      %c7_i32_225 = arith.constant 7 : i32
      %477 = vector.broadcast %c7_i32_225 : i32 to vector<8x8xi32>
      %478 = arith.cmpi eq, %27, %477 : vector<8x8xi32>
      %cst_226 = arith.constant 0.000000e+00 : f32
      %479 = vector.broadcast %cst_226 : f32 to vector<8x8xf32>
      %480 = arith.select %478, %476, %479 : vector<8x8xi1>, vector<8x8xf32>
      %481 = arith.addf %472, %480 : vector<8x8xf32>
      %482 = vector.extract_strided_slice %32 {offsets = [8, 0], sizes = [1, 8], strides = [1, 1]} : vector<9x8xbf16> to vector<1x8xbf16>
      %483 = vector.broadcast %482 : vector<1x8xbf16> to vector<8x8xbf16>
      %484 = arith.mulf %406, %483 : vector<8x8xbf16>
      %cst_227 = arith.constant dense<0.000000e+00> : vector<8x8xf32>
      %485 = tpu.matmul %484, %408, %cst_227 {dimension_numbers = #tpu.dot_dimension_numbers<[1], [0], [0], [1], [0, 0, 1, 1], [], []>} : vector<8x8xbf16>, vector<8x8xbf16>, vector<8x8xf32> -> vector<8x8xf32>
      %c8_i32_228 = arith.constant 8 : i32
      %486 = vector.broadcast %c8_i32_228 : i32 to vector<8x8xi32>
      %487 = arith.cmpi eq, %27, %486 : vector<8x8xi32>
      %cst_229 = arith.constant 0.000000e+00 : f32
      %488 = vector.broadcast %cst_229 : f32 to vector<8x8xf32>
      %489 = arith.select %487, %485, %488 : vector<8x8xi1>, vector<8x8xf32>
      %490 = arith.addf %481, %489 : vector<8x8xf32>
      %cst_230 = arith.constant 0.353553385 : f32
      %491 = vector.broadcast %cst_230 : f32 to vector<8x8xf32>
      %492 = arith.mulf %490, %491 : vector<8x8xf32>
      %cst_231 = arith.constant -1.000000e+10 : f32
      %493 = vector.broadcast %cst_231 : f32 to vector<8x8xf32>
      %494 = arith.select %31, %492, %493 : vector<8x8xi1>, vector<8x8xf32>
      %c3_232 = arith.constant 3 : index
      %c0_233 = arith.constant 0 : index
      %c0_234 = arith.constant 0 : index
      %495 = vector.load %arg9[%c3_232, %c0_233, %c0_234] : memref<4x8x1xf32, #tpu.memory_space<vmem>>, vector<1x8x1xf32>
      %496 = vector.shape_cast %495 : vector<1x8x1xf32> to vector<8x1xf32>
      %cst_235 = arith.constant dense<0xFF800000> : vector<8xf32>
      %497 = vector.multi_reduction <maximumf>, %494, %cst_235 [1] : vector<8x8xf32> to vector<8xf32>
      %498 = vector.shape_cast %497 : vector<8xf32> to vector<8x1xf32>
      %499 = arith.maximumf %496, %498 : vector<8x1xf32>
      %500 = arith.subf %496, %499 : vector<8x1xf32>
      %501 = math.exp %500 : vector<8x1xf32>
      %502 = vector.broadcast %499 : vector<8x1xf32> to vector<8x8xf32>
      %503 = arith.subf %494, %502 : vector<8x8xf32>
      %504 = math.exp %503 : vector<8x8xf32>
      %c3_236 = arith.constant 3 : index
      %c0_237 = arith.constant 0 : index
      %c0_238 = arith.constant 0 : index
      %505 = vector.load %arg10[%c3_236, %c0_237, %c0_238] : memref<4x8x1xf32, #tpu.memory_space<vmem>>, vector<1x8x1xf32>
      %506 = vector.shape_cast %505 : vector<1x8x1xf32> to vector<8x1xf32>
      %507 = arith.mulf %501, %506 : vector<8x1xf32>
      %cst_239 = arith.constant dense<0.000000e+00> : vector<8xf32>
      %508 = vector.multi_reduction <add>, %504, %cst_239 [1] : vector<8x8xf32> to vector<8xf32>
      %509 = vector.shape_cast %508 : vector<8xf32> to vector<8x1xf32>
      %510 = arith.addf %507, %509 : vector<8x1xf32>
      %c3_240 = arith.constant 3 : index
      %c0_241 = arith.constant 0 : index
      %c0_242 = arith.constant 0 : index
      %511 = vector.load %arg10[%c3_240, %c0_241, %c0_242] : memref<4x8x1xf32, #tpu.memory_space<vmem>>, vector<1x8x1xf32>
      %512 = vector.shape_cast %511 : vector<1x8x1xf32> to vector<8x1xf32>
      %513 = vector.shape_cast %510 : vector<8x1xf32> to vector<1x8x1xf32>
      tpu.vector_store %arg10[%c3_240, %c0_241, %c0_242], %513 {strides = array<i32>} : memref<4x8x1xf32, #tpu.memory_space<vmem>>, vector<1x8x1xf32>,
      %514 = arith.truncf %504 : vector<8x8xf32> to vector<8x8xbf16>
      %c0_243 = arith.constant 0 : index
      %c3_244 = arith.constant 3 : index
      %c0_245 = arith.constant 0 : index
      %c0_246 = arith.constant 0 : index
      %515 = vector.load %arg6[%c0_243, %c3_244, %c0_245, %c0_246] : memref<1x4x8x8xbf16, #tpu.memory_space<vmem>>, vector<1x1x8x8xbf16>
      %516 = vector.shape_cast %515 : vector<1x1x8x8xbf16> to vector<8x8xbf16>
      %cst_247 = arith.constant dense<0.000000e+00> : vector<8x8xf32>
      %517 = tpu.matmul %514, %516, %cst_247 {dimension_numbers = #tpu.dot_dimension_numbers<[1], [0], [0], [1], [0, 0, 1, 1], [], []>} : vector<8x8xbf16>, vector<8x8xbf16>, vector<8x8xf32> -> vector<8x8xf32>
      %c3_248 = arith.constant 3 : index
      %c0_249 = arith.constant 0 : index
      %c0_250 = arith.constant 0 : index
      %518 = vector.load %arg11[%c3_248, %c0_249, %c0_250] : memref<4x8x8xf32, #tpu.memory_space<vmem>>, vector<1x8x8xf32>
      %519 = vector.shape_cast %518 : vector<1x8x8xf32> to vector<8x8xf32>
      %520 = vector.broadcast %501 : vector<8x1xf32> to vector<8x8xf32>
      %521 = arith.mulf %520, %519 : vector<8x8xf32>
      %522 = arith.addf %521, %517 : vector<8x8xf32>
      %c3_251 = arith.constant 3 : index
      %c0_252 = arith.constant 0 : index
      %c0_253 = arith.constant 0 : index
      %523 = vector.load %arg11[%c3_251, %c0_252, %c0_253] : memref<4x8x8xf32, #tpu.memory_space<vmem>>, vector<1x8x8xf32>
      %524 = vector.shape_cast %523 : vector<1x8x8xf32> to vector<8x8xf32>
      %525 = vector.shape_cast %522 : vector<8x8xf32> to vector<1x8x8xf32>
      tpu.vector_store %arg11[%c3_251, %c0_252, %c0_253], %525 {strides = array<i32>} : memref<4x8x8xf32, #tpu.memory_space<vmem>>, vector<1x8x8xf32>,
      %c3_254 = arith.constant 3 : index
      %c0_255 = arith.constant 0 : index
      %c0_256 = arith.constant 0 : index
      %526 = vector.load %arg9[%c3_254, %c0_255, %c0_256] : memref<4x8x1xf32, #tpu.memory_space<vmem>>, vector<1x8x1xf32>
      %527 = vector.shape_cast %526 : vector<1x8x1xf32> to vector<8x1xf32>
      %528 = vector.shape_cast %499 : vector<8x1xf32> to vector<1x8x1xf32>
      tpu.vector_store %arg9[%c3_254, %c0_255, %c0_256], %528 {strides = array<i32>} : memref<4x8x1xf32, #tpu.memory_space<vmem>>, vector<1x8x1xf32>,
    } else {
    }
    %c0_i32_4 = arith.constant 0 : i32
    %10 = arith.cmpi eq, %arg2, %c0_i32_4 : i32
    %11 = arith.extui %10 : i1 to i32
    %c0_i32_5 = arith.constant 0 : i32
    %12 = arith.cmpi ne, %11, %c0_i32_5 : i32
    scf.if %12 {
      %c0 = arith.constant 0 : index
      %c0_6 = arith.constant 0 : index
      %c0_7 = arith.constant 0 : index
      %13 = vector.load %arg10[%c0, %c0_6, %c0_7] : memref<4x8x1xf32, #tpu.memory_space<vmem>>, vector<1x8x1xf32>
      %14 = vector.shape_cast %13 : vector<1x8x1xf32> to vector<8x1xf32>
      %15 = tpu.reciprocal %14 {approx = true} : vector<8x1xf32> -> vector<8x1xf32>
      %c0_8 = arith.constant 0 : index
      %c0_9 = arith.constant 0 : index
      %c0_10 = arith.constant 0 : index
      %16 = vector.load %arg11[%c0_8, %c0_9, %c0_10] : memref<4x8x8xf32, #tpu.memory_space<vmem>>, vector<1x8x8xf32>
      %17 = vector.shape_cast %16 : vector<1x8x8xf32> to vector<8x8xf32>
      %18 = vector.broadcast %15 : vector<8x1xf32> to vector<8x8xf32>
      %19 = arith.mulf %17, %18 : vector<8x8xf32>
      %20 = arith.truncf %19 : vector<8x8xf32> to vector<8x8xbf16>
      %c1 = arith.constant 1 : index
      %c0_11 = arith.constant 0 : index
      %c0_12 = arith.constant 0 : index
      %21 = vector.load %arg10[%c1, %c0_11, %c0_12] : memref<4x8x1xf32, #tpu.memory_space<vmem>>, vector<1x8x1xf32>
      %22 = vector.shape_cast %21 : vector<1x8x1xf32> to vector<8x1xf32>
      %23 = tpu.reciprocal %22 {approx = true} : vector<8x1xf32> -> vector<8x1xf32>
      %c1_13 = arith.constant 1 : index
      %c0_14 = arith.constant 0 : index
      %c0_15 = arith.constant 0 : index
      %24 = vector.load %arg11[%c1_13, %c0_14, %c0_15] : memref<4x8x8xf32, #tpu.memory_space<vmem>>, vector<1x8x8xf32>
      %25 = vector.shape_cast %24 : vector<1x8x8xf32> to vector<8x8xf32>
      %26 = vector.broadcast %23 : vector<8x1xf32> to vector<8x8xf32>
      %27 = arith.mulf %25, %26 : vector<8x8xf32>
      %28 = arith.truncf %27 : vector<8x8xf32> to vector<8x8xbf16>
      %c2 = arith.constant 2 : index
      %c0_16 = arith.constant 0 : index
      %c0_17 = arith.constant 0 : index
      %29 = vector.load %arg10[%c2, %c0_16, %c0_17] : memref<4x8x1xf32, #tpu.memory_space<vmem>>, vector<1x8x1xf32>
      %30 = vector.shape_cast %29 : vector<1x8x1xf32> to vector<8x1xf32>
      %31 = tpu.reciprocal %30 {approx = true} : vector<8x1xf32> -> vector<8x1xf32>
      %c2_18 = arith.constant 2 : index
      %c0_19 = arith.constant 0 : index
      %c0_20 = arith.constant 0 : index
      %32 = vector.load %arg11[%c2_18, %c0_19, %c0_20] : memref<4x8x8xf32, #tpu.memory_space<vmem>>, vector<1x8x8xf32>
      %33 = vector.shape_cast %32 : vector<1x8x8xf32> to vector<8x8xf32>
      %34 = vector.broadcast %31 : vector<8x1xf32> to vector<8x8xf32>
      %35 = arith.mulf %33, %34 : vector<8x8xf32>
      %36 = arith.truncf %35 : vector<8x8xf32> to vector<8x8xbf16>
      %c3 = arith.constant 3 : index
      %c0_21 = arith.constant 0 : index
      %c0_22 = arith.constant 0 : index
      %37 = vector.load %arg10[%c3, %c0_21, %c0_22] : memref<4x8x1xf32, #tpu.memory_space<vmem>>, vector<1x8x1xf32>
      %38 = vector.shape_cast %37 : vector<1x8x1xf32> to vector<8x1xf32>
      %39 = tpu.reciprocal %38 {approx = true} : vector<8x1xf32> -> vector<8x1xf32>
      %c3_23 = arith.constant 3 : index
      %c0_24 = arith.constant 0 : index
      %c0_25 = arith.constant 0 : index
      %40 = vector.load %arg11[%c3_23, %c0_24, %c0_25] : memref<4x8x8xf32, #tpu.memory_space<vmem>>, vector<1x8x8xf32>
      %41 = vector.shape_cast %40 : vector<1x8x8xf32> to vector<8x8xf32>
      %42 = vector.broadcast %39 : vector<8x1xf32> to vector<8x8xf32>
      %43 = arith.mulf %41, %42 : vector<8x8xf32>
      %44 = arith.truncf %43 : vector<8x8xf32> to vector<8x8xbf16>
      %45 = tpu.concatenate %20, %28, %36, %44 in 1 : vector<8x8xbf16>, vector<8x8xbf16>, vector<8x8xbf16>, vector<8x8xbf16> -> vector<8x32xbf16>
      %c0_26 = arith.constant 0 : index
      %c0_27 = arith.constant 0 : index
      %c0_28 = arith.constant 0 : index
      %46 = vector.load %arg8[%c0_26, %c0_27, %c0_28] : memref<1x8x32xbf16, #tpu.memory_space<vmem>>, vector<1x8x32xbf16>
      %47 = vector.shape_cast %46 : vector<1x8x32xbf16> to vector<8x32xbf16>
      %48 = vector.shape_cast %45 : vector<8x32xbf16> to vector<1x8x32xbf16>
      tpu.vector_store %arg8[%c0_26, %c0_27, %c0_28], %48 {strides = array<i32>} : memref<1x8x32xbf16, #tpu.memory_space<vmem>>, vector<1x8x32xbf16>,
    } else {
    }
    return
  }
  func.func @transform_0(%arg0: i32, %arg1: i32, %arg2: i32) -> (i32, i32) {
    %c0_i32 = arith.constant 0 : i32
    %c0_i32_0 = arith.constant 0 : i32
    %c0_i32_1 = arith.constant 0 : i32
    return %c0_i32, %c0_i32_0 : i32, i32
  }
  func.func @transform_1(%arg0: i32, %arg1: i32, %arg2: i32) -> (i32, i32, i32, i32) {
    %c0_i32 = arith.constant 0 : i32
    %c0_i32_0 = arith.constant 0 : i32
    %c0_i32_1 = arith.constant 0 : i32
    return %arg0, %c0_i32, %arg1, %c0_i32_0 : i32, i32, i32, i32
  }
  func.func @transform_2(%arg0: i32, %arg1: i32, %arg2: i32) -> (i32, i32, i32, i32) {
    %c0_i32 = arith.constant 0 : i32
    %c0_i32_0 = arith.constant 0 : i32
    %c0_i32_1 = arith.constant 0 : i32
    return %arg0, %c0_i32, %c0_i32_0, %arg2 : i32, i32, i32, i32
  }
  func.func @transform_3(%arg0: i32, %arg1: i32, %arg2: i32) -> (i32, i32, i32, i32) {
    %c0_i32 = arith.constant 0 : i32
    %c0_i32_0 = arith.constant 0 : i32
    %c0_i32_1 = arith.constant 0 : i32
    return %arg0, %c0_i32, %arg2, %c0_i32_0 : i32, i32, i32, i32
  }
  func.func @transform_4(%arg0: i32, %arg1: i32, %arg2: i32) -> (i32, i32, i32) {
    %c0_i32 = arith.constant 0 : i32
    return %arg0, %arg1, %arg2 : i32, i32, i32
  }
  func.func @transform_5(%arg0: i32, %arg1: i32, %arg2: i32) -> (i32, i32, i32) {
    %c0_i32 = arith.constant 0 : i32
    %c0_i32_0 = arith.constant 0 : i32
    return %arg0, %arg1, %c0_i32 : i32, i32, i32
  }
}

module attributes {stable_mosaic.version = 11 : i64} {
  func.func @_mediated_attention_kernel(%arg0: i32, %arg1: i32, %arg2: i32, %arg3: memref<9x8xbf16, #tpu.memory_space<vmem>>, %arg4: memref<1x4x8x8xbf16, #tpu.memory_space<vmem>>, %arg5: memref<1x4x8x8xbf16, #tpu.memory_space<vmem>>, %arg6: memref<1x4x8x8xbf16, #tpu.memory_space<vmem>>, %arg7: memref<1x8x8xi32, #tpu.memory_space<vmem>>, %arg8: memref<1x8x32xbf16, #tpu.memory_space<vmem>>, %arg9: memref<4x8x1xf32, #tpu.memory_space<vmem>>, %arg10: memref<4x8x1xf32, #tpu.memory_space<vmem>>, %arg11: memref<4x8x8xf32, #tpu.memory_space<vmem>>) attributes {dimension_semantics = [#tpu.dimension_semantics<parallel>, #tpu.dimension_semantics<parallel>, #tpu.dimension_semantics<arbitrary>], iteration_bounds = array<i64: 2, 1, 1>, scalar_prefetch = 0 : i64, scratch_operands = 3 : i64, tpu.core_type = #tpu.core_type<tc>, window_params = [{pipeline_mode = #tpu.pipeline_mode<synchronous>, transform_indices = @transform_0, window_bounds = array<i64: 9, 8>}, {transform_indices = @transform_1, window_bounds = array<i64: 1, 4, 8, 8>}, {transform_indices = @transform_2, window_bounds = array<i64: 1, 4, 8, 8>}, {transform_indices = @transform_3, window_bounds = array<i64: 1, 4, 8, 8>}, {transform_indices = @transform_4, window_bounds = array<i64: 1, 8, 8>}, {transform_indices = @transform_5, window_bounds = array<i64: 1, 8, 32>}]} {
    %c0_i32 = arith.constant 0 : i32
    %0 = arith.cmpi eq, %arg2, %c0_i32 : i32
    %1 = arith.extui %0 : i1 to i32
    %c0_i32_0 = arith.constant 0 : i32
    %2 = arith.cmpi ne, %1, %c0_i32_0 : i32
    scf.if %2 {
      %cst_252 = arith.constant 0xFF800000 : f32
      %522 = vector.broadcast %cst_252 : f32 to vector<4x8x1xf32>
      %c0_253 = arith.constant 0 : index
      %c0_254 = arith.constant 0 : index
      %c0_255 = arith.constant 0 : index
      %523 = vector.load %arg9[%c0_253, %c0_254, %c0_255] : memref<4x8x1xf32, #tpu.memory_space<vmem>>, vector<4x8x1xf32>
      tpu.vector_store %arg9[%c0_253, %c0_254, %c0_255], %522 {strides = array<i32>} : memref<4x8x1xf32, #tpu.memory_space<vmem>>, vector<4x8x1xf32>,
      %cst_256 = arith.constant 0.000000e+00 : f32
      %524 = vector.broadcast %cst_256 : f32 to vector<4x8x1xf32>
      %c0_257 = arith.constant 0 : index
      %c0_258 = arith.constant 0 : index
      %c0_259 = arith.constant 0 : index
      %525 = vector.load %arg10[%c0_257, %c0_258, %c0_259] : memref<4x8x1xf32, #tpu.memory_space<vmem>>, vector<4x8x1xf32>
      tpu.vector_store %arg10[%c0_257, %c0_258, %c0_259], %524 {strides = array<i32>} : memref<4x8x1xf32, #tpu.memory_space<vmem>>, vector<4x8x1xf32>,
      %cst_260 = arith.constant 0.000000e+00 : f32
      %526 = vector.broadcast %cst_260 : f32 to vector<4x8x8xf32>
      %c0_261 = arith.constant 0 : index
      %c0_262 = arith.constant 0 : index
      %c0_263 = arith.constant 0 : index
      %527 = vector.load %arg11[%c0_261, %c0_262, %c0_263] : memref<4x8x8xf32, #tpu.memory_space<vmem>>, vector<4x8x8xf32>
      tpu.vector_store %arg11[%c0_261, %c0_262, %c0_263], %526 {strides = array<i32>} : memref<4x8x8xf32, #tpu.memory_space<vmem>>, vector<4x8x8xf32>,
    } else {
    }
    %c8_i32 = arith.constant 8 : i32
    %3 = arith.muli %arg1, %c8_i32 : i32
    %4 = tpu.iota {dimensions = array<i32: 0>} : vector<8x8xi32>
    %5 = vector.broadcast %3 : i32 to vector<8x8xi32>
    %6 = arith.addi %5, %4 : vector<8x8xi32>
    %c8_i32_1 = arith.constant 8 : i32
    %7 = arith.muli %arg2, %c8_i32_1 : i32
    %8 = tpu.iota {dimensions = array<i32: 1>} : vector<8x8xi32>
    %9 = vector.broadcast %7 : i32 to vector<8x8xi32>
    %10 = arith.addi %9, %8 : vector<8x8xi32>
    %11 = arith.subi %6, %10 : vector<8x8xi32>
    %c-4_i32 = arith.constant -4 : i32
    %c4_i32 = arith.constant 4 : i32
    %12 = vector.broadcast %c-4_i32 : i32 to vector<8x8xi32>
    %13 = arith.maxsi %12, %11 : vector<8x8xi32>
    %14 = vector.broadcast %c4_i32 : i32 to vector<8x8xi32>
    %15 = arith.minsi %14, %13 : vector<8x8xi32>
    %c4_i32_2 = arith.constant 4 : i32
    %16 = vector.broadcast %c4_i32_2 : i32 to vector<8x8xi32>
    %17 = arith.addi %15, %16 : vector<8x8xi32>
    %c0 = arith.constant 0 : index
    %c0_3 = arith.constant 0 : index
    %c0_4 = arith.constant 0 : index
    %18 = vector.load %arg7[%c0, %c0_3, %c0_4] : memref<1x8x8xi32, #tpu.memory_space<vmem>>, vector<1x8x8xi32>
    %19 = vector.shape_cast %18 : vector<1x8x8xi32> to vector<8x8xi32>
    %c0_i32_5 = arith.constant 0 : i32
    %20 = vector.broadcast %c0_i32_5 : i32 to vector<8x8xi32>
    %21 = arith.cmpi ne, %19, %20 : vector<8x8xi32>
    %c0_6 = arith.constant 0 : index
    %c0_7 = arith.constant 0 : index
    %22 = vector.load %arg3[%c0_6, %c0_7] : memref<9x8xbf16, #tpu.memory_space<vmem>>, vector<9x8xbf16>
    %c0_8 = arith.constant 0 : index
    %c0_9 = arith.constant 0 : index
    %c0_10 = arith.constant 0 : index
    %c0_11 = arith.constant 0 : index
    %23 = vector.load %arg4[%c0_8, %c0_9, %c0_10, %c0_11] : memref<1x4x8x8xbf16, #tpu.memory_space<vmem>>, vector<1x1x8x8xbf16>
    %24 = vector.shape_cast %23 : vector<1x1x8x8xbf16> to vector<8x8xbf16>
    %c0_12 = arith.constant 0 : index
    %c0_13 = arith.constant 0 : index
    %c0_14 = arith.constant 0 : index
    %c0_15 = arith.constant 0 : index
    %25 = vector.load %arg5[%c0_12, %c0_13, %c0_14, %c0_15] : memref<1x4x8x8xbf16, #tpu.memory_space<vmem>>, vector<1x1x8x8xbf16>
    %26 = vector.shape_cast %25 : vector<1x1x8x8xbf16> to vector<8x8xbf16>
    %cst = arith.constant 0.000000e+00 : f32
    %27 = vector.broadcast %cst : f32 to vector<8x8xf32>
    %28 = vector.extract_strided_slice %22 {offsets = [0, 0], sizes = [1, 8], strides = [1, 1]} : vector<9x8xbf16> to vector<1x8xbf16>
    %29 = vector.broadcast %28 : vector<1x8xbf16> to vector<8x8xbf16>
    %30 = arith.mulf %24, %29 : vector<8x8xbf16>
    %cst_16 = arith.constant dense<0.000000e+00> : vector<8x8xf32>
    %31 = tpu.matmul %30, %26, %cst_16 {dimension_numbers = #tpu.dot_dimension_numbers<[1], [0], [0], [1], [0, 0, 1, 1], [], []>} : vector<8x8xbf16>, vector<8x8xbf16>, vector<8x8xf32> -> vector<8x8xf32>
    %c0_i32_17 = arith.constant 0 : i32
    %32 = vector.broadcast %c0_i32_17 : i32 to vector<8x8xi32>
    %33 = arith.cmpi eq, %17, %32 : vector<8x8xi32>
    %cst_18 = arith.constant 0.000000e+00 : f32
    %34 = vector.broadcast %cst_18 : f32 to vector<8x8xf32>
    %35 = arith.select %33, %31, %34 : vector<8x8xi1>, vector<8x8xf32>
    %36 = arith.addf %27, %35 : vector<8x8xf32>
    %37 = vector.extract_strided_slice %22 {offsets = [1, 0], sizes = [1, 8], strides = [1, 1]} : vector<9x8xbf16> to vector<1x8xbf16>
    %38 = vector.broadcast %37 : vector<1x8xbf16> to vector<8x8xbf16>
    %39 = arith.mulf %24, %38 : vector<8x8xbf16>
    %cst_19 = arith.constant dense<0.000000e+00> : vector<8x8xf32>
    %40 = tpu.matmul %39, %26, %cst_19 {dimension_numbers = #tpu.dot_dimension_numbers<[1], [0], [0], [1], [0, 0, 1, 1], [], []>} : vector<8x8xbf16>, vector<8x8xbf16>, vector<8x8xf32> -> vector<8x8xf32>
    %c1_i32 = arith.constant 1 : i32
    %41 = vector.broadcast %c1_i32 : i32 to vector<8x8xi32>
    %42 = arith.cmpi eq, %17, %41 : vector<8x8xi32>
    %cst_20 = arith.constant 0.000000e+00 : f32
    %43 = vector.broadcast %cst_20 : f32 to vector<8x8xf32>
    %44 = arith.select %42, %40, %43 : vector<8x8xi1>, vector<8x8xf32>
    %45 = arith.addf %36, %44 : vector<8x8xf32>
    %46 = vector.extract_strided_slice %22 {offsets = [2, 0], sizes = [1, 8], strides = [1, 1]} : vector<9x8xbf16> to vector<1x8xbf16>
    %47 = vector.broadcast %46 : vector<1x8xbf16> to vector<8x8xbf16>
    %48 = arith.mulf %24, %47 : vector<8x8xbf16>
    %cst_21 = arith.constant dense<0.000000e+00> : vector<8x8xf32>
    %49 = tpu.matmul %48, %26, %cst_21 {dimension_numbers = #tpu.dot_dimension_numbers<[1], [0], [0], [1], [0, 0, 1, 1], [], []>} : vector<8x8xbf16>, vector<8x8xbf16>, vector<8x8xf32> -> vector<8x8xf32>
    %c2_i32 = arith.constant 2 : i32
    %50 = vector.broadcast %c2_i32 : i32 to vector<8x8xi32>
    %51 = arith.cmpi eq, %17, %50 : vector<8x8xi32>
    %cst_22 = arith.constant 0.000000e+00 : f32
    %52 = vector.broadcast %cst_22 : f32 to vector<8x8xf32>
    %53 = arith.select %51, %49, %52 : vector<8x8xi1>, vector<8x8xf32>
    %54 = arith.addf %45, %53 : vector<8x8xf32>
    %55 = vector.extract_strided_slice %22 {offsets = [3, 0], sizes = [1, 8], strides = [1, 1]} : vector<9x8xbf16> to vector<1x8xbf16>
    %56 = vector.broadcast %55 : vector<1x8xbf16> to vector<8x8xbf16>
    %57 = arith.mulf %24, %56 : vector<8x8xbf16>
    %cst_23 = arith.constant dense<0.000000e+00> : vector<8x8xf32>
    %58 = tpu.matmul %57, %26, %cst_23 {dimension_numbers = #tpu.dot_dimension_numbers<[1], [0], [0], [1], [0, 0, 1, 1], [], []>} : vector<8x8xbf16>, vector<8x8xbf16>, vector<8x8xf32> -> vector<8x8xf32>
    %c3_i32 = arith.constant 3 : i32
    %59 = vector.broadcast %c3_i32 : i32 to vector<8x8xi32>
    %60 = arith.cmpi eq, %17, %59 : vector<8x8xi32>
    %cst_24 = arith.constant 0.000000e+00 : f32
    %61 = vector.broadcast %cst_24 : f32 to vector<8x8xf32>
    %62 = arith.select %60, %58, %61 : vector<8x8xi1>, vector<8x8xf32>
    %63 = arith.addf %54, %62 : vector<8x8xf32>
    %64 = vector.extract_strided_slice %22 {offsets = [4, 0], sizes = [1, 8], strides = [1, 1]} : vector<9x8xbf16> to vector<1x8xbf16>
    %65 = vector.broadcast %64 : vector<1x8xbf16> to vector<8x8xbf16>
    %66 = arith.mulf %24, %65 : vector<8x8xbf16>
    %cst_25 = arith.constant dense<0.000000e+00> : vector<8x8xf32>
    %67 = tpu.matmul %66, %26, %cst_25 {dimension_numbers = #tpu.dot_dimension_numbers<[1], [0], [0], [1], [0, 0, 1, 1], [], []>} : vector<8x8xbf16>, vector<8x8xbf16>, vector<8x8xf32> -> vector<8x8xf32>
    %c4_i32_26 = arith.constant 4 : i32
    %68 = vector.broadcast %c4_i32_26 : i32 to vector<8x8xi32>
    %69 = arith.cmpi eq, %17, %68 : vector<8x8xi32>
    %cst_27 = arith.constant 0.000000e+00 : f32
    %70 = vector.broadcast %cst_27 : f32 to vector<8x8xf32>
    %71 = arith.select %69, %67, %70 : vector<8x8xi1>, vector<8x8xf32>
    %72 = arith.addf %63, %71 : vector<8x8xf32>
    %73 = vector.extract_strided_slice %22 {offsets = [5, 0], sizes = [1, 8], strides = [1, 1]} : vector<9x8xbf16> to vector<1x8xbf16>
    %74 = vector.broadcast %73 : vector<1x8xbf16> to vector<8x8xbf16>
    %75 = arith.mulf %24, %74 : vector<8x8xbf16>
    %cst_28 = arith.constant dense<0.000000e+00> : vector<8x8xf32>
    %76 = tpu.matmul %75, %26, %cst_28 {dimension_numbers = #tpu.dot_dimension_numbers<[1], [0], [0], [1], [0, 0, 1, 1], [], []>} : vector<8x8xbf16>, vector<8x8xbf16>, vector<8x8xf32> -> vector<8x8xf32>
    %c5_i32 = arith.constant 5 : i32
    %77 = vector.broadcast %c5_i32 : i32 to vector<8x8xi32>
    %78 = arith.cmpi eq, %17, %77 : vector<8x8xi32>
    %cst_29 = arith.constant 0.000000e+00 : f32
    %79 = vector.broadcast %cst_29 : f32 to vector<8x8xf32>
    %80 = arith.select %78, %76, %79 : vector<8x8xi1>, vector<8x8xf32>
    %81 = arith.addf %72, %80 : vector<8x8xf32>
    %82 = vector.extract_strided_slice %22 {offsets = [6, 0], sizes = [1, 8], strides = [1, 1]} : vector<9x8xbf16> to vector<1x8xbf16>
    %83 = vector.broadcast %82 : vector<1x8xbf16> to vector<8x8xbf16>
    %84 = arith.mulf %24, %83 : vector<8x8xbf16>
    %cst_30 = arith.constant dense<0.000000e+00> : vector<8x8xf32>
    %85 = tpu.matmul %84, %26, %cst_30 {dimension_numbers = #tpu.dot_dimension_numbers<[1], [0], [0], [1], [0, 0, 1, 1], [], []>} : vector<8x8xbf16>, vector<8x8xbf16>, vector<8x8xf32> -> vector<8x8xf32>
    %c6_i32 = arith.constant 6 : i32
    %86 = vector.broadcast %c6_i32 : i32 to vector<8x8xi32>
    %87 = arith.cmpi eq, %17, %86 : vector<8x8xi32>
    %cst_31 = arith.constant 0.000000e+00 : f32
    %88 = vector.broadcast %cst_31 : f32 to vector<8x8xf32>
    %89 = arith.select %87, %85, %88 : vector<8x8xi1>, vector<8x8xf32>
    %90 = arith.addf %81, %89 : vector<8x8xf32>
    %91 = vector.extract_strided_slice %22 {offsets = [7, 0], sizes = [1, 8], strides = [1, 1]} : vector<9x8xbf16> to vector<1x8xbf16>
    %92 = vector.broadcast %91 : vector<1x8xbf16> to vector<8x8xbf16>
    %93 = arith.mulf %24, %92 : vector<8x8xbf16>
    %cst_32 = arith.constant dense<0.000000e+00> : vector<8x8xf32>
    %94 = tpu.matmul %93, %26, %cst_32 {dimension_numbers = #tpu.dot_dimension_numbers<[1], [0], [0], [1], [0, 0, 1, 1], [], []>} : vector<8x8xbf16>, vector<8x8xbf16>, vector<8x8xf32> -> vector<8x8xf32>
    %c7_i32 = arith.constant 7 : i32
    %95 = vector.broadcast %c7_i32 : i32 to vector<8x8xi32>
    %96 = arith.cmpi eq, %17, %95 : vector<8x8xi32>
    %cst_33 = arith.constant 0.000000e+00 : f32
    %97 = vector.broadcast %cst_33 : f32 to vector<8x8xf32>
    %98 = arith.select %96, %94, %97 : vector<8x8xi1>, vector<8x8xf32>
    %99 = arith.addf %90, %98 : vector<8x8xf32>
    %100 = vector.extract_strided_slice %22 {offsets = [8, 0], sizes = [1, 8], strides = [1, 1]} : vector<9x8xbf16> to vector<1x8xbf16>
    %101 = vector.broadcast %100 : vector<1x8xbf16> to vector<8x8xbf16>
    %102 = arith.mulf %24, %101 : vector<8x8xbf16>
    %cst_34 = arith.constant dense<0.000000e+00> : vector<8x8xf32>
    %103 = tpu.matmul %102, %26, %cst_34 {dimension_numbers = #tpu.dot_dimension_numbers<[1], [0], [0], [1], [0, 0, 1, 1], [], []>} : vector<8x8xbf16>, vector<8x8xbf16>, vector<8x8xf32> -> vector<8x8xf32>
    %c8_i32_35 = arith.constant 8 : i32
    %104 = vector.broadcast %c8_i32_35 : i32 to vector<8x8xi32>
    %105 = arith.cmpi eq, %17, %104 : vector<8x8xi32>
    %cst_36 = arith.constant 0.000000e+00 : f32
    %106 = vector.broadcast %cst_36 : f32 to vector<8x8xf32>
    %107 = arith.select %105, %103, %106 : vector<8x8xi1>, vector<8x8xf32>
    %108 = arith.addf %99, %107 : vector<8x8xf32>
    %cst_37 = arith.constant 0.353553385 : f32
    %109 = vector.broadcast %cst_37 : f32 to vector<8x8xf32>
    %110 = arith.mulf %108, %109 : vector<8x8xf32>
    %cst_38 = arith.constant -1.000000e+10 : f32
    %111 = vector.broadcast %cst_38 : f32 to vector<8x8xf32>
    %112 = arith.select %21, %110, %111 : vector<8x8xi1>, vector<8x8xf32>
    %c0_39 = arith.constant 0 : index
    %c0_40 = arith.constant 0 : index
    %c0_41 = arith.constant 0 : index
    %113 = vector.load %arg9[%c0_39, %c0_40, %c0_41] : memref<4x8x1xf32, #tpu.memory_space<vmem>>, vector<1x8x1xf32>
    %114 = vector.shape_cast %113 : vector<1x8x1xf32> to vector<8x1xf32>
    %cst_42 = arith.constant dense<0xFF800000> : vector<8xf32>
    %115 = vector.multi_reduction <maximumf>, %112, %cst_42 [1] : vector<8x8xf32> to vector<8xf32>
    %116 = vector.shape_cast %115 : vector<8xf32> to vector<8x1xf32>
    %117 = arith.maximumf %114, %116 : vector<8x1xf32>
    %118 = arith.subf %114, %117 : vector<8x1xf32>
    %119 = math.exp %118 : vector<8x1xf32>
    %120 = vector.broadcast %117 : vector<8x1xf32> to vector<8x8xf32>
    %121 = arith.subf %112, %120 : vector<8x8xf32>
    %122 = math.exp %121 : vector<8x8xf32>
    %c0_43 = arith.constant 0 : index
    %c0_44 = arith.constant 0 : index
    %c0_45 = arith.constant 0 : index
    %123 = vector.load %arg10[%c0_43, %c0_44, %c0_45] : memref<4x8x1xf32, #tpu.memory_space<vmem>>, vector<1x8x1xf32>
    %124 = vector.shape_cast %123 : vector<1x8x1xf32> to vector<8x1xf32>
    %125 = arith.mulf %119, %124 : vector<8x1xf32>
    %cst_46 = arith.constant dense<0.000000e+00> : vector<8xf32>
    %126 = vector.multi_reduction <add>, %122, %cst_46 [1] : vector<8x8xf32> to vector<8xf32>
    %127 = vector.shape_cast %126 : vector<8xf32> to vector<8x1xf32>
    %128 = arith.addf %125, %127 : vector<8x1xf32>
    %c0_47 = arith.constant 0 : index
    %c0_48 = arith.constant 0 : index
    %c0_49 = arith.constant 0 : index
    %129 = vector.load %arg10[%c0_47, %c0_48, %c0_49] : memref<4x8x1xf32, #tpu.memory_space<vmem>>, vector<1x8x1xf32>
    %130 = vector.shape_cast %129 : vector<1x8x1xf32> to vector<8x1xf32>
    %131 = vector.shape_cast %128 : vector<8x1xf32> to vector<1x8x1xf32>
    tpu.vector_store %arg10[%c0_47, %c0_48, %c0_49], %131 {strides = array<i32>} : memref<4x8x1xf32, #tpu.memory_space<vmem>>, vector<1x8x1xf32>,
    %132 = arith.truncf %122 : vector<8x8xf32> to vector<8x8xbf16>
    %c0_50 = arith.constant 0 : index
    %c0_51 = arith.constant 0 : index
    %c0_52 = arith.constant 0 : index
    %c0_53 = arith.constant 0 : index
    %133 = vector.load %arg6[%c0_50, %c0_51, %c0_52, %c0_53] : memref<1x4x8x8xbf16, #tpu.memory_space<vmem>>, vector<1x1x8x8xbf16>
    %134 = vector.shape_cast %133 : vector<1x1x8x8xbf16> to vector<8x8xbf16>
    %cst_54 = arith.constant dense<0.000000e+00> : vector<8x8xf32>
    %135 = tpu.matmul %132, %134, %cst_54 {dimension_numbers = #tpu.dot_dimension_numbers<[1], [0], [0], [1], [0, 0, 1, 1], [], []>} : vector<8x8xbf16>, vector<8x8xbf16>, vector<8x8xf32> -> vector<8x8xf32>
    %c0_55 = arith.constant 0 : index
    %c0_56 = arith.constant 0 : index
    %c0_57 = arith.constant 0 : index
    %136 = vector.load %arg11[%c0_55, %c0_56, %c0_57] : memref<4x8x8xf32, #tpu.memory_space<vmem>>, vector<1x8x8xf32>
    %137 = vector.shape_cast %136 : vector<1x8x8xf32> to vector<8x8xf32>
    %138 = vector.broadcast %119 : vector<8x1xf32> to vector<8x8xf32>
    %139 = arith.mulf %138, %137 : vector<8x8xf32>
    %140 = arith.addf %139, %135 : vector<8x8xf32>
    %c0_58 = arith.constant 0 : index
    %c0_59 = arith.constant 0 : index
    %c0_60 = arith.constant 0 : index
    %141 = vector.load %arg11[%c0_58, %c0_59, %c0_60] : memref<4x8x8xf32, #tpu.memory_space<vmem>>, vector<1x8x8xf32>
    %142 = vector.shape_cast %141 : vector<1x8x8xf32> to vector<8x8xf32>
    %143 = vector.shape_cast %140 : vector<8x8xf32> to vector<1x8x8xf32>
    tpu.vector_store %arg11[%c0_58, %c0_59, %c0_60], %143 {strides = array<i32>} : memref<4x8x8xf32, #tpu.memory_space<vmem>>, vector<1x8x8xf32>,
    %c0_61 = arith.constant 0 : index
    %c0_62 = arith.constant 0 : index
    %c0_63 = arith.constant 0 : index
    %144 = vector.load %arg9[%c0_61, %c0_62, %c0_63] : memref<4x8x1xf32, #tpu.memory_space<vmem>>, vector<1x8x1xf32>
    %145 = vector.shape_cast %144 : vector<1x8x1xf32> to vector<8x1xf32>
    %146 = vector.shape_cast %117 : vector<8x1xf32> to vector<1x8x1xf32>
    tpu.vector_store %arg9[%c0_61, %c0_62, %c0_63], %146 {strides = array<i32>} : memref<4x8x1xf32, #tpu.memory_space<vmem>>, vector<1x8x1xf32>,
    %c0_64 = arith.constant 0 : index
    %c1 = arith.constant 1 : index
    %c0_65 = arith.constant 0 : index
    %c0_66 = arith.constant 0 : index
    %147 = vector.load %arg4[%c0_64, %c1, %c0_65, %c0_66] : memref<1x4x8x8xbf16, #tpu.memory_space<vmem>>, vector<1x1x8x8xbf16>
    %148 = vector.shape_cast %147 : vector<1x1x8x8xbf16> to vector<8x8xbf16>
    %c0_67 = arith.constant 0 : index
    %c1_68 = arith.constant 1 : index
    %c0_69 = arith.constant 0 : index
    %c0_70 = arith.constant 0 : index
    %149 = vector.load %arg5[%c0_67, %c1_68, %c0_69, %c0_70] : memref<1x4x8x8xbf16, #tpu.memory_space<vmem>>, vector<1x1x8x8xbf16>
    %150 = vector.shape_cast %149 : vector<1x1x8x8xbf16> to vector<8x8xbf16>
    %cst_71 = arith.constant 0.000000e+00 : f32
    %151 = vector.broadcast %cst_71 : f32 to vector<8x8xf32>
    %152 = vector.extract_strided_slice %22 {offsets = [0, 0], sizes = [1, 8], strides = [1, 1]} : vector<9x8xbf16> to vector<1x8xbf16>
    %153 = vector.broadcast %152 : vector<1x8xbf16> to vector<8x8xbf16>
    %154 = arith.mulf %148, %153 : vector<8x8xbf16>
    %cst_72 = arith.constant dense<0.000000e+00> : vector<8x8xf32>
    %155 = tpu.matmul %154, %150, %cst_72 {dimension_numbers = #tpu.dot_dimension_numbers<[1], [0], [0], [1], [0, 0, 1, 1], [], []>} : vector<8x8xbf16>, vector<8x8xbf16>, vector<8x8xf32> -> vector<8x8xf32>
    %c0_i32_73 = arith.constant 0 : i32
    %156 = vector.broadcast %c0_i32_73 : i32 to vector<8x8xi32>
    %157 = arith.cmpi eq, %17, %156 : vector<8x8xi32>
    %cst_74 = arith.constant 0.000000e+00 : f32
    %158 = vector.broadcast %cst_74 : f32 to vector<8x8xf32>
    %159 = arith.select %157, %155, %158 : vector<8x8xi1>, vector<8x8xf32>
    %160 = arith.addf %151, %159 : vector<8x8xf32>
    %161 = vector.extract_strided_slice %22 {offsets = [1, 0], sizes = [1, 8], strides = [1, 1]} : vector<9x8xbf16> to vector<1x8xbf16>
    %162 = vector.broadcast %161 : vector<1x8xbf16> to vector<8x8xbf16>
    %163 = arith.mulf %148, %162 : vector<8x8xbf16>
    %cst_75 = arith.constant dense<0.000000e+00> : vector<8x8xf32>
    %164 = tpu.matmul %163, %150, %cst_75 {dimension_numbers = #tpu.dot_dimension_numbers<[1], [0], [0], [1], [0, 0, 1, 1], [], []>} : vector<8x8xbf16>, vector<8x8xbf16>, vector<8x8xf32> -> vector<8x8xf32>
    %c1_i32_76 = arith.constant 1 : i32
    %165 = vector.broadcast %c1_i32_76 : i32 to vector<8x8xi32>
    %166 = arith.cmpi eq, %17, %165 : vector<8x8xi32>
    %cst_77 = arith.constant 0.000000e+00 : f32
    %167 = vector.broadcast %cst_77 : f32 to vector<8x8xf32>
    %168 = arith.select %166, %164, %167 : vector<8x8xi1>, vector<8x8xf32>
    %169 = arith.addf %160, %168 : vector<8x8xf32>
    %170 = vector.extract_strided_slice %22 {offsets = [2, 0], sizes = [1, 8], strides = [1, 1]} : vector<9x8xbf16> to vector<1x8xbf16>
    %171 = vector.broadcast %170 : vector<1x8xbf16> to vector<8x8xbf16>
    %172 = arith.mulf %148, %171 : vector<8x8xbf16>
    %cst_78 = arith.constant dense<0.000000e+00> : vector<8x8xf32>
    %173 = tpu.matmul %172, %150, %cst_78 {dimension_numbers = #tpu.dot_dimension_numbers<[1], [0], [0], [1], [0, 0, 1, 1], [], []>} : vector<8x8xbf16>, vector<8x8xbf16>, vector<8x8xf32> -> vector<8x8xf32>
    %c2_i32_79 = arith.constant 2 : i32
    %174 = vector.broadcast %c2_i32_79 : i32 to vector<8x8xi32>
    %175 = arith.cmpi eq, %17, %174 : vector<8x8xi32>
    %cst_80 = arith.constant 0.000000e+00 : f32
    %176 = vector.broadcast %cst_80 : f32 to vector<8x8xf32>
    %177 = arith.select %175, %173, %176 : vector<8x8xi1>, vector<8x8xf32>
    %178 = arith.addf %169, %177 : vector<8x8xf32>
    %179 = vector.extract_strided_slice %22 {offsets = [3, 0], sizes = [1, 8], strides = [1, 1]} : vector<9x8xbf16> to vector<1x8xbf16>
    %180 = vector.broadcast %179 : vector<1x8xbf16> to vector<8x8xbf16>
    %181 = arith.mulf %148, %180 : vector<8x8xbf16>
    %cst_81 = arith.constant dense<0.000000e+00> : vector<8x8xf32>
    %182 = tpu.matmul %181, %150, %cst_81 {dimension_numbers = #tpu.dot_dimension_numbers<[1], [0], [0], [1], [0, 0, 1, 1], [], []>} : vector<8x8xbf16>, vector<8x8xbf16>, vector<8x8xf32> -> vector<8x8xf32>
    %c3_i32_82 = arith.constant 3 : i32
    %183 = vector.broadcast %c3_i32_82 : i32 to vector<8x8xi32>
    %184 = arith.cmpi eq, %17, %183 : vector<8x8xi32>
    %cst_83 = arith.constant 0.000000e+00 : f32
    %185 = vector.broadcast %cst_83 : f32 to vector<8x8xf32>
    %186 = arith.select %184, %182, %185 : vector<8x8xi1>, vector<8x8xf32>
    %187 = arith.addf %178, %186 : vector<8x8xf32>
    %188 = vector.extract_strided_slice %22 {offsets = [4, 0], sizes = [1, 8], strides = [1, 1]} : vector<9x8xbf16> to vector<1x8xbf16>
    %189 = vector.broadcast %188 : vector<1x8xbf16> to vector<8x8xbf16>
    %190 = arith.mulf %148, %189 : vector<8x8xbf16>
    %cst_84 = arith.constant dense<0.000000e+00> : vector<8x8xf32>
    %191 = tpu.matmul %190, %150, %cst_84 {dimension_numbers = #tpu.dot_dimension_numbers<[1], [0], [0], [1], [0, 0, 1, 1], [], []>} : vector<8x8xbf16>, vector<8x8xbf16>, vector<8x8xf32> -> vector<8x8xf32>
    %c4_i32_85 = arith.constant 4 : i32
    %192 = vector.broadcast %c4_i32_85 : i32 to vector<8x8xi32>
    %193 = arith.cmpi eq, %17, %192 : vector<8x8xi32>
    %cst_86 = arith.constant 0.000000e+00 : f32
    %194 = vector.broadcast %cst_86 : f32 to vector<8x8xf32>
    %195 = arith.select %193, %191, %194 : vector<8x8xi1>, vector<8x8xf32>
    %196 = arith.addf %187, %195 : vector<8x8xf32>
    %197 = vector.extract_strided_slice %22 {offsets = [5, 0], sizes = [1, 8], strides = [1, 1]} : vector<9x8xbf16> to vector<1x8xbf16>
    %198 = vector.broadcast %197 : vector<1x8xbf16> to vector<8x8xbf16>
    %199 = arith.mulf %148, %198 : vector<8x8xbf16>
    %cst_87 = arith.constant dense<0.000000e+00> : vector<8x8xf32>
    %200 = tpu.matmul %199, %150, %cst_87 {dimension_numbers = #tpu.dot_dimension_numbers<[1], [0], [0], [1], [0, 0, 1, 1], [], []>} : vector<8x8xbf16>, vector<8x8xbf16>, vector<8x8xf32> -> vector<8x8xf32>
    %c5_i32_88 = arith.constant 5 : i32
    %201 = vector.broadcast %c5_i32_88 : i32 to vector<8x8xi32>
    %202 = arith.cmpi eq, %17, %201 : vector<8x8xi32>
    %cst_89 = arith.constant 0.000000e+00 : f32
    %203 = vector.broadcast %cst_89 : f32 to vector<8x8xf32>
    %204 = arith.select %202, %200, %203 : vector<8x8xi1>, vector<8x8xf32>
    %205 = arith.addf %196, %204 : vector<8x8xf32>
    %206 = vector.extract_strided_slice %22 {offsets = [6, 0], sizes = [1, 8], strides = [1, 1]} : vector<9x8xbf16> to vector<1x8xbf16>
    %207 = vector.broadcast %206 : vector<1x8xbf16> to vector<8x8xbf16>
    %208 = arith.mulf %148, %207 : vector<8x8xbf16>
    %cst_90 = arith.constant dense<0.000000e+00> : vector<8x8xf32>
    %209 = tpu.matmul %208, %150, %cst_90 {dimension_numbers = #tpu.dot_dimension_numbers<[1], [0], [0], [1], [0, 0, 1, 1], [], []>} : vector<8x8xbf16>, vector<8x8xbf16>, vector<8x8xf32> -> vector<8x8xf32>
    %c6_i32_91 = arith.constant 6 : i32
    %210 = vector.broadcast %c6_i32_91 : i32 to vector<8x8xi32>
    %211 = arith.cmpi eq, %17, %210 : vector<8x8xi32>
    %cst_92 = arith.constant 0.000000e+00 : f32
    %212 = vector.broadcast %cst_92 : f32 to vector<8x8xf32>
    %213 = arith.select %211, %209, %212 : vector<8x8xi1>, vector<8x8xf32>
    %214 = arith.addf %205, %213 : vector<8x8xf32>
    %215 = vector.extract_strided_slice %22 {offsets = [7, 0], sizes = [1, 8], strides = [1, 1]} : vector<9x8xbf16> to vector<1x8xbf16>
    %216 = vector.broadcast %215 : vector<1x8xbf16> to vector<8x8xbf16>
    %217 = arith.mulf %148, %216 : vector<8x8xbf16>
    %cst_93 = arith.constant dense<0.000000e+00> : vector<8x8xf32>
    %218 = tpu.matmul %217, %150, %cst_93 {dimension_numbers = #tpu.dot_dimension_numbers<[1], [0], [0], [1], [0, 0, 1, 1], [], []>} : vector<8x8xbf16>, vector<8x8xbf16>, vector<8x8xf32> -> vector<8x8xf32>
    %c7_i32_94 = arith.constant 7 : i32
    %219 = vector.broadcast %c7_i32_94 : i32 to vector<8x8xi32>
    %220 = arith.cmpi eq, %17, %219 : vector<8x8xi32>
    %cst_95 = arith.constant 0.000000e+00 : f32
    %221 = vector.broadcast %cst_95 : f32 to vector<8x8xf32>
    %222 = arith.select %220, %218, %221 : vector<8x8xi1>, vector<8x8xf32>
    %223 = arith.addf %214, %222 : vector<8x8xf32>
    %224 = vector.extract_strided_slice %22 {offsets = [8, 0], sizes = [1, 8], strides = [1, 1]} : vector<9x8xbf16> to vector<1x8xbf16>
    %225 = vector.broadcast %224 : vector<1x8xbf16> to vector<8x8xbf16>
    %226 = arith.mulf %148, %225 : vector<8x8xbf16>
    %cst_96 = arith.constant dense<0.000000e+00> : vector<8x8xf32>
    %227 = tpu.matmul %226, %150, %cst_96 {dimension_numbers = #tpu.dot_dimension_numbers<[1], [0], [0], [1], [0, 0, 1, 1], [], []>} : vector<8x8xbf16>, vector<8x8xbf16>, vector<8x8xf32> -> vector<8x8xf32>
    %c8_i32_97 = arith.constant 8 : i32
    %228 = vector.broadcast %c8_i32_97 : i32 to vector<8x8xi32>
    %229 = arith.cmpi eq, %17, %228 : vector<8x8xi32>
    %cst_98 = arith.constant 0.000000e+00 : f32
    %230 = vector.broadcast %cst_98 : f32 to vector<8x8xf32>
    %231 = arith.select %229, %227, %230 : vector<8x8xi1>, vector<8x8xf32>
    %232 = arith.addf %223, %231 : vector<8x8xf32>
    %cst_99 = arith.constant 0.353553385 : f32
    %233 = vector.broadcast %cst_99 : f32 to vector<8x8xf32>
    %234 = arith.mulf %232, %233 : vector<8x8xf32>
    %cst_100 = arith.constant -1.000000e+10 : f32
    %235 = vector.broadcast %cst_100 : f32 to vector<8x8xf32>
    %236 = arith.select %21, %234, %235 : vector<8x8xi1>, vector<8x8xf32>
    %c1_101 = arith.constant 1 : index
    %c0_102 = arith.constant 0 : index
    %c0_103 = arith.constant 0 : index
    %237 = vector.load %arg9[%c1_101, %c0_102, %c0_103] : memref<4x8x1xf32, #tpu.memory_space<vmem>>, vector<1x8x1xf32>
    %238 = vector.shape_cast %237 : vector<1x8x1xf32> to vector<8x1xf32>
    %cst_104 = arith.constant dense<0xFF800000> : vector<8xf32>
    %239 = vector.multi_reduction <maximumf>, %236, %cst_104 [1] : vector<8x8xf32> to vector<8xf32>
    %240 = vector.shape_cast %239 : vector<8xf32> to vector<8x1xf32>
    %241 = arith.maximumf %238, %240 : vector<8x1xf32>
    %242 = arith.subf %238, %241 : vector<8x1xf32>
    %243 = math.exp %242 : vector<8x1xf32>
    %244 = vector.broadcast %241 : vector<8x1xf32> to vector<8x8xf32>
    %245 = arith.subf %236, %244 : vector<8x8xf32>
    %246 = math.exp %245 : vector<8x8xf32>
    %c1_105 = arith.constant 1 : index
    %c0_106 = arith.constant 0 : index
    %c0_107 = arith.constant 0 : index
    %247 = vector.load %arg10[%c1_105, %c0_106, %c0_107] : memref<4x8x1xf32, #tpu.memory_space<vmem>>, vector<1x8x1xf32>
    %248 = vector.shape_cast %247 : vector<1x8x1xf32> to vector<8x1xf32>
    %249 = arith.mulf %243, %248 : vector<8x1xf32>
    %cst_108 = arith.constant dense<0.000000e+00> : vector<8xf32>
    %250 = vector.multi_reduction <add>, %246, %cst_108 [1] : vector<8x8xf32> to vector<8xf32>
    %251 = vector.shape_cast %250 : vector<8xf32> to vector<8x1xf32>
    %252 = arith.addf %249, %251 : vector<8x1xf32>
    %c1_109 = arith.constant 1 : index
    %c0_110 = arith.constant 0 : index
    %c0_111 = arith.constant 0 : index
    %253 = vector.load %arg10[%c1_109, %c0_110, %c0_111] : memref<4x8x1xf32, #tpu.memory_space<vmem>>, vector<1x8x1xf32>
    %254 = vector.shape_cast %253 : vector<1x8x1xf32> to vector<8x1xf32>
    %255 = vector.shape_cast %252 : vector<8x1xf32> to vector<1x8x1xf32>
    tpu.vector_store %arg10[%c1_109, %c0_110, %c0_111], %255 {strides = array<i32>} : memref<4x8x1xf32, #tpu.memory_space<vmem>>, vector<1x8x1xf32>,
    %256 = arith.truncf %246 : vector<8x8xf32> to vector<8x8xbf16>
    %c0_112 = arith.constant 0 : index
    %c1_113 = arith.constant 1 : index
    %c0_114 = arith.constant 0 : index
    %c0_115 = arith.constant 0 : index
    %257 = vector.load %arg6[%c0_112, %c1_113, %c0_114, %c0_115] : memref<1x4x8x8xbf16, #tpu.memory_space<vmem>>, vector<1x1x8x8xbf16>
    %258 = vector.shape_cast %257 : vector<1x1x8x8xbf16> to vector<8x8xbf16>
    %cst_116 = arith.constant dense<0.000000e+00> : vector<8x8xf32>
    %259 = tpu.matmul %256, %258, %cst_116 {dimension_numbers = #tpu.dot_dimension_numbers<[1], [0], [0], [1], [0, 0, 1, 1], [], []>} : vector<8x8xbf16>, vector<8x8xbf16>, vector<8x8xf32> -> vector<8x8xf32>
    %c1_117 = arith.constant 1 : index
    %c0_118 = arith.constant 0 : index
    %c0_119 = arith.constant 0 : index
    %260 = vector.load %arg11[%c1_117, %c0_118, %c0_119] : memref<4x8x8xf32, #tpu.memory_space<vmem>>, vector<1x8x8xf32>
    %261 = vector.shape_cast %260 : vector<1x8x8xf32> to vector<8x8xf32>
    %262 = vector.broadcast %243 : vector<8x1xf32> to vector<8x8xf32>
    %263 = arith.mulf %262, %261 : vector<8x8xf32>
    %264 = arith.addf %263, %259 : vector<8x8xf32>
    %c1_120 = arith.constant 1 : index
    %c0_121 = arith.constant 0 : index
    %c0_122 = arith.constant 0 : index
    %265 = vector.load %arg11[%c1_120, %c0_121, %c0_122] : memref<4x8x8xf32, #tpu.memory_space<vmem>>, vector<1x8x8xf32>
    %266 = vector.shape_cast %265 : vector<1x8x8xf32> to vector<8x8xf32>
    %267 = vector.shape_cast %264 : vector<8x8xf32> to vector<1x8x8xf32>
    tpu.vector_store %arg11[%c1_120, %c0_121, %c0_122], %267 {strides = array<i32>} : memref<4x8x8xf32, #tpu.memory_space<vmem>>, vector<1x8x8xf32>,
    %c1_123 = arith.constant 1 : index
    %c0_124 = arith.constant 0 : index
    %c0_125 = arith.constant 0 : index
    %268 = vector.load %arg9[%c1_123, %c0_124, %c0_125] : memref<4x8x1xf32, #tpu.memory_space<vmem>>, vector<1x8x1xf32>
    %269 = vector.shape_cast %268 : vector<1x8x1xf32> to vector<8x1xf32>
    %270 = vector.shape_cast %241 : vector<8x1xf32> to vector<1x8x1xf32>
    tpu.vector_store %arg9[%c1_123, %c0_124, %c0_125], %270 {strides = array<i32>} : memref<4x8x1xf32, #tpu.memory_space<vmem>>, vector<1x8x1xf32>,
    %c0_126 = arith.constant 0 : index
    %c2 = arith.constant 2 : index
    %c0_127 = arith.constant 0 : index
    %c0_128 = arith.constant 0 : index
    %271 = vector.load %arg4[%c0_126, %c2, %c0_127, %c0_128] : memref<1x4x8x8xbf16, #tpu.memory_space<vmem>>, vector<1x1x8x8xbf16>
    %272 = vector.shape_cast %271 : vector<1x1x8x8xbf16> to vector<8x8xbf16>
    %c0_129 = arith.constant 0 : index
    %c2_130 = arith.constant 2 : index
    %c0_131 = arith.constant 0 : index
    %c0_132 = arith.constant 0 : index
    %273 = vector.load %arg5[%c0_129, %c2_130, %c0_131, %c0_132] : memref<1x4x8x8xbf16, #tpu.memory_space<vmem>>, vector<1x1x8x8xbf16>
    %274 = vector.shape_cast %273 : vector<1x1x8x8xbf16> to vector<8x8xbf16>
    %cst_133 = arith.constant 0.000000e+00 : f32
    %275 = vector.broadcast %cst_133 : f32 to vector<8x8xf32>
    %276 = vector.extract_strided_slice %22 {offsets = [0, 0], sizes = [1, 8], strides = [1, 1]} : vector<9x8xbf16> to vector<1x8xbf16>
    %277 = vector.broadcast %276 : vector<1x8xbf16> to vector<8x8xbf16>
    %278 = arith.mulf %272, %277 : vector<8x8xbf16>
    %cst_134 = arith.constant dense<0.000000e+00> : vector<8x8xf32>
    %279 = tpu.matmul %278, %274, %cst_134 {dimension_numbers = #tpu.dot_dimension_numbers<[1], [0], [0], [1], [0, 0, 1, 1], [], []>} : vector<8x8xbf16>, vector<8x8xbf16>, vector<8x8xf32> -> vector<8x8xf32>
    %c0_i32_135 = arith.constant 0 : i32
    %280 = vector.broadcast %c0_i32_135 : i32 to vector<8x8xi32>
    %281 = arith.cmpi eq, %17, %280 : vector<8x8xi32>
    %cst_136 = arith.constant 0.000000e+00 : f32
    %282 = vector.broadcast %cst_136 : f32 to vector<8x8xf32>
    %283 = arith.select %281, %279, %282 : vector<8x8xi1>, vector<8x8xf32>
    %284 = arith.addf %275, %283 : vector<8x8xf32>
    %285 = vector.extract_strided_slice %22 {offsets = [1, 0], sizes = [1, 8], strides = [1, 1]} : vector<9x8xbf16> to vector<1x8xbf16>
    %286 = vector.broadcast %285 : vector<1x8xbf16> to vector<8x8xbf16>
    %287 = arith.mulf %272, %286 : vector<8x8xbf16>
    %cst_137 = arith.constant dense<0.000000e+00> : vector<8x8xf32>
    %288 = tpu.matmul %287, %274, %cst_137 {dimension_numbers = #tpu.dot_dimension_numbers<[1], [0], [0], [1], [0, 0, 1, 1], [], []>} : vector<8x8xbf16>, vector<8x8xbf16>, vector<8x8xf32> -> vector<8x8xf32>
    %c1_i32_138 = arith.constant 1 : i32
    %289 = vector.broadcast %c1_i32_138 : i32 to vector<8x8xi32>
    %290 = arith.cmpi eq, %17, %289 : vector<8x8xi32>
    %cst_139 = arith.constant 0.000000e+00 : f32
    %291 = vector.broadcast %cst_139 : f32 to vector<8x8xf32>
    %292 = arith.select %290, %288, %291 : vector<8x8xi1>, vector<8x8xf32>
    %293 = arith.addf %284, %292 : vector<8x8xf32>
    %294 = vector.extract_strided_slice %22 {offsets = [2, 0], sizes = [1, 8], strides = [1, 1]} : vector<9x8xbf16> to vector<1x8xbf16>
    %295 = vector.broadcast %294 : vector<1x8xbf16> to vector<8x8xbf16>
    %296 = arith.mulf %272, %295 : vector<8x8xbf16>
    %cst_140 = arith.constant dense<0.000000e+00> : vector<8x8xf32>
    %297 = tpu.matmul %296, %274, %cst_140 {dimension_numbers = #tpu.dot_dimension_numbers<[1], [0], [0], [1], [0, 0, 1, 1], [], []>} : vector<8x8xbf16>, vector<8x8xbf16>, vector<8x8xf32> -> vector<8x8xf32>
    %c2_i32_141 = arith.constant 2 : i32
    %298 = vector.broadcast %c2_i32_141 : i32 to vector<8x8xi32>
    %299 = arith.cmpi eq, %17, %298 : vector<8x8xi32>
    %cst_142 = arith.constant 0.000000e+00 : f32
    %300 = vector.broadcast %cst_142 : f32 to vector<8x8xf32>
    %301 = arith.select %299, %297, %300 : vector<8x8xi1>, vector<8x8xf32>
    %302 = arith.addf %293, %301 : vector<8x8xf32>
    %303 = vector.extract_strided_slice %22 {offsets = [3, 0], sizes = [1, 8], strides = [1, 1]} : vector<9x8xbf16> to vector<1x8xbf16>
    %304 = vector.broadcast %303 : vector<1x8xbf16> to vector<8x8xbf16>
    %305 = arith.mulf %272, %304 : vector<8x8xbf16>
    %cst_143 = arith.constant dense<0.000000e+00> : vector<8x8xf32>
    %306 = tpu.matmul %305, %274, %cst_143 {dimension_numbers = #tpu.dot_dimension_numbers<[1], [0], [0], [1], [0, 0, 1, 1], [], []>} : vector<8x8xbf16>, vector<8x8xbf16>, vector<8x8xf32> -> vector<8x8xf32>
    %c3_i32_144 = arith.constant 3 : i32
    %307 = vector.broadcast %c3_i32_144 : i32 to vector<8x8xi32>
    %308 = arith.cmpi eq, %17, %307 : vector<8x8xi32>
    %cst_145 = arith.constant 0.000000e+00 : f32
    %309 = vector.broadcast %cst_145 : f32 to vector<8x8xf32>
    %310 = arith.select %308, %306, %309 : vector<8x8xi1>, vector<8x8xf32>
    %311 = arith.addf %302, %310 : vector<8x8xf32>
    %312 = vector.extract_strided_slice %22 {offsets = [4, 0], sizes = [1, 8], strides = [1, 1]} : vector<9x8xbf16> to vector<1x8xbf16>
    %313 = vector.broadcast %312 : vector<1x8xbf16> to vector<8x8xbf16>
    %314 = arith.mulf %272, %313 : vector<8x8xbf16>
    %cst_146 = arith.constant dense<0.000000e+00> : vector<8x8xf32>
    %315 = tpu.matmul %314, %274, %cst_146 {dimension_numbers = #tpu.dot_dimension_numbers<[1], [0], [0], [1], [0, 0, 1, 1], [], []>} : vector<8x8xbf16>, vector<8x8xbf16>, vector<8x8xf32> -> vector<8x8xf32>
    %c4_i32_147 = arith.constant 4 : i32
    %316 = vector.broadcast %c4_i32_147 : i32 to vector<8x8xi32>
    %317 = arith.cmpi eq, %17, %316 : vector<8x8xi32>
    %cst_148 = arith.constant 0.000000e+00 : f32
    %318 = vector.broadcast %cst_148 : f32 to vector<8x8xf32>
    %319 = arith.select %317, %315, %318 : vector<8x8xi1>, vector<8x8xf32>
    %320 = arith.addf %311, %319 : vector<8x8xf32>
    %321 = vector.extract_strided_slice %22 {offsets = [5, 0], sizes = [1, 8], strides = [1, 1]} : vector<9x8xbf16> to vector<1x8xbf16>
    %322 = vector.broadcast %321 : vector<1x8xbf16> to vector<8x8xbf16>
    %323 = arith.mulf %272, %322 : vector<8x8xbf16>
    %cst_149 = arith.constant dense<0.000000e+00> : vector<8x8xf32>
    %324 = tpu.matmul %323, %274, %cst_149 {dimension_numbers = #tpu.dot_dimension_numbers<[1], [0], [0], [1], [0, 0, 1, 1], [], []>} : vector<8x8xbf16>, vector<8x8xbf16>, vector<8x8xf32> -> vector<8x8xf32>
    %c5_i32_150 = arith.constant 5 : i32
    %325 = vector.broadcast %c5_i32_150 : i32 to vector<8x8xi32>
    %326 = arith.cmpi eq, %17, %325 : vector<8x8xi32>
    %cst_151 = arith.constant 0.000000e+00 : f32
    %327 = vector.broadcast %cst_151 : f32 to vector<8x8xf32>
    %328 = arith.select %326, %324, %327 : vector<8x8xi1>, vector<8x8xf32>
    %329 = arith.addf %320, %328 : vector<8x8xf32>
    %330 = vector.extract_strided_slice %22 {offsets = [6, 0], sizes = [1, 8], strides = [1, 1]} : vector<9x8xbf16> to vector<1x8xbf16>
    %331 = vector.broadcast %330 : vector<1x8xbf16> to vector<8x8xbf16>
    %332 = arith.mulf %272, %331 : vector<8x8xbf16>
    %cst_152 = arith.constant dense<0.000000e+00> : vector<8x8xf32>
    %333 = tpu.matmul %332, %274, %cst_152 {dimension_numbers = #tpu.dot_dimension_numbers<[1], [0], [0], [1], [0, 0, 1, 1], [], []>} : vector<8x8xbf16>, vector<8x8xbf16>, vector<8x8xf32> -> vector<8x8xf32>
    %c6_i32_153 = arith.constant 6 : i32
    %334 = vector.broadcast %c6_i32_153 : i32 to vector<8x8xi32>
    %335 = arith.cmpi eq, %17, %334 : vector<8x8xi32>
    %cst_154 = arith.constant 0.000000e+00 : f32
    %336 = vector.broadcast %cst_154 : f32 to vector<8x8xf32>
    %337 = arith.select %335, %333, %336 : vector<8x8xi1>, vector<8x8xf32>
    %338 = arith.addf %329, %337 : vector<8x8xf32>
    %339 = vector.extract_strided_slice %22 {offsets = [7, 0], sizes = [1, 8], strides = [1, 1]} : vector<9x8xbf16> to vector<1x8xbf16>
    %340 = vector.broadcast %339 : vector<1x8xbf16> to vector<8x8xbf16>
    %341 = arith.mulf %272, %340 : vector<8x8xbf16>
    %cst_155 = arith.constant dense<0.000000e+00> : vector<8x8xf32>
    %342 = tpu.matmul %341, %274, %cst_155 {dimension_numbers = #tpu.dot_dimension_numbers<[1], [0], [0], [1], [0, 0, 1, 1], [], []>} : vector<8x8xbf16>, vector<8x8xbf16>, vector<8x8xf32> -> vector<8x8xf32>
    %c7_i32_156 = arith.constant 7 : i32
    %343 = vector.broadcast %c7_i32_156 : i32 to vector<8x8xi32>
    %344 = arith.cmpi eq, %17, %343 : vector<8x8xi32>
    %cst_157 = arith.constant 0.000000e+00 : f32
    %345 = vector.broadcast %cst_157 : f32 to vector<8x8xf32>
    %346 = arith.select %344, %342, %345 : vector<8x8xi1>, vector<8x8xf32>
    %347 = arith.addf %338, %346 : vector<8x8xf32>
    %348 = vector.extract_strided_slice %22 {offsets = [8, 0], sizes = [1, 8], strides = [1, 1]} : vector<9x8xbf16> to vector<1x8xbf16>
    %349 = vector.broadcast %348 : vector<1x8xbf16> to vector<8x8xbf16>
    %350 = arith.mulf %272, %349 : vector<8x8xbf16>
    %cst_158 = arith.constant dense<0.000000e+00> : vector<8x8xf32>
    %351 = tpu.matmul %350, %274, %cst_158 {dimension_numbers = #tpu.dot_dimension_numbers<[1], [0], [0], [1], [0, 0, 1, 1], [], []>} : vector<8x8xbf16>, vector<8x8xbf16>, vector<8x8xf32> -> vector<8x8xf32>
    %c8_i32_159 = arith.constant 8 : i32
    %352 = vector.broadcast %c8_i32_159 : i32 to vector<8x8xi32>
    %353 = arith.cmpi eq, %17, %352 : vector<8x8xi32>
    %cst_160 = arith.constant 0.000000e+00 : f32
    %354 = vector.broadcast %cst_160 : f32 to vector<8x8xf32>
    %355 = arith.select %353, %351, %354 : vector<8x8xi1>, vector<8x8xf32>
    %356 = arith.addf %347, %355 : vector<8x8xf32>
    %cst_161 = arith.constant 0.353553385 : f32
    %357 = vector.broadcast %cst_161 : f32 to vector<8x8xf32>
    %358 = arith.mulf %356, %357 : vector<8x8xf32>
    %cst_162 = arith.constant -1.000000e+10 : f32
    %359 = vector.broadcast %cst_162 : f32 to vector<8x8xf32>
    %360 = arith.select %21, %358, %359 : vector<8x8xi1>, vector<8x8xf32>
    %c2_163 = arith.constant 2 : index
    %c0_164 = arith.constant 0 : index
    %c0_165 = arith.constant 0 : index
    %361 = vector.load %arg9[%c2_163, %c0_164, %c0_165] : memref<4x8x1xf32, #tpu.memory_space<vmem>>, vector<1x8x1xf32>
    %362 = vector.shape_cast %361 : vector<1x8x1xf32> to vector<8x1xf32>
    %cst_166 = arith.constant dense<0xFF800000> : vector<8xf32>
    %363 = vector.multi_reduction <maximumf>, %360, %cst_166 [1] : vector<8x8xf32> to vector<8xf32>
    %364 = vector.shape_cast %363 : vector<8xf32> to vector<8x1xf32>
    %365 = arith.maximumf %362, %364 : vector<8x1xf32>
    %366 = arith.subf %362, %365 : vector<8x1xf32>
    %367 = math.exp %366 : vector<8x1xf32>
    %368 = vector.broadcast %365 : vector<8x1xf32> to vector<8x8xf32>
    %369 = arith.subf %360, %368 : vector<8x8xf32>
    %370 = math.exp %369 : vector<8x8xf32>
    %c2_167 = arith.constant 2 : index
    %c0_168 = arith.constant 0 : index
    %c0_169 = arith.constant 0 : index
    %371 = vector.load %arg10[%c2_167, %c0_168, %c0_169] : memref<4x8x1xf32, #tpu.memory_space<vmem>>, vector<1x8x1xf32>
    %372 = vector.shape_cast %371 : vector<1x8x1xf32> to vector<8x1xf32>
    %373 = arith.mulf %367, %372 : vector<8x1xf32>
    %cst_170 = arith.constant dense<0.000000e+00> : vector<8xf32>
    %374 = vector.multi_reduction <add>, %370, %cst_170 [1] : vector<8x8xf32> to vector<8xf32>
    %375 = vector.shape_cast %374 : vector<8xf32> to vector<8x1xf32>
    %376 = arith.addf %373, %375 : vector<8x1xf32>
    %c2_171 = arith.constant 2 : index
    %c0_172 = arith.constant 0 : index
    %c0_173 = arith.constant 0 : index
    %377 = vector.load %arg10[%c2_171, %c0_172, %c0_173] : memref<4x8x1xf32, #tpu.memory_space<vmem>>, vector<1x8x1xf32>
    %378 = vector.shape_cast %377 : vector<1x8x1xf32> to vector<8x1xf32>
    %379 = vector.shape_cast %376 : vector<8x1xf32> to vector<1x8x1xf32>
    tpu.vector_store %arg10[%c2_171, %c0_172, %c0_173], %379 {strides = array<i32>} : memref<4x8x1xf32, #tpu.memory_space<vmem>>, vector<1x8x1xf32>,
    %380 = arith.truncf %370 : vector<8x8xf32> to vector<8x8xbf16>
    %c0_174 = arith.constant 0 : index
    %c2_175 = arith.constant 2 : index
    %c0_176 = arith.constant 0 : index
    %c0_177 = arith.constant 0 : index
    %381 = vector.load %arg6[%c0_174, %c2_175, %c0_176, %c0_177] : memref<1x4x8x8xbf16, #tpu.memory_space<vmem>>, vector<1x1x8x8xbf16>
    %382 = vector.shape_cast %381 : vector<1x1x8x8xbf16> to vector<8x8xbf16>
    %cst_178 = arith.constant dense<0.000000e+00> : vector<8x8xf32>
    %383 = tpu.matmul %380, %382, %cst_178 {dimension_numbers = #tpu.dot_dimension_numbers<[1], [0], [0], [1], [0, 0, 1, 1], [], []>} : vector<8x8xbf16>, vector<8x8xbf16>, vector<8x8xf32> -> vector<8x8xf32>
    %c2_179 = arith.constant 2 : index
    %c0_180 = arith.constant 0 : index
    %c0_181 = arith.constant 0 : index
    %384 = vector.load %arg11[%c2_179, %c0_180, %c0_181] : memref<4x8x8xf32, #tpu.memory_space<vmem>>, vector<1x8x8xf32>
    %385 = vector.shape_cast %384 : vector<1x8x8xf32> to vector<8x8xf32>
    %386 = vector.broadcast %367 : vector<8x1xf32> to vector<8x8xf32>
    %387 = arith.mulf %386, %385 : vector<8x8xf32>
    %388 = arith.addf %387, %383 : vector<8x8xf32>
    %c2_182 = arith.constant 2 : index
    %c0_183 = arith.constant 0 : index
    %c0_184 = arith.constant 0 : index
    %389 = vector.load %arg11[%c2_182, %c0_183, %c0_184] : memref<4x8x8xf32, #tpu.memory_space<vmem>>, vector<1x8x8xf32>
    %390 = vector.shape_cast %389 : vector<1x8x8xf32> to vector<8x8xf32>
    %391 = vector.shape_cast %388 : vector<8x8xf32> to vector<1x8x8xf32>
    tpu.vector_store %arg11[%c2_182, %c0_183, %c0_184], %391 {strides = array<i32>} : memref<4x8x8xf32, #tpu.memory_space<vmem>>, vector<1x8x8xf32>,
    %c2_185 = arith.constant 2 : index
    %c0_186 = arith.constant 0 : index
    %c0_187 = arith.constant 0 : index
    %392 = vector.load %arg9[%c2_185, %c0_186, %c0_187] : memref<4x8x1xf32, #tpu.memory_space<vmem>>, vector<1x8x1xf32>
    %393 = vector.shape_cast %392 : vector<1x8x1xf32> to vector<8x1xf32>
    %394 = vector.shape_cast %365 : vector<8x1xf32> to vector<1x8x1xf32>
    tpu.vector_store %arg9[%c2_185, %c0_186, %c0_187], %394 {strides = array<i32>} : memref<4x8x1xf32, #tpu.memory_space<vmem>>, vector<1x8x1xf32>,
    %c0_188 = arith.constant 0 : index
    %c3 = arith.constant 3 : index
    %c0_189 = arith.constant 0 : index
    %c0_190 = arith.constant 0 : index
    %395 = vector.load %arg4[%c0_188, %c3, %c0_189, %c0_190] : memref<1x4x8x8xbf16, #tpu.memory_space<vmem>>, vector<1x1x8x8xbf16>
    %396 = vector.shape_cast %395 : vector<1x1x8x8xbf16> to vector<8x8xbf16>
    %c0_191 = arith.constant 0 : index
    %c3_192 = arith.constant 3 : index
    %c0_193 = arith.constant 0 : index
    %c0_194 = arith.constant 0 : index
    %397 = vector.load %arg5[%c0_191, %c3_192, %c0_193, %c0_194] : memref<1x4x8x8xbf16, #tpu.memory_space<vmem>>, vector<1x1x8x8xbf16>
    %398 = vector.shape_cast %397 : vector<1x1x8x8xbf16> to vector<8x8xbf16>
    %cst_195 = arith.constant 0.000000e+00 : f32
    %399 = vector.broadcast %cst_195 : f32 to vector<8x8xf32>
    %400 = vector.extract_strided_slice %22 {offsets = [0, 0], sizes = [1, 8], strides = [1, 1]} : vector<9x8xbf16> to vector<1x8xbf16>
    %401 = vector.broadcast %400 : vector<1x8xbf16> to vector<8x8xbf16>
    %402 = arith.mulf %396, %401 : vector<8x8xbf16>
    %cst_196 = arith.constant dense<0.000000e+00> : vector<8x8xf32>
    %403 = tpu.matmul %402, %398, %cst_196 {dimension_numbers = #tpu.dot_dimension_numbers<[1], [0], [0], [1], [0, 0, 1, 1], [], []>} : vector<8x8xbf16>, vector<8x8xbf16>, vector<8x8xf32> -> vector<8x8xf32>
    %c0_i32_197 = arith.constant 0 : i32
    %404 = vector.broadcast %c0_i32_197 : i32 to vector<8x8xi32>
    %405 = arith.cmpi eq, %17, %404 : vector<8x8xi32>
    %cst_198 = arith.constant 0.000000e+00 : f32
    %406 = vector.broadcast %cst_198 : f32 to vector<8x8xf32>
    %407 = arith.select %405, %403, %406 : vector<8x8xi1>, vector<8x8xf32>
    %408 = arith.addf %399, %407 : vector<8x8xf32>
    %409 = vector.extract_strided_slice %22 {offsets = [1, 0], sizes = [1, 8], strides = [1, 1]} : vector<9x8xbf16> to vector<1x8xbf16>
    %410 = vector.broadcast %409 : vector<1x8xbf16> to vector<8x8xbf16>
    %411 = arith.mulf %396, %410 : vector<8x8xbf16>
    %cst_199 = arith.constant dense<0.000000e+00> : vector<8x8xf32>
    %412 = tpu.matmul %411, %398, %cst_199 {dimension_numbers = #tpu.dot_dimension_numbers<[1], [0], [0], [1], [0, 0, 1, 1], [], []>} : vector<8x8xbf16>, vector<8x8xbf16>, vector<8x8xf32> -> vector<8x8xf32>
    %c1_i32_200 = arith.constant 1 : i32
    %413 = vector.broadcast %c1_i32_200 : i32 to vector<8x8xi32>
    %414 = arith.cmpi eq, %17, %413 : vector<8x8xi32>
    %cst_201 = arith.constant 0.000000e+00 : f32
    %415 = vector.broadcast %cst_201 : f32 to vector<8x8xf32>
    %416 = arith.select %414, %412, %415 : vector<8x8xi1>, vector<8x8xf32>
    %417 = arith.addf %408, %416 : vector<8x8xf32>
    %418 = vector.extract_strided_slice %22 {offsets = [2, 0], sizes = [1, 8], strides = [1, 1]} : vector<9x8xbf16> to vector<1x8xbf16>
    %419 = vector.broadcast %418 : vector<1x8xbf16> to vector<8x8xbf16>
    %420 = arith.mulf %396, %419 : vector<8x8xbf16>
    %cst_202 = arith.constant dense<0.000000e+00> : vector<8x8xf32>
    %421 = tpu.matmul %420, %398, %cst_202 {dimension_numbers = #tpu.dot_dimension_numbers<[1], [0], [0], [1], [0, 0, 1, 1], [], []>} : vector<8x8xbf16>, vector<8x8xbf16>, vector<8x8xf32> -> vector<8x8xf32>
    %c2_i32_203 = arith.constant 2 : i32
    %422 = vector.broadcast %c2_i32_203 : i32 to vector<8x8xi32>
    %423 = arith.cmpi eq, %17, %422 : vector<8x8xi32>
    %cst_204 = arith.constant 0.000000e+00 : f32
    %424 = vector.broadcast %cst_204 : f32 to vector<8x8xf32>
    %425 = arith.select %423, %421, %424 : vector<8x8xi1>, vector<8x8xf32>
    %426 = arith.addf %417, %425 : vector<8x8xf32>
    %427 = vector.extract_strided_slice %22 {offsets = [3, 0], sizes = [1, 8], strides = [1, 1]} : vector<9x8xbf16> to vector<1x8xbf16>
    %428 = vector.broadcast %427 : vector<1x8xbf16> to vector<8x8xbf16>
    %429 = arith.mulf %396, %428 : vector<8x8xbf16>
    %cst_205 = arith.constant dense<0.000000e+00> : vector<8x8xf32>
    %430 = tpu.matmul %429, %398, %cst_205 {dimension_numbers = #tpu.dot_dimension_numbers<[1], [0], [0], [1], [0, 0, 1, 1], [], []>} : vector<8x8xbf16>, vector<8x8xbf16>, vector<8x8xf32> -> vector<8x8xf32>
    %c3_i32_206 = arith.constant 3 : i32
    %431 = vector.broadcast %c3_i32_206 : i32 to vector<8x8xi32>
    %432 = arith.cmpi eq, %17, %431 : vector<8x8xi32>
    %cst_207 = arith.constant 0.000000e+00 : f32
    %433 = vector.broadcast %cst_207 : f32 to vector<8x8xf32>
    %434 = arith.select %432, %430, %433 : vector<8x8xi1>, vector<8x8xf32>
    %435 = arith.addf %426, %434 : vector<8x8xf32>
    %436 = vector.extract_strided_slice %22 {offsets = [4, 0], sizes = [1, 8], strides = [1, 1]} : vector<9x8xbf16> to vector<1x8xbf16>
    %437 = vector.broadcast %436 : vector<1x8xbf16> to vector<8x8xbf16>
    %438 = arith.mulf %396, %437 : vector<8x8xbf16>
    %cst_208 = arith.constant dense<0.000000e+00> : vector<8x8xf32>
    %439 = tpu.matmul %438, %398, %cst_208 {dimension_numbers = #tpu.dot_dimension_numbers<[1], [0], [0], [1], [0, 0, 1, 1], [], []>} : vector<8x8xbf16>, vector<8x8xbf16>, vector<8x8xf32> -> vector<8x8xf32>
    %c4_i32_209 = arith.constant 4 : i32
    %440 = vector.broadcast %c4_i32_209 : i32 to vector<8x8xi32>
    %441 = arith.cmpi eq, %17, %440 : vector<8x8xi32>
    %cst_210 = arith.constant 0.000000e+00 : f32
    %442 = vector.broadcast %cst_210 : f32 to vector<8x8xf32>
    %443 = arith.select %441, %439, %442 : vector<8x8xi1>, vector<8x8xf32>
    %444 = arith.addf %435, %443 : vector<8x8xf32>
    %445 = vector.extract_strided_slice %22 {offsets = [5, 0], sizes = [1, 8], strides = [1, 1]} : vector<9x8xbf16> to vector<1x8xbf16>
    %446 = vector.broadcast %445 : vector<1x8xbf16> to vector<8x8xbf16>
    %447 = arith.mulf %396, %446 : vector<8x8xbf16>
    %cst_211 = arith.constant dense<0.000000e+00> : vector<8x8xf32>
    %448 = tpu.matmul %447, %398, %cst_211 {dimension_numbers = #tpu.dot_dimension_numbers<[1], [0], [0], [1], [0, 0, 1, 1], [], []>} : vector<8x8xbf16>, vector<8x8xbf16>, vector<8x8xf32> -> vector<8x8xf32>
    %c5_i32_212 = arith.constant 5 : i32
    %449 = vector.broadcast %c5_i32_212 : i32 to vector<8x8xi32>
    %450 = arith.cmpi eq, %17, %449 : vector<8x8xi32>
    %cst_213 = arith.constant 0.000000e+00 : f32
    %451 = vector.broadcast %cst_213 : f32 to vector<8x8xf32>
    %452 = arith.select %450, %448, %451 : vector<8x8xi1>, vector<8x8xf32>
    %453 = arith.addf %444, %452 : vector<8x8xf32>
    %454 = vector.extract_strided_slice %22 {offsets = [6, 0], sizes = [1, 8], strides = [1, 1]} : vector<9x8xbf16> to vector<1x8xbf16>
    %455 = vector.broadcast %454 : vector<1x8xbf16> to vector<8x8xbf16>
    %456 = arith.mulf %396, %455 : vector<8x8xbf16>
    %cst_214 = arith.constant dense<0.000000e+00> : vector<8x8xf32>
    %457 = tpu.matmul %456, %398, %cst_214 {dimension_numbers = #tpu.dot_dimension_numbers<[1], [0], [0], [1], [0, 0, 1, 1], [], []>} : vector<8x8xbf16>, vector<8x8xbf16>, vector<8x8xf32> -> vector<8x8xf32>
    %c6_i32_215 = arith.constant 6 : i32
    %458 = vector.broadcast %c6_i32_215 : i32 to vector<8x8xi32>
    %459 = arith.cmpi eq, %17, %458 : vector<8x8xi32>
    %cst_216 = arith.constant 0.000000e+00 : f32
    %460 = vector.broadcast %cst_216 : f32 to vector<8x8xf32>
    %461 = arith.select %459, %457, %460 : vector<8x8xi1>, vector<8x8xf32>
    %462 = arith.addf %453, %461 : vector<8x8xf32>
    %463 = vector.extract_strided_slice %22 {offsets = [7, 0], sizes = [1, 8], strides = [1, 1]} : vector<9x8xbf16> to vector<1x8xbf16>
    %464 = vector.broadcast %463 : vector<1x8xbf16> to vector<8x8xbf16>
    %465 = arith.mulf %396, %464 : vector<8x8xbf16>
    %cst_217 = arith.constant dense<0.000000e+00> : vector<8x8xf32>
    %466 = tpu.matmul %465, %398, %cst_217 {dimension_numbers = #tpu.dot_dimension_numbers<[1], [0], [0], [1], [0, 0, 1, 1], [], []>} : vector<8x8xbf16>, vector<8x8xbf16>, vector<8x8xf32> -> vector<8x8xf32>
    %c7_i32_218 = arith.constant 7 : i32
    %467 = vector.broadcast %c7_i32_218 : i32 to vector<8x8xi32>
    %468 = arith.cmpi eq, %17, %467 : vector<8x8xi32>
    %cst_219 = arith.constant 0.000000e+00 : f32
    %469 = vector.broadcast %cst_219 : f32 to vector<8x8xf32>
    %470 = arith.select %468, %466, %469 : vector<8x8xi1>, vector<8x8xf32>
    %471 = arith.addf %462, %470 : vector<8x8xf32>
    %472 = vector.extract_strided_slice %22 {offsets = [8, 0], sizes = [1, 8], strides = [1, 1]} : vector<9x8xbf16> to vector<1x8xbf16>
    %473 = vector.broadcast %472 : vector<1x8xbf16> to vector<8x8xbf16>
    %474 = arith.mulf %396, %473 : vector<8x8xbf16>
    %cst_220 = arith.constant dense<0.000000e+00> : vector<8x8xf32>
    %475 = tpu.matmul %474, %398, %cst_220 {dimension_numbers = #tpu.dot_dimension_numbers<[1], [0], [0], [1], [0, 0, 1, 1], [], []>} : vector<8x8xbf16>, vector<8x8xbf16>, vector<8x8xf32> -> vector<8x8xf32>
    %c8_i32_221 = arith.constant 8 : i32
    %476 = vector.broadcast %c8_i32_221 : i32 to vector<8x8xi32>
    %477 = arith.cmpi eq, %17, %476 : vector<8x8xi32>
    %cst_222 = arith.constant 0.000000e+00 : f32
    %478 = vector.broadcast %cst_222 : f32 to vector<8x8xf32>
    %479 = arith.select %477, %475, %478 : vector<8x8xi1>, vector<8x8xf32>
    %480 = arith.addf %471, %479 : vector<8x8xf32>
    %cst_223 = arith.constant 0.353553385 : f32
    %481 = vector.broadcast %cst_223 : f32 to vector<8x8xf32>
    %482 = arith.mulf %480, %481 : vector<8x8xf32>
    %cst_224 = arith.constant -1.000000e+10 : f32
    %483 = vector.broadcast %cst_224 : f32 to vector<8x8xf32>
    %484 = arith.select %21, %482, %483 : vector<8x8xi1>, vector<8x8xf32>
    %c3_225 = arith.constant 3 : index
    %c0_226 = arith.constant 0 : index
    %c0_227 = arith.constant 0 : index
    %485 = vector.load %arg9[%c3_225, %c0_226, %c0_227] : memref<4x8x1xf32, #tpu.memory_space<vmem>>, vector<1x8x1xf32>
    %486 = vector.shape_cast %485 : vector<1x8x1xf32> to vector<8x1xf32>
    %cst_228 = arith.constant dense<0xFF800000> : vector<8xf32>
    %487 = vector.multi_reduction <maximumf>, %484, %cst_228 [1] : vector<8x8xf32> to vector<8xf32>
    %488 = vector.shape_cast %487 : vector<8xf32> to vector<8x1xf32>
    %489 = arith.maximumf %486, %488 : vector<8x1xf32>
    %490 = arith.subf %486, %489 : vector<8x1xf32>
    %491 = math.exp %490 : vector<8x1xf32>
    %492 = vector.broadcast %489 : vector<8x1xf32> to vector<8x8xf32>
    %493 = arith.subf %484, %492 : vector<8x8xf32>
    %494 = math.exp %493 : vector<8x8xf32>
    %c3_229 = arith.constant 3 : index
    %c0_230 = arith.constant 0 : index
    %c0_231 = arith.constant 0 : index
    %495 = vector.load %arg10[%c3_229, %c0_230, %c0_231] : memref<4x8x1xf32, #tpu.memory_space<vmem>>, vector<1x8x1xf32>
    %496 = vector.shape_cast %495 : vector<1x8x1xf32> to vector<8x1xf32>
    %497 = arith.mulf %491, %496 : vector<8x1xf32>
    %cst_232 = arith.constant dense<0.000000e+00> : vector<8xf32>
    %498 = vector.multi_reduction <add>, %494, %cst_232 [1] : vector<8x8xf32> to vector<8xf32>
    %499 = vector.shape_cast %498 : vector<8xf32> to vector<8x1xf32>
    %500 = arith.addf %497, %499 : vector<8x1xf32>
    %c3_233 = arith.constant 3 : index
    %c0_234 = arith.constant 0 : index
    %c0_235 = arith.constant 0 : index
    %501 = vector.load %arg10[%c3_233, %c0_234, %c0_235] : memref<4x8x1xf32, #tpu.memory_space<vmem>>, vector<1x8x1xf32>
    %502 = vector.shape_cast %501 : vector<1x8x1xf32> to vector<8x1xf32>
    %503 = vector.shape_cast %500 : vector<8x1xf32> to vector<1x8x1xf32>
    tpu.vector_store %arg10[%c3_233, %c0_234, %c0_235], %503 {strides = array<i32>} : memref<4x8x1xf32, #tpu.memory_space<vmem>>, vector<1x8x1xf32>,
    %504 = arith.truncf %494 : vector<8x8xf32> to vector<8x8xbf16>
    %c0_236 = arith.constant 0 : index
    %c3_237 = arith.constant 3 : index
    %c0_238 = arith.constant 0 : index
    %c0_239 = arith.constant 0 : index
    %505 = vector.load %arg6[%c0_236, %c3_237, %c0_238, %c0_239] : memref<1x4x8x8xbf16, #tpu.memory_space<vmem>>, vector<1x1x8x8xbf16>
    %506 = vector.shape_cast %505 : vector<1x1x8x8xbf16> to vector<8x8xbf16>
    %cst_240 = arith.constant dense<0.000000e+00> : vector<8x8xf32>
    %507 = tpu.matmul %504, %506, %cst_240 {dimension_numbers = #tpu.dot_dimension_numbers<[1], [0], [0], [1], [0, 0, 1, 1], [], []>} : vector<8x8xbf16>, vector<8x8xbf16>, vector<8x8xf32> -> vector<8x8xf32>
    %c3_241 = arith.constant 3 : index
    %c0_242 = arith.constant 0 : index
    %c0_243 = arith.constant 0 : index
    %508 = vector.load %arg11[%c3_241, %c0_242, %c0_243] : memref<4x8x8xf32, #tpu.memory_space<vmem>>, vector<1x8x8xf32>
    %509 = vector.shape_cast %508 : vector<1x8x8xf32> to vector<8x8xf32>
    %510 = vector.broadcast %491 : vector<8x1xf32> to vector<8x8xf32>
    %511 = arith.mulf %510, %509 : vector<8x8xf32>
    %512 = arith.addf %511, %507 : vector<8x8xf32>
    %c3_244 = arith.constant 3 : index
    %c0_245 = arith.constant 0 : index
    %c0_246 = arith.constant 0 : index
    %513 = vector.load %arg11[%c3_244, %c0_245, %c0_246] : memref<4x8x8xf32, #tpu.memory_space<vmem>>, vector<1x8x8xf32>
    %514 = vector.shape_cast %513 : vector<1x8x8xf32> to vector<8x8xf32>
    %515 = vector.shape_cast %512 : vector<8x8xf32> to vector<1x8x8xf32>
    tpu.vector_store %arg11[%c3_244, %c0_245, %c0_246], %515 {strides = array<i32>} : memref<4x8x8xf32, #tpu.memory_space<vmem>>, vector<1x8x8xf32>,
    %c3_247 = arith.constant 3 : index
    %c0_248 = arith.constant 0 : index
    %c0_249 = arith.constant 0 : index
    %516 = vector.load %arg9[%c3_247, %c0_248, %c0_249] : memref<4x8x1xf32, #tpu.memory_space<vmem>>, vector<1x8x1xf32>
    %517 = vector.shape_cast %516 : vector<1x8x1xf32> to vector<8x1xf32>
    %518 = vector.shape_cast %489 : vector<8x1xf32> to vector<1x8x1xf32>
    tpu.vector_store %arg9[%c3_247, %c0_248, %c0_249], %518 {strides = array<i32>} : memref<4x8x1xf32, #tpu.memory_space<vmem>>, vector<1x8x1xf32>,
    %c0_i32_250 = arith.constant 0 : i32
    %519 = arith.cmpi eq, %arg2, %c0_i32_250 : i32
    %520 = arith.extui %519 : i1 to i32
    %c0_i32_251 = arith.constant 0 : i32
    %521 = arith.cmpi ne, %520, %c0_i32_251 : i32
    scf.if %521 {
      %c0_252 = arith.constant 0 : index
      %c0_253 = arith.constant 0 : index
      %c0_254 = arith.constant 0 : index
      %522 = vector.load %arg10[%c0_252, %c0_253, %c0_254] : memref<4x8x1xf32, #tpu.memory_space<vmem>>, vector<1x8x1xf32>
      %523 = vector.shape_cast %522 : vector<1x8x1xf32> to vector<8x1xf32>
      %524 = tpu.reciprocal %523 {approx = true} : vector<8x1xf32> -> vector<8x1xf32>
      %c0_255 = arith.constant 0 : index
      %c0_256 = arith.constant 0 : index
      %c0_257 = arith.constant 0 : index
      %525 = vector.load %arg11[%c0_255, %c0_256, %c0_257] : memref<4x8x8xf32, #tpu.memory_space<vmem>>, vector<1x8x8xf32>
      %526 = vector.shape_cast %525 : vector<1x8x8xf32> to vector<8x8xf32>
      %527 = vector.broadcast %524 : vector<8x1xf32> to vector<8x8xf32>
      %528 = arith.mulf %526, %527 : vector<8x8xf32>
      %529 = arith.truncf %528 : vector<8x8xf32> to vector<8x8xbf16>
      %c1_258 = arith.constant 1 : index
      %c0_259 = arith.constant 0 : index
      %c0_260 = arith.constant 0 : index
      %530 = vector.load %arg10[%c1_258, %c0_259, %c0_260] : memref<4x8x1xf32, #tpu.memory_space<vmem>>, vector<1x8x1xf32>
      %531 = vector.shape_cast %530 : vector<1x8x1xf32> to vector<8x1xf32>
      %532 = tpu.reciprocal %531 {approx = true} : vector<8x1xf32> -> vector<8x1xf32>
      %c1_261 = arith.constant 1 : index
      %c0_262 = arith.constant 0 : index
      %c0_263 = arith.constant 0 : index
      %533 = vector.load %arg11[%c1_261, %c0_262, %c0_263] : memref<4x8x8xf32, #tpu.memory_space<vmem>>, vector<1x8x8xf32>
      %534 = vector.shape_cast %533 : vector<1x8x8xf32> to vector<8x8xf32>
      %535 = vector.broadcast %532 : vector<8x1xf32> to vector<8x8xf32>
      %536 = arith.mulf %534, %535 : vector<8x8xf32>
      %537 = arith.truncf %536 : vector<8x8xf32> to vector<8x8xbf16>
      %c2_264 = arith.constant 2 : index
      %c0_265 = arith.constant 0 : index
      %c0_266 = arith.constant 0 : index
      %538 = vector.load %arg10[%c2_264, %c0_265, %c0_266] : memref<4x8x1xf32, #tpu.memory_space<vmem>>, vector<1x8x1xf32>
      %539 = vector.shape_cast %538 : vector<1x8x1xf32> to vector<8x1xf32>
      %540 = tpu.reciprocal %539 {approx = true} : vector<8x1xf32> -> vector<8x1xf32>
      %c2_267 = arith.constant 2 : index
      %c0_268 = arith.constant 0 : index
      %c0_269 = arith.constant 0 : index
      %541 = vector.load %arg11[%c2_267, %c0_268, %c0_269] : memref<4x8x8xf32, #tpu.memory_space<vmem>>, vector<1x8x8xf32>
      %542 = vector.shape_cast %541 : vector<1x8x8xf32> to vector<8x8xf32>
      %543 = vector.broadcast %540 : vector<8x1xf32> to vector<8x8xf32>
      %544 = arith.mulf %542, %543 : vector<8x8xf32>
      %545 = arith.truncf %544 : vector<8x8xf32> to vector<8x8xbf16>
      %c3_270 = arith.constant 3 : index
      %c0_271 = arith.constant 0 : index
      %c0_272 = arith.constant 0 : index
      %546 = vector.load %arg10[%c3_270, %c0_271, %c0_272] : memref<4x8x1xf32, #tpu.memory_space<vmem>>, vector<1x8x1xf32>
      %547 = vector.shape_cast %546 : vector<1x8x1xf32> to vector<8x1xf32>
      %548 = tpu.reciprocal %547 {approx = true} : vector<8x1xf32> -> vector<8x1xf32>
      %c3_273 = arith.constant 3 : index
      %c0_274 = arith.constant 0 : index
      %c0_275 = arith.constant 0 : index
      %549 = vector.load %arg11[%c3_273, %c0_274, %c0_275] : memref<4x8x8xf32, #tpu.memory_space<vmem>>, vector<1x8x8xf32>
      %550 = vector.shape_cast %549 : vector<1x8x8xf32> to vector<8x8xf32>
      %551 = vector.broadcast %548 : vector<8x1xf32> to vector<8x8xf32>
      %552 = arith.mulf %550, %551 : vector<8x8xf32>
      %553 = arith.truncf %552 : vector<8x8xf32> to vector<8x8xbf16>
      %554 = tpu.concatenate %529, %537, %545, %553 in 1 : vector<8x8xbf16>, vector<8x8xbf16>, vector<8x8xbf16>, vector<8x8xbf16> -> vector<8x32xbf16>
      %c0_276 = arith.constant 0 : index
      %c0_277 = arith.constant 0 : index
      %c0_278 = arith.constant 0 : index
      %555 = vector.load %arg8[%c0_276, %c0_277, %c0_278] : memref<1x8x32xbf16, #tpu.memory_space<vmem>>, vector<1x8x32xbf16>
      %556 = vector.shape_cast %555 : vector<1x8x32xbf16> to vector<8x32xbf16>
      %557 = vector.shape_cast %554 : vector<8x32xbf16> to vector<1x8x32xbf16>
      tpu.vector_store %arg8[%c0_276, %c0_277, %c0_278], %557 {strides = array<i32>} : memref<1x8x32xbf16, #tpu.memory_space<vmem>>, vector<1x8x32xbf16>,
    } else {
    }
    return
  }
  func.func @transform_0(%arg0: i32, %arg1: i32, %arg2: i32) -> (i32, i32) {
    %c0_i32 = arith.constant 0 : i32
    %c0_i32_0 = arith.constant 0 : i32
    %c0_i32_1 = arith.constant 0 : i32
    return %c0_i32, %c0_i32_0 : i32, i32
  }
  func.func @transform_1(%arg0: i32, %arg1: i32, %arg2: i32) -> (i32, i32, i32, i32) {
    %c0_i32 = arith.constant 0 : i32
    %c0_i32_0 = arith.constant 0 : i32
    %c0_i32_1 = arith.constant 0 : i32
    return %arg0, %c0_i32, %arg1, %c0_i32_0 : i32, i32, i32, i32
  }
  func.func @transform_2(%arg0: i32, %arg1: i32, %arg2: i32) -> (i32, i32, i32, i32) {
    %c0_i32 = arith.constant 0 : i32
    %c0_i32_0 = arith.constant 0 : i32
    %c0_i32_1 = arith.constant 0 : i32
    return %arg0, %c0_i32, %c0_i32_0, %arg2 : i32, i32, i32, i32
  }
  func.func @transform_3(%arg0: i32, %arg1: i32, %arg2: i32) -> (i32, i32, i32, i32) {
    %c0_i32 = arith.constant 0 : i32
    %c0_i32_0 = arith.constant 0 : i32
    %c0_i32_1 = arith.constant 0 : i32
    return %arg0, %c0_i32, %arg2, %c0_i32_0 : i32, i32, i32, i32
  }
  func.func @transform_4(%arg0: i32, %arg1: i32, %arg2: i32) -> (i32, i32, i32) {
    %c0_i32 = arith.constant 0 : i32
    return %arg0, %arg1, %arg2 : i32, i32, i32
  }
  func.func @transform_5(%arg0: i32, %arg1: i32, %arg2: i32) -> (i32, i32, i32) {
    %c0_i32 = arith.constant 0 : i32
    %c0_i32_0 = arith.constant 0 : i32
    return %arg0, %arg1, %c0_i32 : i32, i32, i32
  }
}

module attributes {stable_mosaic.version = 11 : i64} {
  func.func @_linear_kernel(%arg0: i32, %arg1: i32, %arg2: i32, %arg3: memref<16x32xbf16, #tpu.memory_space<vmem>>, %arg4: memref<32x128xbf16, #tpu.memory_space<vmem>>, %arg5: memref<1x128xf32, #tpu.memory_space<vmem>>, %arg6: memref<16x128xbf16, #tpu.memory_space<vmem>>, %arg7: memref<16x128xf32, #tpu.memory_space<vmem>>) attributes {dimension_semantics = [#tpu.dimension_semantics<parallel>, #tpu.dimension_semantics<parallel>, #tpu.dimension_semantics<arbitrary>], iteration_bounds = array<i64: 1, 1, 1>, scalar_prefetch = 0 : i64, scratch_operands = 1 : i64, tpu.core_type = #tpu.core_type<tc>, window_params = [{transform_indices = @transform_0, window_bounds = array<i64: 16, 32>}, {transform_indices = @transform_1, window_bounds = array<i64: 32, 128>}, {transform_indices = @transform_2, window_bounds = array<i64: 1, 128>}, {transform_indices = @transform_3, window_bounds = array<i64: 16, 128>}]} {
    %c0_i32 = arith.constant 0 : i32
    %0 = arith.cmpi eq, %arg2, %c0_i32 : i32
    %1 = arith.extui %0 : i1 to i32
    %c0_i32_0 = arith.constant 0 : i32
    %2 = arith.cmpi ne, %1, %c0_i32_0 : i32
    scf.if %2 {
      %cst_10 = arith.constant 0.000000e+00 : f32
      %12 = vector.broadcast %cst_10 : f32 to vector<16x128xf32>
      %c0_11 = arith.constant 0 : index
      %c0_12 = arith.constant 0 : index
      %13 = vector.load %arg7[%c0_11, %c0_12] : memref<16x128xf32, #tpu.memory_space<vmem>>, vector<16x128xf32>
      tpu.vector_store %arg7[%c0_11, %c0_12], %12 {strides = array<i32>} : memref<16x128xf32, #tpu.memory_space<vmem>>, vector<16x128xf32>,
    } else {
    }
    %c0 = arith.constant 0 : index
    %c0_1 = arith.constant 0 : index
    %3 = vector.load %arg7[%c0, %c0_1] : memref<16x128xf32, #tpu.memory_space<vmem>>, vector<16x128xf32>
    %c0_2 = arith.constant 0 : index
    %c0_3 = arith.constant 0 : index
    %4 = vector.load %arg3[%c0_2, %c0_3] : memref<16x32xbf16, #tpu.memory_space<vmem>>, vector<16x32xbf16>
    %c0_4 = arith.constant 0 : index
    %c0_5 = arith.constant 0 : index
    %5 = vector.load %arg4[%c0_4, %c0_5] : memref<32x128xbf16, #tpu.memory_space<vmem>>, vector<32x128xbf16>
    %cst = arith.constant dense<0.000000e+00> : vector<16x128xf32>
    %6 = tpu.matmul %4, %5, %cst {dimension_numbers = #tpu.dot_dimension_numbers<[1], [0], [0], [1], [0, 0, 1, 1], [], []>} : vector<16x32xbf16>, vector<32x128xbf16>, vector<16x128xf32> -> vector<16x128xf32>
    %7 = arith.addf %3, %6 : vector<16x128xf32>
    %c0_6 = arith.constant 0 : index
    %c0_7 = arith.constant 0 : index
    %8 = vector.load %arg7[%c0_6, %c0_7] : memref<16x128xf32, #tpu.memory_space<vmem>>, vector<16x128xf32>
    tpu.vector_store %arg7[%c0_6, %c0_7], %7 {strides = array<i32>} : memref<16x128xf32, #tpu.memory_space<vmem>>, vector<16x128xf32>,
    %c0_i32_8 = arith.constant 0 : i32
    %9 = arith.cmpi eq, %arg2, %c0_i32_8 : i32
    %10 = arith.extui %9 : i1 to i32
    %c0_i32_9 = arith.constant 0 : i32
    %11 = arith.cmpi ne, %10, %c0_i32_9 : i32
    scf.if %11 {
      %c0_10 = arith.constant 0 : index
      %c0_11 = arith.constant 0 : index
      %12 = vector.load %arg7[%c0_10, %c0_11] : memref<16x128xf32, #tpu.memory_space<vmem>>, vector<16x128xf32>
      %c0_12 = arith.constant 0 : index
      %c0_13 = arith.constant 0 : index
      %13 = vector.load %arg5[%c0_12, %c0_13] : memref<1x128xf32, #tpu.memory_space<vmem>>, vector<1x128xf32>
      %14 = vector.broadcast %13 : vector<1x128xf32> to vector<16x128xf32>
      %15 = arith.addf %12, %14 : vector<16x128xf32>
      %cst_14 = arith.constant 0.000000e+00 : f32
      %16 = vector.broadcast %cst_14 : f32 to vector<16x128xf32>
      %17 = arith.maximumf %15, %16 : vector<16x128xf32>
      %18 = arith.truncf %17 : vector<16x128xf32> to vector<16x128xbf16>
      %c0_15 = arith.constant 0 : index
      %c0_16 = arith.constant 0 : index
      %19 = vector.load %arg6[%c0_15, %c0_16] : memref<16x128xbf16, #tpu.memory_space<vmem>>, vector<16x128xbf16>
      tpu.vector_store %arg6[%c0_15, %c0_16], %18 {strides = array<i32>} : memref<16x128xbf16, #tpu.memory_space<vmem>>, vector<16x128xbf16>,
    } else {
    }
    return
  }
  func.func @transform_0(%arg0: i32, %arg1: i32, %arg2: i32) -> (i32, i32) {
    %c0_i32 = arith.constant 0 : i32
    return %arg0, %arg2 : i32, i32
  }
  func.func @transform_1(%arg0: i32, %arg1: i32, %arg2: i32) -> (i32, i32) {
    %c0_i32 = arith.constant 0 : i32
    return %arg2, %arg1 : i32, i32
  }
  func.func @transform_2(%arg0: i32, %arg1: i32, %arg2: i32) -> (i32, i32) {
    %c0_i32 = arith.constant 0 : i32
    %c0_i32_0 = arith.constant 0 : i32
    return %c0_i32, %arg1 : i32, i32
  }
  func.func @transform_3(%arg0: i32, %arg1: i32, %arg2: i32) -> (i32, i32) {
    %c0_i32 = arith.constant 0 : i32
    return %arg0, %arg1 : i32, i32
  }
}

module attributes {stable_mosaic.version = 11 : i64} {
  func.func @_linear_kernel(%arg0: i32, %arg1: i32, %arg2: i32, %arg3: memref<16x128xbf16, #tpu.memory_space<vmem>>, %arg4: memref<128x128xbf16, #tpu.memory_space<vmem>>, %arg5: memref<1x128xf32, #tpu.memory_space<vmem>>, %arg6: memref<16x128xbf16, #tpu.memory_space<vmem>>, %arg7: memref<16x128xf32, #tpu.memory_space<vmem>>) attributes {dimension_semantics = [#tpu.dimension_semantics<parallel>, #tpu.dimension_semantics<parallel>, #tpu.dimension_semantics<arbitrary>], iteration_bounds = array<i64: 1, 1, 1>, scalar_prefetch = 0 : i64, scratch_operands = 1 : i64, tpu.core_type = #tpu.core_type<tc>, window_params = [{transform_indices = @transform_0, window_bounds = array<i64: 16, 128>}, {transform_indices = @transform_1, window_bounds = array<i64: 128, 128>}, {transform_indices = @transform_2, window_bounds = array<i64: 1, 128>}, {transform_indices = @transform_3, window_bounds = array<i64: 16, 128>}]} {
    %c0_i32 = arith.constant 0 : i32
    %0 = arith.cmpi eq, %arg2, %c0_i32 : i32
    %1 = arith.extui %0 : i1 to i32
    %c0_i32_0 = arith.constant 0 : i32
    %2 = arith.cmpi ne, %1, %c0_i32_0 : i32
    scf.if %2 {
      %cst_10 = arith.constant 0.000000e+00 : f32
      %12 = vector.broadcast %cst_10 : f32 to vector<16x128xf32>
      %c0_11 = arith.constant 0 : index
      %c0_12 = arith.constant 0 : index
      %13 = vector.load %arg7[%c0_11, %c0_12] : memref<16x128xf32, #tpu.memory_space<vmem>>, vector<16x128xf32>
      tpu.vector_store %arg7[%c0_11, %c0_12], %12 {strides = array<i32>} : memref<16x128xf32, #tpu.memory_space<vmem>>, vector<16x128xf32>,
    } else {
    }
    %c0 = arith.constant 0 : index
    %c0_1 = arith.constant 0 : index
    %3 = vector.load %arg7[%c0, %c0_1] : memref<16x128xf32, #tpu.memory_space<vmem>>, vector<16x128xf32>
    %c0_2 = arith.constant 0 : index
    %c0_3 = arith.constant 0 : index
    %4 = vector.load %arg3[%c0_2, %c0_3] : memref<16x128xbf16, #tpu.memory_space<vmem>>, vector<16x128xbf16>
    %c0_4 = arith.constant 0 : index
    %c0_5 = arith.constant 0 : index
    %5 = vector.load %arg4[%c0_4, %c0_5] : memref<128x128xbf16, #tpu.memory_space<vmem>>, vector<128x128xbf16>
    %cst = arith.constant dense<0.000000e+00> : vector<16x128xf32>
    %6 = tpu.matmul %4, %5, %cst {dimension_numbers = #tpu.dot_dimension_numbers<[1], [0], [0], [1], [0, 0, 1, 1], [], []>} : vector<16x128xbf16>, vector<128x128xbf16>, vector<16x128xf32> -> vector<16x128xf32>
    %7 = arith.addf %3, %6 : vector<16x128xf32>
    %c0_6 = arith.constant 0 : index
    %c0_7 = arith.constant 0 : index
    %8 = vector.load %arg7[%c0_6, %c0_7] : memref<16x128xf32, #tpu.memory_space<vmem>>, vector<16x128xf32>
    tpu.vector_store %arg7[%c0_6, %c0_7], %7 {strides = array<i32>} : memref<16x128xf32, #tpu.memory_space<vmem>>, vector<16x128xf32>,
    %c0_i32_8 = arith.constant 0 : i32
    %9 = arith.cmpi eq, %arg2, %c0_i32_8 : i32
    %10 = arith.extui %9 : i1 to i32
    %c0_i32_9 = arith.constant 0 : i32
    %11 = arith.cmpi ne, %10, %c0_i32_9 : i32
    scf.if %11 {
      %c0_10 = arith.constant 0 : index
      %c0_11 = arith.constant 0 : index
      %12 = vector.load %arg7[%c0_10, %c0_11] : memref<16x128xf32, #tpu.memory_space<vmem>>, vector<16x128xf32>
      %c0_12 = arith.constant 0 : index
      %c0_13 = arith.constant 0 : index
      %13 = vector.load %arg5[%c0_12, %c0_13] : memref<1x128xf32, #tpu.memory_space<vmem>>, vector<1x128xf32>
      %14 = vector.broadcast %13 : vector<1x128xf32> to vector<16x128xf32>
      %15 = arith.addf %12, %14 : vector<16x128xf32>
      %16 = arith.truncf %15 : vector<16x128xf32> to vector<16x128xbf16>
      %c0_14 = arith.constant 0 : index
      %c0_15 = arith.constant 0 : index
      %17 = vector.load %arg6[%c0_14, %c0_15] : memref<16x128xbf16, #tpu.memory_space<vmem>>, vector<16x128xbf16>
      tpu.vector_store %arg6[%c0_14, %c0_15], %16 {strides = array<i32>} : memref<16x128xbf16, #tpu.memory_space<vmem>>, vector<16x128xbf16>,
    } else {
    }
    return
  }
  func.func @transform_0(%arg0: i32, %arg1: i32, %arg2: i32) -> (i32, i32) {
    %c0_i32 = arith.constant 0 : i32
    return %arg0, %arg2 : i32, i32
  }
  func.func @transform_1(%arg0: i32, %arg1: i32, %arg2: i32) -> (i32, i32) {
    %c0_i32 = arith.constant 0 : i32
    return %arg2, %arg1 : i32, i32
  }
  func.func @transform_2(%arg0: i32, %arg1: i32, %arg2: i32) -> (i32, i32) {
    %c0_i32 = arith.constant 0 : i32
    %c0_i32_0 = arith.constant 0 : i32
    return %c0_i32, %arg1 : i32, i32
  }
  func.func @transform_3(%arg0: i32, %arg1: i32, %arg2: i32) -> (i32, i32) {
    %c0_i32 = arith.constant 0 : i32
    return %arg0, %arg1 : i32, i32
  }
}

module attributes {stable_mosaic.version = 11 : i64} {
  func.func @_add_layernorm_kernel(%arg0: i32, %arg1: memref<16x32xbf16, #tpu.memory_space<vmem>>, %arg2: memref<16x32xbf16, #tpu.memory_space<vmem>>, %arg3: memref<1x32xf32, #tpu.memory_space<vmem>>, %arg4: memref<1x32xf32, #tpu.memory_space<vmem>>, %arg5: memref<16x32xbf16, #tpu.memory_space<vmem>>) attributes {dimension_semantics = [#tpu.dimension_semantics<parallel>], iteration_bounds = array<i64: 1>, scalar_prefetch = 0 : i64, scratch_operands = 0 : i64, tpu.core_type = #tpu.core_type<tc>, window_params = [{transform_indices = @transform_0, window_bounds = array<i64: 16, 32>}, {transform_indices = @transform_1, window_bounds = array<i64: 16, 32>}, {pipeline_mode = #tpu.pipeline_mode<synchronous>, transform_indices = @transform_2, window_bounds = array<i64: 1, 32>}, {pipeline_mode = #tpu.pipeline_mode<synchronous>, transform_indices = @transform_3, window_bounds = array<i64: 1, 32>}, {transform_indices = @transform_4, window_bounds = array<i64: 16, 32>}]} {
    %c0 = arith.constant 0 : index
    %c0_0 = arith.constant 0 : index
    %0 = vector.load %arg1[%c0, %c0_0] : memref<16x32xbf16, #tpu.memory_space<vmem>>, vector<16x32xbf16>
    %1 = arith.extf %0 : vector<16x32xbf16> to vector<16x32xf32>
    %c0_1 = arith.constant 0 : index
    %c0_2 = arith.constant 0 : index
    %2 = vector.load %arg2[%c0_1, %c0_2] : memref<16x32xbf16, #tpu.memory_space<vmem>>, vector<16x32xbf16>
    %3 = arith.extf %2 : vector<16x32xbf16> to vector<16x32xf32>
    %4 = arith.addf %1, %3 : vector<16x32xf32>
    %cst = arith.constant dense<0.000000e+00> : vector<16xf32>
    %5 = vector.multi_reduction <add>, %4, %cst [1] : vector<16x32xf32> to vector<16xf32>
    %6 = vector.shape_cast %5 : vector<16xf32> to vector<16x1xf32>
    %cst_3 = arith.constant 3.200000e+01 : f32
    %7 = vector.broadcast %cst_3 : f32 to vector<16x1xf32>
    %8 = arith.divf %6, %7 : vector<16x1xf32>
    %9 = vector.broadcast %8 : vector<16x1xf32> to vector<16x32xf32>
    %10 = arith.subf %4, %9 : vector<16x32xf32>
    %11 = arith.mulf %10, %10 : vector<16x32xf32>
    %cst_4 = arith.constant dense<0.000000e+00> : vector<16xf32>
    %12 = vector.multi_reduction <add>, %11, %cst_4 [1] : vector<16x32xf32> to vector<16xf32>
    %13 = vector.shape_cast %12 : vector<16xf32> to vector<16x1xf32>
    %cst_5 = arith.constant 3.200000e+01 : f32
    %14 = vector.broadcast %cst_5 : f32 to vector<16x1xf32>
    %15 = arith.divf %13, %14 : vector<16x1xf32>
    %16 = vector.broadcast %8 : vector<16x1xf32> to vector<16x32xf32>
    %17 = arith.subf %4, %16 : vector<16x32xf32>
    %cst_6 = arith.constant 9.99999974E-6 : f32
    %18 = vector.broadcast %cst_6 : f32 to vector<16x1xf32>
    %19 = arith.addf %15, %18 : vector<16x1xf32>
    %20 = math.rsqrt %19 : vector<16x1xf32>
    %21 = vector.broadcast %20 : vector<16x1xf32> to vector<16x32xf32>
    %22 = arith.mulf %17, %21 : vector<16x32xf32>
    %c0_7 = arith.constant 0 : index
    %c0_8 = arith.constant 0 : index
    %23 = vector.load %arg3[%c0_7, %c0_8] : memref<1x32xf32, #tpu.memory_space<vmem>>, vector<1x32xf32>
    %24 = vector.broadcast %23 : vector<1x32xf32> to vector<16x32xf32>
    %25 = arith.mulf %22, %24 : vector<16x32xf32>
    %c0_9 = arith.constant 0 : index
    %c0_10 = arith.constant 0 : index
    %26 = vector.load %arg4[%c0_9, %c0_10] : memref<1x32xf32, #tpu.memory_space<vmem>>, vector<1x32xf32>
    %27 = vector.broadcast %26 : vector<1x32xf32> to vector<16x32xf32>
    %28 = arith.addf %25, %27 : vector<16x32xf32>
    %29 = arith.truncf %28 : vector<16x32xf32> to vector<16x32xbf16>
    %c0_11 = arith.constant 0 : index
    %c0_12 = arith.constant 0 : index
    %30 = vector.load %arg5[%c0_11, %c0_12] : memref<16x32xbf16, #tpu.memory_space<vmem>>, vector<16x32xbf16>
    tpu.vector_store %arg5[%c0_11, %c0_12], %29 {strides = array<i32>} : memref<16x32xbf16, #tpu.memory_space<vmem>>, vector<16x32xbf16>,
    return
  }
  func.func @transform_0(%arg0: i32) -> (i32, i32) {
    %c0_i32 = arith.constant 0 : i32
    %c0_i32_0 = arith.constant 0 : i32
    return %arg0, %c0_i32 : i32, i32
  }
  func.func @transform_1(%arg0: i32) -> (i32, i32) {
    %c0_i32 = arith.constant 0 : i32
    %c0_i32_0 = arith.constant 0 : i32
    return %arg0, %c0_i32 : i32, i32
  }
  func.func @transform_2(%arg0: i32) -> (i32, i32) {
    %c0_i32 = arith.constant 0 : i32
    %c0_i32_0 = arith.constant 0 : i32
    %c0_i32_1 = arith.constant 0 : i32
    return %c0_i32, %c0_i32_0 : i32, i32
  }
  func.func @transform_3(%arg0: i32) -> (i32, i32) {
    %c0_i32 = arith.constant 0 : i32
    %c0_i32_0 = arith.constant 0 : i32
    %c0_i32_1 = arith.constant 0 : i32
    return %c0_i32, %c0_i32_0 : i32, i32
  }
  func.func @transform_4(%arg0: i32) -> (i32, i32) {
    %c0_i32 = arith.constant 0 : i32
    %c0_i32_0 = arith.constant 0 : i32
    return %arg0, %c0_i32 : i32, i32
  }
}

module attributes {stable_mosaic.version = 11 : i64} {
  func.func @_linear_kernel(%arg0: i32, %arg1: i32, %arg2: i32, %arg3: memref<16x32xbf16, #tpu.memory_space<vmem>>, %arg4: memref<32x128xbf16, #tpu.memory_space<vmem>>, %arg5: memref<1x128xf32, #tpu.memory_space<vmem>>, %arg6: memref<16x128xf32, #tpu.memory_space<vmem>>, %arg7: memref<16x128xf32, #tpu.memory_space<vmem>>) attributes {dimension_semantics = [#tpu.dimension_semantics<parallel>, #tpu.dimension_semantics<parallel>, #tpu.dimension_semantics<arbitrary>], iteration_bounds = array<i64: 1, 1, 1>, scalar_prefetch = 0 : i64, scratch_operands = 1 : i64, tpu.core_type = #tpu.core_type<tc>, window_params = [{transform_indices = @transform_0, window_bounds = array<i64: 16, 32>}, {transform_indices = @transform_1, window_bounds = array<i64: 32, 128>}, {transform_indices = @transform_2, window_bounds = array<i64: 1, 128>}, {transform_indices = @transform_3, window_bounds = array<i64: 16, 128>}]} {
    %c0_i32 = arith.constant 0 : i32
    %0 = arith.cmpi eq, %arg2, %c0_i32 : i32
    %1 = arith.extui %0 : i1 to i32
    %c0_i32_0 = arith.constant 0 : i32
    %2 = arith.cmpi ne, %1, %c0_i32_0 : i32
    scf.if %2 {
      %cst_10 = arith.constant 0.000000e+00 : f32
      %12 = vector.broadcast %cst_10 : f32 to vector<16x128xf32>
      %c0_11 = arith.constant 0 : index
      %c0_12 = arith.constant 0 : index
      %13 = vector.load %arg7[%c0_11, %c0_12] : memref<16x128xf32, #tpu.memory_space<vmem>>, vector<16x128xf32>
      tpu.vector_store %arg7[%c0_11, %c0_12], %12 {strides = array<i32>} : memref<16x128xf32, #tpu.memory_space<vmem>>, vector<16x128xf32>,
    } else {
    }
    %c0 = arith.constant 0 : index
    %c0_1 = arith.constant 0 : index
    %3 = vector.load %arg7[%c0, %c0_1] : memref<16x128xf32, #tpu.memory_space<vmem>>, vector<16x128xf32>
    %c0_2 = arith.constant 0 : index
    %c0_3 = arith.constant 0 : index
    %4 = vector.load %arg3[%c0_2, %c0_3] : memref<16x32xbf16, #tpu.memory_space<vmem>>, vector<16x32xbf16>
    %c0_4 = arith.constant 0 : index
    %c0_5 = arith.constant 0 : index
    %5 = vector.load %arg4[%c0_4, %c0_5] : memref<32x128xbf16, #tpu.memory_space<vmem>>, vector<32x128xbf16>
    %cst = arith.constant dense<0.000000e+00> : vector<16x128xf32>
    %6 = tpu.matmul %4, %5, %cst {dimension_numbers = #tpu.dot_dimension_numbers<[1], [0], [0], [1], [0, 0, 1, 1], [], []>} : vector<16x32xbf16>, vector<32x128xbf16>, vector<16x128xf32> -> vector<16x128xf32>
    %7 = arith.addf %3, %6 : vector<16x128xf32>
    %c0_6 = arith.constant 0 : index
    %c0_7 = arith.constant 0 : index
    %8 = vector.load %arg7[%c0_6, %c0_7] : memref<16x128xf32, #tpu.memory_space<vmem>>, vector<16x128xf32>
    tpu.vector_store %arg7[%c0_6, %c0_7], %7 {strides = array<i32>} : memref<16x128xf32, #tpu.memory_space<vmem>>, vector<16x128xf32>,
    %c0_i32_8 = arith.constant 0 : i32
    %9 = arith.cmpi eq, %arg2, %c0_i32_8 : i32
    %10 = arith.extui %9 : i1 to i32
    %c0_i32_9 = arith.constant 0 : i32
    %11 = arith.cmpi ne, %10, %c0_i32_9 : i32
    scf.if %11 {
      %c0_10 = arith.constant 0 : index
      %c0_11 = arith.constant 0 : index
      %12 = vector.load %arg7[%c0_10, %c0_11] : memref<16x128xf32, #tpu.memory_space<vmem>>, vector<16x128xf32>
      %c0_12 = arith.constant 0 : index
      %c0_13 = arith.constant 0 : index
      %13 = vector.load %arg5[%c0_12, %c0_13] : memref<1x128xf32, #tpu.memory_space<vmem>>, vector<1x128xf32>
      %14 = vector.broadcast %13 : vector<1x128xf32> to vector<16x128xf32>
      %15 = arith.addf %12, %14 : vector<16x128xf32>
      %c0_14 = arith.constant 0 : index
      %c0_15 = arith.constant 0 : index
      %16 = vector.load %arg6[%c0_14, %c0_15] : memref<16x128xf32, #tpu.memory_space<vmem>>, vector<16x128xf32>
      tpu.vector_store %arg6[%c0_14, %c0_15], %15 {strides = array<i32>} : memref<16x128xf32, #tpu.memory_space<vmem>>, vector<16x128xf32>,
    } else {
    }
    return
  }
  func.func @transform_0(%arg0: i32, %arg1: i32, %arg2: i32) -> (i32, i32) {
    %c0_i32 = arith.constant 0 : i32
    return %arg0, %arg2 : i32, i32
  }
  func.func @transform_1(%arg0: i32, %arg1: i32, %arg2: i32) -> (i32, i32) {
    %c0_i32 = arith.constant 0 : i32
    return %arg2, %arg1 : i32, i32
  }
  func.func @transform_2(%arg0: i32, %arg1: i32, %arg2: i32) -> (i32, i32) {
    %c0_i32 = arith.constant 0 : i32
    %c0_i32_0 = arith.constant 0 : i32
    return %c0_i32, %arg1 : i32, i32
  }
  func.func @transform_3(%arg0: i32, %arg1: i32, %arg2: i32) -> (i32, i32) {
    %c0_i32 = arith.constant 0 : i32
    return %arg0, %arg1 : i32, i32
  }
}

</mosaic_0001>

<llo_original>
// kernel: sequential_absolute_forward.56
$region0: #{sequential_absolute_forward.56}
  #allocation0 [shape = 'u32[]', space=smem, size = 0x4, offset = 0x4, fixed_abs, tag = 'smem constant byte address 0x4 - core index']
  #allocation1 [shape = 'u32[144,128]{1,0:T(1,128)}', space=vmem, size = 0x12000, scoped, tag = 'internal scratch']
  %s0 = inlined_call_operand.vmem [shape: f32[16,32], index: 0, kind: input, shape index: {}]
  %s1 = inlined_call_operand.vmem [shape: bf16[16,32], index: 1, kind: input, shape index: {}]
  %s2 = inlined_call_operand.vmem [shape: f32[1,32], index: 2, kind: input, shape index: {}]
  %s3 = inlined_call_operand.vmem [shape: f32[1,32], index: 3, kind: input, shape index: {}]
  %s4 = inlined_call_operand.vmem [shape: bf16[16,32], index: 4, kind: output, shape index: {}]
  %s5 = sld [smem:[#allocation0]]
  $region26: #{sequential_absolute_forward.56} parent=0
    _
  %s7 = ssub.s32 1, %s5
  %s8 = scalar_select 0, %s7, %s5
  // Predicated region
  $region2: #{sequential_absolute_forward.56} parent=0 // pred_check
    _
  $region3: #{sequential_absolute_forward.56} parent=0 // pred_check_branch
    %10 = sbr.rel (0) target = $region5
  $region4: #{sequential_absolute_forward.56} parent=0 // pred_region
    _
  $region5: #{sequential_absolute_forward.56} parent=0 // pred_fallthru
    _
  // Predicated region
  $region6: #{sequential_absolute_forward.56} parent=0 // pred_check
    _
  $region7: #{sequential_absolute_forward.56} parent=0 // pred_check_branch
    %12 = sbr.rel (0) target = $region9
  $region8: #{sequential_absolute_forward.56} parent=0 // pred_region
    _
  $region9: #{sequential_absolute_forward.56} parent=0 // pred_fallthru
    _
  // Predicated region
  $region10: #{sequential_absolute_forward.56} parent=0 // pred_check
    _
  $region11: #{sequential_absolute_forward.56} parent=0 // pred_check_branch
    %14 = sbr.rel (0) target = $region13
  $region12: #{sequential_absolute_forward.56} parent=0 // pred_region
    _
  $region13: #{sequential_absolute_forward.56} parent=0 // pred_fallthru
    _
  // Predicated region
  $region14: #{sequential_absolute_forward.56} parent=0 // pred_check
    _
  $region15: #{sequential_absolute_forward.56} parent=0 // pred_check_branch
    %16 = sbr.rel (0) target = $region17
  $region16: #{sequential_absolute_forward.56} parent=0 // pred_region
    _
  $region17: #{sequential_absolute_forward.56} parent=0 // pred_fallthru
    _
  %v17 = vld [vmem:[%s0] sm:$0xff]
  %v18 = vld [vmem:[%s0 + $0x8] sm:$0xff]
  %v19 = vld [vmem:[%s1] sm:$0xf]
  %v20 = vld [vmem:[%s1 + $0x4] sm:$0xf]
  %v21 = vunpack.c.l.bf16 %v19
  %v22 = vunpack.c.l.bf16 %v20
  %v23 = vadd.f32 %v17, %v21
  %v24 = vadd.f32 %v18, %v22
  %vm25 = vcmask 261120
  %v26 = vsel %vm25, %v23, 0.0
  %27 = vadd.xlane.f32.xlu0 %v26
  %v28 = vpop.xlane.xlu0 %27
  %v29 = vsel %vm25, %v24, 0.0
  %30 = vadd.xlane.f32.xlu0 %v29
  %v31 = vpop.xlane.xlu0 %30
  %v32 = vrcp.pop 32.0
  %v33 = vmul.f32 %v28, %v32
  %v34 = vmul.f32 %v31, %v32
  %v35 = vsub.f32 %v23, %v33
  %v36 = vsub.f32 %v24, %v34
  %v37 = vmul.f32 %v35, %v35
  %v38 = vmul.f32 %v36, %v36
  %v39 = vsel %vm25, %v37, 0.0
  %40 = vadd.xlane.f32.xlu0 %v39
  %v41 = vpop.xlane.xlu0 %40
  %v42 = vsel %vm25, %v38, 0.0
  %43 = vadd.xlane.f32.xlu0 %v42
  %v44 = vpop.xlane.xlu0 %43
  %v45 = vmul.f32 %v41, %v32
  %v46 = vmul.f32 %v44, %v32
  %v47 = vadd.f32 %v45, 1e-05
  %v48 = vadd.f32 %v46, 1e-05
  %v49 = vrsqrt.pop %v47
  %v50 = vrsqrt.pop %v48
  %v51 = vmul.f32 %v35, %v49
  %v52 = vmul.f32 %v36, %v50
  %v53 = vld [vmem:[%s2] sm:$0x1]
  %v55 = vlaneseq
  %v56 = vshrl.u32 %v55, 7
  %v57 = vsub.s32 0, %v56
  %v58 = vrot.slane %v53, %v57
  %v60 = vmul.f32 %v51, %v58
  %v61 = vmul.f32 %v52, %v58
  %v62 = vld [vmem:[%s3] sm:$0x1]
  %v64 = vlaneseq
  %v65 = vshrl.u32 %v64, 7
  %v66 = vsub.s32 0, %v65
  %v67 = vrot.slane %v62, %v66
  %v69 = vadd.f32 %v60, %v67
  %v70 = vadd.f32 %v61, %v67
  %v71 = vpack.c.bf16 %v70, %v69
  %v73 = vunpack.c.l.b16 %v71
  %v74 = vunpack.c.h.b16 %v71
  %v75 = vpack.c.b16 %v73, %v73
  %v76 = vpack.c.b16 %v74, %v74
  %vm79 = vcmask 257024
  %80 = vst.msk [vmem:[%s4] sm:$0xf] %vm79, %v75
  %81 = vst.msk [vmem:[%s4 + $0x4] sm:$0xf] %vm79, %v76
  // Predicated region
  $region18: #{sequential_absolute_forward.56} parent=0 // pred_check
    _
  $region19: #{sequential_absolute_forward.56} parent=0 // pred_check_branch
    %83 = sbr.rel (0) target = $region21
  $region20: #{sequential_absolute_forward.56} parent=0 // pred_region
    _
  $region21: #{sequential_absolute_forward.56} parent=0 // pred_fallthru
    _
  // Predicated region
  $region22: #{sequential_absolute_forward.56} parent=0 // pred_check
    _
  $region23: #{sequential_absolute_forward.56} parent=0 // pred_check_branch
    %85 = sbr.rel (0) target = $region25
  $region24: #{sequential_absolute_forward.56} parent=0 // pred_region
    _
  $region25: #{sequential_absolute_forward.56} parent=0 // pred_fallthru
    _

// kernel: sequential_absolute_forward.53
$region0: #{sequential_absolute_forward.53}
  #allocation0 [shape = 'u32[]', space=smem, size = 0x4, offset = 0x4, fixed_abs, tag = 'smem constant byte address 0x4 - core index']
  #allocation1 [shape = 'u32[144,128]{1,0:T(1,128)}', space=vmem, size = 0x12000, scoped, tag = 'internal scratch']
  #allocation2 [shape = 'f32[16,128]{1,0:T(8,128)}', space=vmem, size = 0x2000, scoped, tag = 'scratch operand']
  %s0 = inlined_call_operand.vmem [shape: bf16[16,32], index: 0, kind: input, shape index: {}]
  %s1 = inlined_call_operand.vmem [shape: bf16[32,128], index: 1, kind: input, shape index: {}]
  %s2 = inlined_call_operand.vmem [shape: f32[1,128], index: 2, kind: input, shape index: {}]
  %s3 = inlined_call_operand.vmem [shape: bf16[16,128], index: 3, kind: output, shape index: {}]
  %s4 = sld [smem:[#allocation0]]
  $region30: #{sequential_absolute_forward.53} parent=0
    _
  %s6 = ssub.s32 1, %s4
  %s7 = scalar_select 0, %s6, %s4
  // Predicated region
  $region2: #{sequential_absolute_forward.53} parent=0 // pred_check
    _
  $region3: #{sequential_absolute_forward.53} parent=0 // pred_check_branch
    %9 = sbr.rel (0) target = $region5
  $region4: #{sequential_absolute_forward.53} parent=0 // pred_region
    _
  $region5: #{sequential_absolute_forward.53} parent=0 // pred_fallthru
    _
  // Predicated region
  $region6: #{sequential_absolute_forward.53} parent=0 // pred_check
    _
  $region7: #{sequential_absolute_forward.53} parent=0 // pred_check_branch
    %11 = sbr.rel (0) target = $region9
  $region8: #{sequential_absolute_forward.53} parent=0 // pred_region
    _
  $region9: #{sequential_absolute_forward.53} parent=0 // pred_fallthru
    _
  // Predicated region
  $region10: #{sequential_absolute_forward.53} parent=0 // pred_check
    _
  $region11: #{sequential_absolute_forward.53} parent=0 // pred_check_branch
    %13 = sbr.rel (0) target = $region13
  $region12: #{sequential_absolute_forward.53} parent=0 // pred_region
    _
  $region13: #{sequential_absolute_forward.53} parent=0 // pred_fallthru
    _
  %p15 = scmp.eq.s32.totalorder 0, 0
  // Predicated region
  $region14: #{sequential_absolute_forward.53} parent=0 // pred_check
    %p16 = pneg %p15
  $region15: #{sequential_absolute_forward.53} parent=0 // pred_check_branch
    %18 = sbr.rel (%p16) target = $region17
  $region16: #{sequential_absolute_forward.53} parent=0 // pred_region
    %19 = vst [vmem:[#allocation2] sm:$0xff] 0.0
    %20 = vst [vmem:[#allocation2 + $0x8] sm:$0xff] 0.0
  $region17: #{sequential_absolute_forward.53} parent=0 // pred_fallthru
    _
  %v21 = vld [vmem:[#allocation2] sm:$0xff]
  %v22 = vld [vmem:[#allocation2 + $0x8] sm:$0xff]
  %v23 = vld [vmem:[%s0] sm:$0xf]
  %v24 = vld [vmem:[%s0 + $0x4] sm:$0xf]
  %v25 = vld [vmem:[%s1] sm:$0xf]
  %v26 = vld [vmem:[%s1 + $0x4] sm:$0xf]
  %v27 = vld [vmem:[%s1 + $0x8] sm:$0xf]
  %v28 = vld [vmem:[%s1 + $0xc] sm:$0xf]
  %v31 = vunpack.c.l.b16 %v23
  %v32 = vunpack.c.l.b16 %v24
  %v33 = vpack.c.b16 %v32, %v31
  %v38 = vunpack.c.l.b16 %v25
  %v39 = vunpack.c.l.b16 %v26
  %v40 = vunpack.c.l.b16 %v27
  %v41 = vunpack.c.l.b16 %v28
  %v42 = vpack.c.b16 %v39, %v38
  %v43 = vpack.c.b16 %v41, %v40
  %vm46 = vcmask 261120
  %v48 = vsel %vm46, %v33, 0
  %50 = vmatprep.subr.bf16.mxu0 0
  %51 = vmatpush1.bf16.msra.mxu0 0
  %52 = vmatprep.subr.bf16.mxu0 0
  %53 = vmatpush1.bf16.msra.mxu0 0
  %54 = vmatprep.subr.bf16.mxu0 0
  %55 = vmatpush1.bf16.msra.mxu0 0
  %56 = vmatprep.subr.bf16.mxu0 0
  %57 = vmatpush1.bf16.msra.mxu0 0
  %58 = vmatprep.subr.bf16.mxu0 0
  %59 = vmatpush1.bf16.msra.mxu0 0
  %60 = vmatprep.subr.bf16.mxu0 0
  %61 = vmatpush1.bf16.msra.mxu0 0
  %62 = vmatprep.subr.bf16.mxu0 0
  %63 = vmatpush1.bf16.msra.mxu0 %v43
  %64 = vmatprep.subr.bf16.mxu0 0
  %65 = vmatpush1.bf16.msra.mxu0 %v42
  %66 = vmatprep.subr.bf16.mxu0 0
  %67 = vmatpush2.bf16.msra.mxu0 0
  %68 = vmatprep.subr.bf16.mxu0 0
  %69 = vmatpush2.bf16.msra.mxu0 0
  %70 = vmatprep.subr.bf16.mxu0 0
  %71 = vmatpush2.bf16.msra.mxu0 0
  %72 = vmatprep.subr.bf16.mxu0 0
  %73 = vmatpush2.bf16.msra.mxu0 0
  %74 = vmatprep.subr.bf16.mxu0 0
  %75 = vmatpush2.bf16.msra.mxu0 0
  %76 = vmatprep.subr.bf16.mxu0 0
  %77 = vmatpush2.bf16.msra.mxu0 0
  %78 = vmatprep.subr.bf16.mxu0 0
  %79 = vmatpush2.bf16.msra.mxu0 0
  %80 = vmatprep.subr.bf16.mxu0 0
  %81 = vmatpush2.bf16.msra.mxu0 0
  %82 = vmatprep.mubr.bf16.mxu0 0
  %83 = vmatmul.mubr.bf16.gmra.mxu0 %v48
  %v84 = vpop.f32.mrf.mxu0
  %v85 = vadd.f32 0.0, %v84
  %v86 = vpop.f32.mrf.mxu0
  %v87 = vpop.f32.mrf.mxu0
  %v88 = vadd.f32 0.0, %v87
  %v89 = vpop.f32.mrf.mxu0
  %90 = vdwg.mxu0
  %v91 = vadd.f32 %v21, %v85
  %v92 = vadd.f32 %v22, %v88
  %93 = vst [vmem:[#allocation2] sm:$0xff] %v91
  %94 = vst [vmem:[#allocation2 + $0x8] sm:$0xff] %v92
  // Predicated region
  $region18: #{sequential_absolute_forward.53} parent=0 // pred_check
    %p95 = pneg %p15
  $region19: #{sequential_absolute_forward.53} parent=0 // pred_check_branch
    %97 = sbr.rel (%p95) target = $region21
  $region20: #{sequential_absolute_forward.53} parent=0 // pred_region
    %v98 = vld [vmem:[#allocation2] sm:$0xff]
    %v99 = vld [vmem:[#allocation2 + $0x8] sm:$0xff]
    %v100 = vld [vmem:[%s2] sm:$0x1]
    %v102 = vlaneseq
    %v103 = vshrl.u32 %v102, 7
    %v104 = vsub.s32 0, %v103
    %v105 = vrot.slane %v100, %v104
    %v107 = vadd.f32 %v98, %v105
    %v108 = vadd.f32 %v99, %v105
    %v109 = vpack.c.bf16 %v108, %v107
    %v111 = vunpack.c.l.b16 %v109
    %v112 = vunpack.c.h.b16 %v109
    %v113 = vpack.c.b16 %v111, %v111
    %v114 = vpack.c.b16 %v112, %v112
    %117 = vst [vmem:[%s3] sm:$0xf] %v113
    %118 = vst [vmem:[%s3 + $0x4] sm:$0xf] %v114
  $region21: #{sequential_absolute_forward.53} parent=0 // pred_fallthru
    _
  // Predicated region
  $region22: #{sequential_absolute_forward.53} parent=0 // pred_check
    _
  $region23: #{sequential_absolute_forward.53} parent=0 // pred_check_branch
    %120 = sbr.rel (0) target = $region25
  $region24: #{sequential_absolute_forward.53} parent=0 // pred_region
    _
  $region25: #{sequential_absolute_forward.53} parent=0 // pred_fallthru
    _
  // Predicated region
  $region26: #{sequential_absolute_forward.53} parent=0 // pred_check
    _
  $region27: #{sequential_absolute_forward.53} parent=0 // pred_check_branch
    %122 = sbr.rel (0) target = $region29
  $region28: #{sequential_absolute_forward.53} parent=0 // pred_region
    _
  $region29: #{sequential_absolute_forward.53} parent=0 // pred_fallthru
    _

// kernel: sequential_absolute_forward.43
$region0: #{sequential_absolute_forward.43}
  #allocation0 [shape = 'u32[]', space=smem, size = 0x4, offset = 0x4, fixed_abs, tag = 'smem constant byte address 0x4 - core index']
  #allocation1 [shape = 'u32[144,128]{1,0:T(1,128)}', space=vmem, size = 0x12000, scoped, tag = 'internal scratch']
  #allocation2 [shape = 'f32[16,128]{1,0:T(8,128)}', space=vmem, size = 0x2000, scoped, tag = 'scratch operand']
  %s0 = inlined_call_operand.vmem [shape: bf16[16,32], index: 0, kind: input, shape index: {}]
  %s1 = inlined_call_operand.vmem [shape: bf16[32,128], index: 1, kind: input, shape index: {}]
  %s2 = inlined_call_operand.vmem [shape: f32[1,128], index: 2, kind: input, shape index: {}]
  %s3 = inlined_call_operand.vmem [shape: bf16[16,128], index: 3, kind: output, shape index: {}]
  %s4 = sld [smem:[#allocation0]]
  $region30: #{sequential_absolute_forward.43} parent=0
    _
  %s6 = ssub.s32 1, %s4
  %s7 = scalar_select 0, %s6, %s4
  // Predicated region
  $region2: #{sequential_absolute_forward.43} parent=0 // pred_check
    _
  $region3: #{sequential_absolute_forward.43} parent=0 // pred_check_branch
    %9 = sbr.rel (0) target = $region5
  $region4: #{sequential_absolute_forward.43} parent=0 // pred_region
    _
  $region5: #{sequential_absolute_forward.43} parent=0 // pred_fallthru
    _
  // Predicated region
  $region6: #{sequential_absolute_forward.43} parent=0 // pred_check
    _
  $region7: #{sequential_absolute_forward.43} parent=0 // pred_check_branch
    %11 = sbr.rel (0) target = $region9
  $region8: #{sequential_absolute_forward.43} parent=0 // pred_region
    _
  $region9: #{sequential_absolute_forward.43} parent=0 // pred_fallthru
    _
  // Predicated region
  $region10: #{sequential_absolute_forward.43} parent=0 // pred_check
    _
  $region11: #{sequential_absolute_forward.43} parent=0 // pred_check_branch
    %13 = sbr.rel (0) target = $region13
  $region12: #{sequential_absolute_forward.43} parent=0 // pred_region
    _
  $region13: #{sequential_absolute_forward.43} parent=0 // pred_fallthru
    _
  %p15 = scmp.eq.s32.totalorder 0, 0
  // Predicated region
  $region14: #{sequential_absolute_forward.43} parent=0 // pred_check
    %p16 = pneg %p15
  $region15: #{sequential_absolute_forward.43} parent=0 // pred_check_branch
    %18 = sbr.rel (%p16) target = $region17
  $region16: #{sequential_absolute_forward.43} parent=0 // pred_region
    %19 = vst [vmem:[#allocation2] sm:$0xff] 0.0
    %20 = vst [vmem:[#allocation2 + $0x8] sm:$0xff] 0.0
  $region17: #{sequential_absolute_forward.43} parent=0 // pred_fallthru
    _
  %v21 = vld [vmem:[#allocation2] sm:$0xff]
  %v22 = vld [vmem:[#allocation2 + $0x8] sm:$0xff]
  %v23 = vld [vmem:[%s0] sm:$0xf]
  %v24 = vld [vmem:[%s0 + $0x4] sm:$0xf]
  %v25 = vld [vmem:[%s1] sm:$0xf]
  %v26 = vld [vmem:[%s1 + $0x4] sm:$0xf]
  %v27 = vld [vmem:[%s1 + $0x8] sm:$0xf]
  %v28 = vld [vmem:[%s1 + $0xc] sm:$0xf]
  %v31 = vunpack.c.l.b16 %v23
  %v32 = vunpack.c.l.b16 %v24
  %v33 = vpack.c.b16 %v32, %v31
  %v38 = vunpack.c.l.b16 %v25
  %v39 = vunpack.c.l.b16 %v26
  %v40 = vunpack.c.l.b16 %v27
  %v41 = vunpack.c.l.b16 %v28
  %v42 = vpack.c.b16 %v39, %v38
  %v43 = vpack.c.b16 %v41, %v40
  %vm46 = vcmask 261120
  %v48 = vsel %vm46, %v33, 0
  %50 = vmatprep.subr.bf16.mxu0 0
  %51 = vmatpush1.bf16.msra.mxu0 0
  %52 = vmatprep.subr.bf16.mxu0 0
  %53 = vmatpush1.bf16.msra.mxu0 0
  %54 = vmatprep.subr.bf16.mxu0 0
  %55 = vmatpush1.bf16.msra.mxu0 0
  %56 = vmatprep.subr.bf16.mxu0 0
  %57 = vmatpush1.bf16.msra.mxu0 0
  %58 = vmatprep.subr.bf16.mxu0 0
  %59 = vmatpush1.bf16.msra.mxu0 0
  %60 = vmatprep.subr.bf16.mxu0 0
  %61 = vmatpush1.bf16.msra.mxu0 0
  %62 = vmatprep.subr.bf16.mxu0 0
  %63 = vmatpush1.bf16.msra.mxu0 %v43
  %64 = vmatprep.subr.bf16.mxu0 0
  %65 = vmatpush1.bf16.msra.mxu0 %v42
  %66 = vmatprep.subr.bf16.mxu0 0
  %67 = vmatpush2.bf16.msra.mxu0 0
  %68 = vmatprep.subr.bf16.mxu0 0
  %69 = vmatpush2.bf16.msra.mxu0 0
  %70 = vmatprep.subr.bf16.mxu0 0
  %71 = vmatpush2.bf16.msra.mxu0 0
  %72 = vmatprep.subr.bf16.mxu0 0
  %73 = vmatpush2.bf16.msra.mxu0 0
  %74 = vmatprep.subr.bf16.mxu0 0
  %75 = vmatpush2.bf16.msra.mxu0 0
  %76 = vmatprep.subr.bf16.mxu0 0
  %77 = vmatpush2.bf16.msra.mxu0 0
  %78 = vmatprep.subr.bf16.mxu0 0
  %79 = vmatpush2.bf16.msra.mxu0 0
  %80 = vmatprep.subr.bf16.mxu0 0
  %81 = vmatpush2.bf16.msra.mxu0 0
  %82 = vmatprep.mubr.bf16.mxu0 0
  %83 = vmatmul.mubr.bf16.gmra.mxu0 %v48
  %v84 = vpop.f32.mrf.mxu0
  %v85 = vadd.f32 0.0, %v84
  %v86 = vpop.f32.mrf.mxu0
  %v87 = vpop.f32.mrf.mxu0
  %v88 = vadd.f32 0.0, %v87
  %v89 = vpop.f32.mrf.mxu0
  %90 = vdwg.mxu0
  %v91 = vadd.f32 %v21, %v85
  %v92 = vadd.f32 %v22, %v88
  %93 = vst [vmem:[#allocation2] sm:$0xff] %v91
  %94 = vst [vmem:[#allocation2 + $0x8] sm:$0xff] %v92
  // Predicated region
  $region18: #{sequential_absolute_forward.43} parent=0 // pred_check
    %p95 = pneg %p15
  $region19: #{sequential_absolute_forward.43} parent=0 // pred_check_branch
    %97 = sbr.rel (%p95) target = $region21
  $region20: #{sequential_absolute_forward.43} parent=0 // pred_region
    %v98 = vld [vmem:[#allocation2] sm:$0xff]
    %v99 = vld [vmem:[#allocation2 + $0x8] sm:$0xff]
    %v100 = vld [vmem:[%s2] sm:$0x1]
    %v102 = vlaneseq
    %v103 = vshrl.u32 %v102, 7
    %v104 = vsub.s32 0, %v103
    %v105 = vrot.slane %v100, %v104
    %v107 = vadd.f32 %v98, %v105
    %v108 = vadd.f32 %v99, %v105
    %v109 = vmax.f32 %v107, 0.0
    %v110 = vmax.f32 %v108, 0.0
    %v111 = vpack.c.bf16 %v110, %v109
    %v113 = vunpack.c.l.b16 %v111
    %v114 = vunpack.c.h.b16 %v111
    %v115 = vpack.c.b16 %v113, %v113
    %v116 = vpack.c.b16 %v114, %v114
    %119 = vst [vmem:[%s3] sm:$0xf] %v115
    %120 = vst [vmem:[%s3 + $0x4] sm:$0xf] %v116
  $region21: #{sequential_absolute_forward.43} parent=0 // pred_fallthru
    _
  // Predicated region
  $region22: #{sequential_absolute_forward.43} parent=0 // pred_check
    _
  $region23: #{sequential_absolute_forward.43} parent=0 // pred_check_branch
    %122 = sbr.rel (0) target = $region25
  $region24: #{sequential_absolute_forward.43} parent=0 // pred_region
    _
  $region25: #{sequential_absolute_forward.43} parent=0 // pred_fallthru
    _
  // Predicated region
  $region26: #{sequential_absolute_forward.43} parent=0 // pred_check
    _
  $region27: #{sequential_absolute_forward.43} parent=0 // pred_check_branch
    %124 = sbr.rel (0) target = $region29
  $region28: #{sequential_absolute_forward.43} parent=0 // pred_region
    _
  $region29: #{sequential_absolute_forward.43} parent=0 // pred_fallthru
    _

// kernel: sequential_absolute_forward.44
$region0: #{sequential_absolute_forward.44}
  #allocation0 [shape = 'u32[]', space=smem, size = 0x4, offset = 0x4, fixed_abs, tag = 'smem constant byte address 0x4 - core index']
  #allocation1 [shape = 'u32[144,128]{1,0:T(1,128)}', space=vmem, size = 0x12000, scoped, tag = 'internal scratch']
  #allocation2 [shape = 'f32[16,128]{1,0:T(8,128)}', space=vmem, size = 0x2000, scoped, tag = 'scratch operand']
  %s0 = inlined_call_operand.vmem [shape: bf16[16,128], index: 0, kind: input, shape index: {}]
  %s1 = inlined_call_operand.vmem [shape: bf16[128,128], index: 1, kind: input, shape index: {}]
  %s2 = inlined_call_operand.vmem [shape: f32[1,128], index: 2, kind: input, shape index: {}]
  %s3 = inlined_call_operand.vmem [shape: bf16[16,128], index: 3, kind: output, shape index: {}]
  %s4 = sld [smem:[#allocation0]]
  $region30: #{sequential_absolute_forward.44} parent=0
    _
  %s6 = ssub.s32 1, %s4
  %s7 = scalar_select 0, %s6, %s4
  // Predicated region
  $region2: #{sequential_absolute_forward.44} parent=0 // pred_check
    _
  $region3: #{sequential_absolute_forward.44} parent=0 // pred_check_branch
    %9 = sbr.rel (0) target = $region5
  $region4: #{sequential_absolute_forward.44} parent=0 // pred_region
    _
  $region5: #{sequential_absolute_forward.44} parent=0 // pred_fallthru
    _
  // Predicated region
  $region6: #{sequential_absolute_forward.44} parent=0 // pred_check
    _
  $region7: #{sequential_absolute_forward.44} parent=0 // pred_check_branch
    %11 = sbr.rel (0) target = $region9
  $region8: #{sequential_absolute_forward.44} parent=0 // pred_region
    _
  $region9: #{sequential_absolute_forward.44} parent=0 // pred_fallthru
    _
  // Predicated region
  $region10: #{sequential_absolute_forward.44} parent=0 // pred_check
    _
  $region11: #{sequential_absolute_forward.44} parent=0 // pred_check_branch
    %13 = sbr.rel (0) target = $region13
  $region12: #{sequential_absolute_forward.44} parent=0 // pred_region
    _
  $region13: #{sequential_absolute_forward.44} parent=0 // pred_fallthru
    _
  %p15 = scmp.eq.s32.totalorder 0, 0
  // Predicated region
  $region14: #{sequential_absolute_forward.44} parent=0 // pred_check
    %p16 = pneg %p15
  $region15: #{sequential_absolute_forward.44} parent=0 // pred_check_branch
    %18 = sbr.rel (%p16) target = $region17
  $region16: #{sequential_absolute_forward.44} parent=0 // pred_region
    %19 = vst [vmem:[#allocation2] sm:$0xff] 0.0
    %20 = vst [vmem:[#allocation2 + $0x8] sm:$0xff] 0.0
  $region17: #{sequential_absolute_forward.44} parent=0 // pred_fallthru
    _
  %v21 = vld [vmem:[#allocation2] sm:$0xff]
  %v22 = vld [vmem:[#allocation2 + $0x8] sm:$0xff]
  %v23 = vld [vmem:[%s0] sm:$0xf]
  %v24 = vld [vmem:[%s0 + $0x4] sm:$0xf]
  %v25 = vld [vmem:[%s1] sm:$0xf]
  %v26 = vld [vmem:[%s1 + $0x4] sm:$0xf]
  %v27 = vld [vmem:[%s1 + $0x8] sm:$0xf]
  %v28 = vld [vmem:[%s1 + $0xc] sm:$0xf]
  %v29 = vld [vmem:[%s1 + $0x10] sm:$0xf]
  %v30 = vld [vmem:[%s1 + $0x14] sm:$0xf]
  %v31 = vld [vmem:[%s1 + $0x18] sm:$0xf]
  %v32 = vld [vmem:[%s1 + $0x1c] sm:$0xf]
  %v33 = vld [vmem:[%s1 + $0x20] sm:$0xf]
  %v34 = vld [vmem:[%s1 + $0x24] sm:$0xf]
  %v35 = vld [vmem:[%s1 + $0x28] sm:$0xf]
  %v36 = vld [vmem:[%s1 + $0x2c] sm:$0xf]
  %v37 = vld [vmem:[%s1 + $0x30] sm:$0xf]
  %v38 = vld [vmem:[%s1 + $0x34] sm:$0xf]
  %v39 = vld [vmem:[%s1 + $0x38] sm:$0xf]
  %v40 = vld [vmem:[%s1 + $0x3c] sm:$0xf]
  %v43 = vunpack.c.l.b16 %v23
  %v44 = vunpack.c.l.b16 %v24
  %v45 = vpack.c.b16 %v44, %v43
  %v63 = vunpack.c.l.b16 %v25
  %v64 = vunpack.c.l.b16 %v26
  %v65 = vunpack.c.l.b16 %v27
  %v66 = vunpack.c.l.b16 %v28
  %v67 = vunpack.c.l.b16 %v29
  %v68 = vunpack.c.l.b16 %v30
  %v69 = vunpack.c.l.b16 %v31
  %v70 = vunpack.c.l.b16 %v32
  %v71 = vunpack.c.l.b16 %v33
  %v72 = vunpack.c.l.b16 %v34
  %v73 = vunpack.c.l.b16 %v35
  %v74 = vunpack.c.l.b16 %v36
  %v75 = vunpack.c.l.b16 %v37
  %v76 = vunpack.c.l.b16 %v38
  %v77 = vunpack.c.l.b16 %v39
  %v78 = vunpack.c.l.b16 %v40
  %v79 = vpack.c.b16 %v64, %v63
  %v80 = vpack.c.b16 %v66, %v65
  %v81 = vpack.c.b16 %v68, %v67
  %v82 = vpack.c.b16 %v70, %v69
  %v83 = vpack.c.b16 %v72, %v71
  %v84 = vpack.c.b16 %v74, %v73
  %v85 = vpack.c.b16 %v76, %v75
  %v86 = vpack.c.b16 %v78, %v77
  %95 = vmatprep.subr.bf16.mxu0 0
  %96 = vmatpush1.bf16.msra.mxu0 %v86
  %97 = vmatprep.subr.bf16.mxu0 0
  %98 = vmatpush1.bf16.msra.mxu0 %v85
  %99 = vmatprep.subr.bf16.mxu0 0
  %100 = vmatpush1.bf16.msra.mxu0 %v84
  %101 = vmatprep.subr.bf16.mxu0 0
  %102 = vmatpush1.bf16.msra.mxu0 %v83
  %103 = vmatprep.subr.bf16.mxu0 0
  %104 = vmatpush1.bf16.msra.mxu0 %v82
  %105 = vmatprep.subr.bf16.mxu0 0
  %106 = vmatpush1.bf16.msra.mxu0 %v81
  %107 = vmatprep.subr.bf16.mxu0 0
  %108 = vmatpush1.bf16.msra.mxu0 %v80
  %109 = vmatprep.subr.bf16.mxu0 0
  %110 = vmatpush1.bf16.msra.mxu0 %v79
  %111 = vmatprep.subr.bf16.mxu0 0
  %112 = vmatpush2.bf16.msra.mxu0 0
  %113 = vmatprep.subr.bf16.mxu0 0
  %114 = vmatpush2.bf16.msra.mxu0 0
  %115 = vmatprep.subr.bf16.mxu0 0
  %116 = vmatpush2.bf16.msra.mxu0 0
  %117 = vmatprep.subr.bf16.mxu0 0
  %118 = vmatpush2.bf16.msra.mxu0 0
  %119 = vmatprep.subr.bf16.mxu0 0
  %120 = vmatpush2.bf16.msra.mxu0 0
  %121 = vmatprep.subr.bf16.mxu0 0
  %122 = vmatpush2.bf16.msra.mxu0 0
  %123 = vmatprep.subr.bf16.mxu0 0
  %124 = vmatpush2.bf16.msra.mxu0 0
  %125 = vmatprep.subr.bf16.mxu0 0
  %126 = vmatpush2.bf16.msra.mxu0 0
  %127 = vmatprep.mubr.bf16.mxu0 0
  %128 = vmatmul.mubr.bf16.gmra.mxu0 %v45
  %v129 = vpop.f32.mrf.mxu0
  %v130 = vadd.f32 0.0, %v129
  %v131 = vpop.f32.mrf.mxu0
  %v132 = vpop.f32.mrf.mxu0
  %v133 = vadd.f32 0.0, %v132
  %v134 = vpop.f32.mrf.mxu0
  %135 = vdwg.mxu0
  %v136 = vadd.f32 %v21, %v130
  %v137 = vadd.f32 %v22, %v133
  %138 = vst [vmem:[#allocation2] sm:$0xff] %v136
  %139 = vst [vmem:[#allocation2 + $0x8] sm:$0xff] %v137
  // Predicated region
  $region18: #{sequential_absolute_forward.44} parent=0 // pred_check
    %p140 = pneg %p15
  $region19: #{sequential_absolute_forward.44} parent=0 // pred_check_branch
    %142 = sbr.rel (%p140) target = $region21
  $region20: #{sequential_absolute_forward.44} parent=0 // pred_region
    %v143 = vld [vmem:[#allocation2] sm:$0xff]
    %v144 = vld [vmem:[#allocation2 + $0x8] sm:$0xff]
    %v145 = vld [vmem:[%s2] sm:$0x1]
    %v147 = vlaneseq
    %v148 = vshrl.u32 %v147, 7
    %v149 = vsub.s32 0, %v148
    %v150 = vrot.slane %v145, %v149
    %v152 = vadd.f32 %v143, %v150
    %v153 = vadd.f32 %v144, %v150
    %v154 = vpack.c.bf16 %v153, %v152
    %v156 = vunpack.c.l.b16 %v154
    %v157 = vunpack.c.h.b16 %v154
    %v158 = vpack.c.b16 %v156, %v156
    %v159 = vpack.c.b16 %v157, %v157
    %162 = vst [vmem:[%s3] sm:$0xf] %v158
    %163 = vst [vmem:[%s3 + $0x4] sm:$0xf] %v159
  $region21: #{sequential_absolute_forward.44} parent=0 // pred_fallthru
    _
  // Predicated region
  $region22: #{sequential_absolute_forward.44} parent=0 // pred_check
    _
  $region23: #{sequential_absolute_forward.44} parent=0 // pred_check_branch
    %165 = sbr.rel (0) target = $region25
  $region24: #{sequential_absolute_forward.44} parent=0 // pred_region
    _
  $region25: #{sequential_absolute_forward.44} parent=0 // pred_fallthru
    _
  // Predicated region
  $region26: #{sequential_absolute_forward.44} parent=0 // pred_check
    _
  $region27: #{sequential_absolute_forward.44} parent=0 // pred_check_branch
    %167 = sbr.rel (0) target = $region29
  $region28: #{sequential_absolute_forward.44} parent=0 // pred_region
    _
  $region29: #{sequential_absolute_forward.44} parent=0 // pred_fallthru
    _

// kernel: sequential_absolute_forward.45
$region0: #{sequential_absolute_forward.45}
  #allocation0 [shape = 'u32[]', space=smem, size = 0x4, offset = 0x4, fixed_abs, tag = 'smem constant byte address 0x4 - core index']
  #allocation1 [shape = 'u32[144,128]{1,0:T(1,128)}', space=vmem, size = 0x12000, scoped, tag = 'internal scratch']
  %s0 = inlined_call_operand.vmem [shape: bf16[16,32], index: 0, kind: input, shape index: {}]
  %s1 = inlined_call_operand.vmem [shape: bf16[16,32], index: 1, kind: input, shape index: {}]
  %s2 = inlined_call_operand.vmem [shape: f32[1,32], index: 2, kind: input, shape index: {}]
  %s3 = inlined_call_operand.vmem [shape: f32[1,32], index: 3, kind: input, shape index: {}]
  %s4 = inlined_call_operand.vmem [shape: bf16[16,32], index: 4, kind: output, shape index: {}]
  %s5 = sld [smem:[#allocation0]]
  $region26: #{sequential_absolute_forward.45} parent=0
    _
  %s7 = ssub.s32 1, %s5
  %s8 = scalar_select 0, %s7, %s5
  // Predicated region
  $region2: #{sequential_absolute_forward.45} parent=0 // pred_check
    _
  $region3: #{sequential_absolute_forward.45} parent=0 // pred_check_branch
    %10 = sbr.rel (0) target = $region5
  $region4: #{sequential_absolute_forward.45} parent=0 // pred_region
    _
  $region5: #{sequential_absolute_forward.45} parent=0 // pred_fallthru
    _
  // Predicated region
  $region6: #{sequential_absolute_forward.45} parent=0 // pred_check
    _
  $region7: #{sequential_absolute_forward.45} parent=0 // pred_check_branch
    %12 = sbr.rel (0) target = $region9
  $region8: #{sequential_absolute_forward.45} parent=0 // pred_region
    _
  $region9: #{sequential_absolute_forward.45} parent=0 // pred_fallthru
    _
  // Predicated region
  $region10: #{sequential_absolute_forward.45} parent=0 // pred_check
    _
  $region11: #{sequential_absolute_forward.45} parent=0 // pred_check_branch
    %14 = sbr.rel (0) target = $region13
  $region12: #{sequential_absolute_forward.45} parent=0 // pred_region
    _
  $region13: #{sequential_absolute_forward.45} parent=0 // pred_fallthru
    _
  // Predicated region
  $region14: #{sequential_absolute_forward.45} parent=0 // pred_check
    _
  $region15: #{sequential_absolute_forward.45} parent=0 // pred_check_branch
    %16 = sbr.rel (0) target = $region17
  $region16: #{sequential_absolute_forward.45} parent=0 // pred_region
    _
  $region17: #{sequential_absolute_forward.45} parent=0 // pred_fallthru
    _
  %v17 = vld [vmem:[%s0] sm:$0xf]
  %v18 = vld [vmem:[%s0 + $0x4] sm:$0xf]
  %v19 = vunpack.c.l.bf16 %v17
  %v20 = vunpack.c.l.bf16 %v18
  %v21 = vld [vmem:[%s1] sm:$0xf]
  %v22 = vld [vmem:[%s1 + $0x4] sm:$0xf]
  %v23 = vunpack.c.l.bf16 %v21
  %v24 = vunpack.c.l.bf16 %v22
  %v25 = vadd.f32 %v19, %v23
  %v26 = vadd.f32 %v20, %v24
  %vm27 = vcmask 261120
  %v28 = vsel %vm27, %v25, 0.0
  %29 = vadd.xlane.f32.xlu0 %v28
  %v30 = vpop.xlane.xlu0 %29
  %v31 = vsel %vm27, %v26, 0.0
  %32 = vadd.xlane.f32.xlu0 %v31
  %v33 = vpop.xlane.xlu0 %32
  %v34 = vrcp.pop 32.0
  %v35 = vmul.f32 %v30, %v34
  %v36 = vmul.f32 %v33, %v34
  %v37 = vsub.f32 %v25, %v35
  %v38 = vsub.f32 %v26, %v36
  %v39 = vmul.f32 %v37, %v37
  %v40 = vmul.f32 %v38, %v38
  %v41 = vsel %vm27, %v39, 0.0
  %42 = vadd.xlane.f32.xlu0 %v41
  %v43 = vpop.xlane.xlu0 %42
  %v44 = vsel %vm27, %v40, 0.0
  %45 = vadd.xlane.f32.xlu0 %v44
  %v46 = vpop.xlane.xlu0 %45
  %v47 = vmul.f32 %v43, %v34
  %v48 = vmul.f32 %v46, %v34
  %v49 = vadd.f32 %v47, 1e-05
  %v50 = vadd.f32 %v48, 1e-05
  %v51 = vrsqrt.pop %v49
  %v52 = vrsqrt.pop %v50
  %v53 = vmul.f32 %v37, %v51
  %v54 = vmul.f32 %v38, %v52
  %v55 = vld [vmem:[%s2] sm:$0x1]
  %v57 = vlaneseq
  %v58 = vshrl.u32 %v57, 7
  %v59 = vsub.s32 0, %v58
  %v60 = vrot.slane %v55, %v59
  %v62 = vmul.f32 %v53, %v60
  %v63 = vmul.f32 %v54, %v60
  %v64 = vld [vmem:[%s3] sm:$0x1]
  %v66 = vlaneseq
  %v67 = vshrl.u32 %v66, 7
  %v68 = vsub.s32 0, %v67
  %v69 = vrot.slane %v64, %v68
  %v71 = vadd.f32 %v62, %v69
  %v72 = vadd.f32 %v63, %v69
  %v73 = vpack.c.bf16 %v72, %v71
  %v75 = vunpack.c.l.b16 %v73
  %v76 = vunpack.c.h.b16 %v73
  %v77 = vpack.c.b16 %v75, %v75
  %v78 = vpack.c.b16 %v76, %v76
  %vm81 = vcmask 257024
  %82 = vst.msk [vmem:[%s4] sm:$0xf] %vm81, %v77
  %83 = vst.msk [vmem:[%s4 + $0x4] sm:$0xf] %vm81, %v78
  // Predicated region
  $region18: #{sequential_absolute_forward.45} parent=0 // pred_check
    _
  $region19: #{sequential_absolute_forward.45} parent=0 // pred_check_branch
    %85 = sbr.rel (0) target = $region21
  $region20: #{sequential_absolute_forward.45} parent=0 // pred_region
    _
  $region21: #{sequential_absolute_forward.45} parent=0 // pred_fallthru
    _
  // Predicated region
  $region22: #{sequential_absolute_forward.45} parent=0 // pred_check
    _
  $region23: #{sequential_absolute_forward.45} parent=0 // pred_check_branch
    %87 = sbr.rel (0) target = $region25
  $region24: #{sequential_absolute_forward.45} parent=0 // pred_region
    _
  $region25: #{sequential_absolute_forward.45} parent=0 // pred_fallthru
    _

// kernel: sequential_absolute_forward.40
$region0: #{sequential_absolute_forward.40}
  #allocation0 [shape = 'u32[]', space=smem, size = 0x4, offset = 0x4, fixed_abs, tag = 'smem constant byte address 0x4 - core index']
  #allocation1 [shape = 'u32[144,128]{1,0:T(1,128)}', space=vmem, size = 0x12000, scoped, tag = 'internal scratch']
  #allocation2 [shape = 'f32[4,8,1]{2,1,0:T(8,128)}', space=vmem, size = 0x4000, scoped, tag = 'scratch operand']
  #allocation3 [shape = 'f32[4,8,1]{2,1,0:T(8,128)}', space=vmem, size = 0x4000, scoped, tag = 'scratch operand']
  #allocation4 [shape = 'f32[4,8,8]{2,1,0:T(8,128)}', space=vmem, size = 0x4000, scoped, tag = 'scratch operand']
  %s0 = inlined_call_operand.vmem [shape: bf16[9,8], index: 0, kind: input, shape index: {}]
  %s1 = inlined_call_operand.vmem [shape: bf16[2,4,8,8], index: 1, kind: input, shape index: {}]
  %s2 = inlined_call_operand.vmem [shape: bf16[2,4,8,8], index: 2, kind: input, shape index: {}]
  %s3 = inlined_call_operand.vmem [shape: bf16[2,4,8,8], index: 3, kind: input, shape index: {}]
  %s4 = inlined_call_operand.vmem [shape: s32[2,8,8], index: 4, kind: input, shape index: {}]
  %s5 = inlined_call_operand.vmem [shape: bf16[2,8,32], index: 5, kind: output, shape index: {}]
  %s6 = sld [smem:[#allocation0]]
  $region61: #{sequential_absolute_forward.40} parent=0
    _
  %s8 = ssub.s32 1, %s6
  %s9 = scalar_select 0, %s8, %s6
  loop: start=0, step=1, limit=4
  $region2: #{sequential_absolute_forward.40} parent=0 // loop_pre_header
    _
  $region3: #{sequential_absolute_forward.40} parent=0 // loop_header
    %s11 = sphi 0, %s15
    %p12 = scmp.ge.s32.totalorder %s11, 4
    %s18 = sphi 0, %s37
    %s19 = sphi 0, %s33
    %s20 = sphi 0, %s29
    %s21 = sphi 0, %s18
    %s22 = sphi 0, %s19
    %s23 = sphi 0, %s20
    %s24 = sphi 0, %s21
    %s25 = sphi 0, %s22
    %s26 = sphi 0, %s23
    %s38 = sphi 0, %s38
    %s40 = sphi 0, %s38
    %s41 = sphi 0, %s40
    %s55 = sphi 0, %s41
    %s63 = sphi 0, %s65
    %s66 = sphi 0, %s63
    %s67 = sphi 0, %s66
    %s83 = sphi 0, %s67
    %s91 = sphi 0, %s93
    %s94 = sphi 0, %s91
    %s95 = sphi 0, %s94
    %s111 = sphi 0, %s95
    %s119 = sphi 0, %s121
    %s122 = sphi 0, %s119
    %s123 = sphi 0, %s122
    %s139 = sphi 0, %s123
    %s149 = sphi 0, %s151
    %s152 = sphi 0, %s149
    %s153 = sphi 0, %s152
    %s169 = sphi 0, %s153
    %s177 = sphi 0, %s179
    %s180 = sphi 0, %s177
    %s181 = sphi 0, %s180
    %s197 = sphi 0, %s181
  $region4: #{sequential_absolute_forward.40} parent=0 // loop_header_branch
    %14 = sbr.rel (%p12) target = $region8
  $region5: #{sequential_absolute_forward.40} parent=0 // loop_body
    %s16 = ssub.s32 %s11, 1
    %s17 = ssub.s32 %s11, 2
    %s27 = sadd.s32 1, %s20
    %p28 = scmp.ge.s32.totalorder %s27, 1
    %s29 = scalar_select %p28, 0, %s27
    %s30 = sadd.s32 1, %s19
    %s31 = scalar_select %p28, %s30, %s19
    %p32 = scmp.ge.s32.totalorder %s31, 1
    %s33 = scalar_select %p32, 0, %s31
    %s34 = sadd.s32 1, %s18
    %s35 = scalar_select %p32, %s34, %s18
    %p36 = scmp.ge.s32.totalorder %s35, 2
    %s37 = scalar_select %p36, 0, %s35
    %s39 = sadd.s32 %s38, 1
    %p42 = scmp.eq.s32.totalorder %s11, 1
    %p43 = scmp.ne.s32.totalorder %s38, %s40
    %p44 = scmp.eq.s32.totalorder %s11, 0
    %p45 = por %p43, %p44
    %p46 = scmp.ne.s32.totalorder %s38, %s40
    %p47 = scmp.eq.s32.totalorder %s16, 1
    %p48 = por %p46, %p47
    %p49 = scmp.ne.s32.totalorder %s40, %s41
    %p50 = scmp.eq.s32.totalorder %s16, 0
    %p51 = por %p49, %p50
    %p52 = scmp.ne.s32.totalorder %s40, %s41
    %p53 = scmp.eq.s32.totalorder %s17, 1
    %p54 = por %p52, %p53
    %p56 = scmp.ne.s32.totalorder %s41, %s55
    %p57 = scmp.eq.s32.totalorder %s17, 0
    %p58 = por %p56, %p57
    %s59 = ssub.s32 %s18, %s37
    %s60 = ssub.s32 %s19, %s33
    %s61 = sor.u32 %s59, %s60
    %p62 = scmp.eq.s32.totalorder %s61, 0
    %s64 = sadd.s32 %s63, 1
    %s65 = scalar_select %p62, %s63, %s64
    %p68 = pneg %p62
    %p69 = scmp.eq.s32.totalorder %s11, 1
    %p70 = por %p68, %p69
    %p71 = scmp.ne.s32.totalorder %s63, %s66
    %p72 = scmp.eq.s32.totalorder %s11, 0
    %p73 = por %p71, %p72
    %p74 = scmp.ne.s32.totalorder %s63, %s66
    %p75 = scmp.eq.s32.totalorder %s16, 1
    %p76 = por %p74, %p75
    %p77 = scmp.ne.s32.totalorder %s66, %s67
    %p78 = scmp.eq.s32.totalorder %s16, 0
    %p79 = por %p77, %p78
    %p80 = scmp.ne.s32.totalorder %s66, %s67
    %p81 = scmp.eq.s32.totalorder %s17, 1
    %p82 = por %p80, %p81
    %p84 = scmp.ne.s32.totalorder %s67, %s83
    %p85 = scmp.eq.s32.totalorder %s17, 0
    %p86 = por %p84, %p85
    %s87 = ssub.s32 %s18, %s37
    %s88 = ssub.s32 %s20, %s29
    %s89 = sor.u32 %s87, %s88
    %p90 = scmp.eq.s32.totalorder %s89, 0
    %s92 = sadd.s32 %s91, 1
    %s93 = scalar_select %p90, %s91, %s92
    %p96 = pneg %p90
    %p97 = scmp.eq.s32.totalorder %s11, 1
    %p98 = por %p96, %p97
    %p99 = scmp.ne.s32.totalorder %s91, %s94
    %p100 = scmp.eq.s32.totalorder %s11, 0
    %p101 = por %p99, %p100
    %p102 = scmp.ne.s32.totalorder %s91, %s94
    %p103 = scmp.eq.s32.totalorder %s16, 1
    %p104 = por %p102, %p103
    %p105 = scmp.ne.s32.totalorder %s94, %s95
    %p106 = scmp.eq.s32.totalorder %s16, 0
    %p107 = por %p105, %p106
    %p108 = scmp.ne.s32.totalorder %s94, %s95
    %p109 = scmp.eq.s32.totalorder %s17, 1
    %p110 = por %p108, %p109
    %p112 = scmp.ne.s32.totalorder %s95, %s111
    %p113 = scmp.eq.s32.totalorder %s17, 0
    %p114 = por %p112, %p113
    %s115 = ssub.s32 %s18, %s37
    %s116 = ssub.s32 %s20, %s29
    %s117 = sor.u32 %s115, %s116
    %p118 = scmp.eq.s32.totalorder %s117, 0
    %s120 = sadd.s32 %s119, 1
    %s121 = scalar_select %p118, %s119, %s120
    %p124 = pneg %p118
    %p125 = scmp.eq.s32.totalorder %s11, 1
    %p126 = por %p124, %p125
    %p127 = scmp.ne.s32.totalorder %s119, %s122
    %p128 = scmp.eq.s32.totalorder %s11, 0
    %p129 = por %p127, %p128
    %p130 = scmp.ne.s32.totalorder %s119, %s122
    %p131 = scmp.eq.s32.totalorder %s16, 1
    %p132 = por %p130, %p131
    %p133 = scmp.ne.s32.totalorder %s122, %s123
    %p134 = scmp.eq.s32.totalorder %s16, 0
    %p135 = por %p133, %p134
    %p136 = scmp.ne.s32.totalorder %s122, %s123
    %p137 = scmp.eq.s32.totalorder %s17, 1
    %p138 = por %p136, %p137
    %p140 = scmp.ne.s32.totalorder %s123, %s139
    %p141 = scmp.eq.s32.totalorder %s17, 0
    %p142 = por %p140, %p141
    %s143 = ssub.s32 %s18, %s37
    %s144 = ssub.s32 %s19, %s33
    %s145 = sor.u32 %s143, %s144
    %s146 = ssub.s32 %s20, %s29
    %s147 = sor.u32 %s145, %s146
    %p148 = scmp.eq.s32.totalorder %s147, 0
    %s150 = sadd.s32 %s149, 1
    %s151 = scalar_select %p148, %s149, %s150
    %p154 = pneg %p148
    %p155 = scmp.eq.s32.totalorder %s11, 1
    %p156 = por %p154, %p155
    %p157 = scmp.ne.s32.totalorder %s149, %s152
    %p158 = scmp.eq.s32.totalorder %s11, 0
    %p159 = por %p157, %p158
    %p160 = scmp.ne.s32.totalorder %s149, %s152
    %p161 = scmp.eq.s32.totalorder %s16, 1
    %p162 = por %p160, %p161
    %p163 = scmp.ne.s32.totalorder %s152, %s153
    %p164 = scmp.eq.s32.totalorder %s16, 0
    %p165 = por %p163, %p164
    %p166 = scmp.ne.s32.totalorder %s152, %s153
    %p167 = scmp.eq.s32.totalorder %s17, 1
    %p168 = por %p166, %p167
    %p170 = scmp.ne.s32.totalorder %s153, %s169
    %p171 = scmp.eq.s32.totalorder %s17, 0
    %p172 = por %p170, %p171
    %s173 = ssub.s32 %s18, %s37
    %s174 = ssub.s32 %s19, %s33
    %s175 = sor.u32 %s173, %s174
    %p176 = scmp.eq.s32.totalorder %s175, 0
    %s178 = sadd.s32 %s177, 1
    %s179 = scalar_select %p176, %s177, %s178
    %p182 = pneg %p176
    %p183 = scmp.eq.s32.totalorder %s11, 1
    %p184 = por %p182, %p183
    %p185 = scmp.ne.s32.totalorder %s177, %s180
    %p186 = scmp.eq.s32.totalorder %s11, 0
    %p187 = por %p185, %p186
    %p188 = scmp.ne.s32.totalorder %s177, %s180
    %p189 = scmp.eq.s32.totalorder %s16, 1
    %p190 = por %p188, %p189
    %p191 = scmp.ne.s32.totalorder %s180, %s181
    %p192 = scmp.eq.s32.totalorder %s16, 0
    %p193 = por %p191, %p192
    %p194 = scmp.ne.s32.totalorder %s180, %s181
    %p195 = scmp.eq.s32.totalorder %s17, 1
    %p196 = por %p194, %p195
    %p198 = scmp.ne.s32.totalorder %s181, %s197
    %p199 = scmp.eq.s32.totalorder %s17, 0
    %p200 = por %p198, %p199
    %p201 = scmp.le.s32.totalorder 1, %s11
    %p202 = scmp.lt.s32.totalorder %s11, 3
    %p203 = pnand %p201, %p202
    %p204 = pneg %p203
    // Predicated region
    $region9: #{sequential_absolute_forward.40} parent=5 // pred_check
      _
    $region10: #{sequential_absolute_forward.40} parent=5 // pred_check_branch
      %206 = sbr.rel (%p203) target = $region12
    $region11: #{sequential_absolute_forward.40} parent=5 // pred_region
      %s207 = ssub.s32 %s11, 1
      // Predicated region
      $region13: #{sequential_absolute_forward.40} parent=11 // pred_check
        %p208 = pneg %p51
      $region14: #{sequential_absolute_forward.40} parent=11 // pred_check_branch
        %210 = sbr.rel (%p208) target = $region16
      $region15: #{sequential_absolute_forward.40} parent=11 // pred_region
        _
      $region16: #{sequential_absolute_forward.40} parent=11 // pred_fallthru
        _
    $region12: #{sequential_absolute_forward.40} parent=5 // pred_fallthru
      _
    %p211 = scmp.lt.s32.totalorder %s11, 2
    // Predicated region
    $region17: #{sequential_absolute_forward.40} parent=5 // pred_check
      %p212 = pneg %p211
    $region18: #{sequential_absolute_forward.40} parent=5 // pred_check_branch
      %214 = sbr.rel (%p212) target = $region20
    $region19: #{sequential_absolute_forward.40} parent=5 // pred_region
      // Predicated region
      $region21: #{sequential_absolute_forward.40} parent=19 // pred_check
        %p215 = pneg %p73
      $region22: #{sequential_absolute_forward.40} parent=19 // pred_check_branch
        %217 = sbr.rel (%p215) target = $region24
      $region23: #{sequential_absolute_forward.40} parent=19 // pred_region
        %p218 = scmp.lt.s32.totalorder %s18, 1
        %s219 = scalar_select %p218, %s18, 1
        %p220 = scmp.lt.s32.totalorder %s19, 0
        %s221 = scalar_select %p220, %s19, 0
        %s222 = smul.addr %s219, 4
        %s223 = sadd.s32 %s221, %s222
        %s224 = smul.addr %s223, 4
        %s225 = scalar_lea.vmem %s1, %s224
      $region24: #{sequential_absolute_forward.40} parent=19 // pred_fallthru
        _
      // Predicated region
      $region25: #{sequential_absolute_forward.40} parent=19 // pred_check
        %p226 = pneg %p101
      $region26: #{sequential_absolute_forward.40} parent=19 // pred_check_branch
        %228 = sbr.rel (%p226) target = $region28
      $region27: #{sequential_absolute_forward.40} parent=19 // pred_region
        %p229 = scmp.lt.s32.totalorder %s18, 1
        %s230 = scalar_select %p229, %s18, 1
        %p231 = scmp.lt.s32.totalorder %s20, 0
        %s232 = scalar_select %p231, %s20, 0
        %s233 = smul.addr %s230, 4
        %s234 = sadd.s32 %s232, %s233
        %s235 = smul.addr %s234, 4
        %s236 = scalar_lea.vmem %s2, %s235
      $region28: #{sequential_absolute_forward.40} parent=19 // pred_fallthru
        _
      // Predicated region
      $region29: #{sequential_absolute_forward.40} parent=19 // pred_check
        %p237 = pneg %p129
      $region30: #{sequential_absolute_forward.40} parent=19 // pred_check_branch
        %239 = sbr.rel (%p237) target = $region32
      $region31: #{sequential_absolute_forward.40} parent=19 // pred_region
        %p240 = scmp.lt.s32.totalorder %s18, 1
        %s241 = scalar_select %p240, %s18, 1
        %p242 = scmp.lt.s32.totalorder %s20, 0
        %s243 = scalar_select %p242, %s20, 0
        %s244 = smul.addr %s241, 4
        %s245 = sadd.s32 %s243, %s244
        %s246 = smul.addr %s245, 4
        %s247 = scalar_lea.vmem %s3, %s246
      $region32: #{sequential_absolute_forward.40} parent=19 // pred_fallthru
        _
      // Predicated region
      $region33: #{sequential_absolute_forward.40} parent=19 // pred_check
        %p248 = pneg %p159
      $region34: #{sequential_absolute_forward.40} parent=19 // pred_check_branch
        %250 = sbr.rel (%p248) target = $region36
      $region35: #{sequential_absolute_forward.40} parent=19 // pred_region
        %p251 = scmp.lt.s32.totalorder %s18, 1
        %s252 = scalar_select %p251, %s18, 1
        %p253 = scmp.lt.s32.totalorder %s19, 0
        %s254 = scalar_select %p253, %s19, 0
        %p255 = scmp.lt.s32.totalorder %s20, 0
        %s256 = scalar_select %p255, %s20, 0
        %s257 = sadd.s32 %s256, %s254
        %s258 = sadd.s32 %s257, %s252
        %s259 = smul.addr %s258, 8
        %s260 = scalar_lea.vmem %s4, %s259
      $region36: #{sequential_absolute_forward.40} parent=19 // pred_fallthru
        _
    $region20: #{sequential_absolute_forward.40} parent=5 // pred_fallthru
      _
    %p261 = scmp.le.s32.totalorder 1, %s11
    %p262 = scmp.lt.s32.totalorder %s11, 3
    %p263 = pnand %p261, %p262
    %p264 = pneg %p263
    // Predicated region
    $region37: #{sequential_absolute_forward.40} parent=5 // pred_check
      _
    $region38: #{sequential_absolute_forward.40} parent=5 // pred_check_branch
      %266 = sbr.rel (%p263) target = $region40
    $region39: #{sequential_absolute_forward.40} parent=5 // pred_region
      %s267 = ssub.s32 %s11, 1
      %p268 = pneg %p51
      %p269 = pneg %p48
      %p270 = scmp.lt.s32.totalorder %s21, 1
      %s271 = scalar_select %p270, %s21, 1
      %p272 = scmp.lt.s32.totalorder %s22, 0
      %s273 = scalar_select %p272, %s22, 0
      %s274 = smul.addr %s271, 4
      %s275 = sadd.s32 %s273, %s274
      %s276 = smul.addr %s275, 4
      %s277 = scalar_lea.vmem %s1, %s276
      %p278 = pneg %p79
      %p279 = pneg %p76
      %p280 = scmp.lt.s32.totalorder %s21, 1
      %s281 = scalar_select %p280, %s21, 1
      %p282 = scmp.lt.s32.totalorder %s23, 0
      %s283 = scalar_select %p282, %s23, 0
      %s284 = smul.addr %s281, 4
      %s285 = sadd.s32 %s283, %s284
      %s286 = smul.addr %s285, 4
      %s287 = scalar_lea.vmem %s2, %s286
      %p288 = pneg %p107
      %p289 = pneg %p104
      %p290 = scmp.lt.s32.totalorder %s21, 1
      %s291 = scalar_select %p290, %s21, 1
      %p292 = scmp.lt.s32.totalorder %s23, 0
      %s293 = scalar_select %p292, %s23, 0
      %s294 = smul.addr %s291, 4
      %s295 = sadd.s32 %s293, %s294
      %s296 = smul.addr %s295, 4
      %s297 = scalar_lea.vmem %s3, %s296
      %p298 = pneg %p135
      %p299 = pneg %p132
      %p300 = scmp.lt.s32.totalorder %s21, 1
      %s301 = scalar_select %p300, %s21, 1
      %p302 = scmp.lt.s32.totalorder %s22, 0
      %s303 = scalar_select %p302, %s22, 0
      %p304 = scmp.lt.s32.totalorder %s23, 0
      %s305 = scalar_select %p304, %s23, 0
      %s306 = sadd.s32 %s305, %s303
      %s307 = sadd.s32 %s306, %s301
      %s308 = smul.addr %s307, 8
      %s309 = scalar_lea.vmem %s4, %s308
      %p310 = pneg %p165
      %p311 = pneg %p162
      %p312 = pneg %p193
      %p313 = pneg %p190
      %p314 = scmp.lt.s32.totalorder %s21, 1
      %s315 = scalar_select %p314, %s21, 1
      %p316 = scmp.lt.s32.totalorder %s22, 0
      %s317 = scalar_select %p316, %s22, 0
      %s318 = sadd.s32 %s317, %s315
      %s319 = smul.addr %s318, 4
      %s320 = scalar_lea.vmem %s5, %s319
      %p321 = scmp.lt.s32.totalorder %s21, 1
      %s322 = scalar_select %p321, %s21, 1
      %p323 = scmp.lt.s32.totalorder %s22, 0
      %s324 = scalar_select %p323, %s22, 0
      %s325 = smul.addr %s322, 4
      %s326 = sadd.s32 %s324, %s325
      %s327 = smul.addr %s326, 4
      %s328 = scalar_lea.vmem %s1, %s327
      %p329 = scmp.lt.s32.totalorder %s21, 1
      %s330 = scalar_select %p329, %s21, 1
      %p331 = scmp.lt.s32.totalorder %s23, 0
      %s332 = scalar_select %p331, %s23, 0
      %s333 = smul.addr %s330, 4
      %s334 = sadd.s32 %s332, %s333
      %s335 = smul.addr %s334, 4
      %s336 = scalar_lea.vmem %s2, %s335
      %p337 = scmp.lt.s32.totalorder %s21, 1
      %s338 = scalar_select %p337, %s21, 1
      %p339 = scmp.lt.s32.totalorder %s23, 0
      %s340 = scalar_select %p339, %s23, 0
      %s341 = smul.addr %s338, 4
      %s342 = sadd.s32 %s340, %s341
      %s343 = smul.addr %s342, 4
      %s344 = scalar_lea.vmem %s3, %s343
      %p345 = scmp.lt.s32.totalorder %s21, 1
      %s346 = scalar_select %p345, %s21, 1
      %p347 = scmp.lt.s32.totalorder %s22, 0
      %s348 = scalar_select %p347, %s22, 0
      %p349 = scmp.lt.s32.totalorder %s23, 0
      %s350 = scalar_select %p349, %s23, 0
      %s351 = sadd.s32 %s350, %s348
      %s352 = sadd.s32 %s351, %s346
      %s353 = smul.addr %s352, 8
      %s354 = scalar_lea.vmem %s4, %s353
      %p355 = scmp.lt.s32.totalorder %s21, 1
      %s356 = scalar_select %p355, %s21, 1
      %p357 = scmp.lt.s32.totalorder %s22, 0
      %s358 = scalar_select %p357, %s22, 0
      %s359 = sadd.s32 %s358, %s356
      %s360 = smul.addr %s359, 4
      %s361 = scalar_lea.vmem %s5, %s360
      %p363 = scmp.eq.s32.totalorder %s23, 0
      // Predicated region
      $region41: #{sequential_absolute_forward.40} parent=39 // pred_check
        %p364 = pneg %p363
      $region42: #{sequential_absolute_forward.40} parent=39 // pred_check_branch
        %366 = sbr.rel (%p364) target = $region44
      $region43: #{sequential_absolute_forward.40} parent=39 // pred_region
        %vm367 = vcmask 7168
        %368 = vst.msk [vmem:[#allocation2] sm:$0xff] %vm367, -inf
        %369 = vst.msk [vmem:[#allocation2 + $0x8] sm:$0xff] %vm367, -inf
        %370 = vst.msk [vmem:[#allocation2 + $0x10] sm:$0xff] %vm367, -inf
        %371 = vst.msk [vmem:[#allocation2 + $0x18] sm:$0xff] %vm367, -inf
        %372 = vst.msk [vmem:[#allocation3] sm:$0xff] %vm367, 0.0
        %373 = vst.msk [vmem:[#allocation3 + $0x8] sm:$0xff] %vm367, 0.0
        %374 = vst.msk [vmem:[#allocation3 + $0x10] sm:$0xff] %vm367, 0.0
        %375 = vst.msk [vmem:[#allocation3 + $0x18] sm:$0xff] %vm367, 0.0
        %vm376 = vcmask 64512
        %377 = vst.msk [vmem:[#allocation4] sm:$0xff] %vm376, 0.0
        %378 = vst.msk [vmem:[#allocation4 + $0x8] sm:$0xff] %vm376, 0.0
        %379 = vst.msk [vmem:[#allocation4 + $0x10] sm:$0xff] %vm376, 0.0
        %380 = vst.msk [vmem:[#allocation4 + $0x18] sm:$0xff] %vm376, 0.0
      $region44: #{sequential_absolute_forward.40} parent=39 // pred_fallthru
        _
      %s381 = smul.u32 %s22, 8
      %v382 = vlaneseq
      %v383 = vshrl.u32 %v382, 7
      %v384 = vstv %s381
      %v385 = vadd.s32 %v384, %v383
      %s386 = smul.u32 %s23, 8
      %v387 = vlaneseq
      %v388 = vand.u32 %v387, 127
      %v389 = vstv %s386
      %v390 = vadd.s32 %v389, %v388
      %v391 = vsub.s32 %v385, %v390
      %vm392 = vcmp.gt.s32.totalorder %v391, 4294967292
      %v393 = vsel %vm392, %v391, 4294967292
      %vm394 = vcmp.lt.s32.totalorder %v393, 4
      %v395 = vsel %vm394, %v393, 4
      %v396 = vadd.s32 %v395, 4
      %v397 = vld [vmem:[%s354] sm:$0xff]
      %vm398 = vcmp.ne.s32.totalorder %v397, 0
      %v399 = vld [vmem:[%s0] sm:$0xf]
      %v400 = vld [vmem:[%s0 + $0x4] sm:$0x1]
      %v401 = vld [vmem:[%s328] sm:$0xf]
      %v402 = vld [vmem:[%s336] sm:$0xf]
      %v404 = vpack.i.b16 %v399, %v399
      %v406 = vlaneseq
      %v407 = vshrl.u32 %v406, 7
      %v408 = vsub.s32 0, %v407
      %v409 = vrot.slane %v404, %v408
      %v410 = vmul.bf16 %v401, %v409
      %vm411 = vcmask 64512
      %v413 = vsel %vm411, %v410, 0
      %vm415 = vcmask 1043456
      %v417 = vsel %vm415, %v402, 0
      %419 = vmatprep.subr.bf16.mxu0 0
      %420 = vmatpush1.bf16.msra.mxu0 0
      %421 = vmatprep.subr.bf16.mxu0 0
      %422 = vmatpush1.bf16.msra.mxu0 0
      %423 = vmatprep.subr.bf16.mxu0 0
      %424 = vmatpush1.bf16.msra.mxu0 0
      %425 = vmatprep.subr.bf16.mxu0 0
      %426 = vmatpush1.bf16.msra.mxu0 0
      %427 = vmatprep.subr.bf16.mxu0 0
      %428 = vmatpush1.bf16.msra.mxu0 0
      %429 = vmatprep.subr.bf16.mxu0 0
      %430 = vmatpush1.bf16.msra.mxu0 0
      %431 = vmatprep.subr.bf16.mxu0 0
      %432 = vmatpush1.bf16.msra.mxu0 0
      %433 = vmatprep.subr.bf16.mxu0 0
      %434 = vmatpush1.bf16.msra.mxu0 %v417
      %435 = vmatprep.subr.bf16.mxu0 0
      %436 = vmatpush2.bf16.msra.mxu0 0
      %437 = vmatprep.subr.bf16.mxu0 0
      %438 = vmatpush2.bf16.msra.mxu0 0
      %439 = vmatprep.subr.bf16.mxu0 0
      %440 = vmatpush2.bf16.msra.mxu0 0
      %441 = vmatprep.subr.bf16.mxu0 0
      %442 = vmatpush2.bf16.msra.mxu0 0
      %443 = vmatprep.subr.bf16.mxu0 0
      %444 = vmatpush2.bf16.msra.mxu0 0
      %445 = vmatprep.subr.bf16.mxu0 0
      %446 = vmatpush2.bf16.msra.mxu0 0
      %447 = vmatprep.subr.bf16.mxu0 0
      %448 = vmatpush2.bf16.msra.mxu0 0
      %449 = vmatprep.subr.bf16.mxu0 0
      %450 = vmatpush2.bf16.msra.mxu0 0
      %451 = vmatprep.mubr.bf16.mxu0 0
      %452 = vmatmul.mubr.bf16.gmra.mxu0 %v413
      %v453 = vpop.f32.mrf.mxu0
      %v454 = vadd.f32 0.0, %v453
      %v455 = vpop.f32.mrf.mxu0
      %v456 = vpop.f32.mrf.mxu0
      %v457 = vpop.f32.mrf.mxu0
      %458 = vdwg.mxu0
      %vm459 = vcmp.eq.s32.totalorder %v396, 0
      %v460 = vsel %vm459, %v454, 0.0
      %v461 = vadd.f32 %v460, 0.0
      %v462 = vshrl.u32 %v399, 16
      %v463 = vpack.i.b16 %v462, %v462
      %v465 = vlaneseq
      %v466 = vshrl.u32 %v465, 7
      %v467 = vsub.s32 0, %v466
      %v468 = vrot.slane %v463, %v467
      %v469 = vmul.bf16 %v401, %v468
      %v471 = vsel %vm411, %v469, 0
      %473 = vmatprep.subr.bf16.mxu0 0
      %474 = vmatpush1.bf16.msra.mxu0 0
      %475 = vmatprep.subr.bf16.mxu0 0
      %476 = vmatpush1.bf16.msra.mxu0 0
      %477 = vmatprep.subr.bf16.mxu0 0
      %478 = vmatpush1.bf16.msra.mxu0 0
      %479 = vmatprep.subr.bf16.mxu0 0
      %480 = vmatpush1.bf16.msra.mxu0 0
      %481 = vmatprep.subr.bf16.mxu0 0
      %482 = vmatpush1.bf16.msra.mxu0 0
      %483 = vmatprep.subr.bf16.mxu0 0
      %484 = vmatpush1.bf16.msra.mxu0 0
      %485 = vmatprep.subr.bf16.mxu0 0
      %486 = vmatpush1.bf16.msra.mxu0 0
      %487 = vmatprep.subr.bf16.mxu0 0
      %488 = vmatpush1.bf16.msra.mxu0 %v417
      %489 = vmatprep.subr.bf16.mxu0 0
      %490 = vmatpush2.bf16.msra.mxu0 0
      %491 = vmatprep.subr.bf16.mxu0 0
      %492 = vmatpush2.bf16.msra.mxu0 0
      %493 = vmatprep.subr.bf16.mxu0 0
      %494 = vmatpush2.bf16.msra.mxu0 0
      %495 = vmatprep.subr.bf16.mxu0 0
      %496 = vmatpush2.bf16.msra.mxu0 0
      %497 = vmatprep.subr.bf16.mxu0 0
      %498 = vmatpush2.bf16.msra.mxu0 0
      %499 = vmatprep.subr.bf16.mxu0 0
      %500 = vmatpush2.bf16.msra.mxu0 0
      %501 = vmatprep.subr.bf16.mxu0 0
      %502 = vmatpush2.bf16.msra.mxu0 0
      %503 = vmatprep.subr.bf16.mxu0 0
      %504 = vmatpush2.bf16.msra.mxu0 0
      %505 = vmatprep.mubr.bf16.mxu0 0
      %506 = vmatmul.mubr.bf16.gmra.mxu0 %v471
      %v507 = vpop.f32.mrf.mxu0
      %v508 = vadd.f32 0.0, %v507
      %v509 = vpop.f32.mrf.mxu0
      %v510 = vpop.f32.mrf.mxu0
      %v511 = vpop.f32.mrf.mxu0
      %512 = vdwg.mxu0
      %vm513 = vcmp.eq.s32.totalorder %v396, 1
      %v514 = vsel %vm513, %v508, 0.0
      %v515 = vadd.f32 %v461, %v514
      %v516 = vlaneseq
      %v517 = vshrl.u32 %v516, 7
      %v518 = vsub.s32 1, %v517
      %v519 = vrot.slane %v404, %v518
      %v520 = vmul.bf16 %v401, %v519
      %v522 = vsel %vm411, %v520, 0
      %524 = vmatprep.subr.bf16.mxu0 0
      %525 = vmatpush1.bf16.msra.mxu0 0
      %526 = vmatprep.subr.bf16.mxu0 0
      %527 = vmatpush1.bf16.msra.mxu0 0
      %528 = vmatprep.subr.bf16.mxu0 0
      %529 = vmatpush1.bf16.msra.mxu0 0
      %530 = vmatprep.subr.bf16.mxu0 0
      %531 = vmatpush1.bf16.msra.mxu0 0
      %532 = vmatprep.subr.bf16.mxu0 0
      %533 = vmatpush1.bf16.msra.mxu0 0
      %534 = vmatprep.subr.bf16.mxu0 0
      %535 = vmatpush1.bf16.msra.mxu0 0
      %536 = vmatprep.subr.bf16.mxu0 0
      %537 = vmatpush1.bf16.msra.mxu0 0
      %538 = vmatprep.subr.bf16.mxu0 0
      %539 = vmatpush1.bf16.msra.mxu0 %v417
      %540 = vmatprep.subr.bf16.mxu0 0
      %541 = vmatpush2.bf16.msra.mxu0 0
      %542 = vmatprep.subr.bf16.mxu0 0
      %543 = vmatpush2.bf16.msra.mxu0 0
      %544 = vmatprep.subr.bf16.mxu0 0
      %545 = vmatpush2.bf16.msra.mxu0 0
      %546 = vmatprep.subr.bf16.mxu0 0
      %547 = vmatpush2.bf16.msra.mxu0 0
      %548 = vmatprep.subr.bf16.mxu0 0
      %549 = vmatpush2.bf16.msra.mxu0 0
      %550 = vmatprep.subr.bf16.mxu0 0
      %551 = vmatpush2.bf16.msra.mxu0 0
      %552 = vmatprep.subr.bf16.mxu0 0
      %553 = vmatpush2.bf16.msra.mxu0 0
      %554 = vmatprep.subr.bf16.mxu0 0
      %555 = vmatpush2.bf16.msra.mxu0 0
      %556 = vmatprep.mubr.bf16.mxu0 0
      %557 = vmatmul.mubr.bf16.gmra.mxu0 %v522
      %v558 = vpop.f32.mrf.mxu0
      %v559 = vadd.f32 0.0, %v558
      %v560 = vpop.f32.mrf.mxu0
      %v561 = vpop.f32.mrf.mxu0
      %v562 = vpop.f32.mrf.mxu0
      %563 = vdwg.mxu0
      %vm564 = vcmp.eq.s32.totalorder %v396, 2
      %v565 = vsel %vm564, %v559, 0.0
      %v566 = vadd.f32 %v515, %v565
      %v567 = vlaneseq
      %v568 = vshrl.u32 %v567, 7
      %v569 = vsub.s32 1, %v568
      %v570 = vrot.slane %v463, %v569
      %v571 = vmul.bf16 %v401, %v570
      %v573 = vsel %vm411, %v571, 0
      %575 = vmatprep.subr.bf16.mxu0 0
      %576 = vmatpush1.bf16.msra.mxu0 0
      %577 = vmatprep.subr.bf16.mxu0 0
      %578 = vmatpush1.bf16.msra.mxu0 0
      %579 = vmatprep.subr.bf16.mxu0 0
      %580 = vmatpush1.bf16.msra.mxu0 0
      %581 = vmatprep.subr.bf16.mxu0 0
      %582 = vmatpush1.bf16.msra.mxu0 0
      %583 = vmatprep.subr.bf16.mxu0 0
      %584 = vmatpush1.bf16.msra.mxu0 0
      %585 = vmatprep.subr.bf16.mxu0 0
      %586 = vmatpush1.bf16.msra.mxu0 0
      %587 = vmatprep.subr.bf16.mxu0 0
      %588 = vmatpush1.bf16.msra.mxu0 0
      %589 = vmatprep.subr.bf16.mxu0 0
      %590 = vmatpush1.bf16.msra.mxu0 %v417
      %591 = vmatprep.subr.bf16.mxu0 0
      %592 = vmatpush2.bf16.msra.mxu0 0
      %593 = vmatprep.subr.bf16.mxu0 0
      %594 = vmatpush2.bf16.msra.mxu0 0
      %595 = vmatprep.subr.bf16.mxu0 0
      %596 = vmatpush2.bf16.msra.mxu0 0
      %597 = vmatprep.subr.bf16.mxu0 0
      %598 = vmatpush2.bf16.msra.mxu0 0
      %599 = vmatprep.subr.bf16.mxu0 0
      %600 = vmatpush2.bf16.msra.mxu0 0
      %601 = vmatprep.subr.bf16.mxu0 0
      %602 = vmatpush2.bf16.msra.mxu0 0
      %603 = vmatprep.subr.bf16.mxu0 0
      %604 = vmatpush2.bf16.msra.mxu0 0
      %605 = vmatprep.subr.bf16.mxu0 0
      %606 = vmatpush2.bf16.msra.mxu0 0
      %607 = vmatprep.mubr.bf16.mxu0 0
      %608 = vmatmul.mubr.bf16.gmra.mxu0 %v573
      %v609 = vpop.f32.mrf.mxu0
      %v610 = vadd.f32 0.0, %v609
      %v611 = vpop.f32.mrf.mxu0
      %v612 = vpop.f32.mrf.mxu0
      %v613 = vpop.f32.mrf.mxu0
      %614 = vdwg.mxu0
      %vm615 = vcmp.eq.s32.totalorder %v396, 3
      %v616 = vsel %vm615, %v610, 0.0
      %v617 = vadd.f32 %v566, %v616
      %v618 = vlaneseq
      %v619 = vshrl.u32 %v618, 7
      %v620 = vsub.s32 2, %v619
      %v621 = vrot.slane %v404, %v620
      %v622 = vmul.bf16 %v401, %v621
      %v624 = vsel %vm411, %v622, 0
      %626 = vmatprep.subr.bf16.mxu0 0
      %627 = vmatpush1.bf16.msra.mxu0 0
      %628 = vmatprep.subr.bf16.mxu0 0
      %629 = vmatpush1.bf16.msra.mxu0 0
      %630 = vmatprep.subr.bf16.mxu0 0
      %631 = vmatpush1.bf16.msra.mxu0 0
      %632 = vmatprep.subr.bf16.mxu0 0
      %633 = vmatpush1.bf16.msra.mxu0 0
      %634 = vmatprep.subr.bf16.mxu0 0
      %635 = vmatpush1.bf16.msra.mxu0 0
      %636 = vmatprep.subr.bf16.mxu0 0
      %637 = vmatpush1.bf16.msra.mxu0 0
      %638 = vmatprep.subr.bf16.mxu0 0
      %639 = vmatpush1.bf16.msra.mxu0 0
      %640 = vmatprep.subr.bf16.mxu0 0
      %641 = vmatpush1.bf16.msra.mxu0 %v417
      %642 = vmatprep.subr.bf16.mxu0 0
      %643 = vmatpush2.bf16.msra.mxu0 0
      %644 = vmatprep.subr.bf16.mxu0 0
      %645 = vmatpush2.bf16.msra.mxu0 0
      %646 = vmatprep.subr.bf16.mxu0 0
      %647 = vmatpush2.bf16.msra.mxu0 0
      %648 = vmatprep.subr.bf16.mxu0 0
      %649 = vmatpush2.bf16.msra.mxu0 0
      %650 = vmatprep.subr.bf16.mxu0 0
      %651 = vmatpush2.bf16.msra.mxu0 0
      %652 = vmatprep.subr.bf16.mxu0 0
      %653 = vmatpush2.bf16.msra.mxu0 0
      %654 = vmatprep.subr.bf16.mxu0 0
      %655 = vmatpush2.bf16.msra.mxu0 0
      %656 = vmatprep.subr.bf16.mxu0 0
      %657 = vmatpush2.bf16.msra.mxu0 0
      %658 = vmatprep.mubr.bf16.mxu0 0
      %659 = vmatmul.mubr.bf16.gmra.mxu0 %v624
      %v660 = vpop.f32.mrf.mxu0
      %v661 = vadd.f32 0.0, %v660
      %v662 = vpop.f32.mrf.mxu0
      %v663 = vpop.f32.mrf.mxu0
      %v664 = vpop.f32.mrf.mxu0
      %665 = vdwg.mxu0
      %vm666 = vcmp.eq.s32.totalorder %v396, 4
      %v667 = vsel %vm666, %v661, 0.0
      %v668 = vadd.f32 %v617, %v667
      %v669 = vlaneseq
      %v670 = vshrl.u32 %v669, 7
      %v671 = vsub.s32 2, %v670
      %v672 = vrot.slane %v463, %v671
      %v673 = vmul.bf16 %v401, %v672
      %v675 = vsel %vm411, %v673, 0
      %677 = vmatprep.subr.bf16.mxu0 0
      %678 = vmatpush1.bf16.msra.mxu0 0
      %679 = vmatprep.subr.bf16.mxu0 0
      %680 = vmatpush1.bf16.msra.mxu0 0
      %681 = vmatprep.subr.bf16.mxu0 0
      %682 = vmatpush1.bf16.msra.mxu0 0
      %683 = vmatprep.subr.bf16.mxu0 0
      %684 = vmatpush1.bf16.msra.mxu0 0
      %685 = vmatprep.subr.bf16.mxu0 0
      %686 = vmatpush1.bf16.msra.mxu0 0
      %687 = vmatprep.subr.bf16.mxu0 0
      %688 = vmatpush1.bf16.msra.mxu0 0
      %689 = vmatprep.subr.bf16.mxu0 0
      %690 = vmatpush1.bf16.msra.mxu0 0
      %691 = vmatprep.subr.bf16.mxu0 0
      %692 = vmatpush1.bf16.msra.mxu0 %v417
      %693 = vmatprep.subr.bf16.mxu0 0
      %694 = vmatpush2.bf16.msra.mxu0 0
      %695 = vmatprep.subr.bf16.mxu0 0
      %696 = vmatpush2.bf16.msra.mxu0 0
      %697 = vmatprep.subr.bf16.mxu0 0
      %698 = vmatpush2.bf16.msra.mxu0 0
      %699 = vmatprep.subr.bf16.mxu0 0
      %700 = vmatpush2.bf16.msra.mxu0 0
      %701 = vmatprep.subr.bf16.mxu0 0
      %702 = vmatpush2.bf16.msra.mxu0 0
      %703 = vmatprep.subr.bf16.mxu0 0
      %704 = vmatpush2.bf16.msra.mxu0 0
      %705 = vmatprep.subr.bf16.mxu0 0
      %706 = vmatpush2.bf16.msra.mxu0 0
      %707 = vmatprep.subr.bf16.mxu0 0
      %708 = vmatpush2.bf16.msra.mxu0 0
      %709 = vmatprep.mubr.bf16.mxu0 0
      %710 = vmatmul.mubr.bf16.gmra.mxu0 %v675
      %v711 = vpop.f32.mrf.mxu0
      %v712 = vadd.f32 0.0, %v711
      %v713 = vpop.f32.mrf.mxu0
      %v714 = vpop.f32.mrf.mxu0
      %v715 = vpop.f32.mrf.mxu0
      %716 = vdwg.mxu0
      %vm717 = vcmp.eq.s32.totalorder %v396, 5
      %v718 = vsel %vm717, %v712, 0.0
      %v719 = vadd.f32 %v668, %v718
      %v720 = vlaneseq
      %v721 = vshrl.u32 %v720, 7
      %v722 = vsub.s32 3, %v721
      %v723 = vrot.slane %v404, %v722
      %v724 = vmul.bf16 %v401, %v723
      %v726 = vsel %vm411, %v724, 0
      %728 = vmatprep.subr.bf16.mxu0 0
      %729 = vmatpush1.bf16.msra.mxu0 0
      %730 = vmatprep.subr.bf16.mxu0 0
      %731 = vmatpush1.bf16.msra.mxu0 0
      %732 = vmatprep.subr.bf16.mxu0 0
      %733 = vmatpush1.bf16.msra.mxu0 0
      %734 = vmatprep.subr.bf16.mxu0 0
      %735 = vmatpush1.bf16.msra.mxu0 0
      %736 = vmatprep.subr.bf16.mxu0 0
      %737 = vmatpush1.bf16.msra.mxu0 0
      %738 = vmatprep.subr.bf16.mxu0 0
      %739 = vmatpush1.bf16.msra.mxu0 0
      %740 = vmatprep.subr.bf16.mxu0 0
      %741 = vmatpush1.bf16.msra.mxu0 0
      %742 = vmatprep.subr.bf16.mxu0 0
      %743 = vmatpush1.bf16.msra.mxu0 %v417
      %744 = vmatprep.subr.bf16.mxu0 0
      %745 = vmatpush2.bf16.msra.mxu0 0
      %746 = vmatprep.subr.bf16.mxu0 0
      %747 = vmatpush2.bf16.msra.mxu0 0
      %748 = vmatprep.subr.bf16.mxu0 0
      %749 = vmatpush2.bf16.msra.mxu0 0
      %750 = vmatprep.subr.bf16.mxu0 0
      %751 = vmatpush2.bf16.msra.mxu0 0
      %752 = vmatprep.subr.bf16.mxu0 0
      %753 = vmatpush2.bf16.msra.mxu0 0
      %754 = vmatprep.subr.bf16.mxu0 0
      %755 = vmatpush2.bf16.msra.mxu0 0
      %756 = vmatprep.subr.bf16.mxu0 0
      %757 = vmatpush2.bf16.msra.mxu0 0
      %758 = vmatprep.subr.bf16.mxu0 0
      %759 = vmatpush2.bf16.msra.mxu0 0
      %760 = vmatprep.mubr.bf16.mxu0 0
      %761 = vmatmul.mubr.bf16.gmra.mxu0 %v726
      %v762 = vpop.f32.mrf.mxu0
      %v763 = vadd.f32 0.0, %v762
      %v764 = vpop.f32.mrf.mxu0
      %v765 = vpop.f32.mrf.mxu0
      %v766 = vpop.f32.mrf.mxu0
      %767 = vdwg.mxu0
      %vm768 = vcmp.eq.s32.totalorder %v396, 6
      %v769 = vsel %vm768, %v763, 0.0
      %v770 = vadd.f32 %v719, %v769
      %v771 = vlaneseq
      %v772 = vshrl.u32 %v771, 7
      %v773 = vsub.s32 3, %v772
      %v774 = vrot.slane %v463, %v773
      %v775 = vmul.bf16 %v401, %v774
      %v777 = vsel %vm411, %v775, 0
      %779 = vmatprep.subr.bf16.mxu0 0
      %780 = vmatpush1.bf16.msra.mxu0 0
      %781 = vmatprep.subr.bf16.mxu0 0
      %782 = vmatpush1.bf16.msra.mxu0 0
      %783 = vmatprep.subr.bf16.mxu0 0
      %784 = vmatpush1.bf16.msra.mxu0 0
      %785 = vmatprep.subr.bf16.mxu0 0
      %786 = vmatpush1.bf16.msra.mxu0 0
      %787 = vmatprep.subr.bf16.mxu0 0
      %788 = vmatpush1.bf16.msra.mxu0 0
      %789 = vmatprep.subr.bf16.mxu0 0
      %790 = vmatpush1.bf16.msra.mxu0 0
      %791 = vmatprep.subr.bf16.mxu0 0
      %792 = vmatpush1.bf16.msra.mxu0 0
      %793 = vmatprep.subr.bf16.mxu0 0
      %794 = vmatpush1.bf16.msra.mxu0 %v417
      %795 = vmatprep.subr.bf16.mxu0 0
      %796 = vmatpush2.bf16.msra.mxu0 0
      %797 = vmatprep.subr.bf16.mxu0 0
      %798 = vmatpush2.bf16.msra.mxu0 0
      %799 = vmatprep.subr.bf16.mxu0 0
      %800 = vmatpush2.bf16.msra.mxu0 0
      %801 = vmatprep.subr.bf16.mxu0 0
      %802 = vmatpush2.bf16.msra.mxu0 0
      %803 = vmatprep.subr.bf16.mxu0 0
      %804 = vmatpush2.bf16.msra.mxu0 0
      %805 = vmatprep.subr.bf16.mxu0 0
      %806 = vmatpush2.bf16.msra.mxu0 0
      %807 = vmatprep.subr.bf16.mxu0 0
      %808 = vmatpush2.bf16.msra.mxu0 0
      %809 = vmatprep.subr.bf16.mxu0 0
      %810 = vmatpush2.bf16.msra.mxu0 0
      %811 = vmatprep.mubr.bf16.mxu0 0
      %812 = vmatmul.mubr.bf16.gmra.mxu0 %v777
      %v813 = vpop.f32.mrf.mxu0
      %v814 = vadd.f32 0.0, %v813
      %v815 = vpop.f32.mrf.mxu0
      %v816 = vpop.f32.mrf.mxu0
      %v817 = vpop.f32.mrf.mxu0
      %818 = vdwg.mxu0
      %vm819 = vcmp.eq.s32.totalorder %v396, 7
      %v820 = vsel %vm819, %v814, 0.0
      %v821 = vadd.f32 %v770, %v820
      %v823 = vpack.i.b16 %v400, %v400
      %v825 = vlaneseq
      %v826 = vshrl.u32 %v825, 7
      %v827 = vsub.s32 0, %v826
      %v828 = vrot.slane %v823, %v827
      %v829 = vmul.bf16 %v401, %v828
      %v831 = vsel %vm411, %v829, 0
      %833 = vmatprep.subr.bf16.mxu0 0
      %834 = vmatpush1.bf16.msra.mxu0 0
      %835 = vmatprep.subr.bf16.mxu0 0
      %836 = vmatpush1.bf16.msra.mxu0 0
      %837 = vmatprep.subr.bf16.mxu0 0
      %838 = vmatpush1.bf16.msra.mxu0 0
      %839 = vmatprep.subr.bf16.mxu0 0
      %840 = vmatpush1.bf16.msra.mxu0 0
      %841 = vmatprep.subr.bf16.mxu0 0
      %842 = vmatpush1.bf16.msra.mxu0 0
      %843 = vmatprep.subr.bf16.mxu0 0
      %844 = vmatpush1.bf16.msra.mxu0 0
      %845 = vmatprep.subr.bf16.mxu0 0
      %846 = vmatpush1.bf16.msra.mxu0 0
      %847 = vmatprep.subr.bf16.mxu0 0
      %848 = vmatpush1.bf16.msra.mxu0 %v417
      %849 = vmatprep.subr.bf16.mxu0 0
      %850 = vmatpush2.bf16.msra.mxu0 0
      %851 = vmatprep.subr.bf16.mxu0 0
      %852 = vmatpush2.bf16.msra.mxu0 0
      %853 = vmatprep.subr.bf16.mxu0 0
      %854 = vmatpush2.bf16.msra.mxu0 0
      %855 = vmatprep.subr.bf16.mxu0 0
      %856 = vmatpush2.bf16.msra.mxu0 0
      %857 = vmatprep.subr.bf16.mxu0 0
      %858 = vmatpush2.bf16.msra.mxu0 0
      %859 = vmatprep.subr.bf16.mxu0 0
      %860 = vmatpush2.bf16.msra.mxu0 0
      %861 = vmatprep.subr.bf16.mxu0 0
      %862 = vmatpush2.bf16.msra.mxu0 0
      %863 = vmatprep.subr.bf16.mxu0 0
      %864 = vmatpush2.bf16.msra.mxu0 0
      %865 = vmatprep.mubr.bf16.mxu0 0
      %866 = vmatmul.mubr.bf16.gmra.mxu0 %v831
      %v867 = vpop.f32.mrf.mxu0
      %v868 = vadd.f32 0.0, %v867
      %v869 = vpop.f32.mrf.mxu0
      %v870 = vpop.f32.mrf.mxu0
      %v871 = vpop.f32.mrf.mxu0
      %872 = vdwg.mxu0
      %vm873 = vcmp.eq.s32.totalorder %v396, 8
      %v874 = vsel %vm873, %v868, 0.0
      %v875 = vadd.f32 %v821, %v874
      %v876 = vmul.f32 %v875, 0.35355338
      %v877 = vsel %vm398, %v876, -1e+10
      %v878 = vld [vmem:[#allocation2] sm:$0xff]
      %v879 = vsel %vm411, %v877, -inf
      %880 = vmax.xlane.f32.xlu0 %v879
      %v881 = vpop.xlane.xlu0 %880
      %v882 = vmax.f32 %v878, %v881
      %v883 = vsub.f32 %v878, %v882
      %v884 = vmul.f32 %v883, 1.442695
      %v885 = vpow.pop %v884
      %887 = vset.pattern.permute.xlu0 0
      %888 = vperm.xlu0 %887, %v882
      %v889 = vpop.permute.xlu0 %888
      %v891 = vsub.f32 %v877, %v889
      %v892 = vmul.f32 %v891, 1.442695
      %v893 = vpow.pop %v892
      %v894 = vld [vmem:[#allocation3] sm:$0xff]
      %v895 = vmul.f32 %v885, %v894
      %v896 = vsel %vm411, %v893, 0.0
      %897 = vadd.xlane.f32.xlu0 %v896
      %v898 = vpop.xlane.xlu0 %897
      %v899 = vadd.f32 %v895, %v898
      %vm900 = vcmask 7168
      %901 = vst.msk [vmem:[#allocation3] sm:$0xff] %vm900, %v899
      %v902 = vpack.c.bf16 %v893, %v893
      %v903 = vld [vmem:[%s344] sm:$0xf]
      %v905 = vsel %vm411, %v902, 0
      %v908 = vsel %vm415, %v903, 0
      %910 = vmatprep.subr.bf16.mxu0 0
      %911 = vmatpush1.bf16.msra.mxu0 0
      %912 = vmatprep.subr.bf16.mxu0 0
      %913 = vmatpush1.bf16.msra.mxu0 0
      %914 = vmatprep.subr.bf16.mxu0 0
      %915 = vmatpush1.bf16.msra.mxu0 0
      %916 = vmatprep.subr.bf16.mxu0 0
      %917 = vmatpush1.bf16.msra.mxu0 0
      %918 = vmatprep.subr.bf16.mxu0 0
      %919 = vmatpush1.bf16.msra.mxu0 0
      %920 = vmatprep.subr.bf16.mxu0 0
      %921 = vmatpush1.bf16.msra.mxu0 0
      %922 = vmatprep.subr.bf16.mxu0 0
      %923 = vmatpush1.bf16.msra.mxu0 0
      %924 = vmatprep.subr.bf16.mxu0 0
      %925 = vmatpush1.bf16.msra.mxu0 %v908
      %926 = vmatprep.subr.bf16.mxu0 0
      %927 = vmatpush2.bf16.msra.mxu0 0
      %928 = vmatprep.subr.bf16.mxu0 0
      %929 = vmatpush2.bf16.msra.mxu0 0
      %930 = vmatprep.subr.bf16.mxu0 0
      %931 = vmatpush2.bf16.msra.mxu0 0
      %932 = vmatprep.subr.bf16.mxu0 0
      %933 = vmatpush2.bf16.msra.mxu0 0
      %934 = vmatprep.subr.bf16.mxu0 0
      %935 = vmatpush2.bf16.msra.mxu0 0
      %936 = vmatprep.subr.bf16.mxu0 0
      %937 = vmatpush2.bf16.msra.mxu0 0
      %938 = vmatprep.subr.bf16.mxu0 0
      %939 = vmatpush2.bf16.msra.mxu0 0
      %940 = vmatprep.subr.bf16.mxu0 0
      %941 = vmatpush2.bf16.msra.mxu0 0
      %942 = vmatprep.mubr.bf16.mxu0 0
      %943 = vmatmul.mubr.bf16.gmra.mxu0 %v905
      %v944 = vpop.f32.mrf.mxu0
      %v945 = vadd.f32 0.0, %v944
      %v946 = vpop.f32.mrf.mxu0
      %v947 = vpop.f32.mrf.mxu0
      %v948 = vpop.f32.mrf.mxu0
      %949 = vdwg.mxu0
      %v950 = vld [vmem:[#allocation4] sm:$0xff]
      %952 = vset.pattern.permute.xlu0 0
      %953 = vperm.xlu0 %952, %v885
      %v954 = vpop.permute.xlu0 %953
      %v956 = vmul.f32 %v954, %v950
      %v957 = vadd.f32 %v956, %v945
      %958 = vst.msk [vmem:[#allocation4] sm:$0xff] %vm411, %v957
      %959 = vst.msk [vmem:[#allocation2] sm:$0xff] %vm900, %v882
      %s960 = scalar_lea.vmem %s328, 4
      %v961 = vld [vmem:[%s960] sm:$0xf]
      %s962 = scalar_lea.vmem %s336, 4
      %v963 = vld [vmem:[%s962] sm:$0xf]
      %v964 = vmul.bf16 %v961, %v409
      %v966 = vsel %vm411, %v964, 0
      %v969 = vsel %vm415, %v963, 0
      %971 = vmatprep.subr.bf16.mxu0 0
      %972 = vmatpush1.bf16.msra.mxu0 0
      %973 = vmatprep.subr.bf16.mxu0 0
      %974 = vmatpush1.bf16.msra.mxu0 0
      %975 = vmatprep.subr.bf16.mxu0 0
      %976 = vmatpush1.bf16.msra.mxu0 0
      %977 = vmatprep.subr.bf16.mxu0 0
      %978 = vmatpush1.bf16.msra.mxu0 0
      %979 = vmatprep.subr.bf16.mxu0 0
      %980 = vmatpush1.bf16.msra.mxu0 0
      %981 = vmatprep.subr.bf16.mxu0 0
      %982 = vmatpush1.bf16.msra.mxu0 0
      %983 = vmatprep.subr.bf16.mxu0 0
      %984 = vmatpush1.bf16.msra.mxu0 0
      %985 = vmatprep.subr.bf16.mxu0 0
      %986 = vmatpush1.bf16.msra.mxu0 %v969
      %987 = vmatprep.subr.bf16.mxu0 0
      %988 = vmatpush2.bf16.msra.mxu0 0
      %989 = vmatprep.subr.bf16.mxu0 0
      %990 = vmatpush2.bf16.msra.mxu0 0
      %991 = vmatprep.subr.bf16.mxu0 0
      %992 = vmatpush2.bf16.msra.mxu0 0
      %993 = vmatprep.subr.bf16.mxu0 0
      %994 = vmatpush2.bf16.msra.mxu0 0
      %995 = vmatprep.subr.bf16.mxu0 0
      %996 = vmatpush2.bf16.msra.mxu0 0
      %997 = vmatprep.subr.bf16.mxu0 0
      %998 = vmatpush2.bf16.msra.mxu0 0
      %999 = vmatprep.subr.bf16.mxu0 0
      %1000 = vmatpush2.bf16.msra.mxu0 0
      %1001 = vmatprep.subr.bf16.mxu0 0
      %1002 = vmatpush2.bf16.msra.mxu0 0
      %1003 = vmatprep.mubr.bf16.mxu0 0
      %1004 = vmatmul.mubr.bf16.gmra.mxu0 %v966
      %v1005 = vpop.f32.mrf.mxu0
      %v1006 = vadd.f32 0.0, %v1005
      %v1007 = vpop.f32.mrf.mxu0
      %v1008 = vpop.f32.mrf.mxu0
      %v1009 = vpop.f32.mrf.mxu0
      %1010 = vdwg.mxu0
      %v1011 = vsel %vm459, %v1006, 0.0
      %v1012 = vadd.f32 %v1011, 0.0
      %v1013 = vmul.bf16 %v961, %v468
      %v1015 = vsel %vm411, %v1013, 0
      %1017 = vmatprep.subr.bf16.mxu0 0
      %1018 = vmatpush1.bf16.msra.mxu0 0
      %1019 = vmatprep.subr.bf16.mxu0 0
      %1020 = vmatpush1.bf16.msra.mxu0 0
      %1021 = vmatprep.subr.bf16.mxu0 0
      %1022 = vmatpush1.bf16.msra.mxu0 0
      %1023 = vmatprep.subr.bf16.mxu0 0
      %1024 = vmatpush1.bf16.msra.mxu0 0
      %1025 = vmatprep.subr.bf16.mxu0 0
      %1026 = vmatpush1.bf16.msra.mxu0 0
      %1027 = vmatprep.subr.bf16.mxu0 0
      %1028 = vmatpush1.bf16.msra.mxu0 0
      %1029 = vmatprep.subr.bf16.mxu0 0
      %1030 = vmatpush1.bf16.msra.mxu0 0
      %1031 = vmatprep.subr.bf16.mxu0 0
      %1032 = vmatpush1.bf16.msra.mxu0 %v969
      %1033 = vmatprep.subr.bf16.mxu0 0
      %1034 = vmatpush2.bf16.msra.mxu0 0
      %1035 = vmatprep.subr.bf16.mxu0 0
      %1036 = vmatpush2.bf16.msra.mxu0 0
      %1037 = vmatprep.subr.bf16.mxu0 0
      %1038 = vmatpush2.bf16.msra.mxu0 0
      %1039 = vmatprep.subr.bf16.mxu0 0
      %1040 = vmatpush2.bf16.msra.mxu0 0
      %1041 = vmatprep.subr.bf16.mxu0 0
      %1042 = vmatpush2.bf16.msra.mxu0 0
      %1043 = vmatprep.subr.bf16.mxu0 0
      %1044 = vmatpush2.bf16.msra.mxu0 0
      %1045 = vmatprep.subr.bf16.mxu0 0
      %1046 = vmatpush2.bf16.msra.mxu0 0
      %1047 = vmatprep.subr.bf16.mxu0 0
      %1048 = vmatpush2.bf16.msra.mxu0 0
      %1049 = vmatprep.mubr.bf16.mxu0 0
      %1050 = vmatmul.mubr.bf16.gmra.mxu0 %v1015
      %v1051 = vpop.f32.mrf.mxu0
      %v1052 = vadd.f32 0.0, %v1051
      %v1053 = vpop.f32.mrf.mxu0
      %v1054 = vpop.f32.mrf.mxu0
      %v1055 = vpop.f32.mrf.mxu0
      %1056 = vdwg.mxu0
      %v1057 = vsel %vm513, %v1052, 0.0
      %v1058 = vadd.f32 %v1012, %v1057
      %v1059 = vmul.bf16 %v961, %v519
      %v1061 = vsel %vm411, %v1059, 0
      %1063 = vmatprep.subr.bf16.mxu0 0
      %1064 = vmatpush1.bf16.msra.mxu0 0
      %1065 = vmatprep.subr.bf16.mxu0 0
      %1066 = vmatpush1.bf16.msra.mxu0 0
      %1067 = vmatprep.subr.bf16.mxu0 0
      %1068 = vmatpush1.bf16.msra.mxu0 0
      %1069 = vmatprep.subr.bf16.mxu0 0
      %1070 = vmatpush1.bf16.msra.mxu0 0
      %1071 = vmatprep.subr.bf16.mxu0 0
      %1072 = vmatpush1.bf16.msra.mxu0 0
      %1073 = vmatprep.subr.bf16.mxu0 0
      %1074 = vmatpush1.bf16.msra.mxu0 0
      %1075 = vmatprep.subr.bf16.mxu0 0
      %1076 = vmatpush1.bf16.msra.mxu0 0
      %1077 = vmatprep.subr.bf16.mxu0 0
      %1078 = vmatpush1.bf16.msra.mxu0 %v969
      %1079 = vmatprep.subr.bf16.mxu0 0
      %1080 = vmatpush2.bf16.msra.mxu0 0
      %1081 = vmatprep.subr.bf16.mxu0 0
      %1082 = vmatpush2.bf16.msra.mxu0 0
      %1083 = vmatprep.subr.bf16.mxu0 0
      %1084 = vmatpush2.bf16.msra.mxu0 0
      %1085 = vmatprep.subr.bf16.mxu0 0
      %1086 = vmatpush2.bf16.msra.mxu0 0
      %1087 = vmatprep.subr.bf16.mxu0 0
      %1088 = vmatpush2.bf16.msra.mxu0 0
      %1089 = vmatprep.subr.bf16.mxu0 0
      %1090 = vmatpush2.bf16.msra.mxu0 0
      %1091 = vmatprep.subr.bf16.mxu0 0
      %1092 = vmatpush2.bf16.msra.mxu0 0
      %1093 = vmatprep.subr.bf16.mxu0 0
      %1094 = vmatpush2.bf16.msra.mxu0 0
      %1095 = vmatprep.mubr.bf16.mxu0 0
      %1096 = vmatmul.mubr.bf16.gmra.mxu0 %v1061
      %v1097 = vpop.f32.mrf.mxu0
      %v1098 = vadd.f32 0.0, %v1097
      %v1099 = vpop.f32.mrf.mxu0
      %v1100 = vpop.f32.mrf.mxu0
      %v1101 = vpop.f32.mrf.mxu0
      %1102 = vdwg.mxu0
      %v1103 = vsel %vm564, %v1098, 0.0
      %v1104 = vadd.f32 %v1058, %v1103
      %v1105 = vmul.bf16 %v961, %v570
      %v1107 = vsel %vm411, %v1105, 0
      %1109 = vmatprep.subr.bf16.mxu0 0
      %1110 = vmatpush1.bf16.msra.mxu0 0
      %1111 = vmatprep.subr.bf16.mxu0 0
      %1112 = vmatpush1.bf16.msra.mxu0 0
      %1113 = vmatprep.subr.bf16.mxu0 0
      %1114 = vmatpush1.bf16.msra.mxu0 0
      %1115 = vmatprep.subr.bf16.mxu0 0
      %1116 = vmatpush1.bf16.msra.mxu0 0
      %1117 = vmatprep.subr.bf16.mxu0 0
      %1118 = vmatpush1.bf16.msra.mxu0 0
      %1119 = vmatprep.subr.bf16.mxu0 0
      %1120 = vmatpush1.bf16.msra.mxu0 0
      %1121 = vmatprep.subr.bf16.mxu0 0
      %1122 = vmatpush1.bf16.msra.mxu0 0
      %1123 = vmatprep.subr.bf16.mxu0 0
      %1124 = vmatpush1.bf16.msra.mxu0 %v969
      %1125 = vmatprep.subr.bf16.mxu0 0
      %1126 = vmatpush2.bf16.msra.mxu0 0
      %1127 = vmatprep.subr.bf16.mxu0 0
      %1128 = vmatpush2.bf16.msra.mxu0 0
      %1129 = vmatprep.subr.bf16.mxu0 0
      %1130 = vmatpush2.bf16.msra.mxu0 0
      %1131 = vmatprep.subr.bf16.mxu0 0
      %1132 = vmatpush2.bf16.msra.mxu0 0
      %1133 = vmatprep.subr.bf16.mxu0 0
      %1134 = vmatpush2.bf16.msra.mxu0 0
      %1135 = vmatprep.subr.bf16.mxu0 0
      %1136 = vmatpush2.bf16.msra.mxu0 0
      %1137 = vmatprep.subr.bf16.mxu0 0
      %1138 = vmatpush2.bf16.msra.mxu0 0
      %1139 = vmatprep.subr.bf16.mxu0 0
      %1140 = vmatpush2.bf16.msra.mxu0 0
      %1141 = vmatprep.mubr.bf16.mxu0 0
      %1142 = vmatmul.mubr.bf16.gmra.mxu0 %v1107
      %v1143 = vpop.f32.mrf.mxu0
      %v1144 = vadd.f32 0.0, %v1143
      %v1145 = vpop.f32.mrf.mxu0
      %v1146 = vpop.f32.mrf.mxu0
      %v1147 = vpop.f32.mrf.mxu0
      %1148 = vdwg.mxu0
      %v1149 = vsel %vm615, %v1144, 0.0
      %v1150 = vadd.f32 %v1104, %v1149
      %v1151 = vmul.bf16 %v961, %v621
      %v1153 = vsel %vm411, %v1151, 0
      %1155 = vmatprep.subr.bf16.mxu0 0
      %1156 = vmatpush1.bf16.msra.mxu0 0
      %1157 = vmatprep.subr.bf16.mxu0 0
      %1158 = vmatpush1.bf16.msra.mxu0 0
      %1159 = vmatprep.subr.bf16.mxu0 0
      %1160 = vmatpush1.bf16.msra.mxu0 0
      %1161 = vmatprep.subr.bf16.mxu0 0
      %1162 = vmatpush1.bf16.msra.mxu0 0
      %1163 = vmatprep.subr.bf16.mxu0 0
      %1164 = vmatpush1.bf16.msra.mxu0 0
      %1165 = vmatprep.subr.bf16.mxu0 0
      %1166 = vmatpush1.bf16.msra.mxu0 0
      %1167 = vmatprep.subr.bf16.mxu0 0
      %1168 = vmatpush1.bf16.msra.mxu0 0
      %1169 = vmatprep.subr.bf16.mxu0 0
      %1170 = vmatpush1.bf16.msra.mxu0 %v969
      %1171 = vmatprep.subr.bf16.mxu0 0
      %1172 = vmatpush2.bf16.msra.mxu0 0
      %1173 = vmatprep.subr.bf16.mxu0 0
      %1174 = vmatpush2.bf16.msra.mxu0 0
      %1175 = vmatprep.subr.bf16.mxu0 0
      %1176 = vmatpush2.bf16.msra.mxu0 0
      %1177 = vmatprep.subr.bf16.mxu0 0
      %1178 = vmatpush2.bf16.msra.mxu0 0
      %1179 = vmatprep.subr.bf16.mxu0 0
      %1180 = vmatpush2.bf16.msra.mxu0 0
      %1181 = vmatprep.subr.bf16.mxu0 0
      %1182 = vmatpush2.bf16.msra.mxu0 0
      %1183 = vmatprep.subr.bf16.mxu0 0
      %1184 = vmatpush2.bf16.msra.mxu0 0
      %1185 = vmatprep.subr.bf16.mxu0 0
      %1186 = vmatpush2.bf16.msra.mxu0 0
      %1187 = vmatprep.mubr.bf16.mxu0 0
      %1188 = vmatmul.mubr.bf16.gmra.mxu0 %v1153
      %v1189 = vpop.f32.mrf.mxu0
      %v1190 = vadd.f32 0.0, %v1189
      %v1191 = vpop.f32.mrf.mxu0
      %v1192 = vpop.f32.mrf.mxu0
      %v1193 = vpop.f32.mrf.mxu0
      %1194 = vdwg.mxu0
      %v1195 = vsel %vm666, %v1190, 0.0
      %v1196 = vadd.f32 %v1150, %v1195
      %v1197 = vmul.bf16 %v961, %v672
      %v1199 = vsel %vm411, %v1197, 0
      %1201 = vmatprep.subr.bf16.mxu0 0
      %1202 = vmatpush1.bf16.msra.mxu0 0
      %1203 = vmatprep.subr.bf16.mxu0 0
      %1204 = vmatpush1.bf16.msra.mxu0 0
      %1205 = vmatprep.subr.bf16.mxu0 0
      %1206 = vmatpush1.bf16.msra.mxu0 0
      %1207 = vmatprep.subr.bf16.mxu0 0
      %1208 = vmatpush1.bf16.msra.mxu0 0
      %1209 = vmatprep.subr.bf16.mxu0 0
      %1210 = vmatpush1.bf16.msra.mxu0 0
      %1211 = vmatprep.subr.bf16.mxu0 0
      %1212 = vmatpush1.bf16.msra.mxu0 0
      %1213 = vmatprep.subr.bf16.mxu0 0
      %1214 = vmatpush1.bf16.msra.mxu0 0
      %1215 = vmatprep.subr.bf16.mxu0 0
      %1216 = vmatpush1.bf16.msra.mxu0 %v969
      %1217 = vmatprep.subr.bf16.mxu0 0
      %1218 = vmatpush2.bf16.msra.mxu0 0
      %1219 = vmatprep.subr.bf16.mxu0 0
      %1220 = vmatpush2.bf16.msra.mxu0 0
      %1221 = vmatprep.subr.bf16.mxu0 0
      %1222 = vmatpush2.bf16.msra.mxu0 0
      %1223 = vmatprep.subr.bf16.mxu0 0
      %1224 = vmatpush2.bf16.msra.mxu0 0
      %1225 = vmatprep.subr.bf16.mxu0 0
      %1226 = vmatpush2.bf16.msra.mxu0 0
      %1227 = vmatprep.subr.bf16.mxu0 0
      %1228 = vmatpush2.bf16.msra.mxu0 0
      %1229 = vmatprep.subr.bf16.mxu0 0
      %1230 = vmatpush2.bf16.msra.mxu0 0
      %1231 = vmatprep.subr.bf16.mxu0 0
      %1232 = vmatpush2.bf16.msra.mxu0 0
      %1233 = vmatprep.mubr.bf16.mxu0 0
      %1234 = vmatmul.mubr.bf16.gmra.mxu0 %v1199
      %v1235 = vpop.f32.mrf.mxu0
      %v1236 = vadd.f32 0.0, %v1235
      %v1237 = vpop.f32.mrf.mxu0
      %v1238 = vpop.f32.mrf.mxu0
      %v1239 = vpop.f32.mrf.mxu0
      %1240 = vdwg.mxu0
      %v1241 = vsel %vm717, %v1236, 0.0
      %v1242 = vadd.f32 %v1196, %v1241
      %v1243 = vmul.bf16 %v961, %v723
      %v1245 = vsel %vm411, %v1243, 0
      %1247 = vmatprep.subr.bf16.mxu0 0
      %1248 = vmatpush1.bf16.msra.mxu0 0
      %1249 = vmatprep.subr.bf16.mxu0 0
      %1250 = vmatpush1.bf16.msra.mxu0 0
      %1251 = vmatprep.subr.bf16.mxu0 0
      %1252 = vmatpush1.bf16.msra.mxu0 0
      %1253 = vmatprep.subr.bf16.mxu0 0
      %1254 = vmatpush1.bf16.msra.mxu0 0
      %1255 = vmatprep.subr.bf16.mxu0 0
      %1256 = vmatpush1.bf16.msra.mxu0 0
      %1257 = vmatprep.subr.bf16.mxu0 0
      %1258 = vmatpush1.bf16.msra.mxu0 0
      %1259 = vmatprep.subr.bf16.mxu0 0
      %1260 = vmatpush1.bf16.msra.mxu0 0
      %1261 = vmatprep.subr.bf16.mxu0 0
      %1262 = vmatpush1.bf16.msra.mxu0 %v969
      %1263 = vmatprep.subr.bf16.mxu0 0
      %1264 = vmatpush2.bf16.msra.mxu0 0
      %1265 = vmatprep.subr.bf16.mxu0 0
      %1266 = vmatpush2.bf16.msra.mxu0 0
      %1267 = vmatprep.subr.bf16.mxu0 0
      %1268 = vmatpush2.bf16.msra.mxu0 0
      %1269 = vmatprep.subr.bf16.mxu0 0
      %1270 = vmatpush2.bf16.msra.mxu0 0
      %1271 = vmatprep.subr.bf16.mxu0 0
      %1272 = vmatpush2.bf16.msra.mxu0 0
      %1273 = vmatprep.subr.bf16.mxu0 0
      %1274 = vmatpush2.bf16.msra.mxu0 0
      %1275 = vmatprep.subr.bf16.mxu0 0
      %1276 = vmatpush2.bf16.msra.mxu0 0
      %1277 = vmatprep.subr.bf16.mxu0 0
      %1278 = vmatpush2.bf16.msra.mxu0 0
      %1279 = vmatprep.mubr.bf16.mxu0 0
      %1280 = vmatmul.mubr.bf16.gmra.mxu0 %v1245
      %v1281 = vpop.f32.mrf.mxu0
      %v1282 = vadd.f32 0.0, %v1281
      %v1283 = vpop.f32.mrf.mxu0
      %v1284 = vpop.f32.mrf.mxu0
      %v1285 = vpop.f32.mrf.mxu0
      %1286 = vdwg.mxu0
      %v1287 = vsel %vm768, %v1282, 0.0
      %v1288 = vadd.f32 %v1242, %v1287
      %v1289 = vmul.bf16 %v961, %v774
      %v1291 = vsel %vm411, %v1289, 0
      %1293 = vmatprep.subr.bf16.mxu0 0
      %1294 = vmatpush1.bf16.msra.mxu0 0
      %1295 = vmatprep.subr.bf16.mxu0 0
      %1296 = vmatpush1.bf16.msra.mxu0 0
      %1297 = vmatprep.subr.bf16.mxu0 0
      %1298 = vmatpush1.bf16.msra.mxu0 0
      %1299 = vmatprep.subr.bf16.mxu0 0
      %1300 = vmatpush1.bf16.msra.mxu0 0
      %1301 = vmatprep.subr.bf16.mxu0 0
      %1302 = vmatpush1.bf16.msra.mxu0 0
      %1303 = vmatprep.subr.bf16.mxu0 0
      %1304 = vmatpush1.bf16.msra.mxu0 0
      %1305 = vmatprep.subr.bf16.mxu0 0
      %1306 = vmatpush1.bf16.msra.mxu0 0
      %1307 = vmatprep.subr.bf16.mxu0 0
      %1308 = vmatpush1.bf16.msra.mxu0 %v969
      %1309 = vmatprep.subr.bf16.mxu0 0
      %1310 = vmatpush2.bf16.msra.mxu0 0
      %1311 = vmatprep.subr.bf16.mxu0 0
      %1312 = vmatpush2.bf16.msra.mxu0 0
      %1313 = vmatprep.subr.bf16.mxu0 0
      %1314 = vmatpush2.bf16.msra.mxu0 0
      %1315 = vmatprep.subr.bf16.mxu0 0
      %1316 = vmatpush2.bf16.msra.mxu0 0
      %1317 = vmatprep.subr.bf16.mxu0 0
      %1318 = vmatpush2.bf16.msra.mxu0 0
      %1319 = vmatprep.subr.bf16.mxu0 0
      %1320 = vmatpush2.bf16.msra.mxu0 0
      %1321 = vmatprep.subr.bf16.mxu0 0
      %1322 = vmatpush2.bf16.msra.mxu0 0
      %1323 = vmatprep.subr.bf16.mxu0 0
      %1324 = vmatpush2.bf16.msra.mxu0 0
      %1325 = vmatprep.mubr.bf16.mxu0 0
      %1326 = vmatmul.mubr.bf16.gmra.mxu0 %v1291
      %v1327 = vpop.f32.mrf.mxu0
      %v1328 = vadd.f32 0.0, %v1327
      %v1329 = vpop.f32.mrf.mxu0
      %v1330 = vpop.f32.mrf.mxu0
      %v1331 = vpop.f32.mrf.mxu0
      %1332 = vdwg.mxu0
      %v1333 = vsel %vm819, %v1328, 0.0
      %v1334 = vadd.f32 %v1288, %v1333
      %v1335 = vmul.bf16 %v961, %v828
      %v1337 = vsel %vm411, %v1335, 0
      %1339 = vmatprep.subr.bf16.mxu0 0
      %1340 = vmatpush1.bf16.msra.mxu0 0
      %1341 = vmatprep.subr.bf16.mxu0 0
      %1342 = vmatpush1.bf16.msra.mxu0 0
      %1343 = vmatprep.subr.bf16.mxu0 0
      %1344 = vmatpush1.bf16.msra.mxu0 0
      %1345 = vmatprep.subr.bf16.mxu0 0
      %1346 = vmatpush1.bf16.msra.mxu0 0
      %1347 = vmatprep.subr.bf16.mxu0 0
      %1348 = vmatpush1.bf16.msra.mxu0 0
      %1349 = vmatprep.subr.bf16.mxu0 0
      %1350 = vmatpush1.bf16.msra.mxu0 0
      %1351 = vmatprep.subr.bf16.mxu0 0
      %1352 = vmatpush1.bf16.msra.mxu0 0
      %1353 = vmatprep.subr.bf16.mxu0 0
      %1354 = vmatpush1.bf16.msra.mxu0 %v969
      %1355 = vmatprep.subr.bf16.mxu0 0
      %1356 = vmatpush2.bf16.msra.mxu0 0
      %1357 = vmatprep.subr.bf16.mxu0 0
      %1358 = vmatpush2.bf16.msra.mxu0 0
      %1359 = vmatprep.subr.bf16.mxu0 0
      %1360 = vmatpush2.bf16.msra.mxu0 0
      %1361 = vmatprep.subr.bf16.mxu0 0
      %1362 = vmatpush2.bf16.msra.mxu0 0
      %1363 = vmatprep.subr.bf16.mxu0 0
      %1364 = vmatpush2.bf16.msra.mxu0 0
      %1365 = vmatprep.subr.bf16.mxu0 0
      %1366 = vmatpush2.bf16.msra.mxu0 0
      %1367 = vmatprep.subr.bf16.mxu0 0
      %1368 = vmatpush2.bf16.msra.mxu0 0
      %1369 = vmatprep.subr.bf16.mxu0 0
      %1370 = vmatpush2.bf16.msra.mxu0 0
      %1371 = vmatprep.mubr.bf16.mxu0 0
      %1372 = vmatmul.mubr.bf16.gmra.mxu0 %v1337
      %v1373 = vpop.f32.mrf.mxu0
      %v1374 = vadd.f32 0.0, %v1373
      %v1375 = vpop.f32.mrf.mxu0
      %v1376 = vpop.f32.mrf.mxu0
      %v1377 = vpop.f32.mrf.mxu0
      %1378 = vdwg.mxu0
      %v1379 = vsel %vm873, %v1374, 0.0
      %v1380 = vadd.f32 %v1334, %v1379
      %v1381 = vmul.f32 %v1380, 0.35355338
      %v1382 = vsel %vm398, %v1381, -1e+10
      %s1383 = scalar_lea.vmem [#allocation2], 8
      %v1384 = vld [vmem:[%s1383] sm:$0xff]
      %v1385 = vsel %vm411, %v1382, -inf
      %1386 = vmax.xlane.f32.xlu0 %v1385
      %v1387 = vpop.xlane.xlu0 %1386
      %v1388 = vmax.f32 %v1384, %v1387
      %v1389 = vsub.f32 %v1384, %v1388
      %v1390 = vmul.f32 %v1389, 1.442695
      %v1391 = vpow.pop %v1390
      %1393 = vset.pattern.permute.xlu0 0
      %1394 = vperm.xlu0 %1393, %v1388
      %v1395 = vpop.permute.xlu0 %1394
      %v1397 = vsub.f32 %v1382, %v1395
      %v1398 = vmul.f32 %v1397, 1.442695
      %v1399 = vpow.pop %v1398
      %s1400 = scalar_lea.vmem [#allocation3], 8
      %v1401 = vld [vmem:[%s1400] sm:$0xff]
      %v1402 = vmul.f32 %v1391, %v1401
      %v1403 = vsel %vm411, %v1399, 0.0
      %1404 = vadd.xlane.f32.xlu0 %v1403
      %v1405 = vpop.xlane.xlu0 %1404
      %v1406 = vadd.f32 %v1402, %v1405
      %1407 = vst.msk [vmem:[%s1400] sm:$0xff] %vm900, %v1406
      %v1408 = vpack.c.bf16 %v1399, %v1399
      %s1409 = scalar_lea.vmem %s344, 4
      %v1410 = vld [vmem:[%s1409] sm:$0xf]
      %v1412 = vsel %vm411, %v1408, 0
      %v1415 = vsel %vm415, %v1410, 0
      %1417 = vmatprep.subr.bf16.mxu0 0
      %1418 = vmatpush1.bf16.msra.mxu0 0
      %1419 = vmatprep.subr.bf16.mxu0 0
      %1420 = vmatpush1.bf16.msra.mxu0 0
      %1421 = vmatprep.subr.bf16.mxu0 0
      %1422 = vmatpush1.bf16.msra.mxu0 0
      %1423 = vmatprep.subr.bf16.mxu0 0
      %1424 = vmatpush1.bf16.msra.mxu0 0
      %1425 = vmatprep.subr.bf16.mxu0 0
      %1426 = vmatpush1.bf16.msra.mxu0 0
      %1427 = vmatprep.subr.bf16.mxu0 0
      %1428 = vmatpush1.bf16.msra.mxu0 0
      %1429 = vmatprep.subr.bf16.mxu0 0
      %1430 = vmatpush1.bf16.msra.mxu0 0
      %1431 = vmatprep.subr.bf16.mxu0 0
      %1432 = vmatpush1.bf16.msra.mxu0 %v1415
      %1433 = vmatprep.subr.bf16.mxu0 0
      %1434 = vmatpush2.bf16.msra.mxu0 0
      %1435 = vmatprep.subr.bf16.mxu0 0
      %1436 = vmatpush2.bf16.msra.mxu0 0
      %1437 = vmatprep.subr.bf16.mxu0 0
      %1438 = vmatpush2.bf16.msra.mxu0 0
      %1439 = vmatprep.subr.bf16.mxu0 0
      %1440 = vmatpush2.bf16.msra.mxu0 0
      %1441 = vmatprep.subr.bf16.mxu0 0
      %1442 = vmatpush2.bf16.msra.mxu0 0
      %1443 = vmatprep.subr.bf16.mxu0 0
      %1444 = vmatpush2.bf16.msra.mxu0 0
      %1445 = vmatprep.subr.bf16.mxu0 0
      %1446 = vmatpush2.bf16.msra.mxu0 0
      %1447 = vmatprep.subr.bf16.mxu0 0
      %1448 = vmatpush2.bf16.msra.mxu0 0
      %1449 = vmatprep.mubr.bf16.mxu0 0
      %1450 = vmatmul.mubr.bf16.gmra.mxu0 %v1412
      %v1451 = vpop.f32.mrf.mxu0
      %v1452 = vadd.f32 0.0, %v1451
      %v1453 = vpop.f32.mrf.mxu0
      %v1454 = vpop.f32.mrf.mxu0
      %v1455 = vpop.f32.mrf.mxu0
      %1456 = vdwg.mxu0
      %s1457 = scalar_lea.vmem [#allocation4], 8
      %v1458 = vld [vmem:[%s1457] sm:$0xff]
      %1460 = vset.pattern.permute.xlu0 0
      %1461 = vperm.xlu0 %1460, %v1391
      %v1462 = vpop.permute.xlu0 %1461
      %v1464 = vmul.f32 %v1462, %v1458
      %v1465 = vadd.f32 %v1464, %v1452
      %1466 = vst.msk [vmem:[%s1457] sm:$0xff] %vm411, %v1465
      %1467 = vst.msk [vmem:[%s1383] sm:$0xff] %vm900, %v1388
      %s1468 = scalar_lea.vmem %s328, 8
      %v1469 = vld [vmem:[%s1468] sm:$0xf]
      %s1470 = scalar_lea.vmem %s336, 8
      %v1471 = vld [vmem:[%s1470] sm:$0xf]
      %v1472 = vmul.bf16 %v1469, %v409
      %v1474 = vsel %vm411, %v1472, 0
      %v1477 = vsel %vm415, %v1471, 0
      %1479 = vmatprep.subr.bf16.mxu0 0
      %1480 = vmatpush1.bf16.msra.mxu0 0
      %1481 = vmatprep.subr.bf16.mxu0 0
      %1482 = vmatpush1.bf16.msra.mxu0 0
      %1483 = vmatprep.subr.bf16.mxu0 0
      %1484 = vmatpush1.bf16.msra.mxu0 0
      %1485 = vmatprep.subr.bf16.mxu0 0
      %1486 = vmatpush1.bf16.msra.mxu0 0
      %1487 = vmatprep.subr.bf16.mxu0 0
      %1488 = vmatpush1.bf16.msra.mxu0 0
      %1489 = vmatprep.subr.bf16.mxu0 0
      %1490 = vmatpush1.bf16.msra.mxu0 0
      %1491 = vmatprep.subr.bf16.mxu0 0
      %1492 = vmatpush1.bf16.msra.mxu0 0
      %1493 = vmatprep.subr.bf16.mxu0 0
      %1494 = vmatpush1.bf16.msra.mxu0 %v1477
      %1495 = vmatprep.subr.bf16.mxu0 0
      %1496 = vmatpush2.bf16.msra.mxu0 0
      %1497 = vmatprep.subr.bf16.mxu0 0
      %1498 = vmatpush2.bf16.msra.mxu0 0
      %1499 = vmatprep.subr.bf16.mxu0 0
      %1500 = vmatpush2.bf16.msra.mxu0 0
      %1501 = vmatprep.subr.bf16.mxu0 0
      %1502 = vmatpush2.bf16.msra.mxu0 0
      %1503 = vmatprep.subr.bf16.mxu0 0
      %1504 = vmatpush2.bf16.msra.mxu0 0
      %1505 = vmatprep.subr.bf16.mxu0 0
      %1506 = vmatpush2.bf16.msra.mxu0 0
      %1507 = vmatprep.subr.bf16.mxu0 0
      %1508 = vmatpush2.bf16.msra.mxu0 0
      %1509 = vmatprep.subr.bf16.mxu0 0
      %1510 = vmatpush2.bf16.msra.mxu0 0
      %1511 = vmatprep.mubr.bf16.mxu0 0
      %1512 = vmatmul.mubr.bf16.gmra.mxu0 %v1474
      %v1513 = vpop.f32.mrf.mxu0
      %v1514 = vadd.f32 0.0, %v1513
      %v1515 = vpop.f32.mrf.mxu0
      %v1516 = vpop.f32.mrf.mxu0
      %v1517 = vpop.f32.mrf.mxu0
      %1518 = vdwg.mxu0
      %v1519 = vsel %vm459, %v1514, 0.0
      %v1520 = vadd.f32 %v1519, 0.0
      %v1521 = vmul.bf16 %v1469, %v468
      %v1523 = vsel %vm411, %v1521, 0
      %1525 = vmatprep.subr.bf16.mxu0 0
      %1526 = vmatpush1.bf16.msra.mxu0 0
      %1527 = vmatprep.subr.bf16.mxu0 0
      %1528 = vmatpush1.bf16.msra.mxu0 0
      %1529 = vmatprep.subr.bf16.mxu0 0
      %1530 = vmatpush1.bf16.msra.mxu0 0
      %1531 = vmatprep.subr.bf16.mxu0 0
      %1532 = vmatpush1.bf16.msra.mxu0 0
      %1533 = vmatprep.subr.bf16.mxu0 0
      %1534 = vmatpush1.bf16.msra.mxu0 0
      %1535 = vmatprep.subr.bf16.mxu0 0
      %1536 = vmatpush1.bf16.msra.mxu0 0
      %1537 = vmatprep.subr.bf16.mxu0 0
      %1538 = vmatpush1.bf16.msra.mxu0 0
      %1539 = vmatprep.subr.bf16.mxu0 0
      %1540 = vmatpush1.bf16.msra.mxu0 %v1477
      %1541 = vmatprep.subr.bf16.mxu0 0
      %1542 = vmatpush2.bf16.msra.mxu0 0
      %1543 = vmatprep.subr.bf16.mxu0 0
      %1544 = vmatpush2.bf16.msra.mxu0 0
      %1545 = vmatprep.subr.bf16.mxu0 0
      %1546 = vmatpush2.bf16.msra.mxu0 0
      %1547 = vmatprep.subr.bf16.mxu0 0
      %1548 = vmatpush2.bf16.msra.mxu0 0
      %1549 = vmatprep.subr.bf16.mxu0 0
      %1550 = vmatpush2.bf16.msra.mxu0 0
      %1551 = vmatprep.subr.bf16.mxu0 0
      %1552 = vmatpush2.bf16.msra.mxu0 0
      %1553 = vmatprep.subr.bf16.mxu0 0
      %1554 = vmatpush2.bf16.msra.mxu0 0
      %1555 = vmatprep.subr.bf16.mxu0 0
      %1556 = vmatpush2.bf16.msra.mxu0 0
      %1557 = vmatprep.mubr.bf16.mxu0 0
      %1558 = vmatmul.mubr.bf16.gmra.mxu0 %v1523
      %v1559 = vpop.f32.mrf.mxu0
      %v1560 = vadd.f32 0.0, %v1559
      %v1561 = vpop.f32.mrf.mxu0
      %v1562 = vpop.f32.mrf.mxu0
      %v1563 = vpop.f32.mrf.mxu0
      %1564 = vdwg.mxu0
      %v1565 = vsel %vm513, %v1560, 0.0
      %v1566 = vadd.f32 %v1520, %v1565
      %v1567 = vmul.bf16 %v1469, %v519
      %v1569 = vsel %vm411, %v1567, 0
      %1571 = vmatprep.subr.bf16.mxu0 0
      %1572 = vmatpush1.bf16.msra.mxu0 0
      %1573 = vmatprep.subr.bf16.mxu0 0
      %1574 = vmatpush1.bf16.msra.mxu0 0
      %1575 = vmatprep.subr.bf16.mxu0 0
      %1576 = vmatpush1.bf16.msra.mxu0 0
      %1577 = vmatprep.subr.bf16.mxu0 0
      %1578 = vmatpush1.bf16.msra.mxu0 0
      %1579 = vmatprep.subr.bf16.mxu0 0
      %1580 = vmatpush1.bf16.msra.mxu0 0
      %1581 = vmatprep.subr.bf16.mxu0 0
      %1582 = vmatpush1.bf16.msra.mxu0 0
      %1583 = vmatprep.subr.bf16.mxu0 0
      %1584 = vmatpush1.bf16.msra.mxu0 0
      %1585 = vmatprep.subr.bf16.mxu0 0
      %1586 = vmatpush1.bf16.msra.mxu0 %v1477
      %1587 = vmatprep.subr.bf16.mxu0 0
      %1588 = vmatpush2.bf16.msra.mxu0 0
      %1589 = vmatprep.subr.bf16.mxu0 0
      %1590 = vmatpush2.bf16.msra.mxu0 0
      %1591 = vmatprep.subr.bf16.mxu0 0
      %1592 = vmatpush2.bf16.msra.mxu0 0
      %1593 = vmatprep.subr.bf16.mxu0 0
      %1594 = vmatpush2.bf16.msra.mxu0 0
      %1595 = vmatprep.subr.bf16.mxu0 0
      %1596 = vmatpush2.bf16.msra.mxu0 0
      %1597 = vmatprep.subr.bf16.mxu0 0
      %1598 = vmatpush2.bf16.msra.mxu0 0
      %1599 = vmatprep.subr.bf16.mxu0 0
      %1600 = vmatpush2.bf16.msra.mxu0 0
      %1601 = vmatprep.subr.bf16.mxu0 0
      %1602 = vmatpush2.bf16.msra.mxu0 0
      %1603 = vmatprep.mubr.bf16.mxu0 0
      %1604 = vmatmul.mubr.bf16.gmra.mxu0 %v1569
      %v1605 = vpop.f32.mrf.mxu0
      %v1606 = vadd.f32 0.0, %v1605
      %v1607 = vpop.f32.mrf.mxu0
      %v1608 = vpop.f32.mrf.mxu0
      %v1609 = vpop.f32.mrf.mxu0
      %1610 = vdwg.mxu0
      %v1611 = vsel %vm564, %v1606, 0.0
      %v1612 = vadd.f32 %v1566, %v1611
      %v1613 = vmul.bf16 %v1469, %v570
      %v1615 = vsel %vm411, %v1613, 0
      %1617 = vmatprep.subr.bf16.mxu0 0
      %1618 = vmatpush1.bf16.msra.mxu0 0
      %1619 = vmatprep.subr.bf16.mxu0 0
      %1620 = vmatpush1.bf16.msra.mxu0 0
      %1621 = vmatprep.subr.bf16.mxu0 0
      %1622 = vmatpush1.bf16.msra.mxu0 0
      %1623 = vmatprep.subr.bf16.mxu0 0
      %1624 = vmatpush1.bf16.msra.mxu0 0
      %1625 = vmatprep.subr.bf16.mxu0 0
      %1626 = vmatpush1.bf16.msra.mxu0 0
      %1627 = vmatprep.subr.bf16.mxu0 0
      %1628 = vmatpush1.bf16.msra.mxu0 0
      %1629 = vmatprep.subr.bf16.mxu0 0
      %1630 = vmatpush1.bf16.msra.mxu0 0
      %1631 = vmatprep.subr.bf16.mxu0 0
      %1632 = vmatpush1.bf16.msra.mxu0 %v1477
      %1633 = vmatprep.subr.bf16.mxu0 0
      %1634 = vmatpush2.bf16.msra.mxu0 0
      %1635 = vmatprep.subr.bf16.mxu0 0
      %1636 = vmatpush2.bf16.msra.mxu0 0
      %1637 = vmatprep.subr.bf16.mxu0 0
      %1638 = vmatpush2.bf16.msra.mxu0 0
      %1639 = vmatprep.subr.bf16.mxu0 0
      %1640 = vmatpush2.bf16.msra.mxu0 0
      %1641 = vmatprep.subr.bf16.mxu0 0
      %1642 = vmatpush2.bf16.msra.mxu0 0
      %1643 = vmatprep.subr.bf16.mxu0 0
      %1644 = vmatpush2.bf16.msra.mxu0 0
      %1645 = vmatprep.subr.bf16.mxu0 0
      %1646 = vmatpush2.bf16.msra.mxu0 0
      %1647 = vmatprep.subr.bf16.mxu0 0
      %1648 = vmatpush2.bf16.msra.mxu0 0
      %1649 = vmatprep.mubr.bf16.mxu0 0
      %1650 = vmatmul.mubr.bf16.gmra.mxu0 %v1615
      %v1651 = vpop.f32.mrf.mxu0
      %v1652 = vadd.f32 0.0, %v1651
      %v1653 = vpop.f32.mrf.mxu0
      %v1654 = vpop.f32.mrf.mxu0
      %v1655 = vpop.f32.mrf.mxu0
      %1656 = vdwg.mxu0
      %v1657 = vsel %vm615, %v1652, 0.0
      %v1658 = vadd.f32 %v1612, %v1657
      %v1659 = vmul.bf16 %v1469, %v621
      %v1661 = vsel %vm411, %v1659, 0
      %1663 = vmatprep.subr.bf16.mxu0 0
      %1664 = vmatpush1.bf16.msra.mxu0 0
      %1665 = vmatprep.subr.bf16.mxu0 0
      %1666 = vmatpush1.bf16.msra.mxu0 0
      %1667 = vmatprep.subr.bf16.mxu0 0
      %1668 = vmatpush1.bf16.msra.mxu0 0
      %1669 = vmatprep.subr.bf16.mxu0 0
      %1670 = vmatpush1.bf16.msra.mxu0 0
      %1671 = vmatprep.subr.bf16.mxu0 0
      %1672 = vmatpush1.bf16.msra.mxu0 0
      %1673 = vmatprep.subr.bf16.mxu0 0
      %1674 = vmatpush1.bf16.msra.mxu0 0
      %1675 = vmatprep.subr.bf16.mxu0 0
      %1676 = vmatpush1.bf16.msra.mxu0 0
      %1677 = vmatprep.subr.bf16.mxu0 0
      %1678 = vmatpush1.bf16.msra.mxu0 %v1477
      %1679 = vmatprep.subr.bf16.mxu0 0
      %1680 = vmatpush2.bf16.msra.mxu0 0
      %1681 = vmatprep.subr.bf16.mxu0 0
      %1682 = vmatpush2.bf16.msra.mxu0 0
      %1683 = vmatprep.subr.bf16.mxu0 0
      %1684 = vmatpush2.bf16.msra.mxu0 0
      %1685 = vmatprep.subr.bf16.mxu0 0
      %1686 = vmatpush2.bf16.msra.mxu0 0
      %1687 = vmatprep.subr.bf16.mxu0 0
      %1688 = vmatpush2.bf16.msra.mxu0 0
      %1689 = vmatprep.subr.bf16.mxu0 0
      %1690 = vmatpush2.bf16.msra.mxu0 0
      %1691 = vmatprep.subr.bf16.mxu0 0
      %1692 = vmatpush2.bf16.msra.mxu0 0
      %1693 = vmatprep.subr.bf16.mxu0 0
      %1694 = vmatpush2.bf16.msra.mxu0 0
      %1695 = vmatprep.mubr.bf16.mxu0 0
      %1696 = vmatmul.mubr.bf16.gmra.mxu0 %v1661
      %v1697 = vpop.f32.mrf.mxu0
      %v1698 = vadd.f32 0.0, %v1697
      %v1699 = vpop.f32.mrf.mxu0
      %v1700 = vpop.f32.mrf.mxu0
      %v1701 = vpop.f32.mrf.mxu0
      %1702 = vdwg.mxu0
      %v1703 = vsel %vm666, %v1698, 0.0
      %v1704 = vadd.f32 %v1658, %v1703
      %v1705 = vmul.bf16 %v1469, %v672
      %v1707 = vsel %vm411, %v1705, 0
      %1709 = vmatprep.subr.bf16.mxu0 0
      %1710 = vmatpush1.bf16.msra.mxu0 0
      %1711 = vmatprep.subr.bf16.mxu0 0
      %1712 = vmatpush1.bf16.msra.mxu0 0
      %1713 = vmatprep.subr.bf16.mxu0 0
      %1714 = vmatpush1.bf16.msra.mxu0 0
      %1715 = vmatprep.subr.bf16.mxu0 0
      %1716 = vmatpush1.bf16.msra.mxu0 0
      %1717 = vmatprep.subr.bf16.mxu0 0
      %1718 = vmatpush1.bf16.msra.mxu0 0
      %1719 = vmatprep.subr.bf16.mxu0 0
      %1720 = vmatpush1.bf16.msra.mxu0 0
      %1721 = vmatprep.subr.bf16.mxu0 0
      %1722 = vmatpush1.bf16.msra.mxu0 0
      %1723 = vmatprep.subr.bf16.mxu0 0
      %1724 = vmatpush1.bf16.msra.mxu0 %v1477
      %1725 = vmatprep.subr.bf16.mxu0 0
      %1726 = vmatpush2.bf16.msra.mxu0 0
      %1727 = vmatprep.subr.bf16.mxu0 0
      %1728 = vmatpush2.bf16.msra.mxu0 0
      %1729 = vmatprep.subr.bf16.mxu0 0
      %1730 = vmatpush2.bf16.msra.mxu0 0
      %1731 = vmatprep.subr.bf16.mxu0 0
      %1732 = vmatpush2.bf16.msra.mxu0 0
      %1733 = vmatprep.subr.bf16.mxu0 0
      %1734 = vmatpush2.bf16.msra.mxu0 0
      %1735 = vmatprep.subr.bf16.mxu0 0
      %1736 = vmatpush2.bf16.msra.mxu0 0
      %1737 = vmatprep.subr.bf16.mxu0 0
      %1738 = vmatpush2.bf16.msra.mxu0 0
      %1739 = vmatprep.subr.bf16.mxu0 0
      %1740 = vmatpush2.bf16.msra.mxu0 0
      %1741 = vmatprep.mubr.bf16.mxu0 0
      %1742 = vmatmul.mubr.bf16.gmra.mxu0 %v1707
      %v1743 = vpop.f32.mrf.mxu0
      %v1744 = vadd.f32 0.0, %v1743
      %v1745 = vpop.f32.mrf.mxu0
      %v1746 = vpop.f32.mrf.mxu0
      %v1747 = vpop.f32.mrf.mxu0
      %1748 = vdwg.mxu0
      %v1749 = vsel %vm717, %v1744, 0.0
      %v1750 = vadd.f32 %v1704, %v1749
      %v1751 = vmul.bf16 %v1469, %v723
      %v1753 = vsel %vm411, %v1751, 0
      %1755 = vmatprep.subr.bf16.mxu0 0
      %1756 = vmatpush1.bf16.msra.mxu0 0
      %1757 = vmatprep.subr.bf16.mxu0 0
      %1758 = vmatpush1.bf16.msra.mxu0 0
      %1759 = vmatprep.subr.bf16.mxu0 0
      %1760 = vmatpush1.bf16.msra.mxu0 0
      %1761 = vmatprep.subr.bf16.mxu0 0
      %1762 = vmatpush1.bf16.msra.mxu0 0
      %1763 = vmatprep.subr.bf16.mxu0 0
      %1764 = vmatpush1.bf16.msra.mxu0 0
      %1765 = vmatprep.subr.bf16.mxu0 0
      %1766 = vmatpush1.bf16.msra.mxu0 0
      %1767 = vmatprep.subr.bf16.mxu0 0
      %1768 = vmatpush1.bf16.msra.mxu0 0
      %1769 = vmatprep.subr.bf16.mxu0 0
      %1770 = vmatpush1.bf16.msra.mxu0 %v1477
      %1771 = vmatprep.subr.bf16.mxu0 0
      %1772 = vmatpush2.bf16.msra.mxu0 0
      %1773 = vmatprep.subr.bf16.mxu0 0
      %1774 = vmatpush2.bf16.msra.mxu0 0
      %1775 = vmatprep.subr.bf16.mxu0 0
      %1776 = vmatpush2.bf16.msra.mxu0 0
      %1777 = vmatprep.subr.bf16.mxu0 0
      %1778 = vmatpush2.bf16.msra.mxu0 0
      %1779 = vmatprep.subr.bf16.mxu0 0
      %1780 = vmatpush2.bf16.msra.mxu0 0
      %1781 = vmatprep.subr.bf16.mxu0 0
      %1782 = vmatpush2.bf16.msra.mxu0 0
      %1783 = vmatprep.subr.bf16.mxu0 0
      %1784 = vmatpush2.bf16.msra.mxu0 0
      %1785 = vmatprep.subr.bf16.mxu0 0
      %1786 = vmatpush2.bf16.msra.mxu0 0
      %1787 = vmatprep.mubr.bf16.mxu0 0
      %1788 = vmatmul.mubr.bf16.gmra.mxu0 %v1753
      %v1789 = vpop.f32.mrf.mxu0
      %v1790 = vadd.f32 0.0, %v1789
      %v1791 = vpop.f32.mrf.mxu0
      %v1792 = vpop.f32.mrf.mxu0
      %v1793 = vpop.f32.mrf.mxu0
      %1794 = vdwg.mxu0
      %v1795 = vsel %vm768, %v1790, 0.0
      %v1796 = vadd.f32 %v1750, %v1795
      %v1797 = vmul.bf16 %v1469, %v774
      %v1799 = vsel %vm411, %v1797, 0
      %1801 = vmatprep.subr.bf16.mxu0 0
      %1802 = vmatpush1.bf16.msra.mxu0 0
      %1803 = vmatprep.subr.bf16.mxu0 0
      %1804 = vmatpush1.bf16.msra.mxu0 0
      %1805 = vmatprep.subr.bf16.mxu0 0
      %1806 = vmatpush1.bf16.msra.mxu0 0
      %1807 = vmatprep.subr.bf16.mxu0 0
      %1808 = vmatpush1.bf16.msra.mxu0 0
      %1809 = vmatprep.subr.bf16.mxu0 0
      %1810 = vmatpush1.bf16.msra.mxu0 0
      %1811 = vmatprep.subr.bf16.mxu0 0
      %1812 = vmatpush1.bf16.msra.mxu0 0
      %1813 = vmatprep.subr.bf16.mxu0 0
      %1814 = vmatpush1.bf16.msra.mxu0 0
      %1815 = vmatprep.subr.bf16.mxu0 0
      %1816 = vmatpush1.bf16.msra.mxu0 %v1477
      %1817 = vmatprep.subr.bf16.mxu0 0
      %1818 = vmatpush2.bf16.msra.mxu0 0
      %1819 = vmatprep.subr.bf16.mxu0 0
      %1820 = vmatpush2.bf16.msra.mxu0 0
      %1821 = vmatprep.subr.bf16.mxu0 0
      %1822 = vmatpush2.bf16.msra.mxu0 0
      %1823 = vmatprep.subr.bf16.mxu0 0
      %1824 = vmatpush2.bf16.msra.mxu0 0
      %1825 = vmatprep.subr.bf16.mxu0 0
      %1826 = vmatpush2.bf16.msra.mxu0 0
      %1827 = vmatprep.subr.bf16.mxu0 0
      %1828 = vmatpush2.bf16.msra.mxu0 0
      %1829 = vmatprep.subr.bf16.mxu0 0
      %1830 = vmatpush2.bf16.msra.mxu0 0
      %1831 = vmatprep.subr.bf16.mxu0 0
      %1832 = vmatpush2.bf16.msra.mxu0 0
      %1833 = vmatprep.mubr.bf16.mxu0 0
      %1834 = vmatmul.mubr.bf16.gmra.mxu0 %v1799
      %v1835 = vpop.f32.mrf.mxu0
      %v1836 = vadd.f32 0.0, %v1835
      %v1837 = vpop.f32.mrf.mxu0
      %v1838 = vpop.f32.mrf.mxu0
      %v1839 = vpop.f32.mrf.mxu0
      %1840 = vdwg.mxu0
      %v1841 = vsel %vm819, %v1836, 0.0
      %v1842 = vadd.f32 %v1796, %v1841
      %v1843 = vmul.bf16 %v1469, %v828
      %v1845 = vsel %vm411, %v1843, 0
      %1847 = vmatprep.subr.bf16.mxu0 0
      %1848 = vmatpush1.bf16.msra.mxu0 0
      %1849 = vmatprep.subr.bf16.mxu0 0
      %1850 = vmatpush1.bf16.msra.mxu0 0
      %1851 = vmatprep.subr.bf16.mxu0 0
      %1852 = vmatpush1.bf16.msra.mxu0 0
      %1853 = vmatprep.subr.bf16.mxu0 0
      %1854 = vmatpush1.bf16.msra.mxu0 0
      %1855 = vmatprep.subr.bf16.mxu0 0
      %1856 = vmatpush1.bf16.msra.mxu0 0
      %1857 = vmatprep.subr.bf16.mxu0 0
      %1858 = vmatpush1.bf16.msra.mxu0 0
      %1859 = vmatprep.subr.bf16.mxu0 0
      %1860 = vmatpush1.bf16.msra.mxu0 0
      %1861 = vmatprep.subr.bf16.mxu0 0
      %1862 = vmatpush1.bf16.msra.mxu0 %v1477
      %1863 = vmatprep.subr.bf16.mxu0 0
      %1864 = vmatpush2.bf16.msra.mxu0 0
      %1865 = vmatprep.subr.bf16.mxu0 0
      %1866 = vmatpush2.bf16.msra.mxu0 0
      %1867 = vmatprep.subr.bf16.mxu0 0
      %1868 = vmatpush2.bf16.msra.mxu0 0
      %1869 = vmatprep.subr.bf16.mxu0 0
      %1870 = vmatpush2.bf16.msra.mxu0 0
      %1871 = vmatprep.subr.bf16.mxu0 0
      %1872 = vmatpush2.bf16.msra.mxu0 0
      %1873 = vmatprep.subr.bf16.mxu0 0
      %1874 = vmatpush2.bf16.msra.mxu0 0
      %1875 = vmatprep.subr.bf16.mxu0 0
      %1876 = vmatpush2.bf16.msra.mxu0 0
      %1877 = vmatprep.subr.bf16.mxu0 0
      %1878 = vmatpush2.bf16.msra.mxu0 0
      %1879 = vmatprep.mubr.bf16.mxu0 0
      %1880 = vmatmul.mubr.bf16.gmra.mxu0 %v1845
      %v1881 = vpop.f32.mrf.mxu0
      %v1882 = vadd.f32 0.0, %v1881
      %v1883 = vpop.f32.mrf.mxu0
      %v1884 = vpop.f32.mrf.mxu0
      %v1885 = vpop.f32.mrf.mxu0
      %1886 = vdwg.mxu0
      %v1887 = vsel %vm873, %v1882, 0.0
      %v1888 = vadd.f32 %v1842, %v1887
      %v1889 = vmul.f32 %v1888, 0.35355338
      %v1890 = vsel %vm398, %v1889, -1e+10
      %s1891 = scalar_lea.vmem [#allocation2], 16
      %v1892 = vld [vmem:[%s1891] sm:$0xff]
      %v1893 = vsel %vm411, %v1890, -inf
      %1894 = vmax.xlane.f32.xlu0 %v1893
      %v1895 = vpop.xlane.xlu0 %1894
      %v1896 = vmax.f32 %v1892, %v1895
      %v1897 = vsub.f32 %v1892, %v1896
      %v1898 = vmul.f32 %v1897, 1.442695
      %v1899 = vpow.pop %v1898
      %1901 = vset.pattern.permute.xlu0 0
      %1902 = vperm.xlu0 %1901, %v1896
      %v1903 = vpop.permute.xlu0 %1902
      %v1905 = vsub.f32 %v1890, %v1903
      %v1906 = vmul.f32 %v1905, 1.442695
      %v1907 = vpow.pop %v1906
      %s1908 = scalar_lea.vmem [#allocation3], 16
      %v1909 = vld [vmem:[%s1908] sm:$0xff]
      %v1910 = vmul.f32 %v1899, %v1909
      %v1911 = vsel %vm411, %v1907, 0.0
      %1912 = vadd.xlane.f32.xlu0 %v1911
      %v1913 = vpop.xlane.xlu0 %1912
      %v1914 = vadd.f32 %v1910, %v1913
      %1915 = vst.msk [vmem:[%s1908] sm:$0xff] %vm900, %v1914
      %v1916 = vpack.c.bf16 %v1907, %v1907
      %s1917 = scalar_lea.vmem %s344, 8
      %v1918 = vld [vmem:[%s1917] sm:$0xf]
      %v1920 = vsel %vm411, %v1916, 0
      %v1923 = vsel %vm415, %v1918, 0
      %1925 = vmatprep.subr.bf16.mxu0 0
      %1926 = vmatpush1.bf16.msra.mxu0 0
      %1927 = vmatprep.subr.bf16.mxu0 0
      %1928 = vmatpush1.bf16.msra.mxu0 0
      %1929 = vmatprep.subr.bf16.mxu0 0
      %1930 = vmatpush1.bf16.msra.mxu0 0
      %1931 = vmatprep.subr.bf16.mxu0 0
      %1932 = vmatpush1.bf16.msra.mxu0 0
      %1933 = vmatprep.subr.bf16.mxu0 0
      %1934 = vmatpush1.bf16.msra.mxu0 0
      %1935 = vmatprep.subr.bf16.mxu0 0
      %1936 = vmatpush1.bf16.msra.mxu0 0
      %1937 = vmatprep.subr.bf16.mxu0 0
      %1938 = vmatpush1.bf16.msra.mxu0 0
      %1939 = vmatprep.subr.bf16.mxu0 0
      %1940 = vmatpush1.bf16.msra.mxu0 %v1923
      %1941 = vmatprep.subr.bf16.mxu0 0
      %1942 = vmatpush2.bf16.msra.mxu0 0
      %1943 = vmatprep.subr.bf16.mxu0 0
      %1944 = vmatpush2.bf16.msra.mxu0 0
      %1945 = vmatprep.subr.bf16.mxu0 0
      %1946 = vmatpush2.bf16.msra.mxu0 0
      %1947 = vmatprep.subr.bf16.mxu0 0
      %1948 = vmatpush2.bf16.msra.mxu0 0
      %1949 = vmatprep.subr.bf16.mxu0 0
      %1950 = vmatpush2.bf16.msra.mxu0 0
      %1951 = vmatprep.subr.bf16.mxu0 0
      %1952 = vmatpush2.bf16.msra.mxu0 0
      %1953 = vmatprep.subr.bf16.mxu0 0
      %1954 = vmatpush2.bf16.msra.mxu0 0
      %1955 = vmatprep.subr.bf16.mxu0 0
      %1956 = vmatpush2.bf16.msra.mxu0 0
      %1957 = vmatprep.mubr.bf16.mxu0 0
      %1958 = vmatmul.mubr.bf16.gmra.mxu0 %v1920
      %v1959 = vpop.f32.mrf.mxu0
      %v1960 = vadd.f32 0.0, %v1959
      %v1961 = vpop.f32.mrf.mxu0
      %v1962 = vpop.f32.mrf.mxu0
      %v1963 = vpop.f32.mrf.mxu0
      %1964 = vdwg.mxu0
      %s1965 = scalar_lea.vmem [#allocation4], 16
      %v1966 = vld [vmem:[%s1965] sm:$0xff]
      %1968 = vset.pattern.permute.xlu0 0
      %1969 = vperm.xlu0 %1968, %v1899
      %v1970 = vpop.permute.xlu0 %1969
      %v1972 = vmul.f32 %v1970, %v1966
      %v1973 = vadd.f32 %v1972, %v1960
      %1974 = vst.msk [vmem:[%s1965] sm:$0xff] %vm411, %v1973
      %1975 = vst.msk [vmem:[%s1891] sm:$0xff] %vm900, %v1896
      %s1976 = scalar_lea.vmem %s328, 12
      %v1977 = vld [vmem:[%s1976] sm:$0xf]
      %s1978 = scalar_lea.vmem %s336, 12
      %v1979 = vld [vmem:[%s1978] sm:$0xf]
      %v1980 = vmul.bf16 %v1977, %v409
      %v1982 = vsel %vm411, %v1980, 0
      %v1985 = vsel %vm415, %v1979, 0
      %1987 = vmatprep.subr.bf16.mxu0 0
      %1988 = vmatpush1.bf16.msra.mxu0 0
      %1989 = vmatprep.subr.bf16.mxu0 0
      %1990 = vmatpush1.bf16.msra.mxu0 0
      %1991 = vmatprep.subr.bf16.mxu0 0
      %1992 = vmatpush1.bf16.msra.mxu0 0
      %1993 = vmatprep.subr.bf16.mxu0 0
      %1994 = vmatpush1.bf16.msra.mxu0 0
      %1995 = vmatprep.subr.bf16.mxu0 0
      %1996 = vmatpush1.bf16.msra.mxu0 0
      %1997 = vmatprep.subr.bf16.mxu0 0
      %1998 = vmatpush1.bf16.msra.mxu0 0
      %1999 = vmatprep.subr.bf16.mxu0 0
      %2000 = vmatpush1.bf16.msra.mxu0 0
      %2001 = vmatprep.subr.bf16.mxu0 0
      %2002 = vmatpush1.bf16.msra.mxu0 %v1985
      %2003 = vmatprep.subr.bf16.mxu0 0
      %2004 = vmatpush2.bf16.msra.mxu0 0
      %2005 = vmatprep.subr.bf16.mxu0 0
      %2006 = vmatpush2.bf16.msra.mxu0 0
      %2007 = vmatprep.subr.bf16.mxu0 0
      %2008 = vmatpush2.bf16.msra.mxu0 0
      %2009 = vmatprep.subr.bf16.mxu0 0
      %2010 = vmatpush2.bf16.msra.mxu0 0
      %2011 = vmatprep.subr.bf16.mxu0 0
      %2012 = vmatpush2.bf16.msra.mxu0 0
      %2013 = vmatprep.subr.bf16.mxu0 0
      %2014 = vmatpush2.bf16.msra.mxu0 0
      %2015 = vmatprep.subr.bf16.mxu0 0
      %2016 = vmatpush2.bf16.msra.mxu0 0
      %2017 = vmatprep.subr.bf16.mxu0 0
      %2018 = vmatpush2.bf16.msra.mxu0 0
      %2019 = vmatprep.mubr.bf16.mxu0 0
      %2020 = vmatmul.mubr.bf16.gmra.mxu0 %v1982
      %v2021 = vpop.f32.mrf.mxu0
      %v2022 = vadd.f32 0.0, %v2021
      %v2023 = vpop.f32.mrf.mxu0
      %v2024 = vpop.f32.mrf.mxu0
      %v2025 = vpop.f32.mrf.mxu0
      %2026 = vdwg.mxu0
      %v2027 = vsel %vm459, %v2022, 0.0
      %v2028 = vadd.f32 %v2027, 0.0
      %v2029 = vmul.bf16 %v1977, %v468
      %v2031 = vsel %vm411, %v2029, 0
      %2033 = vmatprep.subr.bf16.mxu0 0
      %2034 = vmatpush1.bf16.msra.mxu0 0
      %2035 = vmatprep.subr.bf16.mxu0 0
      %2036 = vmatpush1.bf16.msra.mxu0 0
      %2037 = vmatprep.subr.bf16.mxu0 0
      %2038 = vmatpush1.bf16.msra.mxu0 0
      %2039 = vmatprep.subr.bf16.mxu0 0
      %2040 = vmatpush1.bf16.msra.mxu0 0
      %2041 = vmatprep.subr.bf16.mxu0 0
      %2042 = vmatpush1.bf16.msra.mxu0 0
      %2043 = vmatprep.subr.bf16.mxu0 0
      %2044 = vmatpush1.bf16.msra.mxu0 0
      %2045 = vmatprep.subr.bf16.mxu0 0
      %2046 = vmatpush1.bf16.msra.mxu0 0
      %2047 = vmatprep.subr.bf16.mxu0 0
      %2048 = vmatpush1.bf16.msra.mxu0 %v1985
      %2049 = vmatprep.subr.bf16.mxu0 0
      %2050 = vmatpush2.bf16.msra.mxu0 0
      %2051 = vmatprep.subr.bf16.mxu0 0
      %2052 = vmatpush2.bf16.msra.mxu0 0
      %2053 = vmatprep.subr.bf16.mxu0 0
      %2054 = vmatpush2.bf16.msra.mxu0 0
      %2055 = vmatprep.subr.bf16.mxu0 0
      %2056 = vmatpush2.bf16.msra.mxu0 0
      %2057 = vmatprep.subr.bf16.mxu0 0
      %2058 = vmatpush2.bf16.msra.mxu0 0
      %2059 = vmatprep.subr.bf16.mxu0 0
      %2060 = vmatpush2.bf16.msra.mxu0 0
      %2061 = vmatprep.subr.bf16.mxu0 0
      %2062 = vmatpush2.bf16.msra.mxu0 0
      %2063 = vmatprep.subr.bf16.mxu0 0
      %2064 = vmatpush2.bf16.msra.mxu0 0
      %2065 = vmatprep.mubr.bf16.mxu0 0
      %2066 = vmatmul.mubr.bf16.gmra.mxu0 %v2031
      %v2067 = vpop.f32.mrf.mxu0
      %v2068 = vadd.f32 0.0, %v2067
      %v2069 = vpop.f32.mrf.mxu0
      %v2070 = vpop.f32.mrf.mxu0
      %v2071 = vpop.f32.mrf.mxu0
      %2072 = vdwg.mxu0
      %v2073 = vsel %vm513, %v2068, 0.0
      %v2074 = vadd.f32 %v2028, %v2073
      %v2075 = vmul.bf16 %v1977, %v519
      %v2077 = vsel %vm411, %v2075, 0
      %2079 = vmatprep.subr.bf16.mxu0 0
      %2080 = vmatpush1.bf16.msra.mxu0 0
      %2081 = vmatprep.subr.bf16.mxu0 0
      %2082 = vmatpush1.bf16.msra.mxu0 0
      %2083 = vmatprep.subr.bf16.mxu0 0
      %2084 = vmatpush1.bf16.msra.mxu0 0
      %2085 = vmatprep.subr.bf16.mxu0 0
      %2086 = vmatpush1.bf16.msra.mxu0 0
      %2087 = vmatprep.subr.bf16.mxu0 0
      %2088 = vmatpush1.bf16.msra.mxu0 0
      %2089 = vmatprep.subr.bf16.mxu0 0
      %2090 = vmatpush1.bf16.msra.mxu0 0
      %2091 = vmatprep.subr.bf16.mxu0 0
      %2092 = vmatpush1.bf16.msra.mxu0 0
      %2093 = vmatprep.subr.bf16.mxu0 0
      %2094 = vmatpush1.bf16.msra.mxu0 %v1985
      %2095 = vmatprep.subr.bf16.mxu0 0
      %2096 = vmatpush2.bf16.msra.mxu0 0
      %2097 = vmatprep.subr.bf16.mxu0 0
      %2098 = vmatpush2.bf16.msra.mxu0 0
      %2099 = vmatprep.subr.bf16.mxu0 0
      %2100 = vmatpush2.bf16.msra.mxu0 0
      %2101 = vmatprep.subr.bf16.mxu0 0
      %2102 = vmatpush2.bf16.msra.mxu0 0
      %2103 = vmatprep.subr.bf16.mxu0 0
      %2104 = vmatpush2.bf16.msra.mxu0 0
      %2105 = vmatprep.subr.bf16.mxu0 0
      %2106 = vmatpush2.bf16.msra.mxu0 0
      %2107 = vmatprep.subr.bf16.mxu0 0
      %2108 = vmatpush2.bf16.msra.mxu0 0
      %2109 = vmatprep.subr.bf16.mxu0 0
      %2110 = vmatpush2.bf16.msra.mxu0 0
      %2111 = vmatprep.mubr.bf16.mxu0 0
      %2112 = vmatmul.mubr.bf16.gmra.mxu0 %v2077
      %v2113 = vpop.f32.mrf.mxu0
      %v2114 = vadd.f32 0.0, %v2113
      %v2115 = vpop.f32.mrf.mxu0
      %v2116 = vpop.f32.mrf.mxu0
      %v2117 = vpop.f32.mrf.mxu0
      %2118 = vdwg.mxu0
      %v2119 = vsel %vm564, %v2114, 0.0
      %v2120 = vadd.f32 %v2074, %v2119
      %v2121 = vmul.bf16 %v1977, %v570
      %v2123 = vsel %vm411, %v2121, 0
      %2125 = vmatprep.subr.bf16.mxu0 0
      %2126 = vmatpush1.bf16.msra.mxu0 0
      %2127 = vmatprep.subr.bf16.mxu0 0
      %2128 = vmatpush1.bf16.msra.mxu0 0
      %2129 = vmatprep.subr.bf16.mxu0 0
      %2130 = vmatpush1.bf16.msra.mxu0 0
      %2131 = vmatprep.subr.bf16.mxu0 0
      %2132 = vmatpush1.bf16.msra.mxu0 0
      %2133 = vmatprep.subr.bf16.mxu0 0
      %2134 = vmatpush1.bf16.msra.mxu0 0
      %2135 = vmatprep.subr.bf16.mxu0 0
      %2136 = vmatpush1.bf16.msra.mxu0 0
      %2137 = vmatprep.subr.bf16.mxu0 0
      %2138 = vmatpush1.bf16.msra.mxu0 0
      %2139 = vmatprep.subr.bf16.mxu0 0
      %2140 = vmatpush1.bf16.msra.mxu0 %v1985
      %2141 = vmatprep.subr.bf16.mxu0 0
      %2142 = vmatpush2.bf16.msra.mxu0 0
      %2143 = vmatprep.subr.bf16.mxu0 0
      %2144 = vmatpush2.bf16.msra.mxu0 0
      %2145 = vmatprep.subr.bf16.mxu0 0
      %2146 = vmatpush2.bf16.msra.mxu0 0
      %2147 = vmatprep.subr.bf16.mxu0 0
      %2148 = vmatpush2.bf16.msra.mxu0 0
      %2149 = vmatprep.subr.bf16.mxu0 0
      %2150 = vmatpush2.bf16.msra.mxu0 0
      %2151 = vmatprep.subr.bf16.mxu0 0
      %2152 = vmatpush2.bf16.msra.mxu0 0
      %2153 = vmatprep.subr.bf16.mxu0 0
      %2154 = vmatpush2.bf16.msra.mxu0 0
      %2155 = vmatprep.subr.bf16.mxu0 0
      %2156 = vmatpush2.bf16.msra.mxu0 0
      %2157 = vmatprep.mubr.bf16.mxu0 0
      %2158 = vmatmul.mubr.bf16.gmra.mxu0 %v2123
      %v2159 = vpop.f32.mrf.mxu0
      %v2160 = vadd.f32 0.0, %v2159
      %v2161 = vpop.f32.mrf.mxu0
      %v2162 = vpop.f32.mrf.mxu0
      %v2163 = vpop.f32.mrf.mxu0
      %2164 = vdwg.mxu0
      %v2165 = vsel %vm615, %v2160, 0.0
      %v2166 = vadd.f32 %v2120, %v2165
      %v2167 = vmul.bf16 %v1977, %v621
      %v2169 = vsel %vm411, %v2167, 0
      %2171 = vmatprep.subr.bf16.mxu0 0
      %2172 = vmatpush1.bf16.msra.mxu0 0
      %2173 = vmatprep.subr.bf16.mxu0 0
      %2174 = vmatpush1.bf16.msra.mxu0 0
      %2175 = vmatprep.subr.bf16.mxu0 0
      %2176 = vmatpush1.bf16.msra.mxu0 0
      %2177 = vmatprep.subr.bf16.mxu0 0
      %2178 = vmatpush1.bf16.msra.mxu0 0
      %2179 = vmatprep.subr.bf16.mxu0 0
      %2180 = vmatpush1.bf16.msra.mxu0 0
      %2181 = vmatprep.subr.bf16.mxu0 0
      %2182 = vmatpush1.bf16.msra.mxu0 0
      %2183 = vmatprep.subr.bf16.mxu0 0
      %2184 = vmatpush1.bf16.msra.mxu0 0
      %2185 = vmatprep.subr.bf16.mxu0 0
      %2186 = vmatpush1.bf16.msra.mxu0 %v1985
      %2187 = vmatprep.subr.bf16.mxu0 0
      %2188 = vmatpush2.bf16.msra.mxu0 0
      %2189 = vmatprep.subr.bf16.mxu0 0
      %2190 = vmatpush2.bf16.msra.mxu0 0
      %2191 = vmatprep.subr.bf16.mxu0 0
      %2192 = vmatpush2.bf16.msra.mxu0 0
      %2193 = vmatprep.subr.bf16.mxu0 0
      %2194 = vmatpush2.bf16.msra.mxu0 0
      %2195 = vmatprep.subr.bf16.mxu0 0
      %2196 = vmatpush2.bf16.msra.mxu0 0
      %2197 = vmatprep.subr.bf16.mxu0 0
      %2198 = vmatpush2.bf16.msra.mxu0 0
      %2199 = vmatprep.subr.bf16.mxu0 0
      %2200 = vmatpush2.bf16.msra.mxu0 0
      %2201 = vmatprep.subr.bf16.mxu0 0
      %2202 = vmatpush2.bf16.msra.mxu0 0
      %2203 = vmatprep.mubr.bf16.mxu0 0
      %2204 = vmatmul.mubr.bf16.gmra.mxu0 %v2169
      %v2205 = vpop.f32.mrf.mxu0
      %v2206 = vadd.f32 0.0, %v2205
      %v2207 = vpop.f32.mrf.mxu0
      %v2208 = vpop.f32.mrf.mxu0
      %v2209 = vpop.f32.mrf.mxu0
      %2210 = vdwg.mxu0
      %v2211 = vsel %vm666, %v2206, 0.0
      %v2212 = vadd.f32 %v2166, %v2211
      %v2213 = vmul.bf16 %v1977, %v672
      %v2215 = vsel %vm411, %v2213, 0
      %2217 = vmatprep.subr.bf16.mxu0 0
      %2218 = vmatpush1.bf16.msra.mxu0 0
      %2219 = vmatprep.subr.bf16.mxu0 0
      %2220 = vmatpush1.bf16.msra.mxu0 0
      %2221 = vmatprep.subr.bf16.mxu0 0
      %2222 = vmatpush1.bf16.msra.mxu0 0
      %2223 = vmatprep.subr.bf16.mxu0 0
      %2224 = vmatpush1.bf16.msra.mxu0 0
      %2225 = vmatprep.subr.bf16.mxu0 0
      %2226 = vmatpush1.bf16.msra.mxu0 0
      %2227 = vmatprep.subr.bf16.mxu0 0
      %2228 = vmatpush1.bf16.msra.mxu0 0
      %2229 = vmatprep.subr.bf16.mxu0 0
      %2230 = vmatpush1.bf16.msra.mxu0 0
      %2231 = vmatprep.subr.bf16.mxu0 0
      %2232 = vmatpush1.bf16.msra.mxu0 %v1985
      %2233 = vmatprep.subr.bf16.mxu0 0
      %2234 = vmatpush2.bf16.msra.mxu0 0
      %2235 = vmatprep.subr.bf16.mxu0 0
      %2236 = vmatpush2.bf16.msra.mxu0 0
      %2237 = vmatprep.subr.bf16.mxu0 0
      %2238 = vmatpush2.bf16.msra.mxu0 0
      %2239 = vmatprep.subr.bf16.mxu0 0
      %2240 = vmatpush2.bf16.msra.mxu0 0
      %2241 = vmatprep.subr.bf16.mxu0 0
      %2242 = vmatpush2.bf16.msra.mxu0 0
      %2243 = vmatprep.subr.bf16.mxu0 0
      %2244 = vmatpush2.bf16.msra.mxu0 0
      %2245 = vmatprep.subr.bf16.mxu0 0
      %2246 = vmatpush2.bf16.msra.mxu0 0
      %2247 = vmatprep.subr.bf16.mxu0 0
      %2248 = vmatpush2.bf16.msra.mxu0 0
      %2249 = vmatprep.mubr.bf16.mxu0 0
      %2250 = vmatmul.mubr.bf16.gmra.mxu0 %v2215
      %v2251 = vpop.f32.mrf.mxu0
      %v2252 = vadd.f32 0.0, %v2251
      %v2253 = vpop.f32.mrf.mxu0
      %v2254 = vpop.f32.mrf.mxu0
      %v2255 = vpop.f32.mrf.mxu0
      %2256 = vdwg.mxu0
      %v2257 = vsel %vm717, %v2252, 0.0
      %v2258 = vadd.f32 %v2212, %v2257
      %v2259 = vmul.bf16 %v1977, %v723
      %v2261 = vsel %vm411, %v2259, 0
      %2263 = vmatprep.subr.bf16.mxu0 0
      %2264 = vmatpush1.bf16.msra.mxu0 0
      %2265 = vmatprep.subr.bf16.mxu0 0
      %2266 = vmatpush1.bf16.msra.mxu0 0
      %2267 = vmatprep.subr.bf16.mxu0 0
      %2268 = vmatpush1.bf16.msra.mxu0 0
      %2269 = vmatprep.subr.bf16.mxu0 0
      %2270 = vmatpush1.bf16.msra.mxu0 0
      %2271 = vmatprep.subr.bf16.mxu0 0
      %2272 = vmatpush1.bf16.msra.mxu0 0
      %2273 = vmatprep.subr.bf16.mxu0 0
      %2274 = vmatpush1.bf16.msra.mxu0 0
      %2275 = vmatprep.subr.bf16.mxu0 0
      %2276 = vmatpush1.bf16.msra.mxu0 0
      %2277 = vmatprep.subr.bf16.mxu0 0
      %2278 = vmatpush1.bf16.msra.mxu0 %v1985
      %2279 = vmatprep.subr.bf16.mxu0 0
      %2280 = vmatpush2.bf16.msra.mxu0 0
      %2281 = vmatprep.subr.bf16.mxu0 0
      %2282 = vmatpush2.bf16.msra.mxu0 0
      %2283 = vmatprep.subr.bf16.mxu0 0
      %2284 = vmatpush2.bf16.msra.mxu0 0
      %2285 = vmatprep.subr.bf16.mxu0 0
      %2286 = vmatpush2.bf16.msra.mxu0 0
      %2287 = vmatprep.subr.bf16.mxu0 0
      %2288 = vmatpush2.bf16.msra.mxu0 0
      %2289 = vmatprep.subr.bf16.mxu0 0
      %2290 = vmatpush2.bf16.msra.mxu0 0
      %2291 = vmatprep.subr.bf16.mxu0 0
      %2292 = vmatpush2.bf16.msra.mxu0 0
      %2293 = vmatprep.subr.bf16.mxu0 0
      %2294 = vmatpush2.bf16.msra.mxu0 0
      %2295 = vmatprep.mubr.bf16.mxu0 0
      %2296 = vmatmul.mubr.bf16.gmra.mxu0 %v2261
      %v2297 = vpop.f32.mrf.mxu0
      %v2298 = vadd.f32 0.0, %v2297
      %v2299 = vpop.f32.mrf.mxu0
      %v2300 = vpop.f32.mrf.mxu0
      %v2301 = vpop.f32.mrf.mxu0
      %2302 = vdwg.mxu0
      %v2303 = vsel %vm768, %v2298, 0.0
      %v2304 = vadd.f32 %v2258, %v2303
      %v2305 = vmul.bf16 %v1977, %v774
      %v2307 = vsel %vm411, %v2305, 0
      %2309 = vmatprep.subr.bf16.mxu0 0
      %2310 = vmatpush1.bf16.msra.mxu0 0
      %2311 = vmatprep.subr.bf16.mxu0 0
      %2312 = vmatpush1.bf16.msra.mxu0 0
      %2313 = vmatprep.subr.bf16.mxu0 0
      %2314 = vmatpush1.bf16.msra.mxu0 0
      %2315 = vmatprep.subr.bf16.mxu0 0
      %2316 = vmatpush1.bf16.msra.mxu0 0
      %2317 = vmatprep.subr.bf16.mxu0 0
      %2318 = vmatpush1.bf16.msra.mxu0 0
      %2319 = vmatprep.subr.bf16.mxu0 0
      %2320 = vmatpush1.bf16.msra.mxu0 0
      %2321 = vmatprep.subr.bf16.mxu0 0
      %2322 = vmatpush1.bf16.msra.mxu0 0
      %2323 = vmatprep.subr.bf16.mxu0 0
      %2324 = vmatpush1.bf16.msra.mxu0 %v1985
      %2325 = vmatprep.subr.bf16.mxu0 0
      %2326 = vmatpush2.bf16.msra.mxu0 0
      %2327 = vmatprep.subr.bf16.mxu0 0
      %2328 = vmatpush2.bf16.msra.mxu0 0
      %2329 = vmatprep.subr.bf16.mxu0 0
      %2330 = vmatpush2.bf16.msra.mxu0 0
      %2331 = vmatprep.subr.bf16.mxu0 0
      %2332 = vmatpush2.bf16.msra.mxu0 0
      %2333 = vmatprep.subr.bf16.mxu0 0
      %2334 = vmatpush2.bf16.msra.mxu0 0
      %2335 = vmatprep.subr.bf16.mxu0 0
      %2336 = vmatpush2.bf16.msra.mxu0 0
      %2337 = vmatprep.subr.bf16.mxu0 0
      %2338 = vmatpush2.bf16.msra.mxu0 0
      %2339 = vmatprep.subr.bf16.mxu0 0
      %2340 = vmatpush2.bf16.msra.mxu0 0
      %2341 = vmatprep.mubr.bf16.mxu0 0
      %2342 = vmatmul.mubr.bf16.gmra.mxu0 %v2307
      %v2343 = vpop.f32.mrf.mxu0
      %v2344 = vadd.f32 0.0, %v2343
      %v2345 = vpop.f32.mrf.mxu0
      %v2346 = vpop.f32.mrf.mxu0
      %v2347 = vpop.f32.mrf.mxu0
      %2348 = vdwg.mxu0
      %v2349 = vsel %vm819, %v2344, 0.0
      %v2350 = vadd.f32 %v2304, %v2349
      %v2351 = vmul.bf16 %v1977, %v828
      %v2353 = vsel %vm411, %v2351, 0
      %2355 = vmatprep.subr.bf16.mxu0 0
      %2356 = vmatpush1.bf16.msra.mxu0 0
      %2357 = vmatprep.subr.bf16.mxu0 0
      %2358 = vmatpush1.bf16.msra.mxu0 0
      %2359 = vmatprep.subr.bf16.mxu0 0
      %2360 = vmatpush1.bf16.msra.mxu0 0
      %2361 = vmatprep.subr.bf16.mxu0 0
      %2362 = vmatpush1.bf16.msra.mxu0 0
      %2363 = vmatprep.subr.bf16.mxu0 0
      %2364 = vmatpush1.bf16.msra.mxu0 0
      %2365 = vmatprep.subr.bf16.mxu0 0
      %2366 = vmatpush1.bf16.msra.mxu0 0
      %2367 = vmatprep.subr.bf16.mxu0 0
      %2368 = vmatpush1.bf16.msra.mxu0 0
      %2369 = vmatprep.subr.bf16.mxu0 0
      %2370 = vmatpush1.bf16.msra.mxu0 %v1985
      %2371 = vmatprep.subr.bf16.mxu0 0
      %2372 = vmatpush2.bf16.msra.mxu0 0
      %2373 = vmatprep.subr.bf16.mxu0 0
      %2374 = vmatpush2.bf16.msra.mxu0 0
      %2375 = vmatprep.subr.bf16.mxu0 0
      %2376 = vmatpush2.bf16.msra.mxu0 0
      %2377 = vmatprep.subr.bf16.mxu0 0
      %2378 = vmatpush2.bf16.msra.mxu0 0
      %2379 = vmatprep.subr.bf16.mxu0 0
      %2380 = vmatpush2.bf16.msra.mxu0 0
      %2381 = vmatprep.subr.bf16.mxu0 0
      %2382 = vmatpush2.bf16.msra.mxu0 0
      %2383 = vmatprep.subr.bf16.mxu0 0
      %2384 = vmatpush2.bf16.msra.mxu0 0
      %2385 = vmatprep.subr.bf16.mxu0 0
      %2386 = vmatpush2.bf16.msra.mxu0 0
      %2387 = vmatprep.mubr.bf16.mxu0 0
      %2388 = vmatmul.mubr.bf16.gmra.mxu0 %v2353
      %v2389 = vpop.f32.mrf.mxu0
      %v2390 = vadd.f32 0.0, %v2389
      %v2391 = vpop.f32.mrf.mxu0
      %v2392 = vpop.f32.mrf.mxu0
      %v2393 = vpop.f32.mrf.mxu0
      %2394 = vdwg.mxu0
      %v2395 = vsel %vm873, %v2390, 0.0
      %v2396 = vadd.f32 %v2350, %v2395
      %v2397 = vmul.f32 %v2396, 0.35355338
      %v2398 = vsel %vm398, %v2397, -1e+10
      %s2399 = scalar_lea.vmem [#allocation2], 24
      %v2400 = vld [vmem:[%s2399] sm:$0xff]
      %v2401 = vsel %vm411, %v2398, -inf
      %2402 = vmax.xlane.f32.xlu0 %v2401
      %v2403 = vpop.xlane.xlu0 %2402
      %v2404 = vmax.f32 %v2400, %v2403
      %v2405 = vsub.f32 %v2400, %v2404
      %v2406 = vmul.f32 %v2405, 1.442695
      %v2407 = vpow.pop %v2406
      %2409 = vset.pattern.permute.xlu0 0
      %2410 = vperm.xlu0 %2409, %v2404
      %v2411 = vpop.permute.xlu0 %2410
      %v2413 = vsub.f32 %v2398, %v2411
      %v2414 = vmul.f32 %v2413, 1.442695
      %v2415 = vpow.pop %v2414
      %s2416 = scalar_lea.vmem [#allocation3], 24
      %v2417 = vld [vmem:[%s2416] sm:$0xff]
      %v2418 = vmul.f32 %v2407, %v2417
      %v2419 = vsel %vm411, %v2415, 0.0
      %2420 = vadd.xlane.f32.xlu0 %v2419
      %v2421 = vpop.xlane.xlu0 %2420
      %v2422 = vadd.f32 %v2418, %v2421
      %2423 = vst.msk [vmem:[%s2416] sm:$0xff] %vm900, %v2422
      %v2424 = vpack.c.bf16 %v2415, %v2415
      %s2425 = scalar_lea.vmem %s344, 12
      %v2426 = vld [vmem:[%s2425] sm:$0xf]
      %v2428 = vsel %vm411, %v2424, 0
      %v2431 = vsel %vm415, %v2426, 0
      %2433 = vmatprep.subr.bf16.mxu0 0
      %2434 = vmatpush1.bf16.msra.mxu0 0
      %2435 = vmatprep.subr.bf16.mxu0 0
      %2436 = vmatpush1.bf16.msra.mxu0 0
      %2437 = vmatprep.subr.bf16.mxu0 0
      %2438 = vmatpush1.bf16.msra.mxu0 0
      %2439 = vmatprep.subr.bf16.mxu0 0
      %2440 = vmatpush1.bf16.msra.mxu0 0
      %2441 = vmatprep.subr.bf16.mxu0 0
      %2442 = vmatpush1.bf16.msra.mxu0 0
      %2443 = vmatprep.subr.bf16.mxu0 0
      %2444 = vmatpush1.bf16.msra.mxu0 0
      %2445 = vmatprep.subr.bf16.mxu0 0
      %2446 = vmatpush1.bf16.msra.mxu0 0
      %2447 = vmatprep.subr.bf16.mxu0 0
      %2448 = vmatpush1.bf16.msra.mxu0 %v2431
      %2449 = vmatprep.subr.bf16.mxu0 0
      %2450 = vmatpush2.bf16.msra.mxu0 0
      %2451 = vmatprep.subr.bf16.mxu0 0
      %2452 = vmatpush2.bf16.msra.mxu0 0
      %2453 = vmatprep.subr.bf16.mxu0 0
      %2454 = vmatpush2.bf16.msra.mxu0 0
      %2455 = vmatprep.subr.bf16.mxu0 0
      %2456 = vmatpush2.bf16.msra.mxu0 0
      %2457 = vmatprep.subr.bf16.mxu0 0
      %2458 = vmatpush2.bf16.msra.mxu0 0
      %2459 = vmatprep.subr.bf16.mxu0 0
      %2460 = vmatpush2.bf16.msra.mxu0 0
      %2461 = vmatprep.subr.bf16.mxu0 0
      %2462 = vmatpush2.bf16.msra.mxu0 0
      %2463 = vmatprep.subr.bf16.mxu0 0
      %2464 = vmatpush2.bf16.msra.mxu0 0
      %2465 = vmatprep.mubr.bf16.mxu0 0
      %2466 = vmatmul.mubr.bf16.gmra.mxu0 %v2428
      %v2467 = vpop.f32.mrf.mxu0
      %v2468 = vadd.f32 0.0, %v2467
      %v2469 = vpop.f32.mrf.mxu0
      %v2470 = vpop.f32.mrf.mxu0
      %v2471 = vpop.f32.mrf.mxu0
      %2472 = vdwg.mxu0
      %s2473 = scalar_lea.vmem [#allocation4], 24
      %v2474 = vld [vmem:[%s2473] sm:$0xff]
      %2476 = vset.pattern.permute.xlu0 0
      %2477 = vperm.xlu0 %2476, %v2407
      %v2478 = vpop.permute.xlu0 %2477
      %v2480 = vmul.f32 %v2478, %v2474
      %v2481 = vadd.f32 %v2480, %v2468
      %2482 = vst.msk [vmem:[%s2473] sm:$0xff] %vm411, %v2481
      %2483 = vst.msk [vmem:[%s2399] sm:$0xff] %vm900, %v2404
      // Predicated region
      $region45: #{sequential_absolute_forward.40} parent=39 // pred_check
        %p2484 = pneg %p363
      $region46: #{sequential_absolute_forward.40} parent=39 // pred_check_branch
        %2486 = sbr.rel (%p2484) target = $region48
      $region47: #{sequential_absolute_forward.40} parent=39 // pred_region
        %v2487 = vld [vmem:[#allocation3] sm:$0xff]
        %v2488 = vrcp.pop %v2487
        %v2489 = vld [vmem:[#allocation4] sm:$0xff]
        %2491 = vset.pattern.permute.xlu0 0
        %2492 = vperm.xlu0 %2491, %v2488
        %v2493 = vpop.permute.xlu0 %2492
        %v2495 = vmul.f32 %v2489, %v2493
        %v2496 = vpack.c.bf16 %v2495, %v2495
        %v2497 = vld [vmem:[%s1400] sm:$0xff]
        %v2498 = vrcp.pop %v2497
        %v2499 = vld [vmem:[%s1457] sm:$0xff]
        %2501 = vset.pattern.permute.xlu0 0
        %2502 = vperm.xlu0 %2501, %v2498
        %v2503 = vpop.permute.xlu0 %2502
        %v2505 = vmul.f32 %v2499, %v2503
        %v2506 = vpack.c.bf16 %v2505, %v2505
        %v2507 = vld [vmem:[%s1908] sm:$0xff]
        %v2508 = vrcp.pop %v2507
        %v2509 = vld [vmem:[%s1965] sm:$0xff]
        %2511 = vset.pattern.permute.xlu0 0
        %2512 = vperm.xlu0 %2511, %v2508
        %v2513 = vpop.permute.xlu0 %2512
        %v2515 = vmul.f32 %v2509, %v2513
        %v2516 = vpack.c.bf16 %v2515, %v2515
        %v2517 = vld [vmem:[%s2416] sm:$0xff]
        %v2518 = vrcp.pop %v2517
        %v2519 = vld [vmem:[%s2473] sm:$0xff]
        %2521 = vset.pattern.permute.xlu0 0
        %2522 = vperm.xlu0 %2521, %v2518
        %v2523 = vpop.permute.xlu0 %2522
        %v2525 = vmul.f32 %v2519, %v2523
        %v2526 = vpack.c.bf16 %v2525, %v2525
        %2528 = vrot.lane.b32.xlu0 %v2506, 8
        %v2529 = vpop.permute.xlu0 %2528
        %2531 = vrot.lane.b32.xlu0 %v2516, 16
        %v2532 = vpop.permute.xlu0 %2531
        %2534 = vrot.lane.b32.xlu0 %v2526, 24
        %v2535 = vpop.permute.xlu0 %2534
        %v2538 = vsel %vm411, %v2496, %v2529
        %vm2539 = vcmask 130048
        %v2541 = vsel %vm2539, %v2538, %v2532
        %vm2542 = vcmask 195584
        %v2544 = vsel %vm2542, %v2541, %v2535
        %vm2546 = vcmask 257024
        %2547 = vst.msk [vmem:[%s361] sm:$0xf] %vm2546, %v2544
      $region48: #{sequential_absolute_forward.40} parent=39 // pred_fallthru
        _
      %p2548 = scmp.lt.s32.totalorder %s21, 1
      %s2549 = scalar_select %p2548, %s21, 1
      %p2550 = scmp.lt.s32.totalorder %s22, 0
      %s2551 = scalar_select %p2550, %s22, 0
      %s2552 = sadd.s32 %s2551, %s2549
      %s2553 = smul.addr %s2552, 4
      %s2554 = scalar_lea.vmem %s5, %s2553
      // Predicated region
      $region49: #{sequential_absolute_forward.40} parent=39 // pred_check
        %p2555 = pneg %p190
      $region50: #{sequential_absolute_forward.40} parent=39 // pred_check_branch
        %2557 = sbr.rel (%p2555) target = $region52
      $region51: #{sequential_absolute_forward.40} parent=39 // pred_region
        _
      $region52: #{sequential_absolute_forward.40} parent=39 // pred_fallthru
        _
    $region40: #{sequential_absolute_forward.40} parent=5 // pred_fallthru
      _
    %p2558 = scmp.le.s32.totalorder 2, %s11
    // Predicated region
    $region53: #{sequential_absolute_forward.40} parent=5 // pred_check
      %p2559 = pneg %p2558
    $region54: #{sequential_absolute_forward.40} parent=5 // pred_check_branch
      %2561 = sbr.rel (%p2559) target = $region56
    $region55: #{sequential_absolute_forward.40} parent=5 // pred_region
      %s2562 = ssub.s32 %s11, 2
      // Predicated region
      $region57: #{sequential_absolute_forward.40} parent=55 // pred_check
        %p2563 = pneg %p196
      $region58: #{sequential_absolute_forward.40} parent=55 // pred_check_branch
        %2565 = sbr.rel (%p2563) target = $region60
      $region59: #{sequential_absolute_forward.40} parent=55 // pred_region
        %p2566 = scmp.lt.s32.totalorder %s24, 1
        %s2567 = scalar_select %p2566, %s24, 1
        %p2568 = scmp.lt.s32.totalorder %s25, 0
        %s2569 = scalar_select %p2568, %s25, 0
        %s2570 = sadd.s32 %s2569, %s2567
        %s2571 = smul.addr %s2570, 4
        %s2572 = scalar_lea.vmem %s5, %s2571
      $region60: #{sequential_absolute_forward.40} parent=55 // pred_fallthru
        _
    $region56: #{sequential_absolute_forward.40} parent=5 // pred_fallthru
      _
  $region6: #{sequential_absolute_forward.40} parent=0 // loop_footer
    %s15 = sadd.s32 1, %s11
  $region7: #{sequential_absolute_forward.40} parent=0 // loop_footer_branch
    %10 = sbr.rel target = $region3
  $region8: #{sequential_absolute_forward.40} parent=0 // loop_exit
    _

// kernel: sequential_absolute_forward.54
$region0: #{sequential_absolute_forward.54}
  #allocation0 [shape = 'u32[]', space=smem, size = 0x4, offset = 0x4, fixed_abs, tag = 'smem constant byte address 0x4 - core index']
  #allocation1 [shape = 'u32[144,128]{1,0:T(1,128)}', space=vmem, size = 0x12000, scoped, tag = 'internal scratch']
  #allocation2 [shape = 'f32[4,8,1]{2,1,0:T(8,128)}', space=vmem, size = 0x4000, scoped, tag = 'scratch operand']
  #allocation3 [shape = 'f32[4,8,1]{2,1,0:T(8,128)}', space=vmem, size = 0x4000, scoped, tag = 'scratch operand']
  #allocation4 [shape = 'f32[4,8,8]{2,1,0:T(8,128)}', space=vmem, size = 0x4000, scoped, tag = 'scratch operand']
  %s0 = inlined_call_operand.vmem [shape: bf16[9,8], index: 0, kind: input, shape index: {}]
  %s1 = inlined_call_operand.vmem [shape: bf16[2,4,8,8], index: 1, kind: input, shape index: {}]
  %s2 = inlined_call_operand.vmem [shape: bf16[2,4,8,8], index: 2, kind: input, shape index: {}]
  %s3 = inlined_call_operand.vmem [shape: bf16[2,4,8,8], index: 3, kind: input, shape index: {}]
  %s4 = inlined_call_operand.vmem [shape: s32[2,8,8], index: 4, kind: input, shape index: {}]
  %s5 = inlined_call_operand.vmem [shape: bf16[2,8,32], index: 5, kind: output, shape index: {}]
  %s6 = sld [smem:[#allocation0]]
  $region65: #{sequential_absolute_forward.54} parent=0
    _
  %s8 = ssub.s32 1, %s6
  %s9 = scalar_select 0, %s8, %s6
  loop: start=0, step=1, limit=4
  $region2: #{sequential_absolute_forward.54} parent=0 // loop_pre_header
    _
  $region3: #{sequential_absolute_forward.54} parent=0 // loop_header
    %s11 = sphi 0, %s15
    %p12 = scmp.ge.s32.totalorder %s11, 4
    %s18 = sphi 0, %s37
    %s19 = sphi 0, %s33
    %s20 = sphi 0, %s29
    %s21 = sphi 0, %s18
    %s22 = sphi 0, %s19
    %s23 = sphi 0, %s20
    %s24 = sphi 0, %s21
    %s25 = sphi 0, %s22
    %s26 = sphi 0, %s23
    %s38 = sphi 0, %s38
    %s40 = sphi 0, %s38
    %s41 = sphi 0, %s40
    %s55 = sphi 0, %s41
    %s63 = sphi 0, %s65
    %s66 = sphi 0, %s63
    %s67 = sphi 0, %s66
    %s83 = sphi 0, %s67
    %s91 = sphi 0, %s93
    %s94 = sphi 0, %s91
    %s95 = sphi 0, %s94
    %s111 = sphi 0, %s95
    %s119 = sphi 0, %s121
    %s122 = sphi 0, %s119
    %s123 = sphi 0, %s122
    %s139 = sphi 0, %s123
    %s149 = sphi 0, %s151
    %s152 = sphi 0, %s149
    %s153 = sphi 0, %s152
    %s169 = sphi 0, %s153
    %s177 = sphi 0, %s179
    %s180 = sphi 0, %s177
    %s181 = sphi 0, %s180
    %s197 = sphi 0, %s181
  $region4: #{sequential_absolute_forward.54} parent=0 // loop_header_branch
    %14 = sbr.rel (%p12) target = $region8
  $region5: #{sequential_absolute_forward.54} parent=0 // loop_body
    %s16 = ssub.s32 %s11, 1
    %s17 = ssub.s32 %s11, 2
    %s27 = sadd.s32 1, %s20
    %p28 = scmp.ge.s32.totalorder %s27, 1
    %s29 = scalar_select %p28, 0, %s27
    %s30 = sadd.s32 1, %s19
    %s31 = scalar_select %p28, %s30, %s19
    %p32 = scmp.ge.s32.totalorder %s31, 1
    %s33 = scalar_select %p32, 0, %s31
    %s34 = sadd.s32 1, %s18
    %s35 = scalar_select %p32, %s34, %s18
    %p36 = scmp.ge.s32.totalorder %s35, 2
    %s37 = scalar_select %p36, 0, %s35
    %s39 = sadd.s32 %s38, 1
    %p42 = scmp.eq.s32.totalorder %s11, 1
    %p43 = scmp.ne.s32.totalorder %s38, %s40
    %p44 = scmp.eq.s32.totalorder %s11, 0
    %p45 = por %p43, %p44
    %p46 = scmp.ne.s32.totalorder %s38, %s40
    %p47 = scmp.eq.s32.totalorder %s16, 1
    %p48 = por %p46, %p47
    %p49 = scmp.ne.s32.totalorder %s40, %s41
    %p50 = scmp.eq.s32.totalorder %s16, 0
    %p51 = por %p49, %p50
    %p52 = scmp.ne.s32.totalorder %s40, %s41
    %p53 = scmp.eq.s32.totalorder %s17, 1
    %p54 = por %p52, %p53
    %p56 = scmp.ne.s32.totalorder %s41, %s55
    %p57 = scmp.eq.s32.totalorder %s17, 0
    %p58 = por %p56, %p57
    %s59 = ssub.s32 %s18, %s37
    %s60 = ssub.s32 %s19, %s33
    %s61 = sor.u32 %s59, %s60
    %p62 = scmp.eq.s32.totalorder %s61, 0
    %s64 = sadd.s32 %s63, 1
    %s65 = scalar_select %p62, %s63, %s64
    %p68 = pneg %p62
    %p69 = scmp.eq.s32.totalorder %s11, 1
    %p70 = por %p68, %p69
    %p71 = scmp.ne.s32.totalorder %s63, %s66
    %p72 = scmp.eq.s32.totalorder %s11, 0
    %p73 = por %p71, %p72
    %p74 = scmp.ne.s32.totalorder %s63, %s66
    %p75 = scmp.eq.s32.totalorder %s16, 1
    %p76 = por %p74, %p75
    %p77 = scmp.ne.s32.totalorder %s66, %s67
    %p78 = scmp.eq.s32.totalorder %s16, 0
    %p79 = por %p77, %p78
    %p80 = scmp.ne.s32.totalorder %s66, %s67
    %p81 = scmp.eq.s32.totalorder %s17, 1
    %p82 = por %p80, %p81
    %p84 = scmp.ne.s32.totalorder %s67, %s83
    %p85 = scmp.eq.s32.totalorder %s17, 0
    %p86 = por %p84, %p85
    %s87 = ssub.s32 %s18, %s37
    %s88 = ssub.s32 %s20, %s29
    %s89 = sor.u32 %s87, %s88
    %p90 = scmp.eq.s32.totalorder %s89, 0
    %s92 = sadd.s32 %s91, 1
    %s93 = scalar_select %p90, %s91, %s92
    %p96 = pneg %p90
    %p97 = scmp.eq.s32.totalorder %s11, 1
    %p98 = por %p96, %p97
    %p99 = scmp.ne.s32.totalorder %s91, %s94
    %p100 = scmp.eq.s32.totalorder %s11, 0
    %p101 = por %p99, %p100
    %p102 = scmp.ne.s32.totalorder %s91, %s94
    %p103 = scmp.eq.s32.totalorder %s16, 1
    %p104 = por %p102, %p103
    %p105 = scmp.ne.s32.totalorder %s94, %s95
    %p106 = scmp.eq.s32.totalorder %s16, 0
    %p107 = por %p105, %p106
    %p108 = scmp.ne.s32.totalorder %s94, %s95
    %p109 = scmp.eq.s32.totalorder %s17, 1
    %p110 = por %p108, %p109
    %p112 = scmp.ne.s32.totalorder %s95, %s111
    %p113 = scmp.eq.s32.totalorder %s17, 0
    %p114 = por %p112, %p113
    %s115 = ssub.s32 %s18, %s37
    %s116 = ssub.s32 %s20, %s29
    %s117 = sor.u32 %s115, %s116
    %p118 = scmp.eq.s32.totalorder %s117, 0
    %s120 = sadd.s32 %s119, 1
    %s121 = scalar_select %p118, %s119, %s120
    %p124 = pneg %p118
    %p125 = scmp.eq.s32.totalorder %s11, 1
    %p126 = por %p124, %p125
    %p127 = scmp.ne.s32.totalorder %s119, %s122
    %p128 = scmp.eq.s32.totalorder %s11, 0
    %p129 = por %p127, %p128
    %p130 = scmp.ne.s32.totalorder %s119, %s122
    %p131 = scmp.eq.s32.totalorder %s16, 1
    %p132 = por %p130, %p131
    %p133 = scmp.ne.s32.totalorder %s122, %s123
    %p134 = scmp.eq.s32.totalorder %s16, 0
    %p135 = por %p133, %p134
    %p136 = scmp.ne.s32.totalorder %s122, %s123
    %p137 = scmp.eq.s32.totalorder %s17, 1
    %p138 = por %p136, %p137
    %p140 = scmp.ne.s32.totalorder %s123, %s139
    %p141 = scmp.eq.s32.totalorder %s17, 0
    %p142 = por %p140, %p141
    %s143 = ssub.s32 %s18, %s37
    %s144 = ssub.s32 %s19, %s33
    %s145 = sor.u32 %s143, %s144
    %s146 = ssub.s32 %s20, %s29
    %s147 = sor.u32 %s145, %s146
    %p148 = scmp.eq.s32.totalorder %s147, 0
    %s150 = sadd.s32 %s149, 1
    %s151 = scalar_select %p148, %s149, %s150
    %p154 = pneg %p148
    %p155 = scmp.eq.s32.totalorder %s11, 1
    %p156 = por %p154, %p155
    %p157 = scmp.ne.s32.totalorder %s149, %s152
    %p158 = scmp.eq.s32.totalorder %s11, 0
    %p159 = por %p157, %p158
    %p160 = scmp.ne.s32.totalorder %s149, %s152
    %p161 = scmp.eq.s32.totalorder %s16, 1
    %p162 = por %p160, %p161
    %p163 = scmp.ne.s32.totalorder %s152, %s153
    %p164 = scmp.eq.s32.totalorder %s16, 0
    %p165 = por %p163, %p164
    %p166 = scmp.ne.s32.totalorder %s152, %s153
    %p167 = scmp.eq.s32.totalorder %s17, 1
    %p168 = por %p166, %p167
    %p170 = scmp.ne.s32.totalorder %s153, %s169
    %p171 = scmp.eq.s32.totalorder %s17, 0
    %p172 = por %p170, %p171
    %s173 = ssub.s32 %s18, %s37
    %s174 = ssub.s32 %s19, %s33
    %s175 = sor.u32 %s173, %s174
    %p176 = scmp.eq.s32.totalorder %s175, 0
    %s178 = sadd.s32 %s177, 1
    %s179 = scalar_select %p176, %s177, %s178
    %p182 = pneg %p176
    %p183 = scmp.eq.s32.totalorder %s11, 1
    %p184 = por %p182, %p183
    %p185 = scmp.ne.s32.totalorder %s177, %s180
    %p186 = scmp.eq.s32.totalorder %s11, 0
    %p187 = por %p185, %p186
    %p188 = scmp.ne.s32.totalorder %s177, %s180
    %p189 = scmp.eq.s32.totalorder %s16, 1
    %p190 = por %p188, %p189
    %p191 = scmp.ne.s32.totalorder %s180, %s181
    %p192 = scmp.eq.s32.totalorder %s16, 0
    %p193 = por %p191, %p192
    %p194 = scmp.ne.s32.totalorder %s180, %s181
    %p195 = scmp.eq.s32.totalorder %s17, 1
    %p196 = por %p194, %p195
    %p198 = scmp.ne.s32.totalorder %s181, %s197
    %p199 = scmp.eq.s32.totalorder %s17, 0
    %p200 = por %p198, %p199
    %p201 = scmp.le.s32.totalorder 1, %s11
    %p202 = scmp.lt.s32.totalorder %s11, 3
    %p203 = pnand %p201, %p202
    %p204 = pneg %p203
    // Predicated region
    $region9: #{sequential_absolute_forward.54} parent=5 // pred_check
      _
    $region10: #{sequential_absolute_forward.54} parent=5 // pred_check_branch
      %206 = sbr.rel (%p203) target = $region12
    $region11: #{sequential_absolute_forward.54} parent=5 // pred_region
      %s207 = ssub.s32 %s11, 1
      // Predicated region
      $region13: #{sequential_absolute_forward.54} parent=11 // pred_check
        %p208 = pneg %p51
      $region14: #{sequential_absolute_forward.54} parent=11 // pred_check_branch
        %210 = sbr.rel (%p208) target = $region16
      $region15: #{sequential_absolute_forward.54} parent=11 // pred_region
        _
      $region16: #{sequential_absolute_forward.54} parent=11 // pred_fallthru
        _
    $region12: #{sequential_absolute_forward.54} parent=5 // pred_fallthru
      _
    %p211 = scmp.lt.s32.totalorder %s11, 2
    // Predicated region
    $region17: #{sequential_absolute_forward.54} parent=5 // pred_check
      %p212 = pneg %p211
    $region18: #{sequential_absolute_forward.54} parent=5 // pred_check_branch
      %214 = sbr.rel (%p212) target = $region20
    $region19: #{sequential_absolute_forward.54} parent=5 // pred_region
      // Predicated region
      $region21: #{sequential_absolute_forward.54} parent=19 // pred_check
        %p215 = pneg %p73
      $region22: #{sequential_absolute_forward.54} parent=19 // pred_check_branch
        %217 = sbr.rel (%p215) target = $region24
      $region23: #{sequential_absolute_forward.54} parent=19 // pred_region
        %p218 = scmp.lt.s32.totalorder %s18, 1
        %s219 = scalar_select %p218, %s18, 1
        %p220 = scmp.lt.s32.totalorder %s19, 0
        %s221 = scalar_select %p220, %s19, 0
        %s222 = smul.addr %s219, 4
        %s223 = sadd.s32 %s221, %s222
        %s224 = smul.addr %s223, 4
        %s225 = scalar_lea.vmem %s1, %s224
      $region24: #{sequential_absolute_forward.54} parent=19 // pred_fallthru
        _
      // Predicated region
      $region25: #{sequential_absolute_forward.54} parent=19 // pred_check
        %p226 = pneg %p101
      $region26: #{sequential_absolute_forward.54} parent=19 // pred_check_branch
        %228 = sbr.rel (%p226) target = $region28
      $region27: #{sequential_absolute_forward.54} parent=19 // pred_region
        %p229 = scmp.lt.s32.totalorder %s18, 1
        %s230 = scalar_select %p229, %s18, 1
        %p231 = scmp.lt.s32.totalorder %s20, 0
        %s232 = scalar_select %p231, %s20, 0
        %s233 = smul.addr %s230, 4
        %s234 = sadd.s32 %s232, %s233
        %s235 = smul.addr %s234, 4
        %s236 = scalar_lea.vmem %s2, %s235
      $region28: #{sequential_absolute_forward.54} parent=19 // pred_fallthru
        _
      // Predicated region
      $region29: #{sequential_absolute_forward.54} parent=19 // pred_check
        %p237 = pneg %p129
      $region30: #{sequential_absolute_forward.54} parent=19 // pred_check_branch
        %239 = sbr.rel (%p237) target = $region32
      $region31: #{sequential_absolute_forward.54} parent=19 // pred_region
        %p240 = scmp.lt.s32.totalorder %s18, 1
        %s241 = scalar_select %p240, %s18, 1
        %p242 = scmp.lt.s32.totalorder %s20, 0
        %s243 = scalar_select %p242, %s20, 0
        %s244 = smul.addr %s241, 4
        %s245 = sadd.s32 %s243, %s244
        %s246 = smul.addr %s245, 4
        %s247 = scalar_lea.vmem %s3, %s246
      $region32: #{sequential_absolute_forward.54} parent=19 // pred_fallthru
        _
      // Predicated region
      $region33: #{sequential_absolute_forward.54} parent=19 // pred_check
        %p248 = pneg %p159
      $region34: #{sequential_absolute_forward.54} parent=19 // pred_check_branch
        %250 = sbr.rel (%p248) target = $region36
      $region35: #{sequential_absolute_forward.54} parent=19 // pred_region
        %p251 = scmp.lt.s32.totalorder %s18, 1
        %s252 = scalar_select %p251, %s18, 1
        %p253 = scmp.lt.s32.totalorder %s19, 0
        %s254 = scalar_select %p253, %s19, 0
        %p255 = scmp.lt.s32.totalorder %s20, 0
        %s256 = scalar_select %p255, %s20, 0
        %s257 = sadd.s32 %s256, %s254
        %s258 = sadd.s32 %s257, %s252
        %s259 = smul.addr %s258, 8
        %s260 = scalar_lea.vmem %s4, %s259
      $region36: #{sequential_absolute_forward.54} parent=19 // pred_fallthru
        _
    $region20: #{sequential_absolute_forward.54} parent=5 // pred_fallthru
      _
    %p261 = scmp.le.s32.totalorder 1, %s11
    %p262 = scmp.lt.s32.totalorder %s11, 3
    %p263 = pnand %p261, %p262
    %p264 = pneg %p263
    // Predicated region
    $region37: #{sequential_absolute_forward.54} parent=5 // pred_check
      _
    $region38: #{sequential_absolute_forward.54} parent=5 // pred_check_branch
      %266 = sbr.rel (%p263) target = $region40
    $region39: #{sequential_absolute_forward.54} parent=5 // pred_region
      %s267 = ssub.s32 %s11, 1
      %p268 = pneg %p51
      %p269 = pneg %p48
      %p270 = scmp.lt.s32.totalorder %s21, 1
      %s271 = scalar_select %p270, %s21, 1
      %p272 = scmp.lt.s32.totalorder %s22, 0
      %s273 = scalar_select %p272, %s22, 0
      %s274 = smul.addr %s271, 4
      %s275 = sadd.s32 %s273, %s274
      %s276 = smul.addr %s275, 4
      %s277 = scalar_lea.vmem %s1, %s276
      %p278 = pneg %p79
      %p279 = pneg %p76
      %p280 = scmp.lt.s32.totalorder %s21, 1
      %s281 = scalar_select %p280, %s21, 1
      %p282 = scmp.lt.s32.totalorder %s23, 0
      %s283 = scalar_select %p282, %s23, 0
      %s284 = smul.addr %s281, 4
      %s285 = sadd.s32 %s283, %s284
      %s286 = smul.addr %s285, 4
      %s287 = scalar_lea.vmem %s2, %s286
      %p288 = pneg %p107
      %p289 = pneg %p104
      %p290 = scmp.lt.s32.totalorder %s21, 1
      %s291 = scalar_select %p290, %s21, 1
      %p292 = scmp.lt.s32.totalorder %s23, 0
      %s293 = scalar_select %p292, %s23, 0
      %s294 = smul.addr %s291, 4
      %s295 = sadd.s32 %s293, %s294
      %s296 = smul.addr %s295, 4
      %s297 = scalar_lea.vmem %s3, %s296
      %p298 = pneg %p135
      %p299 = pneg %p132
      %p300 = scmp.lt.s32.totalorder %s21, 1
      %s301 = scalar_select %p300, %s21, 1
      %p302 = scmp.lt.s32.totalorder %s22, 0
      %s303 = scalar_select %p302, %s22, 0
      %p304 = scmp.lt.s32.totalorder %s23, 0
      %s305 = scalar_select %p304, %s23, 0
      %s306 = sadd.s32 %s305, %s303
      %s307 = sadd.s32 %s306, %s301
      %s308 = smul.addr %s307, 8
      %s309 = scalar_lea.vmem %s4, %s308
      %p310 = pneg %p165
      %p311 = pneg %p162
      %p312 = pneg %p193
      %p313 = pneg %p190
      %p314 = scmp.lt.s32.totalorder %s21, 1
      %s315 = scalar_select %p314, %s21, 1
      %p316 = scmp.lt.s32.totalorder %s22, 0
      %s317 = scalar_select %p316, %s22, 0
      %s318 = sadd.s32 %s317, %s315
      %s319 = smul.addr %s318, 4
      %s320 = scalar_lea.vmem %s5, %s319
      %p321 = scmp.lt.s32.totalorder %s21, 1
      %s322 = scalar_select %p321, %s21, 1
      %p323 = scmp.lt.s32.totalorder %s22, 0
      %s324 = scalar_select %p323, %s22, 0
      %s325 = smul.addr %s322, 4
      %s326 = sadd.s32 %s324, %s325
      %s327 = smul.addr %s326, 4
      %s328 = scalar_lea.vmem %s1, %s327
      %p329 = scmp.lt.s32.totalorder %s21, 1
      %s330 = scalar_select %p329, %s21, 1
      %p331 = scmp.lt.s32.totalorder %s23, 0
      %s332 = scalar_select %p331, %s23, 0
      %s333 = smul.addr %s330, 4
      %s334 = sadd.s32 %s332, %s333
      %s335 = smul.addr %s334, 4
      %s336 = scalar_lea.vmem %s2, %s335
      %p337 = scmp.lt.s32.totalorder %s21, 1
      %s338 = scalar_select %p337, %s21, 1
      %p339 = scmp.lt.s32.totalorder %s23, 0
      %s340 = scalar_select %p339, %s23, 0
      %s341 = smul.addr %s338, 4
      %s342 = sadd.s32 %s340, %s341
      %s343 = smul.addr %s342, 4
      %s344 = scalar_lea.vmem %s3, %s343
      %p345 = scmp.lt.s32.totalorder %s21, 1
      %s346 = scalar_select %p345, %s21, 1
      %p347 = scmp.lt.s32.totalorder %s22, 0
      %s348 = scalar_select %p347, %s22, 0
      %p349 = scmp.lt.s32.totalorder %s23, 0
      %s350 = scalar_select %p349, %s23, 0
      %s351 = sadd.s32 %s350, %s348
      %s352 = sadd.s32 %s351, %s346
      %s353 = smul.addr %s352, 8
      %s354 = scalar_lea.vmem %s4, %s353
      %p355 = scmp.lt.s32.totalorder %s21, 1
      %s356 = scalar_select %p355, %s21, 1
      %p357 = scmp.lt.s32.totalorder %s22, 0
      %s358 = scalar_select %p357, %s22, 0
      %s359 = sadd.s32 %s358, %s356
      %s360 = smul.addr %s359, 4
      %s361 = scalar_lea.vmem %s5, %s360
      %p363 = scmp.eq.s32.totalorder %s23, 0
      // Predicated region
      $region41: #{sequential_absolute_forward.54} parent=39 // pred_check
        %p364 = pneg %p363
      $region42: #{sequential_absolute_forward.54} parent=39 // pred_check_branch
        %366 = sbr.rel (%p364) target = $region44
      $region43: #{sequential_absolute_forward.54} parent=39 // pred_region
        %vm367 = vcmask 7168
        %368 = vst.msk [vmem:[#allocation2] sm:$0xff] %vm367, -inf
        %369 = vst.msk [vmem:[#allocation2 + $0x8] sm:$0xff] %vm367, -inf
        %370 = vst.msk [vmem:[#allocation2 + $0x10] sm:$0xff] %vm367, -inf
        %371 = vst.msk [vmem:[#allocation2 + $0x18] sm:$0xff] %vm367, -inf
        %372 = vst.msk [vmem:[#allocation3] sm:$0xff] %vm367, 0.0
        %373 = vst.msk [vmem:[#allocation3 + $0x8] sm:$0xff] %vm367, 0.0
        %374 = vst.msk [vmem:[#allocation3 + $0x10] sm:$0xff] %vm367, 0.0
        %375 = vst.msk [vmem:[#allocation3 + $0x18] sm:$0xff] %vm367, 0.0
        %vm376 = vcmask 64512
        %377 = vst.msk [vmem:[#allocation4] sm:$0xff] %vm376, 0.0
        %378 = vst.msk [vmem:[#allocation4 + $0x8] sm:$0xff] %vm376, 0.0
        %379 = vst.msk [vmem:[#allocation4 + $0x10] sm:$0xff] %vm376, 0.0
        %380 = vst.msk [vmem:[#allocation4 + $0x18] sm:$0xff] %vm376, 0.0
      $region44: #{sequential_absolute_forward.54} parent=39 // pred_fallthru
        _
      %s381 = smul.u32 %s23, 8
      %s382 = sadd.s32 %s22, 1
      %s383 = smul.u32 %s382, 8
      %s384 = ssub.s32 %s383, 1
      %p385 = scmp.le.s32.totalorder %s381, %s384
      // Predicated region
      $region45: #{sequential_absolute_forward.54} parent=39 // pred_check
        %p386 = pneg %p385
      $region46: #{sequential_absolute_forward.54} parent=39 // pred_check_branch
        %388 = sbr.rel (%p386) target = $region48
      $region47: #{sequential_absolute_forward.54} parent=39 // pred_region
        %s389 = smul.u32 %s22, 8
        %v390 = vlaneseq
        %v391 = vshrl.u32 %v390, 7
        %v392 = vstv %s389
        %v393 = vadd.s32 %v392, %v391
        %v394 = vlaneseq
        %v395 = vand.u32 %v394, 127
        %v396 = vstv %s381
        %v397 = vadd.s32 %v396, %v395
        %v398 = vsub.s32 %v393, %v397
        %vm399 = vcmp.gt.s32.totalorder %v398, 4294967292
        %v400 = vsel %vm399, %v398, 4294967292
        %vm401 = vcmp.lt.s32.totalorder %v400, 4
        %v402 = vsel %vm401, %v400, 4
        %v403 = vadd.s32 %v402, 4
        %v404 = vld [vmem:[%s354] sm:$0xff]
        %vm405 = vcmp.ne.s32.totalorder %v404, 0
        %v406 = vld [vmem:[%s0] sm:$0xf]
        %v407 = vld [vmem:[%s0 + $0x4] sm:$0x1]
        %v408 = vld [vmem:[%s328] sm:$0xf]
        %v409 = vld [vmem:[%s336] sm:$0xf]
        %v411 = vpack.i.b16 %v406, %v406
        %v413 = vlaneseq
        %v414 = vshrl.u32 %v413, 7
        %v415 = vsub.s32 0, %v414
        %v416 = vrot.slane %v411, %v415
        %v417 = vmul.bf16 %v408, %v416
        %vm418 = vcmask 64512
        %v420 = vsel %vm418, %v417, 0
        %vm422 = vcmask 1043456
        %v424 = vsel %vm422, %v409, 0
        %426 = vmatprep.subr.bf16.mxu0 0
        %427 = vmatpush1.bf16.msra.mxu0 0
        %428 = vmatprep.subr.bf16.mxu0 0
        %429 = vmatpush1.bf16.msra.mxu0 0
        %430 = vmatprep.subr.bf16.mxu0 0
        %431 = vmatpush1.bf16.msra.mxu0 0
        %432 = vmatprep.subr.bf16.mxu0 0
        %433 = vmatpush1.bf16.msra.mxu0 0
        %434 = vmatprep.subr.bf16.mxu0 0
        %435 = vmatpush1.bf16.msra.mxu0 0
        %436 = vmatprep.subr.bf16.mxu0 0
        %437 = vmatpush1.bf16.msra.mxu0 0
        %438 = vmatprep.subr.bf16.mxu0 0
        %439 = vmatpush1.bf16.msra.mxu0 0
        %440 = vmatprep.subr.bf16.mxu0 0
        %441 = vmatpush1.bf16.msra.mxu0 %v424
        %442 = vmatprep.subr.bf16.mxu0 0
        %443 = vmatpush2.bf16.msra.mxu0 0
        %444 = vmatprep.subr.bf16.mxu0 0
        %445 = vmatpush2.bf16.msra.mxu0 0
        %446 = vmatprep.subr.bf16.mxu0 0
        %447 = vmatpush2.bf16.msra.mxu0 0
        %448 = vmatprep.subr.bf16.mxu0 0
        %449 = vmatpush2.bf16.msra.mxu0 0
        %450 = vmatprep.subr.bf16.mxu0 0
        %451 = vmatpush2.bf16.msra.mxu0 0
        %452 = vmatprep.subr.bf16.mxu0 0
        %453 = vmatpush2.bf16.msra.mxu0 0
        %454 = vmatprep.subr.bf16.mxu0 0
        %455 = vmatpush2.bf16.msra.mxu0 0
        %456 = vmatprep.subr.bf16.mxu0 0
        %457 = vmatpush2.bf16.msra.mxu0 0
        %458 = vmatprep.mubr.bf16.mxu0 0
        %459 = vmatmul.mubr.bf16.gmra.mxu0 %v420
        %v460 = vpop.f32.mrf.mxu0
        %v461 = vadd.f32 0.0, %v460
        %v462 = vpop.f32.mrf.mxu0
        %v463 = vpop.f32.mrf.mxu0
        %v464 = vpop.f32.mrf.mxu0
        %465 = vdwg.mxu0
        %vm466 = vcmp.eq.s32.totalorder %v403, 0
        %v467 = vsel %vm466, %v461, 0.0
        %v468 = vadd.f32 %v467, 0.0
        %v469 = vshrl.u32 %v406, 16
        %v470 = vpack.i.b16 %v469, %v469
        %v472 = vlaneseq
        %v473 = vshrl.u32 %v472, 7
        %v474 = vsub.s32 0, %v473
        %v475 = vrot.slane %v470, %v474
        %v476 = vmul.bf16 %v408, %v475
        %v478 = vsel %vm418, %v476, 0
        %480 = vmatprep.subr.bf16.mxu0 0
        %481 = vmatpush1.bf16.msra.mxu0 0
        %482 = vmatprep.subr.bf16.mxu0 0
        %483 = vmatpush1.bf16.msra.mxu0 0
        %484 = vmatprep.subr.bf16.mxu0 0
        %485 = vmatpush1.bf16.msra.mxu0 0
        %486 = vmatprep.subr.bf16.mxu0 0
        %487 = vmatpush1.bf16.msra.mxu0 0
        %488 = vmatprep.subr.bf16.mxu0 0
        %489 = vmatpush1.bf16.msra.mxu0 0
        %490 = vmatprep.subr.bf16.mxu0 0
        %491 = vmatpush1.bf16.msra.mxu0 0
        %492 = vmatprep.subr.bf16.mxu0 0
        %493 = vmatpush1.bf16.msra.mxu0 0
        %494 = vmatprep.subr.bf16.mxu0 0
        %495 = vmatpush1.bf16.msra.mxu0 %v424
        %496 = vmatprep.subr.bf16.mxu0 0
        %497 = vmatpush2.bf16.msra.mxu0 0
        %498 = vmatprep.subr.bf16.mxu0 0
        %499 = vmatpush2.bf16.msra.mxu0 0
        %500 = vmatprep.subr.bf16.mxu0 0
        %501 = vmatpush2.bf16.msra.mxu0 0
        %502 = vmatprep.subr.bf16.mxu0 0
        %503 = vmatpush2.bf16.msra.mxu0 0
        %504 = vmatprep.subr.bf16.mxu0 0
        %505 = vmatpush2.bf16.msra.mxu0 0
        %506 = vmatprep.subr.bf16.mxu0 0
        %507 = vmatpush2.bf16.msra.mxu0 0
        %508 = vmatprep.subr.bf16.mxu0 0
        %509 = vmatpush2.bf16.msra.mxu0 0
        %510 = vmatprep.subr.bf16.mxu0 0
        %511 = vmatpush2.bf16.msra.mxu0 0
        %512 = vmatprep.mubr.bf16.mxu0 0
        %513 = vmatmul.mubr.bf16.gmra.mxu0 %v478
        %v514 = vpop.f32.mrf.mxu0
        %v515 = vadd.f32 0.0, %v514
        %v516 = vpop.f32.mrf.mxu0
        %v517 = vpop.f32.mrf.mxu0
        %v518 = vpop.f32.mrf.mxu0
        %519 = vdwg.mxu0
        %vm520 = vcmp.eq.s32.totalorder %v403, 1
        %v521 = vsel %vm520, %v515, 0.0
        %v522 = vadd.f32 %v468, %v521
        %v523 = vlaneseq
        %v524 = vshrl.u32 %v523, 7
        %v525 = vsub.s32 1, %v524
        %v526 = vrot.slane %v411, %v525
        %v527 = vmul.bf16 %v408, %v526
        %v529 = vsel %vm418, %v527, 0
        %531 = vmatprep.subr.bf16.mxu0 0
        %532 = vmatpush1.bf16.msra.mxu0 0
        %533 = vmatprep.subr.bf16.mxu0 0
        %534 = vmatpush1.bf16.msra.mxu0 0
        %535 = vmatprep.subr.bf16.mxu0 0
        %536 = vmatpush1.bf16.msra.mxu0 0
        %537 = vmatprep.subr.bf16.mxu0 0
        %538 = vmatpush1.bf16.msra.mxu0 0
        %539 = vmatprep.subr.bf16.mxu0 0
        %540 = vmatpush1.bf16.msra.mxu0 0
        %541 = vmatprep.subr.bf16.mxu0 0
        %542 = vmatpush1.bf16.msra.mxu0 0
        %543 = vmatprep.subr.bf16.mxu0 0
        %544 = vmatpush1.bf16.msra.mxu0 0
        %545 = vmatprep.subr.bf16.mxu0 0
        %546 = vmatpush1.bf16.msra.mxu0 %v424
        %547 = vmatprep.subr.bf16.mxu0 0
        %548 = vmatpush2.bf16.msra.mxu0 0
        %549 = vmatprep.subr.bf16.mxu0 0
        %550 = vmatpush2.bf16.msra.mxu0 0
        %551 = vmatprep.subr.bf16.mxu0 0
        %552 = vmatpush2.bf16.msra.mxu0 0
        %553 = vmatprep.subr.bf16.mxu0 0
        %554 = vmatpush2.bf16.msra.mxu0 0
        %555 = vmatprep.subr.bf16.mxu0 0
        %556 = vmatpush2.bf16.msra.mxu0 0
        %557 = vmatprep.subr.bf16.mxu0 0
        %558 = vmatpush2.bf16.msra.mxu0 0
        %559 = vmatprep.subr.bf16.mxu0 0
        %560 = vmatpush2.bf16.msra.mxu0 0
        %561 = vmatprep.subr.bf16.mxu0 0
        %562 = vmatpush2.bf16.msra.mxu0 0
        %563 = vmatprep.mubr.bf16.mxu0 0
        %564 = vmatmul.mubr.bf16.gmra.mxu0 %v529
        %v565 = vpop.f32.mrf.mxu0
        %v566 = vadd.f32 0.0, %v565
        %v567 = vpop.f32.mrf.mxu0
        %v568 = vpop.f32.mrf.mxu0
        %v569 = vpop.f32.mrf.mxu0
        %570 = vdwg.mxu0
        %vm571 = vcmp.eq.s32.totalorder %v403, 2
        %v572 = vsel %vm571, %v566, 0.0
        %v573 = vadd.f32 %v522, %v572
        %v574 = vlaneseq
        %v575 = vshrl.u32 %v574, 7
        %v576 = vsub.s32 1, %v575
        %v577 = vrot.slane %v470, %v576
        %v578 = vmul.bf16 %v408, %v577
        %v580 = vsel %vm418, %v578, 0
        %582 = vmatprep.subr.bf16.mxu0 0
        %583 = vmatpush1.bf16.msra.mxu0 0
        %584 = vmatprep.subr.bf16.mxu0 0
        %585 = vmatpush1.bf16.msra.mxu0 0
        %586 = vmatprep.subr.bf16.mxu0 0
        %587 = vmatpush1.bf16.msra.mxu0 0
        %588 = vmatprep.subr.bf16.mxu0 0
        %589 = vmatpush1.bf16.msra.mxu0 0
        %590 = vmatprep.subr.bf16.mxu0 0
        %591 = vmatpush1.bf16.msra.mxu0 0
        %592 = vmatprep.subr.bf16.mxu0 0
        %593 = vmatpush1.bf16.msra.mxu0 0
        %594 = vmatprep.subr.bf16.mxu0 0
        %595 = vmatpush1.bf16.msra.mxu0 0
        %596 = vmatprep.subr.bf16.mxu0 0
        %597 = vmatpush1.bf16.msra.mxu0 %v424
        %598 = vmatprep.subr.bf16.mxu0 0
        %599 = vmatpush2.bf16.msra.mxu0 0
        %600 = vmatprep.subr.bf16.mxu0 0
        %601 = vmatpush2.bf16.msra.mxu0 0
        %602 = vmatprep.subr.bf16.mxu0 0
        %603 = vmatpush2.bf16.msra.mxu0 0
        %604 = vmatprep.subr.bf16.mxu0 0
        %605 = vmatpush2.bf16.msra.mxu0 0
        %606 = vmatprep.subr.bf16.mxu0 0
        %607 = vmatpush2.bf16.msra.mxu0 0
        %608 = vmatprep.subr.bf16.mxu0 0
        %609 = vmatpush2.bf16.msra.mxu0 0
        %610 = vmatprep.subr.bf16.mxu0 0
        %611 = vmatpush2.bf16.msra.mxu0 0
        %612 = vmatprep.subr.bf16.mxu0 0
        %613 = vmatpush2.bf16.msra.mxu0 0
        %614 = vmatprep.mubr.bf16.mxu0 0
        %615 = vmatmul.mubr.bf16.gmra.mxu0 %v580
        %v616 = vpop.f32.mrf.mxu0
        %v617 = vadd.f32 0.0, %v616
        %v618 = vpop.f32.mrf.mxu0
        %v619 = vpop.f32.mrf.mxu0
        %v620 = vpop.f32.mrf.mxu0
        %621 = vdwg.mxu0
        %vm622 = vcmp.eq.s32.totalorder %v403, 3
        %v623 = vsel %vm622, %v617, 0.0
        %v624 = vadd.f32 %v573, %v623
        %v625 = vlaneseq
        %v626 = vshrl.u32 %v625, 7
        %v627 = vsub.s32 2, %v626
        %v628 = vrot.slane %v411, %v627
        %v629 = vmul.bf16 %v408, %v628
        %v631 = vsel %vm418, %v629, 0
        %633 = vmatprep.subr.bf16.mxu0 0
        %634 = vmatpush1.bf16.msra.mxu0 0
        %635 = vmatprep.subr.bf16.mxu0 0
        %636 = vmatpush1.bf16.msra.mxu0 0
        %637 = vmatprep.subr.bf16.mxu0 0
        %638 = vmatpush1.bf16.msra.mxu0 0
        %639 = vmatprep.subr.bf16.mxu0 0
        %640 = vmatpush1.bf16.msra.mxu0 0
        %641 = vmatprep.subr.bf16.mxu0 0
        %642 = vmatpush1.bf16.msra.mxu0 0
        %643 = vmatprep.subr.bf16.mxu0 0
        %644 = vmatpush1.bf16.msra.mxu0 0
        %645 = vmatprep.subr.bf16.mxu0 0
        %646 = vmatpush1.bf16.msra.mxu0 0
        %647 = vmatprep.subr.bf16.mxu0 0
        %648 = vmatpush1.bf16.msra.mxu0 %v424
        %649 = vmatprep.subr.bf16.mxu0 0
        %650 = vmatpush2.bf16.msra.mxu0 0
        %651 = vmatprep.subr.bf16.mxu0 0
        %652 = vmatpush2.bf16.msra.mxu0 0
        %653 = vmatprep.subr.bf16.mxu0 0
        %654 = vmatpush2.bf16.msra.mxu0 0
        %655 = vmatprep.subr.bf16.mxu0 0
        %656 = vmatpush2.bf16.msra.mxu0 0
        %657 = vmatprep.subr.bf16.mxu0 0
        %658 = vmatpush2.bf16.msra.mxu0 0
        %659 = vmatprep.subr.bf16.mxu0 0
        %660 = vmatpush2.bf16.msra.mxu0 0
        %661 = vmatprep.subr.bf16.mxu0 0
        %662 = vmatpush2.bf16.msra.mxu0 0
        %663 = vmatprep.subr.bf16.mxu0 0
        %664 = vmatpush2.bf16.msra.mxu0 0
        %665 = vmatprep.mubr.bf16.mxu0 0
        %666 = vmatmul.mubr.bf16.gmra.mxu0 %v631
        %v667 = vpop.f32.mrf.mxu0
        %v668 = vadd.f32 0.0, %v667
        %v669 = vpop.f32.mrf.mxu0
        %v670 = vpop.f32.mrf.mxu0
        %v671 = vpop.f32.mrf.mxu0
        %672 = vdwg.mxu0
        %vm673 = vcmp.eq.s32.totalorder %v403, 4
        %v674 = vsel %vm673, %v668, 0.0
        %v675 = vadd.f32 %v624, %v674
        %v676 = vlaneseq
        %v677 = vshrl.u32 %v676, 7
        %v678 = vsub.s32 2, %v677
        %v679 = vrot.slane %v470, %v678
        %v680 = vmul.bf16 %v408, %v679
        %v682 = vsel %vm418, %v680, 0
        %684 = vmatprep.subr.bf16.mxu0 0
        %685 = vmatpush1.bf16.msra.mxu0 0
        %686 = vmatprep.subr.bf16.mxu0 0
        %687 = vmatpush1.bf16.msra.mxu0 0
        %688 = vmatprep.subr.bf16.mxu0 0
        %689 = vmatpush1.bf16.msra.mxu0 0
        %690 = vmatprep.subr.bf16.mxu0 0
        %691 = vmatpush1.bf16.msra.mxu0 0
        %692 = vmatprep.subr.bf16.mxu0 0
        %693 = vmatpush1.bf16.msra.mxu0 0
        %694 = vmatprep.subr.bf16.mxu0 0
        %695 = vmatpush1.bf16.msra.mxu0 0
        %696 = vmatprep.subr.bf16.mxu0 0
        %697 = vmatpush1.bf16.msra.mxu0 0
        %698 = vmatprep.subr.bf16.mxu0 0
        %699 = vmatpush1.bf16.msra.mxu0 %v424
        %700 = vmatprep.subr.bf16.mxu0 0
        %701 = vmatpush2.bf16.msra.mxu0 0
        %702 = vmatprep.subr.bf16.mxu0 0
        %703 = vmatpush2.bf16.msra.mxu0 0
        %704 = vmatprep.subr.bf16.mxu0 0
        %705 = vmatpush2.bf16.msra.mxu0 0
        %706 = vmatprep.subr.bf16.mxu0 0
        %707 = vmatpush2.bf16.msra.mxu0 0
        %708 = vmatprep.subr.bf16.mxu0 0
        %709 = vmatpush2.bf16.msra.mxu0 0
        %710 = vmatprep.subr.bf16.mxu0 0
        %711 = vmatpush2.bf16.msra.mxu0 0
        %712 = vmatprep.subr.bf16.mxu0 0
        %713 = vmatpush2.bf16.msra.mxu0 0
        %714 = vmatprep.subr.bf16.mxu0 0
        %715 = vmatpush2.bf16.msra.mxu0 0
        %716 = vmatprep.mubr.bf16.mxu0 0
        %717 = vmatmul.mubr.bf16.gmra.mxu0 %v682
        %v718 = vpop.f32.mrf.mxu0
        %v719 = vadd.f32 0.0, %v718
        %v720 = vpop.f32.mrf.mxu0
        %v721 = vpop.f32.mrf.mxu0
        %v722 = vpop.f32.mrf.mxu0
        %723 = vdwg.mxu0
        %vm724 = vcmp.eq.s32.totalorder %v403, 5
        %v725 = vsel %vm724, %v719, 0.0
        %v726 = vadd.f32 %v675, %v725
        %v727 = vlaneseq
        %v728 = vshrl.u32 %v727, 7
        %v729 = vsub.s32 3, %v728
        %v730 = vrot.slane %v411, %v729
        %v731 = vmul.bf16 %v408, %v730
        %v733 = vsel %vm418, %v731, 0
        %735 = vmatprep.subr.bf16.mxu0 0
        %736 = vmatpush1.bf16.msra.mxu0 0
        %737 = vmatprep.subr.bf16.mxu0 0
        %738 = vmatpush1.bf16.msra.mxu0 0
        %739 = vmatprep.subr.bf16.mxu0 0
        %740 = vmatpush1.bf16.msra.mxu0 0
        %741 = vmatprep.subr.bf16.mxu0 0
        %742 = vmatpush1.bf16.msra.mxu0 0
        %743 = vmatprep.subr.bf16.mxu0 0
        %744 = vmatpush1.bf16.msra.mxu0 0
        %745 = vmatprep.subr.bf16.mxu0 0
        %746 = vmatpush1.bf16.msra.mxu0 0
        %747 = vmatprep.subr.bf16.mxu0 0
        %748 = vmatpush1.bf16.msra.mxu0 0
        %749 = vmatprep.subr.bf16.mxu0 0
        %750 = vmatpush1.bf16.msra.mxu0 %v424
        %751 = vmatprep.subr.bf16.mxu0 0
        %752 = vmatpush2.bf16.msra.mxu0 0
        %753 = vmatprep.subr.bf16.mxu0 0
        %754 = vmatpush2.bf16.msra.mxu0 0
        %755 = vmatprep.subr.bf16.mxu0 0
        %756 = vmatpush2.bf16.msra.mxu0 0
        %757 = vmatprep.subr.bf16.mxu0 0
        %758 = vmatpush2.bf16.msra.mxu0 0
        %759 = vmatprep.subr.bf16.mxu0 0
        %760 = vmatpush2.bf16.msra.mxu0 0
        %761 = vmatprep.subr.bf16.mxu0 0
        %762 = vmatpush2.bf16.msra.mxu0 0
        %763 = vmatprep.subr.bf16.mxu0 0
        %764 = vmatpush2.bf16.msra.mxu0 0
        %765 = vmatprep.subr.bf16.mxu0 0
        %766 = vmatpush2.bf16.msra.mxu0 0
        %767 = vmatprep.mubr.bf16.mxu0 0
        %768 = vmatmul.mubr.bf16.gmra.mxu0 %v733
        %v769 = vpop.f32.mrf.mxu0
        %v770 = vadd.f32 0.0, %v769
        %v771 = vpop.f32.mrf.mxu0
        %v772 = vpop.f32.mrf.mxu0
        %v773 = vpop.f32.mrf.mxu0
        %774 = vdwg.mxu0
        %vm775 = vcmp.eq.s32.totalorder %v403, 6
        %v776 = vsel %vm775, %v770, 0.0
        %v777 = vadd.f32 %v726, %v776
        %v778 = vlaneseq
        %v779 = vshrl.u32 %v778, 7
        %v780 = vsub.s32 3, %v779
        %v781 = vrot.slane %v470, %v780
        %v782 = vmul.bf16 %v408, %v781
        %v784 = vsel %vm418, %v782, 0
        %786 = vmatprep.subr.bf16.mxu0 0
        %787 = vmatpush1.bf16.msra.mxu0 0
        %788 = vmatprep.subr.bf16.mxu0 0
        %789 = vmatpush1.bf16.msra.mxu0 0
        %790 = vmatprep.subr.bf16.mxu0 0
        %791 = vmatpush1.bf16.msra.mxu0 0
        %792 = vmatprep.subr.bf16.mxu0 0
        %793 = vmatpush1.bf16.msra.mxu0 0
        %794 = vmatprep.subr.bf16.mxu0 0
        %795 = vmatpush1.bf16.msra.mxu0 0
        %796 = vmatprep.subr.bf16.mxu0 0
        %797 = vmatpush1.bf16.msra.mxu0 0
        %798 = vmatprep.subr.bf16.mxu0 0
        %799 = vmatpush1.bf16.msra.mxu0 0
        %800 = vmatprep.subr.bf16.mxu0 0
        %801 = vmatpush1.bf16.msra.mxu0 %v424
        %802 = vmatprep.subr.bf16.mxu0 0
        %803 = vmatpush2.bf16.msra.mxu0 0
        %804 = vmatprep.subr.bf16.mxu0 0
        %805 = vmatpush2.bf16.msra.mxu0 0
        %806 = vmatprep.subr.bf16.mxu0 0
        %807 = vmatpush2.bf16.msra.mxu0 0
        %808 = vmatprep.subr.bf16.mxu0 0
        %809 = vmatpush2.bf16.msra.mxu0 0
        %810 = vmatprep.subr.bf16.mxu0 0
        %811 = vmatpush2.bf16.msra.mxu0 0
        %812 = vmatprep.subr.bf16.mxu0 0
        %813 = vmatpush2.bf16.msra.mxu0 0
        %814 = vmatprep.subr.bf16.mxu0 0
        %815 = vmatpush2.bf16.msra.mxu0 0
        %816 = vmatprep.subr.bf16.mxu0 0
        %817 = vmatpush2.bf16.msra.mxu0 0
        %818 = vmatprep.mubr.bf16.mxu0 0
        %819 = vmatmul.mubr.bf16.gmra.mxu0 %v784
        %v820 = vpop.f32.mrf.mxu0
        %v821 = vadd.f32 0.0, %v820
        %v822 = vpop.f32.mrf.mxu0
        %v823 = vpop.f32.mrf.mxu0
        %v824 = vpop.f32.mrf.mxu0
        %825 = vdwg.mxu0
        %vm826 = vcmp.eq.s32.totalorder %v403, 7
        %v827 = vsel %vm826, %v821, 0.0
        %v828 = vadd.f32 %v777, %v827
        %v830 = vpack.i.b16 %v407, %v407
        %v832 = vlaneseq
        %v833 = vshrl.u32 %v832, 7
        %v834 = vsub.s32 0, %v833
        %v835 = vrot.slane %v830, %v834
        %v836 = vmul.bf16 %v408, %v835
        %v838 = vsel %vm418, %v836, 0
        %840 = vmatprep.subr.bf16.mxu0 0
        %841 = vmatpush1.bf16.msra.mxu0 0
        %842 = vmatprep.subr.bf16.mxu0 0
        %843 = vmatpush1.bf16.msra.mxu0 0
        %844 = vmatprep.subr.bf16.mxu0 0
        %845 = vmatpush1.bf16.msra.mxu0 0
        %846 = vmatprep.subr.bf16.mxu0 0
        %847 = vmatpush1.bf16.msra.mxu0 0
        %848 = vmatprep.subr.bf16.mxu0 0
        %849 = vmatpush1.bf16.msra.mxu0 0
        %850 = vmatprep.subr.bf16.mxu0 0
        %851 = vmatpush1.bf16.msra.mxu0 0
        %852 = vmatprep.subr.bf16.mxu0 0
        %853 = vmatpush1.bf16.msra.mxu0 0
        %854 = vmatprep.subr.bf16.mxu0 0
        %855 = vmatpush1.bf16.msra.mxu0 %v424
        %856 = vmatprep.subr.bf16.mxu0 0
        %857 = vmatpush2.bf16.msra.mxu0 0
        %858 = vmatprep.subr.bf16.mxu0 0
        %859 = vmatpush2.bf16.msra.mxu0 0
        %860 = vmatprep.subr.bf16.mxu0 0
        %861 = vmatpush2.bf16.msra.mxu0 0
        %862 = vmatprep.subr.bf16.mxu0 0
        %863 = vmatpush2.bf16.msra.mxu0 0
        %864 = vmatprep.subr.bf16.mxu0 0
        %865 = vmatpush2.bf16.msra.mxu0 0
        %866 = vmatprep.subr.bf16.mxu0 0
        %867 = vmatpush2.bf16.msra.mxu0 0
        %868 = vmatprep.subr.bf16.mxu0 0
        %869 = vmatpush2.bf16.msra.mxu0 0
        %870 = vmatprep.subr.bf16.mxu0 0
        %871 = vmatpush2.bf16.msra.mxu0 0
        %872 = vmatprep.mubr.bf16.mxu0 0
        %873 = vmatmul.mubr.bf16.gmra.mxu0 %v838
        %v874 = vpop.f32.mrf.mxu0
        %v875 = vadd.f32 0.0, %v874
        %v876 = vpop.f32.mrf.mxu0
        %v877 = vpop.f32.mrf.mxu0
        %v878 = vpop.f32.mrf.mxu0
        %879 = vdwg.mxu0
        %vm880 = vcmp.eq.s32.totalorder %v403, 8
        %v881 = vsel %vm880, %v875, 0.0
        %v882 = vadd.f32 %v828, %v881
        %v883 = vmul.f32 %v882, 0.35355338
        %v884 = vsel %vm405, %v883, -1e+10
        %v885 = vld [vmem:[#allocation2] sm:$0xff]
        %v886 = vsel %vm418, %v884, -inf
        %887 = vmax.xlane.f32.xlu0 %v886
        %v888 = vpop.xlane.xlu0 %887
        %v889 = vmax.f32 %v885, %v888
        %v890 = vsub.f32 %v885, %v889
        %v891 = vmul.f32 %v890, 1.442695
        %v892 = vpow.pop %v891
        %894 = vset.pattern.permute.xlu0 0
        %895 = vperm.xlu0 %894, %v889
        %v896 = vpop.permute.xlu0 %895
        %v898 = vsub.f32 %v884, %v896
        %v899 = vmul.f32 %v898, 1.442695
        %v900 = vpow.pop %v899
        %v901 = vld [vmem:[#allocation3] sm:$0xff]
        %v902 = vmul.f32 %v892, %v901
        %v903 = vsel %vm418, %v900, 0.0
        %904 = vadd.xlane.f32.xlu0 %v903
        %v905 = vpop.xlane.xlu0 %904
        %v906 = vadd.f32 %v902, %v905
        %vm907 = vcmask 7168
        %908 = vst.msk [vmem:[#allocation3] sm:$0xff] %vm907, %v906
        %v909 = vpack.c.bf16 %v900, %v900
        %v910 = vld [vmem:[%s344] sm:$0xf]
        %v912 = vsel %vm418, %v909, 0
        %v915 = vsel %vm422, %v910, 0
        %917 = vmatprep.subr.bf16.mxu0 0
        %918 = vmatpush1.bf16.msra.mxu0 0
        %919 = vmatprep.subr.bf16.mxu0 0
        %920 = vmatpush1.bf16.msra.mxu0 0
        %921 = vmatprep.subr.bf16.mxu0 0
        %922 = vmatpush1.bf16.msra.mxu0 0
        %923 = vmatprep.subr.bf16.mxu0 0
        %924 = vmatpush1.bf16.msra.mxu0 0
        %925 = vmatprep.subr.bf16.mxu0 0
        %926 = vmatpush1.bf16.msra.mxu0 0
        %927 = vmatprep.subr.bf16.mxu0 0
        %928 = vmatpush1.bf16.msra.mxu0 0
        %929 = vmatprep.subr.bf16.mxu0 0
        %930 = vmatpush1.bf16.msra.mxu0 0
        %931 = vmatprep.subr.bf16.mxu0 0
        %932 = vmatpush1.bf16.msra.mxu0 %v915
        %933 = vmatprep.subr.bf16.mxu0 0
        %934 = vmatpush2.bf16.msra.mxu0 0
        %935 = vmatprep.subr.bf16.mxu0 0
        %936 = vmatpush2.bf16.msra.mxu0 0
        %937 = vmatprep.subr.bf16.mxu0 0
        %938 = vmatpush2.bf16.msra.mxu0 0
        %939 = vmatprep.subr.bf16.mxu0 0
        %940 = vmatpush2.bf16.msra.mxu0 0
        %941 = vmatprep.subr.bf16.mxu0 0
        %942 = vmatpush2.bf16.msra.mxu0 0
        %943 = vmatprep.subr.bf16.mxu0 0
        %944 = vmatpush2.bf16.msra.mxu0 0
        %945 = vmatprep.subr.bf16.mxu0 0
        %946 = vmatpush2.bf16.msra.mxu0 0
        %947 = vmatprep.subr.bf16.mxu0 0
        %948 = vmatpush2.bf16.msra.mxu0 0
        %949 = vmatprep.mubr.bf16.mxu0 0
        %950 = vmatmul.mubr.bf16.gmra.mxu0 %v912
        %v951 = vpop.f32.mrf.mxu0
        %v952 = vadd.f32 0.0, %v951
        %v953 = vpop.f32.mrf.mxu0
        %v954 = vpop.f32.mrf.mxu0
        %v955 = vpop.f32.mrf.mxu0
        %956 = vdwg.mxu0
        %v957 = vld [vmem:[#allocation4] sm:$0xff]
        %959 = vset.pattern.permute.xlu0 0
        %960 = vperm.xlu0 %959, %v892
        %v961 = vpop.permute.xlu0 %960
        %v963 = vmul.f32 %v961, %v957
        %v964 = vadd.f32 %v963, %v952
        %965 = vst.msk [vmem:[#allocation4] sm:$0xff] %vm418, %v964
        %966 = vst.msk [vmem:[#allocation2] sm:$0xff] %vm907, %v889
        %s967 = scalar_lea.vmem %s328, 4
        %v968 = vld [vmem:[%s967] sm:$0xf]
        %s969 = scalar_lea.vmem %s336, 4
        %v970 = vld [vmem:[%s969] sm:$0xf]
        %v971 = vmul.bf16 %v968, %v416
        %v973 = vsel %vm418, %v971, 0
        %v976 = vsel %vm422, %v970, 0
        %978 = vmatprep.subr.bf16.mxu0 0
        %979 = vmatpush1.bf16.msra.mxu0 0
        %980 = vmatprep.subr.bf16.mxu0 0
        %981 = vmatpush1.bf16.msra.mxu0 0
        %982 = vmatprep.subr.bf16.mxu0 0
        %983 = vmatpush1.bf16.msra.mxu0 0
        %984 = vmatprep.subr.bf16.mxu0 0
        %985 = vmatpush1.bf16.msra.mxu0 0
        %986 = vmatprep.subr.bf16.mxu0 0
        %987 = vmatpush1.bf16.msra.mxu0 0
        %988 = vmatprep.subr.bf16.mxu0 0
        %989 = vmatpush1.bf16.msra.mxu0 0
        %990 = vmatprep.subr.bf16.mxu0 0
        %991 = vmatpush1.bf16.msra.mxu0 0
        %992 = vmatprep.subr.bf16.mxu0 0
        %993 = vmatpush1.bf16.msra.mxu0 %v976
        %994 = vmatprep.subr.bf16.mxu0 0
        %995 = vmatpush2.bf16.msra.mxu0 0
        %996 = vmatprep.subr.bf16.mxu0 0
        %997 = vmatpush2.bf16.msra.mxu0 0
        %998 = vmatprep.subr.bf16.mxu0 0
        %999 = vmatpush2.bf16.msra.mxu0 0
        %1000 = vmatprep.subr.bf16.mxu0 0
        %1001 = vmatpush2.bf16.msra.mxu0 0
        %1002 = vmatprep.subr.bf16.mxu0 0
        %1003 = vmatpush2.bf16.msra.mxu0 0
        %1004 = vmatprep.subr.bf16.mxu0 0
        %1005 = vmatpush2.bf16.msra.mxu0 0
        %1006 = vmatprep.subr.bf16.mxu0 0
        %1007 = vmatpush2.bf16.msra.mxu0 0
        %1008 = vmatprep.subr.bf16.mxu0 0
        %1009 = vmatpush2.bf16.msra.mxu0 0
        %1010 = vmatprep.mubr.bf16.mxu0 0
        %1011 = vmatmul.mubr.bf16.gmra.mxu0 %v973
        %v1012 = vpop.f32.mrf.mxu0
        %v1013 = vadd.f32 0.0, %v1012
        %v1014 = vpop.f32.mrf.mxu0
        %v1015 = vpop.f32.mrf.mxu0
        %v1016 = vpop.f32.mrf.mxu0
        %1017 = vdwg.mxu0
        %v1018 = vsel %vm466, %v1013, 0.0
        %v1019 = vadd.f32 %v1018, 0.0
        %v1020 = vmul.bf16 %v968, %v475
        %v1022 = vsel %vm418, %v1020, 0
        %1024 = vmatprep.subr.bf16.mxu0 0
        %1025 = vmatpush1.bf16.msra.mxu0 0
        %1026 = vmatprep.subr.bf16.mxu0 0
        %1027 = vmatpush1.bf16.msra.mxu0 0
        %1028 = vmatprep.subr.bf16.mxu0 0
        %1029 = vmatpush1.bf16.msra.mxu0 0
        %1030 = vmatprep.subr.bf16.mxu0 0
        %1031 = vmatpush1.bf16.msra.mxu0 0
        %1032 = vmatprep.subr.bf16.mxu0 0
        %1033 = vmatpush1.bf16.msra.mxu0 0
        %1034 = vmatprep.subr.bf16.mxu0 0
        %1035 = vmatpush1.bf16.msra.mxu0 0
        %1036 = vmatprep.subr.bf16.mxu0 0
        %1037 = vmatpush1.bf16.msra.mxu0 0
        %1038 = vmatprep.subr.bf16.mxu0 0
        %1039 = vmatpush1.bf16.msra.mxu0 %v976
        %1040 = vmatprep.subr.bf16.mxu0 0
        %1041 = vmatpush2.bf16.msra.mxu0 0
        %1042 = vmatprep.subr.bf16.mxu0 0
        %1043 = vmatpush2.bf16.msra.mxu0 0
        %1044 = vmatprep.subr.bf16.mxu0 0
        %1045 = vmatpush2.bf16.msra.mxu0 0
        %1046 = vmatprep.subr.bf16.mxu0 0
        %1047 = vmatpush2.bf16.msra.mxu0 0
        %1048 = vmatprep.subr.bf16.mxu0 0
        %1049 = vmatpush2.bf16.msra.mxu0 0
        %1050 = vmatprep.subr.bf16.mxu0 0
        %1051 = vmatpush2.bf16.msra.mxu0 0
        %1052 = vmatprep.subr.bf16.mxu0 0
        %1053 = vmatpush2.bf16.msra.mxu0 0
        %1054 = vmatprep.subr.bf16.mxu0 0
        %1055 = vmatpush2.bf16.msra.mxu0 0
        %1056 = vmatprep.mubr.bf16.mxu0 0
        %1057 = vmatmul.mubr.bf16.gmra.mxu0 %v1022
        %v1058 = vpop.f32.mrf.mxu0
        %v1059 = vadd.f32 0.0, %v1058
        %v1060 = vpop.f32.mrf.mxu0
        %v1061 = vpop.f32.mrf.mxu0
        %v1062 = vpop.f32.mrf.mxu0
        %1063 = vdwg.mxu0
        %v1064 = vsel %vm520, %v1059, 0.0
        %v1065 = vadd.f32 %v1019, %v1064
        %v1066 = vmul.bf16 %v968, %v526
        %v1068 = vsel %vm418, %v1066, 0
        %1070 = vmatprep.subr.bf16.mxu0 0
        %1071 = vmatpush1.bf16.msra.mxu0 0
        %1072 = vmatprep.subr.bf16.mxu0 0
        %1073 = vmatpush1.bf16.msra.mxu0 0
        %1074 = vmatprep.subr.bf16.mxu0 0
        %1075 = vmatpush1.bf16.msra.mxu0 0
        %1076 = vmatprep.subr.bf16.mxu0 0
        %1077 = vmatpush1.bf16.msra.mxu0 0
        %1078 = vmatprep.subr.bf16.mxu0 0
        %1079 = vmatpush1.bf16.msra.mxu0 0
        %1080 = vmatprep.subr.bf16.mxu0 0
        %1081 = vmatpush1.bf16.msra.mxu0 0
        %1082 = vmatprep.subr.bf16.mxu0 0
        %1083 = vmatpush1.bf16.msra.mxu0 0
        %1084 = vmatprep.subr.bf16.mxu0 0
        %1085 = vmatpush1.bf16.msra.mxu0 %v976
        %1086 = vmatprep.subr.bf16.mxu0 0
        %1087 = vmatpush2.bf16.msra.mxu0 0
        %1088 = vmatprep.subr.bf16.mxu0 0
        %1089 = vmatpush2.bf16.msra.mxu0 0
        %1090 = vmatprep.subr.bf16.mxu0 0
        %1091 = vmatpush2.bf16.msra.mxu0 0
        %1092 = vmatprep.subr.bf16.mxu0 0
        %1093 = vmatpush2.bf16.msra.mxu0 0
        %1094 = vmatprep.subr.bf16.mxu0 0
        %1095 = vmatpush2.bf16.msra.mxu0 0
        %1096 = vmatprep.subr.bf16.mxu0 0
        %1097 = vmatpush2.bf16.msra.mxu0 0
        %1098 = vmatprep.subr.bf16.mxu0 0
        %1099 = vmatpush2.bf16.msra.mxu0 0
        %1100 = vmatprep.subr.bf16.mxu0 0
        %1101 = vmatpush2.bf16.msra.mxu0 0
        %1102 = vmatprep.mubr.bf16.mxu0 0
        %1103 = vmatmul.mubr.bf16.gmra.mxu0 %v1068
        %v1104 = vpop.f32.mrf.mxu0
        %v1105 = vadd.f32 0.0, %v1104
        %v1106 = vpop.f32.mrf.mxu0
        %v1107 = vpop.f32.mrf.mxu0
        %v1108 = vpop.f32.mrf.mxu0
        %1109 = vdwg.mxu0
        %v1110 = vsel %vm571, %v1105, 0.0
        %v1111 = vadd.f32 %v1065, %v1110
        %v1112 = vmul.bf16 %v968, %v577
        %v1114 = vsel %vm418, %v1112, 0
        %1116 = vmatprep.subr.bf16.mxu0 0
        %1117 = vmatpush1.bf16.msra.mxu0 0
        %1118 = vmatprep.subr.bf16.mxu0 0
        %1119 = vmatpush1.bf16.msra.mxu0 0
        %1120 = vmatprep.subr.bf16.mxu0 0
        %1121 = vmatpush1.bf16.msra.mxu0 0
        %1122 = vmatprep.subr.bf16.mxu0 0
        %1123 = vmatpush1.bf16.msra.mxu0 0
        %1124 = vmatprep.subr.bf16.mxu0 0
        %1125 = vmatpush1.bf16.msra.mxu0 0
        %1126 = vmatprep.subr.bf16.mxu0 0
        %1127 = vmatpush1.bf16.msra.mxu0 0
        %1128 = vmatprep.subr.bf16.mxu0 0
        %1129 = vmatpush1.bf16.msra.mxu0 0
        %1130 = vmatprep.subr.bf16.mxu0 0
        %1131 = vmatpush1.bf16.msra.mxu0 %v976
        %1132 = vmatprep.subr.bf16.mxu0 0
        %1133 = vmatpush2.bf16.msra.mxu0 0
        %1134 = vmatprep.subr.bf16.mxu0 0
        %1135 = vmatpush2.bf16.msra.mxu0 0
        %1136 = vmatprep.subr.bf16.mxu0 0
        %1137 = vmatpush2.bf16.msra.mxu0 0
        %1138 = vmatprep.subr.bf16.mxu0 0
        %1139 = vmatpush2.bf16.msra.mxu0 0
        %1140 = vmatprep.subr.bf16.mxu0 0
        %1141 = vmatpush2.bf16.msra.mxu0 0
        %1142 = vmatprep.subr.bf16.mxu0 0
        %1143 = vmatpush2.bf16.msra.mxu0 0
        %1144 = vmatprep.subr.bf16.mxu0 0
        %1145 = vmatpush2.bf16.msra.mxu0 0
        %1146 = vmatprep.subr.bf16.mxu0 0
        %1147 = vmatpush2.bf16.msra.mxu0 0
        %1148 = vmatprep.mubr.bf16.mxu0 0
        %1149 = vmatmul.mubr.bf16.gmra.mxu0 %v1114
        %v1150 = vpop.f32.mrf.mxu0
        %v1151 = vadd.f32 0.0, %v1150
        %v1152 = vpop.f32.mrf.mxu0
        %v1153 = vpop.f32.mrf.mxu0
        %v1154 = vpop.f32.mrf.mxu0
        %1155 = vdwg.mxu0
        %v1156 = vsel %vm622, %v1151, 0.0
        %v1157 = vadd.f32 %v1111, %v1156
        %v1158 = vmul.bf16 %v968, %v628
        %v1160 = vsel %vm418, %v1158, 0
        %1162 = vmatprep.subr.bf16.mxu0 0
        %1163 = vmatpush1.bf16.msra.mxu0 0
        %1164 = vmatprep.subr.bf16.mxu0 0
        %1165 = vmatpush1.bf16.msra.mxu0 0
        %1166 = vmatprep.subr.bf16.mxu0 0
        %1167 = vmatpush1.bf16.msra.mxu0 0
        %1168 = vmatprep.subr.bf16.mxu0 0
        %1169 = vmatpush1.bf16.msra.mxu0 0
        %1170 = vmatprep.subr.bf16.mxu0 0
        %1171 = vmatpush1.bf16.msra.mxu0 0
        %1172 = vmatprep.subr.bf16.mxu0 0
        %1173 = vmatpush1.bf16.msra.mxu0 0
        %1174 = vmatprep.subr.bf16.mxu0 0
        %1175 = vmatpush1.bf16.msra.mxu0 0
        %1176 = vmatprep.subr.bf16.mxu0 0
        %1177 = vmatpush1.bf16.msra.mxu0 %v976
        %1178 = vmatprep.subr.bf16.mxu0 0
        %1179 = vmatpush2.bf16.msra.mxu0 0
        %1180 = vmatprep.subr.bf16.mxu0 0
        %1181 = vmatpush2.bf16.msra.mxu0 0
        %1182 = vmatprep.subr.bf16.mxu0 0
        %1183 = vmatpush2.bf16.msra.mxu0 0
        %1184 = vmatprep.subr.bf16.mxu0 0
        %1185 = vmatpush2.bf16.msra.mxu0 0
        %1186 = vmatprep.subr.bf16.mxu0 0
        %1187 = vmatpush2.bf16.msra.mxu0 0
        %1188 = vmatprep.subr.bf16.mxu0 0
        %1189 = vmatpush2.bf16.msra.mxu0 0
        %1190 = vmatprep.subr.bf16.mxu0 0
        %1191 = vmatpush2.bf16.msra.mxu0 0
        %1192 = vmatprep.subr.bf16.mxu0 0
        %1193 = vmatpush2.bf16.msra.mxu0 0
        %1194 = vmatprep.mubr.bf16.mxu0 0
        %1195 = vmatmul.mubr.bf16.gmra.mxu0 %v1160
        %v1196 = vpop.f32.mrf.mxu0
        %v1197 = vadd.f32 0.0, %v1196
        %v1198 = vpop.f32.mrf.mxu0
        %v1199 = vpop.f32.mrf.mxu0
        %v1200 = vpop.f32.mrf.mxu0
        %1201 = vdwg.mxu0
        %v1202 = vsel %vm673, %v1197, 0.0
        %v1203 = vadd.f32 %v1157, %v1202
        %v1204 = vmul.bf16 %v968, %v679
        %v1206 = vsel %vm418, %v1204, 0
        %1208 = vmatprep.subr.bf16.mxu0 0
        %1209 = vmatpush1.bf16.msra.mxu0 0
        %1210 = vmatprep.subr.bf16.mxu0 0
        %1211 = vmatpush1.bf16.msra.mxu0 0
        %1212 = vmatprep.subr.bf16.mxu0 0
        %1213 = vmatpush1.bf16.msra.mxu0 0
        %1214 = vmatprep.subr.bf16.mxu0 0
        %1215 = vmatpush1.bf16.msra.mxu0 0
        %1216 = vmatprep.subr.bf16.mxu0 0
        %1217 = vmatpush1.bf16.msra.mxu0 0
        %1218 = vmatprep.subr.bf16.mxu0 0
        %1219 = vmatpush1.bf16.msra.mxu0 0
        %1220 = vmatprep.subr.bf16.mxu0 0
        %1221 = vmatpush1.bf16.msra.mxu0 0
        %1222 = vmatprep.subr.bf16.mxu0 0
        %1223 = vmatpush1.bf16.msra.mxu0 %v976
        %1224 = vmatprep.subr.bf16.mxu0 0
        %1225 = vmatpush2.bf16.msra.mxu0 0
        %1226 = vmatprep.subr.bf16.mxu0 0
        %1227 = vmatpush2.bf16.msra.mxu0 0
        %1228 = vmatprep.subr.bf16.mxu0 0
        %1229 = vmatpush2.bf16.msra.mxu0 0
        %1230 = vmatprep.subr.bf16.mxu0 0
        %1231 = vmatpush2.bf16.msra.mxu0 0
        %1232 = vmatprep.subr.bf16.mxu0 0
        %1233 = vmatpush2.bf16.msra.mxu0 0
        %1234 = vmatprep.subr.bf16.mxu0 0
        %1235 = vmatpush2.bf16.msra.mxu0 0
        %1236 = vmatprep.subr.bf16.mxu0 0
        %1237 = vmatpush2.bf16.msra.mxu0 0
        %1238 = vmatprep.subr.bf16.mxu0 0
        %1239 = vmatpush2.bf16.msra.mxu0 0
        %1240 = vmatprep.mubr.bf16.mxu0 0
        %1241 = vmatmul.mubr.bf16.gmra.mxu0 %v1206
        %v1242 = vpop.f32.mrf.mxu0
        %v1243 = vadd.f32 0.0, %v1242
        %v1244 = vpop.f32.mrf.mxu0
        %v1245 = vpop.f32.mrf.mxu0
        %v1246 = vpop.f32.mrf.mxu0
        %1247 = vdwg.mxu0
        %v1248 = vsel %vm724, %v1243, 0.0
        %v1249 = vadd.f32 %v1203, %v1248
        %v1250 = vmul.bf16 %v968, %v730
        %v1252 = vsel %vm418, %v1250, 0
        %1254 = vmatprep.subr.bf16.mxu0 0
        %1255 = vmatpush1.bf16.msra.mxu0 0
        %1256 = vmatprep.subr.bf16.mxu0 0
        %1257 = vmatpush1.bf16.msra.mxu0 0
        %1258 = vmatprep.subr.bf16.mxu0 0
        %1259 = vmatpush1.bf16.msra.mxu0 0
        %1260 = vmatprep.subr.bf16.mxu0 0
        %1261 = vmatpush1.bf16.msra.mxu0 0
        %1262 = vmatprep.subr.bf16.mxu0 0
        %1263 = vmatpush1.bf16.msra.mxu0 0
        %1264 = vmatprep.subr.bf16.mxu0 0
        %1265 = vmatpush1.bf16.msra.mxu0 0
        %1266 = vmatprep.subr.bf16.mxu0 0
        %1267 = vmatpush1.bf16.msra.mxu0 0
        %1268 = vmatprep.subr.bf16.mxu0 0
        %1269 = vmatpush1.bf16.msra.mxu0 %v976
        %1270 = vmatprep.subr.bf16.mxu0 0
        %1271 = vmatpush2.bf16.msra.mxu0 0
        %1272 = vmatprep.subr.bf16.mxu0 0
        %1273 = vmatpush2.bf16.msra.mxu0 0
        %1274 = vmatprep.subr.bf16.mxu0 0
        %1275 = vmatpush2.bf16.msra.mxu0 0
        %1276 = vmatprep.subr.bf16.mxu0 0
        %1277 = vmatpush2.bf16.msra.mxu0 0
        %1278 = vmatprep.subr.bf16.mxu0 0
        %1279 = vmatpush2.bf16.msra.mxu0 0
        %1280 = vmatprep.subr.bf16.mxu0 0
        %1281 = vmatpush2.bf16.msra.mxu0 0
        %1282 = vmatprep.subr.bf16.mxu0 0
        %1283 = vmatpush2.bf16.msra.mxu0 0
        %1284 = vmatprep.subr.bf16.mxu0 0
        %1285 = vmatpush2.bf16.msra.mxu0 0
        %1286 = vmatprep.mubr.bf16.mxu0 0
        %1287 = vmatmul.mubr.bf16.gmra.mxu0 %v1252
        %v1288 = vpop.f32.mrf.mxu0
        %v1289 = vadd.f32 0.0, %v1288
        %v1290 = vpop.f32.mrf.mxu0
        %v1291 = vpop.f32.mrf.mxu0
        %v1292 = vpop.f32.mrf.mxu0
        %1293 = vdwg.mxu0
        %v1294 = vsel %vm775, %v1289, 0.0
        %v1295 = vadd.f32 %v1249, %v1294
        %v1296 = vmul.bf16 %v968, %v781
        %v1298 = vsel %vm418, %v1296, 0
        %1300 = vmatprep.subr.bf16.mxu0 0
        %1301 = vmatpush1.bf16.msra.mxu0 0
        %1302 = vmatprep.subr.bf16.mxu0 0
        %1303 = vmatpush1.bf16.msra.mxu0 0
        %1304 = vmatprep.subr.bf16.mxu0 0
        %1305 = vmatpush1.bf16.msra.mxu0 0
        %1306 = vmatprep.subr.bf16.mxu0 0
        %1307 = vmatpush1.bf16.msra.mxu0 0
        %1308 = vmatprep.subr.bf16.mxu0 0
        %1309 = vmatpush1.bf16.msra.mxu0 0
        %1310 = vmatprep.subr.bf16.mxu0 0
        %1311 = vmatpush1.bf16.msra.mxu0 0
        %1312 = vmatprep.subr.bf16.mxu0 0
        %1313 = vmatpush1.bf16.msra.mxu0 0
        %1314 = vmatprep.subr.bf16.mxu0 0
        %1315 = vmatpush1.bf16.msra.mxu0 %v976
        %1316 = vmatprep.subr.bf16.mxu0 0
        %1317 = vmatpush2.bf16.msra.mxu0 0
        %1318 = vmatprep.subr.bf16.mxu0 0
        %1319 = vmatpush2.bf16.msra.mxu0 0
        %1320 = vmatprep.subr.bf16.mxu0 0
        %1321 = vmatpush2.bf16.msra.mxu0 0
        %1322 = vmatprep.subr.bf16.mxu0 0
        %1323 = vmatpush2.bf16.msra.mxu0 0
        %1324 = vmatprep.subr.bf16.mxu0 0
        %1325 = vmatpush2.bf16.msra.mxu0 0
        %1326 = vmatprep.subr.bf16.mxu0 0
        %1327 = vmatpush2.bf16.msra.mxu0 0
        %1328 = vmatprep.subr.bf16.mxu0 0
        %1329 = vmatpush2.bf16.msra.mxu0 0
        %1330 = vmatprep.subr.bf16.mxu0 0
        %1331 = vmatpush2.bf16.msra.mxu0 0
        %1332 = vmatprep.mubr.bf16.mxu0 0
        %1333 = vmatmul.mubr.bf16.gmra.mxu0 %v1298
        %v1334 = vpop.f32.mrf.mxu0
        %v1335 = vadd.f32 0.0, %v1334
        %v1336 = vpop.f32.mrf.mxu0
        %v1337 = vpop.f32.mrf.mxu0
        %v1338 = vpop.f32.mrf.mxu0
        %1339 = vdwg.mxu0
        %v1340 = vsel %vm826, %v1335, 0.0
        %v1341 = vadd.f32 %v1295, %v1340
        %v1342 = vmul.bf16 %v968, %v835
        %v1344 = vsel %vm418, %v1342, 0
        %1346 = vmatprep.subr.bf16.mxu0 0
        %1347 = vmatpush1.bf16.msra.mxu0 0
        %1348 = vmatprep.subr.bf16.mxu0 0
        %1349 = vmatpush1.bf16.msra.mxu0 0
        %1350 = vmatprep.subr.bf16.mxu0 0
        %1351 = vmatpush1.bf16.msra.mxu0 0
        %1352 = vmatprep.subr.bf16.mxu0 0
        %1353 = vmatpush1.bf16.msra.mxu0 0
        %1354 = vmatprep.subr.bf16.mxu0 0
        %1355 = vmatpush1.bf16.msra.mxu0 0
        %1356 = vmatprep.subr.bf16.mxu0 0
        %1357 = vmatpush1.bf16.msra.mxu0 0
        %1358 = vmatprep.subr.bf16.mxu0 0
        %1359 = vmatpush1.bf16.msra.mxu0 0
        %1360 = vmatprep.subr.bf16.mxu0 0
        %1361 = vmatpush1.bf16.msra.mxu0 %v976
        %1362 = vmatprep.subr.bf16.mxu0 0
        %1363 = vmatpush2.bf16.msra.mxu0 0
        %1364 = vmatprep.subr.bf16.mxu0 0
        %1365 = vmatpush2.bf16.msra.mxu0 0
        %1366 = vmatprep.subr.bf16.mxu0 0
        %1367 = vmatpush2.bf16.msra.mxu0 0
        %1368 = vmatprep.subr.bf16.mxu0 0
        %1369 = vmatpush2.bf16.msra.mxu0 0
        %1370 = vmatprep.subr.bf16.mxu0 0
        %1371 = vmatpush2.bf16.msra.mxu0 0
        %1372 = vmatprep.subr.bf16.mxu0 0
        %1373 = vmatpush2.bf16.msra.mxu0 0
        %1374 = vmatprep.subr.bf16.mxu0 0
        %1375 = vmatpush2.bf16.msra.mxu0 0
        %1376 = vmatprep.subr.bf16.mxu0 0
        %1377 = vmatpush2.bf16.msra.mxu0 0
        %1378 = vmatprep.mubr.bf16.mxu0 0
        %1379 = vmatmul.mubr.bf16.gmra.mxu0 %v1344
        %v1380 = vpop.f32.mrf.mxu0
        %v1381 = vadd.f32 0.0, %v1380
        %v1382 = vpop.f32.mrf.mxu0
        %v1383 = vpop.f32.mrf.mxu0
        %v1384 = vpop.f32.mrf.mxu0
        %1385 = vdwg.mxu0
        %v1386 = vsel %vm880, %v1381, 0.0
        %v1387 = vadd.f32 %v1341, %v1386
        %v1388 = vmul.f32 %v1387, 0.35355338
        %v1389 = vsel %vm405, %v1388, -1e+10
        %s1390 = scalar_lea.vmem [#allocation2], 8
        %v1391 = vld [vmem:[%s1390] sm:$0xff]
        %v1392 = vsel %vm418, %v1389, -inf
        %1393 = vmax.xlane.f32.xlu0 %v1392
        %v1394 = vpop.xlane.xlu0 %1393
        %v1395 = vmax.f32 %v1391, %v1394
        %v1396 = vsub.f32 %v1391, %v1395
        %v1397 = vmul.f32 %v1396, 1.442695
        %v1398 = vpow.pop %v1397
        %1400 = vset.pattern.permute.xlu0 0
        %1401 = vperm.xlu0 %1400, %v1395
        %v1402 = vpop.permute.xlu0 %1401
        %v1404 = vsub.f32 %v1389, %v1402
        %v1405 = vmul.f32 %v1404, 1.442695
        %v1406 = vpow.pop %v1405
        %s1407 = scalar_lea.vmem [#allocation3], 8
        %v1408 = vld [vmem:[%s1407] sm:$0xff]
        %v1409 = vmul.f32 %v1398, %v1408
        %v1410 = vsel %vm418, %v1406, 0.0
        %1411 = vadd.xlane.f32.xlu0 %v1410
        %v1412 = vpop.xlane.xlu0 %1411
        %v1413 = vadd.f32 %v1409, %v1412
        %1414 = vst.msk [vmem:[%s1407] sm:$0xff] %vm907, %v1413
        %v1415 = vpack.c.bf16 %v1406, %v1406
        %s1416 = scalar_lea.vmem %s344, 4
        %v1417 = vld [vmem:[%s1416] sm:$0xf]
        %v1419 = vsel %vm418, %v1415, 0
        %v1422 = vsel %vm422, %v1417, 0
        %1424 = vmatprep.subr.bf16.mxu0 0
        %1425 = vmatpush1.bf16.msra.mxu0 0
        %1426 = vmatprep.subr.bf16.mxu0 0
        %1427 = vmatpush1.bf16.msra.mxu0 0
        %1428 = vmatprep.subr.bf16.mxu0 0
        %1429 = vmatpush1.bf16.msra.mxu0 0
        %1430 = vmatprep.subr.bf16.mxu0 0
        %1431 = vmatpush1.bf16.msra.mxu0 0
        %1432 = vmatprep.subr.bf16.mxu0 0
        %1433 = vmatpush1.bf16.msra.mxu0 0
        %1434 = vmatprep.subr.bf16.mxu0 0
        %1435 = vmatpush1.bf16.msra.mxu0 0
        %1436 = vmatprep.subr.bf16.mxu0 0
        %1437 = vmatpush1.bf16.msra.mxu0 0
        %1438 = vmatprep.subr.bf16.mxu0 0
        %1439 = vmatpush1.bf16.msra.mxu0 %v1422
        %1440 = vmatprep.subr.bf16.mxu0 0
        %1441 = vmatpush2.bf16.msra.mxu0 0
        %1442 = vmatprep.subr.bf16.mxu0 0
        %1443 = vmatpush2.bf16.msra.mxu0 0
        %1444 = vmatprep.subr.bf16.mxu0 0
        %1445 = vmatpush2.bf16.msra.mxu0 0
        %1446 = vmatprep.subr.bf16.mxu0 0
        %1447 = vmatpush2.bf16.msra.mxu0 0
        %1448 = vmatprep.subr.bf16.mxu0 0
        %1449 = vmatpush2.bf16.msra.mxu0 0
        %1450 = vmatprep.subr.bf16.mxu0 0
        %1451 = vmatpush2.bf16.msra.mxu0 0
        %1452 = vmatprep.subr.bf16.mxu0 0
        %1453 = vmatpush2.bf16.msra.mxu0 0
        %1454 = vmatprep.subr.bf16.mxu0 0
        %1455 = vmatpush2.bf16.msra.mxu0 0
        %1456 = vmatprep.mubr.bf16.mxu0 0
        %1457 = vmatmul.mubr.bf16.gmra.mxu0 %v1419
        %v1458 = vpop.f32.mrf.mxu0
        %v1459 = vadd.f32 0.0, %v1458
        %v1460 = vpop.f32.mrf.mxu0
        %v1461 = vpop.f32.mrf.mxu0
        %v1462 = vpop.f32.mrf.mxu0
        %1463 = vdwg.mxu0
        %s1464 = scalar_lea.vmem [#allocation4], 8
        %v1465 = vld [vmem:[%s1464] sm:$0xff]
        %1467 = vset.pattern.permute.xlu0 0
        %1468 = vperm.xlu0 %1467, %v1398
        %v1469 = vpop.permute.xlu0 %1468
        %v1471 = vmul.f32 %v1469, %v1465
        %v1472 = vadd.f32 %v1471, %v1459
        %1473 = vst.msk [vmem:[%s1464] sm:$0xff] %vm418, %v1472
        %1474 = vst.msk [vmem:[%s1390] sm:$0xff] %vm907, %v1395
        %s1475 = scalar_lea.vmem %s328, 8
        %v1476 = vld [vmem:[%s1475] sm:$0xf]
        %s1477 = scalar_lea.vmem %s336, 8
        %v1478 = vld [vmem:[%s1477] sm:$0xf]
        %v1479 = vmul.bf16 %v1476, %v416
        %v1481 = vsel %vm418, %v1479, 0
        %v1484 = vsel %vm422, %v1478, 0
        %1486 = vmatprep.subr.bf16.mxu0 0
        %1487 = vmatpush1.bf16.msra.mxu0 0
        %1488 = vmatprep.subr.bf16.mxu0 0
        %1489 = vmatpush1.bf16.msra.mxu0 0
        %1490 = vmatprep.subr.bf16.mxu0 0
        %1491 = vmatpush1.bf16.msra.mxu0 0
        %1492 = vmatprep.subr.bf16.mxu0 0
        %1493 = vmatpush1.bf16.msra.mxu0 0
        %1494 = vmatprep.subr.bf16.mxu0 0
        %1495 = vmatpush1.bf16.msra.mxu0 0
        %1496 = vmatprep.subr.bf16.mxu0 0
        %1497 = vmatpush1.bf16.msra.mxu0 0
        %1498 = vmatprep.subr.bf16.mxu0 0
        %1499 = vmatpush1.bf16.msra.mxu0 0
        %1500 = vmatprep.subr.bf16.mxu0 0
        %1501 = vmatpush1.bf16.msra.mxu0 %v1484
        %1502 = vmatprep.subr.bf16.mxu0 0
        %1503 = vmatpush2.bf16.msra.mxu0 0
        %1504 = vmatprep.subr.bf16.mxu0 0
        %1505 = vmatpush2.bf16.msra.mxu0 0
        %1506 = vmatprep.subr.bf16.mxu0 0
        %1507 = vmatpush2.bf16.msra.mxu0 0
        %1508 = vmatprep.subr.bf16.mxu0 0
        %1509 = vmatpush2.bf16.msra.mxu0 0
        %1510 = vmatprep.subr.bf16.mxu0 0
        %1511 = vmatpush2.bf16.msra.mxu0 0
        %1512 = vmatprep.subr.bf16.mxu0 0
        %1513 = vmatpush2.bf16.msra.mxu0 0
        %1514 = vmatprep.subr.bf16.mxu0 0
        %1515 = vmatpush2.bf16.msra.mxu0 0
        %1516 = vmatprep.subr.bf16.mxu0 0
        %1517 = vmatpush2.bf16.msra.mxu0 0
        %1518 = vmatprep.mubr.bf16.mxu0 0
        %1519 = vmatmul.mubr.bf16.gmra.mxu0 %v1481
        %v1520 = vpop.f32.mrf.mxu0
        %v1521 = vadd.f32 0.0, %v1520
        %v1522 = vpop.f32.mrf.mxu0
        %v1523 = vpop.f32.mrf.mxu0
        %v1524 = vpop.f32.mrf.mxu0
        %1525 = vdwg.mxu0
        %v1526 = vsel %vm466, %v1521, 0.0
        %v1527 = vadd.f32 %v1526, 0.0
        %v1528 = vmul.bf16 %v1476, %v475
        %v1530 = vsel %vm418, %v1528, 0
        %1532 = vmatprep.subr.bf16.mxu0 0
        %1533 = vmatpush1.bf16.msra.mxu0 0
        %1534 = vmatprep.subr.bf16.mxu0 0
        %1535 = vmatpush1.bf16.msra.mxu0 0
        %1536 = vmatprep.subr.bf16.mxu0 0
        %1537 = vmatpush1.bf16.msra.mxu0 0
        %1538 = vmatprep.subr.bf16.mxu0 0
        %1539 = vmatpush1.bf16.msra.mxu0 0
        %1540 = vmatprep.subr.bf16.mxu0 0
        %1541 = vmatpush1.bf16.msra.mxu0 0
        %1542 = vmatprep.subr.bf16.mxu0 0
        %1543 = vmatpush1.bf16.msra.mxu0 0
        %1544 = vmatprep.subr.bf16.mxu0 0
        %1545 = vmatpush1.bf16.msra.mxu0 0
        %1546 = vmatprep.subr.bf16.mxu0 0
        %1547 = vmatpush1.bf16.msra.mxu0 %v1484
        %1548 = vmatprep.subr.bf16.mxu0 0
        %1549 = vmatpush2.bf16.msra.mxu0 0
        %1550 = vmatprep.subr.bf16.mxu0 0
        %1551 = vmatpush2.bf16.msra.mxu0 0
        %1552 = vmatprep.subr.bf16.mxu0 0
        %1553 = vmatpush2.bf16.msra.mxu0 0
        %1554 = vmatprep.subr.bf16.mxu0 0
        %1555 = vmatpush2.bf16.msra.mxu0 0
        %1556 = vmatprep.subr.bf16.mxu0 0
        %1557 = vmatpush2.bf16.msra.mxu0 0
        %1558 = vmatprep.subr.bf16.mxu0 0
        %1559 = vmatpush2.bf16.msra.mxu0 0
        %1560 = vmatprep.subr.bf16.mxu0 0
        %1561 = vmatpush2.bf16.msra.mxu0 0
        %1562 = vmatprep.subr.bf16.mxu0 0
        %1563 = vmatpush2.bf16.msra.mxu0 0
        %1564 = vmatprep.mubr.bf16.mxu0 0
        %1565 = vmatmul.mubr.bf16.gmra.mxu0 %v1530
        %v1566 = vpop.f32.mrf.mxu0
        %v1567 = vadd.f32 0.0, %v1566
        %v1568 = vpop.f32.mrf.mxu0
        %v1569 = vpop.f32.mrf.mxu0
        %v1570 = vpop.f32.mrf.mxu0
        %1571 = vdwg.mxu0
        %v1572 = vsel %vm520, %v1567, 0.0
        %v1573 = vadd.f32 %v1527, %v1572
        %v1574 = vmul.bf16 %v1476, %v526
        %v1576 = vsel %vm418, %v1574, 0
        %1578 = vmatprep.subr.bf16.mxu0 0
        %1579 = vmatpush1.bf16.msra.mxu0 0
        %1580 = vmatprep.subr.bf16.mxu0 0
        %1581 = vmatpush1.bf16.msra.mxu0 0
        %1582 = vmatprep.subr.bf16.mxu0 0
        %1583 = vmatpush1.bf16.msra.mxu0 0
        %1584 = vmatprep.subr.bf16.mxu0 0
        %1585 = vmatpush1.bf16.msra.mxu0 0
        %1586 = vmatprep.subr.bf16.mxu0 0
        %1587 = vmatpush1.bf16.msra.mxu0 0
        %1588 = vmatprep.subr.bf16.mxu0 0
        %1589 = vmatpush1.bf16.msra.mxu0 0
        %1590 = vmatprep.subr.bf16.mxu0 0
        %1591 = vmatpush1.bf16.msra.mxu0 0
        %1592 = vmatprep.subr.bf16.mxu0 0
        %1593 = vmatpush1.bf16.msra.mxu0 %v1484
        %1594 = vmatprep.subr.bf16.mxu0 0
        %1595 = vmatpush2.bf16.msra.mxu0 0
        %1596 = vmatprep.subr.bf16.mxu0 0
        %1597 = vmatpush2.bf16.msra.mxu0 0
        %1598 = vmatprep.subr.bf16.mxu0 0
        %1599 = vmatpush2.bf16.msra.mxu0 0
        %1600 = vmatprep.subr.bf16.mxu0 0
        %1601 = vmatpush2.bf16.msra.mxu0 0
        %1602 = vmatprep.subr.bf16.mxu0 0
        %1603 = vmatpush2.bf16.msra.mxu0 0
        %1604 = vmatprep.subr.bf16.mxu0 0
        %1605 = vmatpush2.bf16.msra.mxu0 0
        %1606 = vmatprep.subr.bf16.mxu0 0
        %1607 = vmatpush2.bf16.msra.mxu0 0
        %1608 = vmatprep.subr.bf16.mxu0 0
        %1609 = vmatpush2.bf16.msra.mxu0 0
        %1610 = vmatprep.mubr.bf16.mxu0 0
        %1611 = vmatmul.mubr.bf16.gmra.mxu0 %v1576
        %v1612 = vpop.f32.mrf.mxu0
        %v1613 = vadd.f32 0.0, %v1612
        %v1614 = vpop.f32.mrf.mxu0
        %v1615 = vpop.f32.mrf.mxu0
        %v1616 = vpop.f32.mrf.mxu0
        %1617 = vdwg.mxu0
        %v1618 = vsel %vm571, %v1613, 0.0
        %v1619 = vadd.f32 %v1573, %v1618
        %v1620 = vmul.bf16 %v1476, %v577
        %v1622 = vsel %vm418, %v1620, 0
        %1624 = vmatprep.subr.bf16.mxu0 0
        %1625 = vmatpush1.bf16.msra.mxu0 0
        %1626 = vmatprep.subr.bf16.mxu0 0
        %1627 = vmatpush1.bf16.msra.mxu0 0
        %1628 = vmatprep.subr.bf16.mxu0 0
        %1629 = vmatpush1.bf16.msra.mxu0 0
        %1630 = vmatprep.subr.bf16.mxu0 0
        %1631 = vmatpush1.bf16.msra.mxu0 0
        %1632 = vmatprep.subr.bf16.mxu0 0
        %1633 = vmatpush1.bf16.msra.mxu0 0
        %1634 = vmatprep.subr.bf16.mxu0 0
        %1635 = vmatpush1.bf16.msra.mxu0 0
        %1636 = vmatprep.subr.bf16.mxu0 0
        %1637 = vmatpush1.bf16.msra.mxu0 0
        %1638 = vmatprep.subr.bf16.mxu0 0
        %1639 = vmatpush1.bf16.msra.mxu0 %v1484
        %1640 = vmatprep.subr.bf16.mxu0 0
        %1641 = vmatpush2.bf16.msra.mxu0 0
        %1642 = vmatprep.subr.bf16.mxu0 0
        %1643 = vmatpush2.bf16.msra.mxu0 0
        %1644 = vmatprep.subr.bf16.mxu0 0
        %1645 = vmatpush2.bf16.msra.mxu0 0
        %1646 = vmatprep.subr.bf16.mxu0 0
        %1647 = vmatpush2.bf16.msra.mxu0 0
        %1648 = vmatprep.subr.bf16.mxu0 0
        %1649 = vmatpush2.bf16.msra.mxu0 0
        %1650 = vmatprep.subr.bf16.mxu0 0
        %1651 = vmatpush2.bf16.msra.mxu0 0
        %1652 = vmatprep.subr.bf16.mxu0 0
        %1653 = vmatpush2.bf16.msra.mxu0 0
        %1654 = vmatprep.subr.bf16.mxu0 0
        %1655 = vmatpush2.bf16.msra.mxu0 0
        %1656 = vmatprep.mubr.bf16.mxu0 0
        %1657 = vmatmul.mubr.bf16.gmra.mxu0 %v1622
        %v1658 = vpop.f32.mrf.mxu0
        %v1659 = vadd.f32 0.0, %v1658
        %v1660 = vpop.f32.mrf.mxu0
        %v1661 = vpop.f32.mrf.mxu0
        %v1662 = vpop.f32.mrf.mxu0
        %1663 = vdwg.mxu0
        %v1664 = vsel %vm622, %v1659, 0.0
        %v1665 = vadd.f32 %v1619, %v1664
        %v1666 = vmul.bf16 %v1476, %v628
        %v1668 = vsel %vm418, %v1666, 0
        %1670 = vmatprep.subr.bf16.mxu0 0
        %1671 = vmatpush1.bf16.msra.mxu0 0
        %1672 = vmatprep.subr.bf16.mxu0 0
        %1673 = vmatpush1.bf16.msra.mxu0 0
        %1674 = vmatprep.subr.bf16.mxu0 0
        %1675 = vmatpush1.bf16.msra.mxu0 0
        %1676 = vmatprep.subr.bf16.mxu0 0
        %1677 = vmatpush1.bf16.msra.mxu0 0
        %1678 = vmatprep.subr.bf16.mxu0 0
        %1679 = vmatpush1.bf16.msra.mxu0 0
        %1680 = vmatprep.subr.bf16.mxu0 0
        %1681 = vmatpush1.bf16.msra.mxu0 0
        %1682 = vmatprep.subr.bf16.mxu0 0
        %1683 = vmatpush1.bf16.msra.mxu0 0
        %1684 = vmatprep.subr.bf16.mxu0 0
        %1685 = vmatpush1.bf16.msra.mxu0 %v1484
        %1686 = vmatprep.subr.bf16.mxu0 0
        %1687 = vmatpush2.bf16.msra.mxu0 0
        %1688 = vmatprep.subr.bf16.mxu0 0
        %1689 = vmatpush2.bf16.msra.mxu0 0
        %1690 = vmatprep.subr.bf16.mxu0 0
        %1691 = vmatpush2.bf16.msra.mxu0 0
        %1692 = vmatprep.subr.bf16.mxu0 0
        %1693 = vmatpush2.bf16.msra.mxu0 0
        %1694 = vmatprep.subr.bf16.mxu0 0
        %1695 = vmatpush2.bf16.msra.mxu0 0
        %1696 = vmatprep.subr.bf16.mxu0 0
        %1697 = vmatpush2.bf16.msra.mxu0 0
        %1698 = vmatprep.subr.bf16.mxu0 0
        %1699 = vmatpush2.bf16.msra.mxu0 0
        %1700 = vmatprep.subr.bf16.mxu0 0
        %1701 = vmatpush2.bf16.msra.mxu0 0
        %1702 = vmatprep.mubr.bf16.mxu0 0
        %1703 = vmatmul.mubr.bf16.gmra.mxu0 %v1668
        %v1704 = vpop.f32.mrf.mxu0
        %v1705 = vadd.f32 0.0, %v1704
        %v1706 = vpop.f32.mrf.mxu0
        %v1707 = vpop.f32.mrf.mxu0
        %v1708 = vpop.f32.mrf.mxu0
        %1709 = vdwg.mxu0
        %v1710 = vsel %vm673, %v1705, 0.0
        %v1711 = vadd.f32 %v1665, %v1710
        %v1712 = vmul.bf16 %v1476, %v679
        %v1714 = vsel %vm418, %v1712, 0
        %1716 = vmatprep.subr.bf16.mxu0 0
        %1717 = vmatpush1.bf16.msra.mxu0 0
        %1718 = vmatprep.subr.bf16.mxu0 0
        %1719 = vmatpush1.bf16.msra.mxu0 0
        %1720 = vmatprep.subr.bf16.mxu0 0
        %1721 = vmatpush1.bf16.msra.mxu0 0
        %1722 = vmatprep.subr.bf16.mxu0 0
        %1723 = vmatpush1.bf16.msra.mxu0 0
        %1724 = vmatprep.subr.bf16.mxu0 0
        %1725 = vmatpush1.bf16.msra.mxu0 0
        %1726 = vmatprep.subr.bf16.mxu0 0
        %1727 = vmatpush1.bf16.msra.mxu0 0
        %1728 = vmatprep.subr.bf16.mxu0 0
        %1729 = vmatpush1.bf16.msra.mxu0 0
        %1730 = vmatprep.subr.bf16.mxu0 0
        %1731 = vmatpush1.bf16.msra.mxu0 %v1484
        %1732 = vmatprep.subr.bf16.mxu0 0
        %1733 = vmatpush2.bf16.msra.mxu0 0
        %1734 = vmatprep.subr.bf16.mxu0 0
        %1735 = vmatpush2.bf16.msra.mxu0 0
        %1736 = vmatprep.subr.bf16.mxu0 0
        %1737 = vmatpush2.bf16.msra.mxu0 0
        %1738 = vmatprep.subr.bf16.mxu0 0
        %1739 = vmatpush2.bf16.msra.mxu0 0
        %1740 = vmatprep.subr.bf16.mxu0 0
        %1741 = vmatpush2.bf16.msra.mxu0 0
        %1742 = vmatprep.subr.bf16.mxu0 0
        %1743 = vmatpush2.bf16.msra.mxu0 0
        %1744 = vmatprep.subr.bf16.mxu0 0
        %1745 = vmatpush2.bf16.msra.mxu0 0
        %1746 = vmatprep.subr.bf16.mxu0 0
        %1747 = vmatpush2.bf16.msra.mxu0 0
        %1748 = vmatprep.mubr.bf16.mxu0 0
        %1749 = vmatmul.mubr.bf16.gmra.mxu0 %v1714
        %v1750 = vpop.f32.mrf.mxu0
        %v1751 = vadd.f32 0.0, %v1750
        %v1752 = vpop.f32.mrf.mxu0
        %v1753 = vpop.f32.mrf.mxu0
        %v1754 = vpop.f32.mrf.mxu0
        %1755 = vdwg.mxu0
        %v1756 = vsel %vm724, %v1751, 0.0
        %v1757 = vadd.f32 %v1711, %v1756
        %v1758 = vmul.bf16 %v1476, %v730
        %v1760 = vsel %vm418, %v1758, 0
        %1762 = vmatprep.subr.bf16.mxu0 0
        %1763 = vmatpush1.bf16.msra.mxu0 0
        %1764 = vmatprep.subr.bf16.mxu0 0
        %1765 = vmatpush1.bf16.msra.mxu0 0
        %1766 = vmatprep.subr.bf16.mxu0 0
        %1767 = vmatpush1.bf16.msra.mxu0 0
        %1768 = vmatprep.subr.bf16.mxu0 0
        %1769 = vmatpush1.bf16.msra.mxu0 0
        %1770 = vmatprep.subr.bf16.mxu0 0
        %1771 = vmatpush1.bf16.msra.mxu0 0
        %1772 = vmatprep.subr.bf16.mxu0 0
        %1773 = vmatpush1.bf16.msra.mxu0 0
        %1774 = vmatprep.subr.bf16.mxu0 0
        %1775 = vmatpush1.bf16.msra.mxu0 0
        %1776 = vmatprep.subr.bf16.mxu0 0
        %1777 = vmatpush1.bf16.msra.mxu0 %v1484
        %1778 = vmatprep.subr.bf16.mxu0 0
        %1779 = vmatpush2.bf16.msra.mxu0 0
        %1780 = vmatprep.subr.bf16.mxu0 0
        %1781 = vmatpush2.bf16.msra.mxu0 0
        %1782 = vmatprep.subr.bf16.mxu0 0
        %1783 = vmatpush2.bf16.msra.mxu0 0
        %1784 = vmatprep.subr.bf16.mxu0 0
        %1785 = vmatpush2.bf16.msra.mxu0 0
        %1786 = vmatprep.subr.bf16.mxu0 0
        %1787 = vmatpush2.bf16.msra.mxu0 0
        %1788 = vmatprep.subr.bf16.mxu0 0
        %1789 = vmatpush2.bf16.msra.mxu0 0
        %1790 = vmatprep.subr.bf16.mxu0 0
        %1791 = vmatpush2.bf16.msra.mxu0 0
        %1792 = vmatprep.subr.bf16.mxu0 0
        %1793 = vmatpush2.bf16.msra.mxu0 0
        %1794 = vmatprep.mubr.bf16.mxu0 0
        %1795 = vmatmul.mubr.bf16.gmra.mxu0 %v1760
        %v1796 = vpop.f32.mrf.mxu0
        %v1797 = vadd.f32 0.0, %v1796
        %v1798 = vpop.f32.mrf.mxu0
        %v1799 = vpop.f32.mrf.mxu0
        %v1800 = vpop.f32.mrf.mxu0
        %1801 = vdwg.mxu0
        %v1802 = vsel %vm775, %v1797, 0.0
        %v1803 = vadd.f32 %v1757, %v1802
        %v1804 = vmul.bf16 %v1476, %v781
        %v1806 = vsel %vm418, %v1804, 0
        %1808 = vmatprep.subr.bf16.mxu0 0
        %1809 = vmatpush1.bf16.msra.mxu0 0
        %1810 = vmatprep.subr.bf16.mxu0 0
        %1811 = vmatpush1.bf16.msra.mxu0 0
        %1812 = vmatprep.subr.bf16.mxu0 0
        %1813 = vmatpush1.bf16.msra.mxu0 0
        %1814 = vmatprep.subr.bf16.mxu0 0
        %1815 = vmatpush1.bf16.msra.mxu0 0
        %1816 = vmatprep.subr.bf16.mxu0 0
        %1817 = vmatpush1.bf16.msra.mxu0 0
        %1818 = vmatprep.subr.bf16.mxu0 0
        %1819 = vmatpush1.bf16.msra.mxu0 0
        %1820 = vmatprep.subr.bf16.mxu0 0
        %1821 = vmatpush1.bf16.msra.mxu0 0
        %1822 = vmatprep.subr.bf16.mxu0 0
        %1823 = vmatpush1.bf16.msra.mxu0 %v1484
        %1824 = vmatprep.subr.bf16.mxu0 0
        %1825 = vmatpush2.bf16.msra.mxu0 0
        %1826 = vmatprep.subr.bf16.mxu0 0
        %1827 = vmatpush2.bf16.msra.mxu0 0
        %1828 = vmatprep.subr.bf16.mxu0 0
        %1829 = vmatpush2.bf16.msra.mxu0 0
        %1830 = vmatprep.subr.bf16.mxu0 0
        %1831 = vmatpush2.bf16.msra.mxu0 0
        %1832 = vmatprep.subr.bf16.mxu0 0
        %1833 = vmatpush2.bf16.msra.mxu0 0
        %1834 = vmatprep.subr.bf16.mxu0 0
        %1835 = vmatpush2.bf16.msra.mxu0 0
        %1836 = vmatprep.subr.bf16.mxu0 0
        %1837 = vmatpush2.bf16.msra.mxu0 0
        %1838 = vmatprep.subr.bf16.mxu0 0
        %1839 = vmatpush2.bf16.msra.mxu0 0
        %1840 = vmatprep.mubr.bf16.mxu0 0
        %1841 = vmatmul.mubr.bf16.gmra.mxu0 %v1806
        %v1842 = vpop.f32.mrf.mxu0
        %v1843 = vadd.f32 0.0, %v1842
        %v1844 = vpop.f32.mrf.mxu0
        %v1845 = vpop.f32.mrf.mxu0
        %v1846 = vpop.f32.mrf.mxu0
        %1847 = vdwg.mxu0
        %v1848 = vsel %vm826, %v1843, 0.0
        %v1849 = vadd.f32 %v1803, %v1848
        %v1850 = vmul.bf16 %v1476, %v835
        %v1852 = vsel %vm418, %v1850, 0
        %1854 = vmatprep.subr.bf16.mxu0 0
        %1855 = vmatpush1.bf16.msra.mxu0 0
        %1856 = vmatprep.subr.bf16.mxu0 0
        %1857 = vmatpush1.bf16.msra.mxu0 0
        %1858 = vmatprep.subr.bf16.mxu0 0
        %1859 = vmatpush1.bf16.msra.mxu0 0
        %1860 = vmatprep.subr.bf16.mxu0 0
        %1861 = vmatpush1.bf16.msra.mxu0 0
        %1862 = vmatprep.subr.bf16.mxu0 0
        %1863 = vmatpush1.bf16.msra.mxu0 0
        %1864 = vmatprep.subr.bf16.mxu0 0
        %1865 = vmatpush1.bf16.msra.mxu0 0
        %1866 = vmatprep.subr.bf16.mxu0 0
        %1867 = vmatpush1.bf16.msra.mxu0 0
        %1868 = vmatprep.subr.bf16.mxu0 0
        %1869 = vmatpush1.bf16.msra.mxu0 %v1484
        %1870 = vmatprep.subr.bf16.mxu0 0
        %1871 = vmatpush2.bf16.msra.mxu0 0
        %1872 = vmatprep.subr.bf16.mxu0 0
        %1873 = vmatpush2.bf16.msra.mxu0 0
        %1874 = vmatprep.subr.bf16.mxu0 0
        %1875 = vmatpush2.bf16.msra.mxu0 0
        %1876 = vmatprep.subr.bf16.mxu0 0
        %1877 = vmatpush2.bf16.msra.mxu0 0
        %1878 = vmatprep.subr.bf16.mxu0 0
        %1879 = vmatpush2.bf16.msra.mxu0 0
        %1880 = vmatprep.subr.bf16.mxu0 0
        %1881 = vmatpush2.bf16.msra.mxu0 0
        %1882 = vmatprep.subr.bf16.mxu0 0
        %1883 = vmatpush2.bf16.msra.mxu0 0
        %1884 = vmatprep.subr.bf16.mxu0 0
        %1885 = vmatpush2.bf16.msra.mxu0 0
        %1886 = vmatprep.mubr.bf16.mxu0 0
        %1887 = vmatmul.mubr.bf16.gmra.mxu0 %v1852
        %v1888 = vpop.f32.mrf.mxu0
        %v1889 = vadd.f32 0.0, %v1888
        %v1890 = vpop.f32.mrf.mxu0
        %v1891 = vpop.f32.mrf.mxu0
        %v1892 = vpop.f32.mrf.mxu0
        %1893 = vdwg.mxu0
        %v1894 = vsel %vm880, %v1889, 0.0
        %v1895 = vadd.f32 %v1849, %v1894
        %v1896 = vmul.f32 %v1895, 0.35355338
        %v1897 = vsel %vm405, %v1896, -1e+10
        %s1898 = scalar_lea.vmem [#allocation2], 16
        %v1899 = vld [vmem:[%s1898] sm:$0xff]
        %v1900 = vsel %vm418, %v1897, -inf
        %1901 = vmax.xlane.f32.xlu0 %v1900
        %v1902 = vpop.xlane.xlu0 %1901
        %v1903 = vmax.f32 %v1899, %v1902
        %v1904 = vsub.f32 %v1899, %v1903
        %v1905 = vmul.f32 %v1904, 1.442695
        %v1906 = vpow.pop %v1905
        %1908 = vset.pattern.permute.xlu0 0
        %1909 = vperm.xlu0 %1908, %v1903
        %v1910 = vpop.permute.xlu0 %1909
        %v1912 = vsub.f32 %v1897, %v1910
        %v1913 = vmul.f32 %v1912, 1.442695
        %v1914 = vpow.pop %v1913
        %s1915 = scalar_lea.vmem [#allocation3], 16
        %v1916 = vld [vmem:[%s1915] sm:$0xff]
        %v1917 = vmul.f32 %v1906, %v1916
        %v1918 = vsel %vm418, %v1914, 0.0
        %1919 = vadd.xlane.f32.xlu0 %v1918
        %v1920 = vpop.xlane.xlu0 %1919
        %v1921 = vadd.f32 %v1917, %v1920
        %1922 = vst.msk [vmem:[%s1915] sm:$0xff] %vm907, %v1921
        %v1923 = vpack.c.bf16 %v1914, %v1914
        %s1924 = scalar_lea.vmem %s344, 8
        %v1925 = vld [vmem:[%s1924] sm:$0xf]
        %v1927 = vsel %vm418, %v1923, 0
        %v1930 = vsel %vm422, %v1925, 0
        %1932 = vmatprep.subr.bf16.mxu0 0
        %1933 = vmatpush1.bf16.msra.mxu0 0
        %1934 = vmatprep.subr.bf16.mxu0 0
        %1935 = vmatpush1.bf16.msra.mxu0 0
        %1936 = vmatprep.subr.bf16.mxu0 0
        %1937 = vmatpush1.bf16.msra.mxu0 0
        %1938 = vmatprep.subr.bf16.mxu0 0
        %1939 = vmatpush1.bf16.msra.mxu0 0
        %1940 = vmatprep.subr.bf16.mxu0 0
        %1941 = vmatpush1.bf16.msra.mxu0 0
        %1942 = vmatprep.subr.bf16.mxu0 0
        %1943 = vmatpush1.bf16.msra.mxu0 0
        %1944 = vmatprep.subr.bf16.mxu0 0
        %1945 = vmatpush1.bf16.msra.mxu0 0
        %1946 = vmatprep.subr.bf16.mxu0 0
        %1947 = vmatpush1.bf16.msra.mxu0 %v1930
        %1948 = vmatprep.subr.bf16.mxu0 0
        %1949 = vmatpush2.bf16.msra.mxu0 0
        %1950 = vmatprep.subr.bf16.mxu0 0
        %1951 = vmatpush2.bf16.msra.mxu0 0
        %1952 = vmatprep.subr.bf16.mxu0 0
        %1953 = vmatpush2.bf16.msra.mxu0 0
        %1954 = vmatprep.subr.bf16.mxu0 0
        %1955 = vmatpush2.bf16.msra.mxu0 0
        %1956 = vmatprep.subr.bf16.mxu0 0
        %1957 = vmatpush2.bf16.msra.mxu0 0
        %1958 = vmatprep.subr.bf16.mxu0 0
        %1959 = vmatpush2.bf16.msra.mxu0 0
        %1960 = vmatprep.subr.bf16.mxu0 0
        %1961 = vmatpush2.bf16.msra.mxu0 0
        %1962 = vmatprep.subr.bf16.mxu0 0
        %1963 = vmatpush2.bf16.msra.mxu0 0
        %1964 = vmatprep.mubr.bf16.mxu0 0
        %1965 = vmatmul.mubr.bf16.gmra.mxu0 %v1927
        %v1966 = vpop.f32.mrf.mxu0
        %v1967 = vadd.f32 0.0, %v1966
        %v1968 = vpop.f32.mrf.mxu0
        %v1969 = vpop.f32.mrf.mxu0
        %v1970 = vpop.f32.mrf.mxu0
        %1971 = vdwg.mxu0
        %s1972 = scalar_lea.vmem [#allocation4], 16
        %v1973 = vld [vmem:[%s1972] sm:$0xff]
        %1975 = vset.pattern.permute.xlu0 0
        %1976 = vperm.xlu0 %1975, %v1906
        %v1977 = vpop.permute.xlu0 %1976
        %v1979 = vmul.f32 %v1977, %v1973
        %v1980 = vadd.f32 %v1979, %v1967
        %1981 = vst.msk [vmem:[%s1972] sm:$0xff] %vm418, %v1980
        %1982 = vst.msk [vmem:[%s1898] sm:$0xff] %vm907, %v1903
        %s1983 = scalar_lea.vmem %s328, 12
        %v1984 = vld [vmem:[%s1983] sm:$0xf]
        %s1985 = scalar_lea.vmem %s336, 12
        %v1986 = vld [vmem:[%s1985] sm:$0xf]
        %v1987 = vmul.bf16 %v1984, %v416
        %v1989 = vsel %vm418, %v1987, 0
        %v1992 = vsel %vm422, %v1986, 0
        %1994 = vmatprep.subr.bf16.mxu0 0
        %1995 = vmatpush1.bf16.msra.mxu0 0
        %1996 = vmatprep.subr.bf16.mxu0 0
        %1997 = vmatpush1.bf16.msra.mxu0 0
        %1998 = vmatprep.subr.bf16.mxu0 0
        %1999 = vmatpush1.bf16.msra.mxu0 0
        %2000 = vmatprep.subr.bf16.mxu0 0
        %2001 = vmatpush1.bf16.msra.mxu0 0
        %2002 = vmatprep.subr.bf16.mxu0 0
        %2003 = vmatpush1.bf16.msra.mxu0 0
        %2004 = vmatprep.subr.bf16.mxu0 0
        %2005 = vmatpush1.bf16.msra.mxu0 0
        %2006 = vmatprep.subr.bf16.mxu0 0
        %2007 = vmatpush1.bf16.msra.mxu0 0
        %2008 = vmatprep.subr.bf16.mxu0 0
        %2009 = vmatpush1.bf16.msra.mxu0 %v1992
        %2010 = vmatprep.subr.bf16.mxu0 0
        %2011 = vmatpush2.bf16.msra.mxu0 0
        %2012 = vmatprep.subr.bf16.mxu0 0
        %2013 = vmatpush2.bf16.msra.mxu0 0
        %2014 = vmatprep.subr.bf16.mxu0 0
        %2015 = vmatpush2.bf16.msra.mxu0 0
        %2016 = vmatprep.subr.bf16.mxu0 0
        %2017 = vmatpush2.bf16.msra.mxu0 0
        %2018 = vmatprep.subr.bf16.mxu0 0
        %2019 = vmatpush2.bf16.msra.mxu0 0
        %2020 = vmatprep.subr.bf16.mxu0 0
        %2021 = vmatpush2.bf16.msra.mxu0 0
        %2022 = vmatprep.subr.bf16.mxu0 0
        %2023 = vmatpush2.bf16.msra.mxu0 0
        %2024 = vmatprep.subr.bf16.mxu0 0
        %2025 = vmatpush2.bf16.msra.mxu0 0
        %2026 = vmatprep.mubr.bf16.mxu0 0
        %2027 = vmatmul.mubr.bf16.gmra.mxu0 %v1989
        %v2028 = vpop.f32.mrf.mxu0
        %v2029 = vadd.f32 0.0, %v2028
        %v2030 = vpop.f32.mrf.mxu0
        %v2031 = vpop.f32.mrf.mxu0
        %v2032 = vpop.f32.mrf.mxu0
        %2033 = vdwg.mxu0
        %v2034 = vsel %vm466, %v2029, 0.0
        %v2035 = vadd.f32 %v2034, 0.0
        %v2036 = vmul.bf16 %v1984, %v475
        %v2038 = vsel %vm418, %v2036, 0
        %2040 = vmatprep.subr.bf16.mxu0 0
        %2041 = vmatpush1.bf16.msra.mxu0 0
        %2042 = vmatprep.subr.bf16.mxu0 0
        %2043 = vmatpush1.bf16.msra.mxu0 0
        %2044 = vmatprep.subr.bf16.mxu0 0
        %2045 = vmatpush1.bf16.msra.mxu0 0
        %2046 = vmatprep.subr.bf16.mxu0 0
        %2047 = vmatpush1.bf16.msra.mxu0 0
        %2048 = vmatprep.subr.bf16.mxu0 0
        %2049 = vmatpush1.bf16.msra.mxu0 0
        %2050 = vmatprep.subr.bf16.mxu0 0
        %2051 = vmatpush1.bf16.msra.mxu0 0
        %2052 = vmatprep.subr.bf16.mxu0 0
        %2053 = vmatpush1.bf16.msra.mxu0 0
        %2054 = vmatprep.subr.bf16.mxu0 0
        %2055 = vmatpush1.bf16.msra.mxu0 %v1992
        %2056 = vmatprep.subr.bf16.mxu0 0
        %2057 = vmatpush2.bf16.msra.mxu0 0
        %2058 = vmatprep.subr.bf16.mxu0 0
        %2059 = vmatpush2.bf16.msra.mxu0 0
        %2060 = vmatprep.subr.bf16.mxu0 0
        %2061 = vmatpush2.bf16.msra.mxu0 0
        %2062 = vmatprep.subr.bf16.mxu0 0
        %2063 = vmatpush2.bf16.msra.mxu0 0
        %2064 = vmatprep.subr.bf16.mxu0 0
        %2065 = vmatpush2.bf16.msra.mxu0 0
        %2066 = vmatprep.subr.bf16.mxu0 0
        %2067 = vmatpush2.bf16.msra.mxu0 0
        %2068 = vmatprep.subr.bf16.mxu0 0
        %2069 = vmatpush2.bf16.msra.mxu0 0
        %2070 = vmatprep.subr.bf16.mxu0 0
        %2071 = vmatpush2.bf16.msra.mxu0 0
        %2072 = vmatprep.mubr.bf16.mxu0 0
        %2073 = vmatmul.mubr.bf16.gmra.mxu0 %v2038
        %v2074 = vpop.f32.mrf.mxu0
        %v2075 = vadd.f32 0.0, %v2074
        %v2076 = vpop.f32.mrf.mxu0
        %v2077 = vpop.f32.mrf.mxu0
        %v2078 = vpop.f32.mrf.mxu0
        %2079 = vdwg.mxu0
        %v2080 = vsel %vm520, %v2075, 0.0
        %v2081 = vadd.f32 %v2035, %v2080
        %v2082 = vmul.bf16 %v1984, %v526
        %v2084 = vsel %vm418, %v2082, 0
        %2086 = vmatprep.subr.bf16.mxu0 0
        %2087 = vmatpush1.bf16.msra.mxu0 0
        %2088 = vmatprep.subr.bf16.mxu0 0
        %2089 = vmatpush1.bf16.msra.mxu0 0
        %2090 = vmatprep.subr.bf16.mxu0 0
        %2091 = vmatpush1.bf16.msra.mxu0 0
        %2092 = vmatprep.subr.bf16.mxu0 0
        %2093 = vmatpush1.bf16.msra.mxu0 0
        %2094 = vmatprep.subr.bf16.mxu0 0
        %2095 = vmatpush1.bf16.msra.mxu0 0
        %2096 = vmatprep.subr.bf16.mxu0 0
        %2097 = vmatpush1.bf16.msra.mxu0 0
        %2098 = vmatprep.subr.bf16.mxu0 0
        %2099 = vmatpush1.bf16.msra.mxu0 0
        %2100 = vmatprep.subr.bf16.mxu0 0
        %2101 = vmatpush1.bf16.msra.mxu0 %v1992
        %2102 = vmatprep.subr.bf16.mxu0 0
        %2103 = vmatpush2.bf16.msra.mxu0 0
        %2104 = vmatprep.subr.bf16.mxu0 0
        %2105 = vmatpush2.bf16.msra.mxu0 0
        %2106 = vmatprep.subr.bf16.mxu0 0
        %2107 = vmatpush2.bf16.msra.mxu0 0
        %2108 = vmatprep.subr.bf16.mxu0 0
        %2109 = vmatpush2.bf16.msra.mxu0 0
        %2110 = vmatprep.subr.bf16.mxu0 0
        %2111 = vmatpush2.bf16.msra.mxu0 0
        %2112 = vmatprep.subr.bf16.mxu0 0
        %2113 = vmatpush2.bf16.msra.mxu0 0
        %2114 = vmatprep.subr.bf16.mxu0 0
        %2115 = vmatpush2.bf16.msra.mxu0 0
        %2116 = vmatprep.subr.bf16.mxu0 0
        %2117 = vmatpush2.bf16.msra.mxu0 0
        %2118 = vmatprep.mubr.bf16.mxu0 0
        %2119 = vmatmul.mubr.bf16.gmra.mxu0 %v2084
        %v2120 = vpop.f32.mrf.mxu0
        %v2121 = vadd.f32 0.0, %v2120
        %v2122 = vpop.f32.mrf.mxu0
        %v2123 = vpop.f32.mrf.mxu0
        %v2124 = vpop.f32.mrf.mxu0
        %2125 = vdwg.mxu0
        %v2126 = vsel %vm571, %v2121, 0.0
        %v2127 = vadd.f32 %v2081, %v2126
        %v2128 = vmul.bf16 %v1984, %v577
        %v2130 = vsel %vm418, %v2128, 0
        %2132 = vmatprep.subr.bf16.mxu0 0
        %2133 = vmatpush1.bf16.msra.mxu0 0
        %2134 = vmatprep.subr.bf16.mxu0 0
        %2135 = vmatpush1.bf16.msra.mxu0 0
        %2136 = vmatprep.subr.bf16.mxu0 0
        %2137 = vmatpush1.bf16.msra.mxu0 0
        %2138 = vmatprep.subr.bf16.mxu0 0
        %2139 = vmatpush1.bf16.msra.mxu0 0
        %2140 = vmatprep.subr.bf16.mxu0 0
        %2141 = vmatpush1.bf16.msra.mxu0 0
        %2142 = vmatprep.subr.bf16.mxu0 0
        %2143 = vmatpush1.bf16.msra.mxu0 0
        %2144 = vmatprep.subr.bf16.mxu0 0
        %2145 = vmatpush1.bf16.msra.mxu0 0
        %2146 = vmatprep.subr.bf16.mxu0 0
        %2147 = vmatpush1.bf16.msra.mxu0 %v1992
        %2148 = vmatprep.subr.bf16.mxu0 0
        %2149 = vmatpush2.bf16.msra.mxu0 0
        %2150 = vmatprep.subr.bf16.mxu0 0
        %2151 = vmatpush2.bf16.msra.mxu0 0
        %2152 = vmatprep.subr.bf16.mxu0 0
        %2153 = vmatpush2.bf16.msra.mxu0 0
        %2154 = vmatprep.subr.bf16.mxu0 0
        %2155 = vmatpush2.bf16.msra.mxu0 0
        %2156 = vmatprep.subr.bf16.mxu0 0
        %2157 = vmatpush2.bf16.msra.mxu0 0
        %2158 = vmatprep.subr.bf16.mxu0 0
        %2159 = vmatpush2.bf16.msra.mxu0 0
        %2160 = vmatprep.subr.bf16.mxu0 0
        %2161 = vmatpush2.bf16.msra.mxu0 0
        %2162 = vmatprep.subr.bf16.mxu0 0
        %2163 = vmatpush2.bf16.msra.mxu0 0
        %2164 = vmatprep.mubr.bf16.mxu0 0
        %2165 = vmatmul.mubr.bf16.gmra.mxu0 %v2130
        %v2166 = vpop.f32.mrf.mxu0
        %v2167 = vadd.f32 0.0, %v2166
        %v2168 = vpop.f32.mrf.mxu0
        %v2169 = vpop.f32.mrf.mxu0
        %v2170 = vpop.f32.mrf.mxu0
        %2171 = vdwg.mxu0
        %v2172 = vsel %vm622, %v2167, 0.0
        %v2173 = vadd.f32 %v2127, %v2172
        %v2174 = vmul.bf16 %v1984, %v628
        %v2176 = vsel %vm418, %v2174, 0
        %2178 = vmatprep.subr.bf16.mxu0 0
        %2179 = vmatpush1.bf16.msra.mxu0 0
        %2180 = vmatprep.subr.bf16.mxu0 0
        %2181 = vmatpush1.bf16.msra.mxu0 0
        %2182 = vmatprep.subr.bf16.mxu0 0
        %2183 = vmatpush1.bf16.msra.mxu0 0
        %2184 = vmatprep.subr.bf16.mxu0 0
        %2185 = vmatpush1.bf16.msra.mxu0 0
        %2186 = vmatprep.subr.bf16.mxu0 0
        %2187 = vmatpush1.bf16.msra.mxu0 0
        %2188 = vmatprep.subr.bf16.mxu0 0
        %2189 = vmatpush1.bf16.msra.mxu0 0
        %2190 = vmatprep.subr.bf16.mxu0 0
        %2191 = vmatpush1.bf16.msra.mxu0 0
        %2192 = vmatprep.subr.bf16.mxu0 0
        %2193 = vmatpush1.bf16.msra.mxu0 %v1992
        %2194 = vmatprep.subr.bf16.mxu0 0
        %2195 = vmatpush2.bf16.msra.mxu0 0
        %2196 = vmatprep.subr.bf16.mxu0 0
        %2197 = vmatpush2.bf16.msra.mxu0 0
        %2198 = vmatprep.subr.bf16.mxu0 0
        %2199 = vmatpush2.bf16.msra.mxu0 0
        %2200 = vmatprep.subr.bf16.mxu0 0
        %2201 = vmatpush2.bf16.msra.mxu0 0
        %2202 = vmatprep.subr.bf16.mxu0 0
        %2203 = vmatpush2.bf16.msra.mxu0 0
        %2204 = vmatprep.subr.bf16.mxu0 0
        %2205 = vmatpush2.bf16.msra.mxu0 0
        %2206 = vmatprep.subr.bf16.mxu0 0
        %2207 = vmatpush2.bf16.msra.mxu0 0
        %2208 = vmatprep.subr.bf16.mxu0 0
        %2209 = vmatpush2.bf16.msra.mxu0 0
        %2210 = vmatprep.mubr.bf16.mxu0 0
        %2211 = vmatmul.mubr.bf16.gmra.mxu0 %v2176
        %v2212 = vpop.f32.mrf.mxu0
        %v2213 = vadd.f32 0.0, %v2212
        %v2214 = vpop.f32.mrf.mxu0
        %v2215 = vpop.f32.mrf.mxu0
        %v2216 = vpop.f32.mrf.mxu0
        %2217 = vdwg.mxu0
        %v2218 = vsel %vm673, %v2213, 0.0
        %v2219 = vadd.f32 %v2173, %v2218
        %v2220 = vmul.bf16 %v1984, %v679
        %v2222 = vsel %vm418, %v2220, 0
        %2224 = vmatprep.subr.bf16.mxu0 0
        %2225 = vmatpush1.bf16.msra.mxu0 0
        %2226 = vmatprep.subr.bf16.mxu0 0
        %2227 = vmatpush1.bf16.msra.mxu0 0
        %2228 = vmatprep.subr.bf16.mxu0 0
        %2229 = vmatpush1.bf16.msra.mxu0 0
        %2230 = vmatprep.subr.bf16.mxu0 0
        %2231 = vmatpush1.bf16.msra.mxu0 0
        %2232 = vmatprep.subr.bf16.mxu0 0
        %2233 = vmatpush1.bf16.msra.mxu0 0
        %2234 = vmatprep.subr.bf16.mxu0 0
        %2235 = vmatpush1.bf16.msra.mxu0 0
        %2236 = vmatprep.subr.bf16.mxu0 0
        %2237 = vmatpush1.bf16.msra.mxu0 0
        %2238 = vmatprep.subr.bf16.mxu0 0
        %2239 = vmatpush1.bf16.msra.mxu0 %v1992
        %2240 = vmatprep.subr.bf16.mxu0 0
        %2241 = vmatpush2.bf16.msra.mxu0 0
        %2242 = vmatprep.subr.bf16.mxu0 0
        %2243 = vmatpush2.bf16.msra.mxu0 0
        %2244 = vmatprep.subr.bf16.mxu0 0
        %2245 = vmatpush2.bf16.msra.mxu0 0
        %2246 = vmatprep.subr.bf16.mxu0 0
        %2247 = vmatpush2.bf16.msra.mxu0 0
        %2248 = vmatprep.subr.bf16.mxu0 0
        %2249 = vmatpush2.bf16.msra.mxu0 0
        %2250 = vmatprep.subr.bf16.mxu0 0
        %2251 = vmatpush2.bf16.msra.mxu0 0
        %2252 = vmatprep.subr.bf16.mxu0 0
        %2253 = vmatpush2.bf16.msra.mxu0 0
        %2254 = vmatprep.subr.bf16.mxu0 0
        %2255 = vmatpush2.bf16.msra.mxu0 0
        %2256 = vmatprep.mubr.bf16.mxu0 0
        %2257 = vmatmul.mubr.bf16.gmra.mxu0 %v2222
        %v2258 = vpop.f32.mrf.mxu0
        %v2259 = vadd.f32 0.0, %v2258
        %v2260 = vpop.f32.mrf.mxu0
        %v2261 = vpop.f32.mrf.mxu0
        %v2262 = vpop.f32.mrf.mxu0
        %2263 = vdwg.mxu0
        %v2264 = vsel %vm724, %v2259, 0.0
        %v2265 = vadd.f32 %v2219, %v2264
        %v2266 = vmul.bf16 %v1984, %v730
        %v2268 = vsel %vm418, %v2266, 0
        %2270 = vmatprep.subr.bf16.mxu0 0
        %2271 = vmatpush1.bf16.msra.mxu0 0
        %2272 = vmatprep.subr.bf16.mxu0 0
        %2273 = vmatpush1.bf16.msra.mxu0 0
        %2274 = vmatprep.subr.bf16.mxu0 0
        %2275 = vmatpush1.bf16.msra.mxu0 0
        %2276 = vmatprep.subr.bf16.mxu0 0
        %2277 = vmatpush1.bf16.msra.mxu0 0
        %2278 = vmatprep.subr.bf16.mxu0 0
        %2279 = vmatpush1.bf16.msra.mxu0 0
        %2280 = vmatprep.subr.bf16.mxu0 0
        %2281 = vmatpush1.bf16.msra.mxu0 0
        %2282 = vmatprep.subr.bf16.mxu0 0
        %2283 = vmatpush1.bf16.msra.mxu0 0
        %2284 = vmatprep.subr.bf16.mxu0 0
        %2285 = vmatpush1.bf16.msra.mxu0 %v1992
        %2286 = vmatprep.subr.bf16.mxu0 0
        %2287 = vmatpush2.bf16.msra.mxu0 0
        %2288 = vmatprep.subr.bf16.mxu0 0
        %2289 = vmatpush2.bf16.msra.mxu0 0
        %2290 = vmatprep.subr.bf16.mxu0 0
        %2291 = vmatpush2.bf16.msra.mxu0 0
        %2292 = vmatprep.subr.bf16.mxu0 0
        %2293 = vmatpush2.bf16.msra.mxu0 0
        %2294 = vmatprep.subr.bf16.mxu0 0
        %2295 = vmatpush2.bf16.msra.mxu0 0
        %2296 = vmatprep.subr.bf16.mxu0 0
        %2297 = vmatpush2.bf16.msra.mxu0 0
        %2298 = vmatprep.subr.bf16.mxu0 0
        %2299 = vmatpush2.bf16.msra.mxu0 0
        %2300 = vmatprep.subr.bf16.mxu0 0
        %2301 = vmatpush2.bf16.msra.mxu0 0
        %2302 = vmatprep.mubr.bf16.mxu0 0
        %2303 = vmatmul.mubr.bf16.gmra.mxu0 %v2268
        %v2304 = vpop.f32.mrf.mxu0
        %v2305 = vadd.f32 0.0, %v2304
        %v2306 = vpop.f32.mrf.mxu0
        %v2307 = vpop.f32.mrf.mxu0
        %v2308 = vpop.f32.mrf.mxu0
        %2309 = vdwg.mxu0
        %v2310 = vsel %vm775, %v2305, 0.0
        %v2311 = vadd.f32 %v2265, %v2310
        %v2312 = vmul.bf16 %v1984, %v781
        %v2314 = vsel %vm418, %v2312, 0
        %2316 = vmatprep.subr.bf16.mxu0 0
        %2317 = vmatpush1.bf16.msra.mxu0 0
        %2318 = vmatprep.subr.bf16.mxu0 0
        %2319 = vmatpush1.bf16.msra.mxu0 0
        %2320 = vmatprep.subr.bf16.mxu0 0
        %2321 = vmatpush1.bf16.msra.mxu0 0
        %2322 = vmatprep.subr.bf16.mxu0 0
        %2323 = vmatpush1.bf16.msra.mxu0 0
        %2324 = vmatprep.subr.bf16.mxu0 0
        %2325 = vmatpush1.bf16.msra.mxu0 0
        %2326 = vmatprep.subr.bf16.mxu0 0
        %2327 = vmatpush1.bf16.msra.mxu0 0
        %2328 = vmatprep.subr.bf16.mxu0 0
        %2329 = vmatpush1.bf16.msra.mxu0 0
        %2330 = vmatprep.subr.bf16.mxu0 0
        %2331 = vmatpush1.bf16.msra.mxu0 %v1992
        %2332 = vmatprep.subr.bf16.mxu0 0
        %2333 = vmatpush2.bf16.msra.mxu0 0
        %2334 = vmatprep.subr.bf16.mxu0 0
        %2335 = vmatpush2.bf16.msra.mxu0 0
        %2336 = vmatprep.subr.bf16.mxu0 0
        %2337 = vmatpush2.bf16.msra.mxu0 0
        %2338 = vmatprep.subr.bf16.mxu0 0
        %2339 = vmatpush2.bf16.msra.mxu0 0
        %2340 = vmatprep.subr.bf16.mxu0 0
        %2341 = vmatpush2.bf16.msra.mxu0 0
        %2342 = vmatprep.subr.bf16.mxu0 0
        %2343 = vmatpush2.bf16.msra.mxu0 0
        %2344 = vmatprep.subr.bf16.mxu0 0
        %2345 = vmatpush2.bf16.msra.mxu0 0
        %2346 = vmatprep.subr.bf16.mxu0 0
        %2347 = vmatpush2.bf16.msra.mxu0 0
        %2348 = vmatprep.mubr.bf16.mxu0 0
        %2349 = vmatmul.mubr.bf16.gmra.mxu0 %v2314
        %v2350 = vpop.f32.mrf.mxu0
        %v2351 = vadd.f32 0.0, %v2350
        %v2352 = vpop.f32.mrf.mxu0
        %v2353 = vpop.f32.mrf.mxu0
        %v2354 = vpop.f32.mrf.mxu0
        %2355 = vdwg.mxu0
        %v2356 = vsel %vm826, %v2351, 0.0
        %v2357 = vadd.f32 %v2311, %v2356
        %v2358 = vmul.bf16 %v1984, %v835
        %v2360 = vsel %vm418, %v2358, 0
        %2362 = vmatprep.subr.bf16.mxu0 0
        %2363 = vmatpush1.bf16.msra.mxu0 0
        %2364 = vmatprep.subr.bf16.mxu0 0
        %2365 = vmatpush1.bf16.msra.mxu0 0
        %2366 = vmatprep.subr.bf16.mxu0 0
        %2367 = vmatpush1.bf16.msra.mxu0 0
        %2368 = vmatprep.subr.bf16.mxu0 0
        %2369 = vmatpush1.bf16.msra.mxu0 0
        %2370 = vmatprep.subr.bf16.mxu0 0
        %2371 = vmatpush1.bf16.msra.mxu0 0
        %2372 = vmatprep.subr.bf16.mxu0 0
        %2373 = vmatpush1.bf16.msra.mxu0 0
        %2374 = vmatprep.subr.bf16.mxu0 0
        %2375 = vmatpush1.bf16.msra.mxu0 0
        %2376 = vmatprep.subr.bf16.mxu0 0
        %2377 = vmatpush1.bf16.msra.mxu0 %v1992
        %2378 = vmatprep.subr.bf16.mxu0 0
        %2379 = vmatpush2.bf16.msra.mxu0 0
        %2380 = vmatprep.subr.bf16.mxu0 0
        %2381 = vmatpush2.bf16.msra.mxu0 0
        %2382 = vmatprep.subr.bf16.mxu0 0
        %2383 = vmatpush2.bf16.msra.mxu0 0
        %2384 = vmatprep.subr.bf16.mxu0 0
        %2385 = vmatpush2.bf16.msra.mxu0 0
        %2386 = vmatprep.subr.bf16.mxu0 0
        %2387 = vmatpush2.bf16.msra.mxu0 0
        %2388 = vmatprep.subr.bf16.mxu0 0
        %2389 = vmatpush2.bf16.msra.mxu0 0
        %2390 = vmatprep.subr.bf16.mxu0 0
        %2391 = vmatpush2.bf16.msra.mxu0 0
        %2392 = vmatprep.subr.bf16.mxu0 0
        %2393 = vmatpush2.bf16.msra.mxu0 0
        %2394 = vmatprep.mubr.bf16.mxu0 0
        %2395 = vmatmul.mubr.bf16.gmra.mxu0 %v2360
        %v2396 = vpop.f32.mrf.mxu0
        %v2397 = vadd.f32 0.0, %v2396
        %v2398 = vpop.f32.mrf.mxu0
        %v2399 = vpop.f32.mrf.mxu0
        %v2400 = vpop.f32.mrf.mxu0
        %2401 = vdwg.mxu0
        %v2402 = vsel %vm880, %v2397, 0.0
        %v2403 = vadd.f32 %v2357, %v2402
        %v2404 = vmul.f32 %v2403, 0.35355338
        %v2405 = vsel %vm405, %v2404, -1e+10
        %s2406 = scalar_lea.vmem [#allocation2], 24
        %v2407 = vld [vmem:[%s2406] sm:$0xff]
        %v2408 = vsel %vm418, %v2405, -inf
        %2409 = vmax.xlane.f32.xlu0 %v2408
        %v2410 = vpop.xlane.xlu0 %2409
        %v2411 = vmax.f32 %v2407, %v2410
        %v2412 = vsub.f32 %v2407, %v2411
        %v2413 = vmul.f32 %v2412, 1.442695
        %v2414 = vpow.pop %v2413
        %2416 = vset.pattern.permute.xlu0 0
        %2417 = vperm.xlu0 %2416, %v2411
        %v2418 = vpop.permute.xlu0 %2417
        %v2420 = vsub.f32 %v2405, %v2418
        %v2421 = vmul.f32 %v2420, 1.442695
        %v2422 = vpow.pop %v2421
        %s2423 = scalar_lea.vmem [#allocation3], 24
        %v2424 = vld [vmem:[%s2423] sm:$0xff]
        %v2425 = vmul.f32 %v2414, %v2424
        %v2426 = vsel %vm418, %v2422, 0.0
        %2427 = vadd.xlane.f32.xlu0 %v2426
        %v2428 = vpop.xlane.xlu0 %2427
        %v2429 = vadd.f32 %v2425, %v2428
        %2430 = vst.msk [vmem:[%s2423] sm:$0xff] %vm907, %v2429
        %v2431 = vpack.c.bf16 %v2422, %v2422
        %s2432 = scalar_lea.vmem %s344, 12
        %v2433 = vld [vmem:[%s2432] sm:$0xf]
        %v2435 = vsel %vm418, %v2431, 0
        %v2438 = vsel %vm422, %v2433, 0
        %2440 = vmatprep.subr.bf16.mxu0 0
        %2441 = vmatpush1.bf16.msra.mxu0 0
        %2442 = vmatprep.subr.bf16.mxu0 0
        %2443 = vmatpush1.bf16.msra.mxu0 0
        %2444 = vmatprep.subr.bf16.mxu0 0
        %2445 = vmatpush1.bf16.msra.mxu0 0
        %2446 = vmatprep.subr.bf16.mxu0 0
        %2447 = vmatpush1.bf16.msra.mxu0 0
        %2448 = vmatprep.subr.bf16.mxu0 0
        %2449 = vmatpush1.bf16.msra.mxu0 0
        %2450 = vmatprep.subr.bf16.mxu0 0
        %2451 = vmatpush1.bf16.msra.mxu0 0
        %2452 = vmatprep.subr.bf16.mxu0 0
        %2453 = vmatpush1.bf16.msra.mxu0 0
        %2454 = vmatprep.subr.bf16.mxu0 0
        %2455 = vmatpush1.bf16.msra.mxu0 %v2438
        %2456 = vmatprep.subr.bf16.mxu0 0
        %2457 = vmatpush2.bf16.msra.mxu0 0
        %2458 = vmatprep.subr.bf16.mxu0 0
        %2459 = vmatpush2.bf16.msra.mxu0 0
        %2460 = vmatprep.subr.bf16.mxu0 0
        %2461 = vmatpush2.bf16.msra.mxu0 0
        %2462 = vmatprep.subr.bf16.mxu0 0
        %2463 = vmatpush2.bf16.msra.mxu0 0
        %2464 = vmatprep.subr.bf16.mxu0 0
        %2465 = vmatpush2.bf16.msra.mxu0 0
        %2466 = vmatprep.subr.bf16.mxu0 0
        %2467 = vmatpush2.bf16.msra.mxu0 0
        %2468 = vmatprep.subr.bf16.mxu0 0
        %2469 = vmatpush2.bf16.msra.mxu0 0
        %2470 = vmatprep.subr.bf16.mxu0 0
        %2471 = vmatpush2.bf16.msra.mxu0 0
        %2472 = vmatprep.mubr.bf16.mxu0 0
        %2473 = vmatmul.mubr.bf16.gmra.mxu0 %v2435
        %v2474 = vpop.f32.mrf.mxu0
        %v2475 = vadd.f32 0.0, %v2474
        %v2476 = vpop.f32.mrf.mxu0
        %v2477 = vpop.f32.mrf.mxu0
        %v2478 = vpop.f32.mrf.mxu0
        %2479 = vdwg.mxu0
        %s2480 = scalar_lea.vmem [#allocation4], 24
        %v2481 = vld [vmem:[%s2480] sm:$0xff]
        %2483 = vset.pattern.permute.xlu0 0
        %2484 = vperm.xlu0 %2483, %v2414
        %v2485 = vpop.permute.xlu0 %2484
        %v2487 = vmul.f32 %v2485, %v2481
        %v2488 = vadd.f32 %v2487, %v2475
        %2489 = vst.msk [vmem:[%s2480] sm:$0xff] %vm418, %v2488
        %2490 = vst.msk [vmem:[%s2406] sm:$0xff] %vm907, %v2411
      $region48: #{sequential_absolute_forward.54} parent=39 // pred_fallthru
        _
      // Predicated region
      $region49: #{sequential_absolute_forward.54} parent=39 // pred_check
        %p2491 = pneg %p363
      $region50: #{sequential_absolute_forward.54} parent=39 // pred_check_branch
        %2493 = sbr.rel (%p2491) target = $region52
      $region51: #{sequential_absolute_forward.54} parent=39 // pred_region
        %v2494 = vld [vmem:[#allocation3] sm:$0xff]
        %v2495 = vrcp.pop %v2494
        %v2496 = vld [vmem:[#allocation4] sm:$0xff]
        %2498 = vset.pattern.permute.xlu0 0
        %2499 = vperm.xlu0 %2498, %v2495
        %v2500 = vpop.permute.xlu0 %2499
        %v2502 = vmul.f32 %v2496, %v2500
        %v2503 = vpack.c.bf16 %v2502, %v2502
        %s2504 = scalar_lea.vmem [#allocation3], 8
        %v2505 = vld [vmem:[%s2504] sm:$0xff]
        %v2506 = vrcp.pop %v2505
        %s2507 = scalar_lea.vmem [#allocation4], 8
        %v2508 = vld [vmem:[%s2507] sm:$0xff]
        %2510 = vset.pattern.permute.xlu0 0
        %2511 = vperm.xlu0 %2510, %v2506
        %v2512 = vpop.permute.xlu0 %2511
        %v2514 = vmul.f32 %v2508, %v2512
        %v2515 = vpack.c.bf16 %v2514, %v2514
        %s2516 = scalar_lea.vmem [#allocation3], 16
        %v2517 = vld [vmem:[%s2516] sm:$0xff]
        %v2518 = vrcp.pop %v2517
        %s2519 = scalar_lea.vmem [#allocation4], 16
        %v2520 = vld [vmem:[%s2519] sm:$0xff]
        %2522 = vset.pattern.permute.xlu0 0
        %2523 = vperm.xlu0 %2522, %v2518
        %v2524 = vpop.permute.xlu0 %2523
        %v2526 = vmul.f32 %v2520, %v2524
        %v2527 = vpack.c.bf16 %v2526, %v2526
        %s2528 = scalar_lea.vmem [#allocation3], 24
        %v2529 = vld [vmem:[%s2528] sm:$0xff]
        %v2530 = vrcp.pop %v2529
        %s2531 = scalar_lea.vmem [#allocation4], 24
        %v2532 = vld [vmem:[%s2531] sm:$0xff]
        %2534 = vset.pattern.permute.xlu0 0
        %2535 = vperm.xlu0 %2534, %v2530
        %v2536 = vpop.permute.xlu0 %2535
        %v2538 = vmul.f32 %v2532, %v2536
        %v2539 = vpack.c.bf16 %v2538, %v2538
        %2541 = vrot.lane.b32.xlu0 %v2515, 8
        %v2542 = vpop.permute.xlu0 %2541
        %2544 = vrot.lane.b32.xlu0 %v2527, 16
        %v2545 = vpop.permute.xlu0 %2544
        %2547 = vrot.lane.b32.xlu0 %v2539, 24
        %v2548 = vpop.permute.xlu0 %2547
        %vm2549 = vcmask 64512
        %v2552 = vsel %vm2549, %v2503, %v2542
        %vm2553 = vcmask 130048
        %v2555 = vsel %vm2553, %v2552, %v2545
        %vm2556 = vcmask 195584
        %v2558 = vsel %vm2556, %v2555, %v2548
        %vm2560 = vcmask 257024
        %2561 = vst.msk [vmem:[%s361] sm:$0xf] %vm2560, %v2558
      $region52: #{sequential_absolute_forward.54} parent=39 // pred_fallthru
        _
      %p2562 = scmp.lt.s32.totalorder %s21, 1
      %s2563 = scalar_select %p2562, %s21, 1
      %p2564 = scmp.lt.s32.totalorder %s22, 0
      %s2565 = scalar_select %p2564, %s22, 0
      %s2566 = sadd.s32 %s2565, %s2563
      %s2567 = smul.addr %s2566, 4
      %s2568 = scalar_lea.vmem %s5, %s2567
      // Predicated region
      $region53: #{sequential_absolute_forward.54} parent=39 // pred_check
        %p2569 = pneg %p190
      $region54: #{sequential_absolute_forward.54} parent=39 // pred_check_branch
        %2571 = sbr.rel (%p2569) target = $region56
      $region55: #{sequential_absolute_forward.54} parent=39 // pred_region
        _
      $region56: #{sequential_absolute_forward.54} parent=39 // pred_fallthru
        _
    $region40: #{sequential_absolute_forward.54} parent=5 // pred_fallthru
      _
    %p2572 = scmp.le.s32.totalorder 2, %s11
    // Predicated region
    $region57: #{sequential_absolute_forward.54} parent=5 // pred_check
      %p2573 = pneg %p2572
    $region58: #{sequential_absolute_forward.54} parent=5 // pred_check_branch
      %2575 = sbr.rel (%p2573) target = $region60
    $region59: #{sequential_absolute_forward.54} parent=5 // pred_region
      %s2576 = ssub.s32 %s11, 2
      // Predicated region
      $region61: #{sequential_absolute_forward.54} parent=59 // pred_check
        %p2577 = pneg %p196
      $region62: #{sequential_absolute_forward.54} parent=59 // pred_check_branch
        %2579 = sbr.rel (%p2577) target = $region64
      $region63: #{sequential_absolute_forward.54} parent=59 // pred_region
        %p2580 = scmp.lt.s32.totalorder %s24, 1
        %s2581 = scalar_select %p2580, %s24, 1
        %p2582 = scmp.lt.s32.totalorder %s25, 0
        %s2583 = scalar_select %p2582, %s25, 0
        %s2584 = sadd.s32 %s2583, %s2581
        %s2585 = smul.addr %s2584, 4
        %s2586 = scalar_lea.vmem %s5, %s2585
      $region64: #{sequential_absolute_forward.54} parent=59 // pred_fallthru
        _
    $region60: #{sequential_absolute_forward.54} parent=5 // pred_fallthru
      _
  $region6: #{sequential_absolute_forward.54} parent=0 // loop_footer
    %s15 = sadd.s32 1, %s11
  $region7: #{sequential_absolute_forward.54} parent=0 // loop_footer_branch
    %10 = sbr.rel target = $region3
  $region8: #{sequential_absolute_forward.54} parent=0 // loop_exit
    _

// kernel: sequential_absolute_forward.77
$region0: #{sequential_absolute_forward.77}
  #allocation0 [shape = 'u32[]', space=smem, size = 0x4, offset = 0x4, fixed_abs, tag = 'smem constant byte address 0x4 - core index']
  #allocation1 [shape = 'u32[144,128]{1,0:T(1,128)}', space=vmem, size = 0x12000, scoped, tag = 'internal scratch']
  #allocation2 [shape = 'f32[16,128]{1,0:T(8,128)}', space=vmem, size = 0x2000, scoped, tag = 'scratch operand']
  %s0 = inlined_call_operand.vmem [shape: bf16[16,32], index: 0, kind: input, shape index: {}]
  %s1 = inlined_call_operand.vmem [shape: bf16[32,128], index: 1, kind: input, shape index: {}]
  %s2 = inlined_call_operand.vmem [shape: f32[1,128], index: 2, kind: input, shape index: {}]
  %s3 = inlined_call_operand.vmem [shape: f32[16,128], index: 3, kind: output, shape index: {}]
  %s4 = sld [smem:[#allocation0]]
  $region30: #{sequential_absolute_forward.77} parent=0
    _
  %s6 = ssub.s32 1, %s4
  %s7 = scalar_select 0, %s6, %s4
  // Predicated region
  $region2: #{sequential_absolute_forward.77} parent=0 // pred_check
    _
  $region3: #{sequential_absolute_forward.77} parent=0 // pred_check_branch
    %9 = sbr.rel (0) target = $region5
  $region4: #{sequential_absolute_forward.77} parent=0 // pred_region
    _
  $region5: #{sequential_absolute_forward.77} parent=0 // pred_fallthru
    _
  // Predicated region
  $region6: #{sequential_absolute_forward.77} parent=0 // pred_check
    _
  $region7: #{sequential_absolute_forward.77} parent=0 // pred_check_branch
    %11 = sbr.rel (0) target = $region9
  $region8: #{sequential_absolute_forward.77} parent=0 // pred_region
    _
  $region9: #{sequential_absolute_forward.77} parent=0 // pred_fallthru
    _
  // Predicated region
  $region10: #{sequential_absolute_forward.77} parent=0 // pred_check
    _
  $region11: #{sequential_absolute_forward.77} parent=0 // pred_check_branch
    %13 = sbr.rel (0) target = $region13
  $region12: #{sequential_absolute_forward.77} parent=0 // pred_region
    _
  $region13: #{sequential_absolute_forward.77} parent=0 // pred_fallthru
    _
  %p15 = scmp.eq.s32.totalorder 0, 0
  // Predicated region
  $region14: #{sequential_absolute_forward.77} parent=0 // pred_check
    %p16 = pneg %p15
  $region15: #{sequential_absolute_forward.77} parent=0 // pred_check_branch
    %18 = sbr.rel (%p16) target = $region17
  $region16: #{sequential_absolute_forward.77} parent=0 // pred_region
    %19 = vst [vmem:[#allocation2] sm:$0xff] 0.0
    %20 = vst [vmem:[#allocation2 + $0x8] sm:$0xff] 0.0
  $region17: #{sequential_absolute_forward.77} parent=0 // pred_fallthru
    _
  %v21 = vld [vmem:[#allocation2] sm:$0xff]
  %v22 = vld [vmem:[#allocation2 + $0x8] sm:$0xff]
  %v23 = vld [vmem:[%s0] sm:$0xf]
  %v24 = vld [vmem:[%s0 + $0x4] sm:$0xf]
  %v25 = vld [vmem:[%s1] sm:$0xf]
  %v26 = vld [vmem:[%s1 + $0x4] sm:$0xf]
  %v27 = vld [vmem:[%s1 + $0x8] sm:$0xf]
  %v28 = vld [vmem:[%s1 + $0xc] sm:$0xf]
  %v31 = vunpack.c.l.b16 %v23
  %v32 = vunpack.c.l.b16 %v24
  %v33 = vpack.c.b16 %v32, %v31
  %v38 = vunpack.c.l.b16 %v25
  %v39 = vunpack.c.l.b16 %v26
  %v40 = vunpack.c.l.b16 %v27
  %v41 = vunpack.c.l.b16 %v28
  %v42 = vpack.c.b16 %v39, %v38
  %v43 = vpack.c.b16 %v41, %v40
  %vm46 = vcmask 261120
  %v48 = vsel %vm46, %v33, 0
  %50 = vmatprep.subr.bf16.mxu0 0
  %51 = vmatpush1.bf16.msra.mxu0 0
  %52 = vmatprep.subr.bf16.mxu0 0
  %53 = vmatpush1.bf16.msra.mxu0 0
  %54 = vmatprep.subr.bf16.mxu0 0
  %55 = vmatpush1.bf16.msra.mxu0 0
  %56 = vmatprep.subr.bf16.mxu0 0
  %57 = vmatpush1.bf16.msra.mxu0 0
  %58 = vmatprep.subr.bf16.mxu0 0
  %59 = vmatpush1.bf16.msra.mxu0 0
  %60 = vmatprep.subr.bf16.mxu0 0
  %61 = vmatpush1.bf16.msra.mxu0 0
  %62 = vmatprep.subr.bf16.mxu0 0
  %63 = vmatpush1.bf16.msra.mxu0 %v43
  %64 = vmatprep.subr.bf16.mxu0 0
  %65 = vmatpush1.bf16.msra.mxu0 %v42
  %66 = vmatprep.subr.bf16.mxu0 0
  %67 = vmatpush2.bf16.msra.mxu0 0
  %68 = vmatprep.subr.bf16.mxu0 0
  %69 = vmatpush2.bf16.msra.mxu0 0
  %70 = vmatprep.subr.bf16.mxu0 0
  %71 = vmatpush2.bf16.msra.mxu0 0
  %72 = vmatprep.subr.bf16.mxu0 0
  %73 = vmatpush2.bf16.msra.mxu0 0
  %74 = vmatprep.subr.bf16.mxu0 0
  %75 = vmatpush2.bf16.msra.mxu0 0
  %76 = vmatprep.subr.bf16.mxu0 0
  %77 = vmatpush2.bf16.msra.mxu0 0
  %78 = vmatprep.subr.bf16.mxu0 0
  %79 = vmatpush2.bf16.msra.mxu0 0
  %80 = vmatprep.subr.bf16.mxu0 0
  %81 = vmatpush2.bf16.msra.mxu0 0
  %82 = vmatprep.mubr.bf16.mxu0 0
  %83 = vmatmul.mubr.bf16.gmra.mxu0 %v48
  %v84 = vpop.f32.mrf.mxu0
  %v85 = vadd.f32 0.0, %v84
  %v86 = vpop.f32.mrf.mxu0
  %v87 = vpop.f32.mrf.mxu0
  %v88 = vadd.f32 0.0, %v87
  %v89 = vpop.f32.mrf.mxu0
  %90 = vdwg.mxu0
  %v91 = vadd.f32 %v21, %v85
  %v92 = vadd.f32 %v22, %v88
  %93 = vst [vmem:[#allocation2] sm:$0xff] %v91
  %94 = vst [vmem:[#allocation2 + $0x8] sm:$0xff] %v92
  // Predicated region
  $region18: #{sequential_absolute_forward.77} parent=0 // pred_check
    %p95 = pneg %p15
  $region19: #{sequential_absolute_forward.77} parent=0 // pred_check_branch
    %97 = sbr.rel (%p95) target = $region21
  $region20: #{sequential_absolute_forward.77} parent=0 // pred_region
    %v98 = vld [vmem:[#allocation2] sm:$0xff]
    %v99 = vld [vmem:[#allocation2 + $0x8] sm:$0xff]
    %v100 = vld [vmem:[%s2] sm:$0x1]
    %v102 = vlaneseq
    %v103 = vshrl.u32 %v102, 7
    %v104 = vsub.s32 0, %v103
    %v105 = vrot.slane %v100, %v104
    %v107 = vadd.f32 %v98, %v105
    %v108 = vadd.f32 %v99, %v105
    %109 = vst [vmem:[%s3] sm:$0xff] %v107
    %110 = vst [vmem:[%s3 + $0x8] sm:$0xff] %v108
  $region21: #{sequential_absolute_forward.77} parent=0 // pred_fallthru
    _
  // Predicated region
  $region22: #{sequential_absolute_forward.77} parent=0 // pred_check
    _
  $region23: #{sequential_absolute_forward.77} parent=0 // pred_check_branch
    %112 = sbr.rel (0) target = $region25
  $region24: #{sequential_absolute_forward.77} parent=0 // pred_region
    _
  $region25: #{sequential_absolute_forward.77} parent=0 // pred_fallthru
    _
  // Predicated region
  $region26: #{sequential_absolute_forward.77} parent=0 // pred_check
    _
  $region27: #{sequential_absolute_forward.77} parent=0 // pred_check_branch
    %114 = sbr.rel (0) target = $region29
  $region28: #{sequential_absolute_forward.77} parent=0 // pred_region
    _
  $region29: #{sequential_absolute_forward.77} parent=0 // pred_fallthru
    _

</llo_original>
